<compile_context>
chip_gen: v7x
topology: tpu7x:2x2x1
jax: 0.10.0
libtpu: 0.0.40
codegen_flags: <defaults>
</compile_context>

<pallas_src>
import functools

import numpy as np
import jax
import jax.numpy as jnp
from jax.experimental import pallas as pl
from jax.experimental.pallas import tpu as pltpu

BN_EPS = 1e-5

# Network geometry (input spatial 8x20 so that 64*3*6 = 1152 matches fc1).
N = 2
C0, H1, W1 = 2, 8, 20
C1 = 16
H2, W2 = H1 // 2 + 1, W1 // 2 + 1      # 5, 11  (MaxPool2d(2,2,padding=1))
C2 = 32
H3, W3 = H2 // 2 + 1, W2 // 2 + 1      # 3, 6
C3 = 64
FC_H = 64


# ------------------------------ fused kernel --------------------------------

def fused_forward_kernel(
        x_ref,
        bw1_ref, s1_ref, st1_ref, e1_ref, o1_ref, g1_ref, be1_ref, m1_ref,
        bw2_ref, s2_ref, st2_ref, e2_ref, o2_ref, g2_ref, be2_ref, m2_ref,
        bw3_ref, s3_ref, st3_ref, g3_ref, be3_ref, m3_ref,
        w1r_ref, fb1_ref, fw2_ref,
        out_ref,
        p2_ref, p3_ref):
    f32 = jnp.float32

    # Zero the row-padded scratch slabs feeding conv2 / conv3 (the zero rows
    # around each image provide the convs' H padding; W padding lives in BigW).
    p2_ref[...] = jnp.zeros_like(p2_ref)
    p3_ref[...] = jnp.zeros_like(p3_ref)

    def conv_bn_relu(src_ref, bw_ref, s_ref, st_ref, g_ref, be_ref, m_ref,
                     H, W, Cout):
        # src_ref: (N*(H+2), W*Cin) stacked slab with zero rows at each image's
        # top/bottom.  Both images go through the SAME 3 MXU matmuls (one per
        # kh tap).  Rows straddling an image boundary are garbage: masked out
        # of the BN statistics and never read downstream.
        R = N * (H + 2) - 2
        acc = jnp.dot(src_ref[0:R, :], bw_ref[0], preferred_element_type=f32)
        acc = acc + jnp.dot(src_ref[1:R + 1, :], bw_ref[1],
                            preferred_element_type=f32)
        acc = acc + jnp.dot(src_ref[2:R + 2, :], bw_ref[2],
                            preferred_element_type=f32)
        # Training-mode BatchNorm: biased batch stats over the valid (N,H,W)
        # positions.  Row reduction via the mask-row matmul, channel reduction
        # via the selector matmul (sum and sum-of-squares share one matmul).
        s_lanes = jnp.dot(m_ref[...], acc, preferred_element_type=f32)
        ss_lanes = jnp.dot(m_ref[...], acc * acc, preferred_element_type=f32)
        inv_cnt = 1.0 / float(N * H * W)
        stats = jnp.dot(jnp.concatenate([s_lanes, ss_lanes], axis=0), s_ref[...],
                        preferred_element_type=f32) * inv_cnt        # (2, Cout)
        mean = stats[0:1, :]
        var = stats[1:2, :] - mean * mean
        scale_c = g_ref[...] * jax.lax.rsqrt(var + BN_EPS)            # (1, Cout)
        shift_c = be_ref[...] - mean * scale_c
        coeffs = jnp.dot(jnp.concatenate([scale_c, shift_c], axis=0), st_ref[...],
                         preferred_element_type=f32)                  # (2, W*Cout)
        return jnp.maximum(acc * coeffs[0:1, :] + coeffs[1:2, :], 0.0)

    def maxpool_into(y, e_ref, o_ref, dst_ref, H, Ho, WoC):
        # 2x2 / stride 2 / padding 1 max pool.  Column taps via two selector
        # matmuls over the full stacked slab (both images at once); row-pair
        # max per image, one store per image into the padded destination.
        # Inputs are post-ReLU (>= 0), so zero padding == PyTorch's -inf pad.
        hp = jnp.maximum(
            jnp.dot(y, e_ref[...], preferred_element_type=f32),
            jnp.dot(y, o_ref[...], preferred_element_type=f32))
        zrow = jnp.zeros((1, WoC), f32)
        for n in range(N):
            base = n * (H + 2)
            pad = jnp.concatenate([zrow, hp[base:base + H, :], zrow], axis=0)
            pooled = jnp.concatenate(
                [jnp.maximum(pad[2 * io:2 * io + 1, :], pad[2 * io + 1:2 * io + 2, :])
                 for io in range(Ho)], axis=0)
            dst_ref[n * (Ho + 2) + 1: n * (Ho + 2) + 1 + Ho, :] = pooled

    # Stage 1: conv1 + bn1 + relu -> pool1 (into p2 scratch)
    y1 = conv_bn_relu(x_ref, bw1_ref, s1_ref, st1_ref, g1_ref, be1_ref, m1_ref,
                      H1, W1, C1)
    maxpool_into(y1, e1_ref, o1_ref, p2_ref, H1, H2, W2 * C1)
    # Stage 2: conv2 + bn2 + relu -> pool2 (into p3 scratch)
    y2 = conv_bn_relu(p2_ref, bw2_ref, s2_ref, st2_ref, g2_ref, be2_ref, m2_ref,
                      H2, W2, C2)
    maxpool_into(y2, e2_ref, o2_ref, p3_ref, H2, H3, W3 * C2)
    # Stage 3: conv3 + bn3 + relu (the PyTorch forward never applies maxpool3)
    y3 = conv_bn_relu(p3_ref, bw3_ref, s3_ref, st3_ref, g3_ref, be3_ref, m3_ref,
                      H3, W3, C3)
    # Head: Linear(1152,64)+bias -> ReLU -> Linear(64,1, no bias).  Both images
    # are batched into every matmul; fc1 is pre-permuted so the conv3 layout is
    # consumed directly (no in-kernel flatten/transpose needed).
    h = jnp.zeros((N, FC_H), f32)
    for i in range(H3):
        rows = jnp.concatenate(
            [y3[n * (H3 + 2) + i: n * (H3 + 2) + i + 1, :] for n in range(N)],
            axis=0)                                                   # (N, W3*C3)
        h = h + jnp.dot(rows, w1r_ref[i], preferred_element_type=f32)
    h = jnp.maximum(h + fb1_ref[...], 0.0)
    out_ref[...] = jnp.dot(h, fw2_ref[...], preferred_element_type=f32)


# ---------------------- one-time weight preprocessing ------------------------

def _make_big_w(w_oihw, W):
    """(3, W*Cin, W*Cout): conv as 3 row-shifted matmuls in the (rows, W*Cin)
    lane layout; kw taps and the W zero-padding are folded into the matrix."""
    w = np.asarray(w_oihw, np.float32)
    Cout, Cin = w.shape[0], w.shape[1]
    bw = np.zeros((3, W * Cin, W * Cout), np.float32)
    for di in range(3):
        for dj in range(3):
            blk = w[:, :, di, dj].T                       # (Cin, Cout)
            for j in range(W):
                jin = j + dj - 1
                if 0 <= jin < W:
                    bw[di, jin * Cin:(jin + 1) * Cin, j * Cout:(j + 1) * Cout] = blk
    return bw


def _make_bn_selectors(W, C):
    s = np.tile(np.eye(C, dtype=np.float32), (W, 1))      # (W*C, C): lanes -> channel sum
    st = np.tile(np.eye(C, dtype=np.float32), (1, W))     # (C, W*C): channel -> lanes expand
    return s, st


def _make_pool_selectors(W, Wo, C):
    eye = np.eye(C, dtype=np.float32)
    e = np.zeros((W * C, Wo * C), np.float32)
    o = np.zeros((W * C, Wo * C), np.float32)
    for jo in range(Wo):
        je, jd = 2 * jo, 2 * jo - 1
        if je < W:
            e[je * C:(je + 1) * C, jo * C:(jo + 1) * C] = eye
        if 0 <= jd < W:
            o[jd * C:(jd + 1) * C, jo * C:(jo + 1) * C] = eye
    return e, o


def _make_valid_mask(H):
    """(1, N*(H+2)-2) mask selecting the valid conv-output rows of the stacked
    batch slab (1 for image rows, 0 for rows straddling image boundaries)."""
    R = N * (H + 2) - 2
    m = np.zeros((1, R), np.float32)
    for n in range(N):
        m[0, n * (H + 2): n * (H + 2) + H] = 1.0
    return m


def prepare_params(params):
    """Fold layout / padding / flatten-order into the weights (done once)."""
    s1, st1 = _make_bn_selectors(W1, C1)
    s2, st2 = _make_bn_selectors(W2, C2)
    s3, st3 = _make_bn_selectors(W3, C3)
    e1, o1 = _make_pool_selectors(W1, W2, C1)
    e2, o2 = _make_pool_selectors(W2, W3, C2)
    # fc1 rows are in PyTorch NCHW flatten order (c*H3*W3 + i*W3 + j); permute
    # them to the kernel's (i, j*C3 + c) layout.
    fw1 = np.asarray(params["fw1"], np.float32)           # (1152, 64)
    w1r = fw1.reshape(C3, H3, W3, FC_H).transpose(1, 2, 0, 3).reshape(H3, W3 * C3, FC_H)
    prep = dict(
        bw1=_make_big_w(params["w1"], W1), s1=s1, st1=st1, e1=e1, o1=o1,
        g1=np.asarray(params["g1"], np.float32).reshape(1, C1),
        be1=np.asarray(params["be1"], np.float32).reshape(1, C1),
        m1=_make_valid_mask(H1),
        bw2=_make_big_w(params["w2"], W2), s2=s2, st2=st2, e2=e2, o2=o2,
        g2=np.asarray(params["g2"], np.float32).reshape(1, C2),
        be2=np.asarray(params["be2"], np.float32).reshape(1, C2),
        m2=_make_valid_mask(H2),
        bw3=_make_big_w(params["w3"], W3), s3=s3, st3=st3,
        g3=np.asarray(params["g3"], np.float32).reshape(1, C3),
        be3=np.asarray(params["be3"], np.float32).reshape(1, C3),
        m3=_make_valid_mask(H3),
        w1r=w1r,
        fb1=np.asarray(params["fb1"], np.float32).reshape(1, FC_H),
        fw2=np.asarray(params["fw2"], np.float32).reshape(1, FC_H).T,   # (64, 1)
    )
    return {k: jnp.asarray(v) for k, v in prep.items()}


# ------------------------------- forward -------------------------------------

_OPERAND_ORDER = ("bw1", "s1", "st1", "e1", "o1", "g1", "be1", "m1",
                  "bw2", "s2", "st2", "e2", "o2", "g2", "be2", "m2",
                  "bw3", "s3", "st3", "g3", "be3", "m3",
                  "w1r", "fb1", "fw2")


def _zero_block(i, nd):
    return (0,) * nd


def model_forward(x_nchw, prep):
    # NCHW -> stacked (N*(H+2), W*C) slab: channels packed W-major along lanes,
    # one zero row of padding above/below each image (the conv's W padding is
    # folded into BigW).
    x = jnp.transpose(x_nchw, (0, 2, 3, 1)).astype(jnp.float32)
    x = jnp.pad(x, ((0, 0), (1, 1), (0, 0), (0, 0)))
    x = x.reshape(N * (H1 + 2), W1 * C0)

    operands = [x] + [prep[k] for k in _OPERAND_ORDER]
    in_specs = [pl.BlockSpec(a.shape, functools.partial(_zero_block, nd=a.ndim))
                for a in operands]
    return pl.pallas_call(
        fused_forward_kernel,
        grid=(1,),
        in_specs=in_specs,
        out_specs=pl.BlockSpec((N, 1), lambda i: (0, 0)),
        out_shape=jax.ShapeDtypeStruct((N, 1), jnp.float32),
        scratch_shapes=[
            pltpu.VMEM((N * (H2 + 2), W2 * C1), jnp.float32),   # pooled-1, row padded
            pltpu.VMEM((N * (H3 + 2), W3 * C2), jnp.float32),   # pooled-2, row padded
        ],
        compiler_params=pltpu.CompilerParams(
            dimension_semantics=("arbitrary",),
            vmem_limit_bytes=64 * 1024 * 1024),
    )(*operands)


# ------------------------------ parameter init -------------------------------

def init_params(key):
    ks = jax.random.split(key, 6)

    def conv_w(k, cout, cin):
        # kaiming_normal_, mode='fan_out', relu: std = sqrt(2 / (cout * 3 * 3))
        std = (2.0 / (cout * 9)) ** 0.5
        return std * jax.random.normal(k, (cout, cin, 3, 3), jnp.float32)

    b1 = 1.0 / 1152 ** 0.5
    b2 = 1.0 / 64 ** 0.5
    return {
        # Conv biases are omitted: under training-mode BatchNorm they are
        # cancelled exactly by the batch-mean subtraction.
        "w1": conv_w(ks[0], C1, C0),
        "g1": jnp.ones((C1,), jnp.float32), "be1": jnp.zeros((C1,), jnp.float32),
        "w2": conv_w(ks[1], C2, C1),
        "g2": jnp.ones((C2,), jnp.float32), "be2": jnp.zeros((C2,), jnp.float32),
        "w3": conv_w(ks[2], C3, C2),
        "g3": jnp.ones((C3,), jnp.float32), "be3": jnp.zeros((C3,), jnp.float32),
        # fc1 stored pre-transposed (in_features, out_features), rows in the
        # PyTorch NCHW flatten order; fc2 stored like torch's (1, 64) weight.
        "fw1": jax.random.uniform(ks[3], (1152, FC_H), jnp.float32, -b1, b1),
        "fb1": jax.random.uniform(ks[4], (FC_H,), jnp.float32, -b1, b1),
        "fw2": jax.random.uniform(ks[5], (1, FC_H), jnp.float32, -b2, b2),
    }


# ----------------------------------- main ------------------------------------

if __name__ == "__main__":
    key = jax.random.PRNGKey(0)
    pkey, xkey = jax.random.split(key)
    params = init_params(pkey)
    prep = prepare_params(params)

    # NCHW input like PyTorch: batch=2, channels=2, spatial 8x20
    # (8x20 -pool-> 5x11 -pool-> 3x6; 64*3*6 = 1152 = fc in_features).
    x = jax.random.normal(xkey, (N, C0, H1, W1), jnp.float32)

    fwd = jax.jit(functools.partial(model_forward, prep=prep))
    out = jax.block_until_ready(fwd(x))

    assert out.shape == (N, 1), out.shape
    assert out.dtype == jnp.float32
    print("KERNEL_OK")
</pallas_src>

<mosaic_0001>
module attributes {stable_mosaic.version = 11 : i64} {
  func.func @fused_forward_kernel(%arg0: i32, %arg1: memref<20x40xf32, #tpu.memory_space<vmem>>, %arg2: memref<3x40x320xf32, #tpu.memory_space<vmem>>, %arg3: memref<320x16xf32, #tpu.memory_space<vmem>>, %arg4: memref<16x320xf32, #tpu.memory_space<vmem>>, %arg5: memref<320x176xf32, #tpu.memory_space<vmem>>, %arg6: memref<320x176xf32, #tpu.memory_space<vmem>>, %arg7: memref<1x16xf32, #tpu.memory_space<vmem>>, %arg8: memref<1x16xf32, #tpu.memory_space<vmem>>, %arg9: memref<1x18xf32, #tpu.memory_space<vmem>>, %arg10: memref<3x176x352xf32, #tpu.memory_space<vmem>>, %arg11: memref<352x32xf32, #tpu.memory_space<vmem>>, %arg12: memref<32x352xf32, #tpu.memory_space<vmem>>, %arg13: memref<352x192xf32, #tpu.memory_space<vmem>>, %arg14: memref<352x192xf32, #tpu.memory_space<vmem>>, %arg15: memref<1x32xf32, #tpu.memory_space<vmem>>, %arg16: memref<1x32xf32, #tpu.memory_space<vmem>>, %arg17: memref<1x12xf32, #tpu.memory_space<vmem>>, %arg18: memref<3x192x384xf32, #tpu.memory_space<vmem>>, %arg19: memref<384x64xf32, #tpu.memory_space<vmem>>, %arg20: memref<64x384xf32, #tpu.memory_space<vmem>>, %arg21: memref<1x64xf32, #tpu.memory_space<vmem>>, %arg22: memref<1x64xf32, #tpu.memory_space<vmem>>, %arg23: memref<1x8xf32, #tpu.memory_space<vmem>>, %arg24: memref<3x384x64xf32, #tpu.memory_space<vmem>>, %arg25: memref<1x64xf32, #tpu.memory_space<vmem>>, %arg26: memref<64x1xf32, #tpu.memory_space<vmem>>, %arg27: memref<2x1xf32, #tpu.memory_space<vmem>>, %arg28: memref<14x176xf32, #tpu.memory_space<vmem>>, %arg29: memref<10x192xf32, #tpu.memory_space<vmem>>) attributes {dimension_semantics = [#tpu.dimension_semantics<arbitrary>], iteration_bounds = array<i64: 1>, scalar_prefetch = 0 : i64, scratch_operands = 2 : i64, tpu.core_type = #tpu.core_type<tc>, window_params = [{pipeline_mode = #tpu.pipeline_mode<synchronous>, transform_indices = @transform_0, window_bounds = array<i64: 20, 40>}, {pipeline_mode = #tpu.pipeline_mode<synchronous>, transform_indices = @transform_1, window_bounds = array<i64: 3, 40, 320>}, {pipeline_mode = #tpu.pipeline_mode<synchronous>, transform_indices = @transform_2, window_bounds = array<i64: 320, 16>}, {pipeline_mode = #tpu.pipeline_mode<synchronous>, transform_indices = @transform_3, window_bounds = array<i64: 16, 320>}, {pipeline_mode = #tpu.pipeline_mode<synchronous>, transform_indices = @transform_4, window_bounds = array<i64: 320, 176>}, {pipeline_mode = #tpu.pipeline_mode<synchronous>, transform_indices = @transform_5, window_bounds = array<i64: 320, 176>}, {pipeline_mode = #tpu.pipeline_mode<synchronous>, transform_indices = @transform_6, window_bounds = array<i64: 1, 16>}, {pipeline_mode = #tpu.pipeline_mode<synchronous>, transform_indices = @transform_7, window_bounds = array<i64: 1, 16>}, {pipeline_mode = #tpu.pipeline_mode<synchronous>, transform_indices = @transform_8, window_bounds = array<i64: 1, 18>}, {pipeline_mode = #tpu.pipeline_mode<synchronous>, transform_indices = @transform_9, window_bounds = array<i64: 3, 176, 352>}, {pipeline_mode = #tpu.pipeline_mode<synchronous>, transform_indices = @transform_10, window_bounds = array<i64: 352, 32>}, {pipeline_mode = #tpu.pipeline_mode<synchronous>, transform_indices = @transform_11, window_bounds = array<i64: 32, 352>}, {pipeline_mode = #tpu.pipeline_mode<synchronous>, transform_indices = @transform_12, window_bounds = array<i64: 352, 192>}, {pipeline_mode = #tpu.pipeline_mode<synchronous>, transform_indices = @transform_13, window_bounds = array<i64: 352, 192>}, {pipeline_mode = #tpu.pipeline_mode<synchronous>, transform_indices = @transform_14, window_bounds = array<i64: 1, 32>}, {pipeline_mode = #tpu.pipeline_mode<synchronous>, transform_indices = @transform_15, window_bounds = array<i64: 1, 32>}, {pipeline_mode = #tpu.pipeline_mode<synchronous>, transform_indices = @transform_16, window_bounds = array<i64: 1, 12>}, {pipeline_mode = #tpu.pipeline_mode<synchronous>, transform_indices = @transform_17, window_bounds = array<i64: 3, 192, 384>}, {pipeline_mode = #tpu.pipeline_mode<synchronous>, transform_indices = @transform_18, window_bounds = array<i64: 384, 64>}, {pipeline_mode = #tpu.pipeline_mode<synchronous>, transform_indices = @transform_19, window_bounds = array<i64: 64, 384>}, {pipeline_mode = #tpu.pipeline_mode<synchronous>, transform_indices = @transform_20, window_bounds = array<i64: 1, 64>}, {pipeline_mode = #tpu.pipeline_mode<synchronous>, transform_indices = @transform_21, window_bounds = array<i64: 1, 64>}, {pipeline_mode = #tpu.pipeline_mode<synchronous>, transform_indices = @transform_22, window_bounds = array<i64: 1, 8>}, {pipeline_mode = #tpu.pipeline_mode<synchronous>, transform_indices = @transform_23, window_bounds = array<i64: 3, 384, 64>}, {pipeline_mode = #tpu.pipeline_mode<synchronous>, transform_indices = @transform_24, window_bounds = array<i64: 1, 64>}, {pipeline_mode = #tpu.pipeline_mode<synchronous>, transform_indices = @transform_25, window_bounds = array<i64: 64, 1>}, {pipeline_mode = #tpu.pipeline_mode<synchronous>, transform_indices = @transform_26, window_bounds = array<i64: 2, 1>}]} {
    %cst = arith.constant 0.000000e+00 : f32
    %0 = vector.broadcast %cst : f32 to vector<14x176xf32>
    %c0 = arith.constant 0 : index
    %c0_0 = arith.constant 0 : index
    %1 = vector.load %arg28[%c0, %c0_0] : memref<14x176xf32, #tpu.memory_space<vmem>>, vector<14x176xf32>
    tpu.vector_store %arg28[%c0, %c0_0], %0 {strides = array<i32>} : memref<14x176xf32, #tpu.memory_space<vmem>>, vector<14x176xf32>,
    %cst_1 = arith.constant 0.000000e+00 : f32
    %2 = vector.broadcast %cst_1 : f32 to vector<10x192xf32>
    %c0_2 = arith.constant 0 : index
    %c0_3 = arith.constant 0 : index
    %3 = vector.load %arg29[%c0_2, %c0_3] : memref<10x192xf32, #tpu.memory_space<vmem>>, vector<10x192xf32>
    tpu.vector_store %arg29[%c0_2, %c0_3], %2 {strides = array<i32>} : memref<10x192xf32, #tpu.memory_space<vmem>>, vector<10x192xf32>,
    %c0_4 = arith.constant 0 : index
    %c0_5 = arith.constant 0 : index
    %4 = vector.load %arg1[%c0_4, %c0_5] : memref<20x40xf32, #tpu.memory_space<vmem>>, vector<18x40xf32>
    %c0_6 = arith.constant 0 : index
    %c0_7 = arith.constant 0 : index
    %c0_8 = arith.constant 0 : index
    %5 = vector.load %arg2[%c0_6, %c0_7, %c0_8] : memref<3x40x320xf32, #tpu.memory_space<vmem>>, vector<1x40x320xf32>
    %6 = vector.shape_cast %5 : vector<1x40x320xf32> to vector<40x320xf32>
    %cst_9 = arith.constant dense<0.000000e+00> : vector<18x320xf32>
    %7 = tpu.matmul %4, %6, %cst_9 {dimension_numbers = #tpu.dot_dimension_numbers<[1], [0], [0], [1], [0, 0, 1, 1], [], []>} : vector<18x40xf32>, vector<40x320xf32>, vector<18x320xf32> -> vector<18x320xf32>
    %c1 = arith.constant 1 : index
    %c0_10 = arith.constant 0 : index
    %8 = vector.load %arg1[%c1, %c0_10] : memref<20x40xf32, #tpu.memory_space<vmem>>, vector<18x40xf32>
    %c1_11 = arith.constant 1 : index
    %c0_12 = arith.constant 0 : index
    %c0_13 = arith.constant 0 : index
    %9 = vector.load %arg2[%c1_11, %c0_12, %c0_13] : memref<3x40x320xf32, #tpu.memory_space<vmem>>, vector<1x40x320xf32>
    %10 = vector.shape_cast %9 : vector<1x40x320xf32> to vector<40x320xf32>
    %cst_14 = arith.constant dense<0.000000e+00> : vector<18x320xf32>
    %11 = tpu.matmul %8, %10, %cst_14 {dimension_numbers = #tpu.dot_dimension_numbers<[1], [0], [0], [1], [0, 0, 1, 1], [], []>} : vector<18x40xf32>, vector<40x320xf32>, vector<18x320xf32> -> vector<18x320xf32>
    %12 = arith.addf %7, %11 : vector<18x320xf32>
    %c2 = arith.constant 2 : index
    %c0_15 = arith.constant 0 : index
    %13 = vector.load %arg1[%c2, %c0_15] : memref<20x40xf32, #tpu.memory_space<vmem>>, vector<18x40xf32>
    %c2_16 = arith.constant 2 : index
    %c0_17 = arith.constant 0 : index
    %c0_18 = arith.constant 0 : index
    %14 = vector.load %arg2[%c2_16, %c0_17, %c0_18] : memref<3x40x320xf32, #tpu.memory_space<vmem>>, vector<1x40x320xf32>
    %15 = vector.shape_cast %14 : vector<1x40x320xf32> to vector<40x320xf32>
    %cst_19 = arith.constant dense<0.000000e+00> : vector<18x320xf32>
    %16 = tpu.matmul %13, %15, %cst_19 {dimension_numbers = #tpu.dot_dimension_numbers<[1], [0], [0], [1], [0, 0, 1, 1], [], []>} : vector<18x40xf32>, vector<40x320xf32>, vector<18x320xf32> -> vector<18x320xf32>
    %17 = arith.addf %12, %16 : vector<18x320xf32>
    %c0_20 = arith.constant 0 : index
    %c0_21 = arith.constant 0 : index
    %18 = vector.load %arg9[%c0_20, %c0_21] : memref<1x18xf32, #tpu.memory_space<vmem>>, vector<1x18xf32>
    %cst_22 = arith.constant dense<0.000000e+00> : vector<1x320xf32>
    %19 = tpu.matmul %18, %17, %cst_22 {dimension_numbers = #tpu.dot_dimension_numbers<[1], [0], [0], [1], [0, 0, 1, 1], [], []>} : vector<1x18xf32>, vector<18x320xf32>, vector<1x320xf32> -> vector<1x320xf32>
    %c0_23 = arith.constant 0 : index
    %c0_24 = arith.constant 0 : index
    %20 = vector.load %arg9[%c0_23, %c0_24] : memref<1x18xf32, #tpu.memory_space<vmem>>, vector<1x18xf32>
    %21 = arith.mulf %17, %17 : vector<18x320xf32>
    %cst_25 = arith.constant dense<0.000000e+00> : vector<1x320xf32>
    %22 = tpu.matmul %20, %21, %cst_25 {dimension_numbers = #tpu.dot_dimension_numbers<[1], [0], [0], [1], [0, 0, 1, 1], [], []>} : vector<1x18xf32>, vector<18x320xf32>, vector<1x320xf32> -> vector<1x320xf32>
    %23 = tpu.concatenate %19, %22 in 0 : vector<1x320xf32>, vector<1x320xf32> -> vector<2x320xf32>
    %c0_26 = arith.constant 0 : index
    %c0_27 = arith.constant 0 : index
    %24 = vector.load %arg3[%c0_26, %c0_27] : memref<320x16xf32, #tpu.memory_space<vmem>>, vector<320x16xf32>
    %cst_28 = arith.constant dense<0.000000e+00> : vector<2x16xf32>
    %25 = tpu.matmul %23, %24, %cst_28 {dimension_numbers = #tpu.dot_dimension_numbers<[1], [0], [0], [1], [0, 0, 1, 1], [], []>} : vector<2x320xf32>, vector<320x16xf32>, vector<2x16xf32> -> vector<2x16xf32>
    %cst_29 = arith.constant 3.125000e-03 : f32
    %26 = vector.broadcast %cst_29 : f32 to vector<2x16xf32>
    %27 = arith.mulf %25, %26 : vector<2x16xf32>
    %28 = vector.extract_strided_slice %27 {offsets = [0, 0], sizes = [1, 16], strides = [1, 1]} : vector<2x16xf32> to vector<1x16xf32>
    %29 = vector.extract_strided_slice %27 {offsets = [1, 0], sizes = [1, 16], strides = [1, 1]} : vector<2x16xf32> to vector<1x16xf32>
    %30 = arith.mulf %28, %28 : vector<1x16xf32>
    %31 = arith.subf %29, %30 : vector<1x16xf32>
    %c0_30 = arith.constant 0 : index
    %c0_31 = arith.constant 0 : index
    %32 = vector.load %arg7[%c0_30, %c0_31] : memref<1x16xf32, #tpu.memory_space<vmem>>, vector<1x16xf32>
    %cst_32 = arith.constant 9.99999974E-6 : f32
    %33 = vector.broadcast %cst_32 : f32 to vector<1x16xf32>
    %34 = arith.addf %31, %33 : vector<1x16xf32>
    %35 = math.rsqrt %34 : vector<1x16xf32>
    %36 = arith.mulf %32, %35 : vector<1x16xf32>
    %c0_33 = arith.constant 0 : index
    %c0_34 = arith.constant 0 : index
    %37 = vector.load %arg8[%c0_33, %c0_34] : memref<1x16xf32, #tpu.memory_space<vmem>>, vector<1x16xf32>
    %38 = arith.mulf %28, %36 : vector<1x16xf32>
    %39 = arith.subf %37, %38 : vector<1x16xf32>
    %40 = tpu.concatenate %36, %39 in 0 : vector<1x16xf32>, vector<1x16xf32> -> vector<2x16xf32>
    %c0_35 = arith.constant 0 : index
    %c0_36 = arith.constant 0 : index
    %41 = vector.load %arg4[%c0_35, %c0_36] : memref<16x320xf32, #tpu.memory_space<vmem>>, vector<16x320xf32>
    %cst_37 = arith.constant dense<0.000000e+00> : vector<2x320xf32>
    %42 = tpu.matmul %40, %41, %cst_37 {dimension_numbers = #tpu.dot_dimension_numbers<[1], [0], [0], [1], [0, 0, 1, 1], [], []>} : vector<2x16xf32>, vector<16x320xf32>, vector<2x320xf32> -> vector<2x320xf32>
    %43 = vector.extract_strided_slice %42 {offsets = [0, 0], sizes = [1, 320], strides = [1, 1]} : vector<2x320xf32> to vector<1x320xf32>
    %44 = vector.broadcast %43 : vector<1x320xf32> to vector<18x320xf32>
    %45 = arith.mulf %17, %44 : vector<18x320xf32>
    %46 = vector.extract_strided_slice %42 {offsets = [1, 0], sizes = [1, 320], strides = [1, 1]} : vector<2x320xf32> to vector<1x320xf32>
    %47 = vector.broadcast %46 : vector<1x320xf32> to vector<18x320xf32>
    %48 = arith.addf %45, %47 : vector<18x320xf32>
    %cst_38 = arith.constant 0.000000e+00 : f32
    %49 = vector.broadcast %cst_38 : f32 to vector<18x320xf32>
    %50 = arith.maximumf %48, %49 : vector<18x320xf32>
    %c0_39 = arith.constant 0 : index
    %c0_40 = arith.constant 0 : index
    %51 = vector.load %arg5[%c0_39, %c0_40] : memref<320x176xf32, #tpu.memory_space<vmem>>, vector<320x176xf32>
    %cst_41 = arith.constant dense<0.000000e+00> : vector<18x176xf32>
    %52 = tpu.matmul %50, %51, %cst_41 {dimension_numbers = #tpu.dot_dimension_numbers<[1], [0], [0], [1], [0, 0, 1, 1], [], []>} : vector<18x320xf32>, vector<320x176xf32>, vector<18x176xf32> -> vector<18x176xf32>
    %c0_42 = arith.constant 0 : index
    %c0_43 = arith.constant 0 : index
    %53 = vector.load %arg6[%c0_42, %c0_43] : memref<320x176xf32, #tpu.memory_space<vmem>>, vector<320x176xf32>
    %cst_44 = arith.constant dense<0.000000e+00> : vector<18x176xf32>
    %54 = tpu.matmul %50, %53, %cst_44 {dimension_numbers = #tpu.dot_dimension_numbers<[1], [0], [0], [1], [0, 0, 1, 1], [], []>} : vector<18x320xf32>, vector<320x176xf32>, vector<18x176xf32> -> vector<18x176xf32>
    %55 = arith.maximumf %52, %54 : vector<18x176xf32>
    %cst_45 = arith.constant 0.000000e+00 : f32
    %56 = vector.broadcast %cst_45 : f32 to vector<1x176xf32>
    %57 = vector.extract_strided_slice %55 {offsets = [0, 0], sizes = [8, 176], strides = [1, 1]} : vector<18x176xf32> to vector<8x176xf32>
    %58 = tpu.concatenate %56, %57, %56 in 0 : vector<1x176xf32>, vector<8x176xf32>, vector<1x176xf32> -> vector<10x176xf32>
    %59 = vector.extract_strided_slice %58 {offsets = [0, 0], sizes = [1, 176], strides = [1, 1]} : vector<10x176xf32> to vector<1x176xf32>
    %60 = vector.extract_strided_slice %58 {offsets = [1, 0], sizes = [1, 176], strides = [1, 1]} : vector<10x176xf32> to vector<1x176xf32>
    %61 = arith.maximumf %59, %60 : vector<1x176xf32>
    %62 = vector.extract_strided_slice %58 {offsets = [2, 0], sizes = [1, 176], strides = [1, 1]} : vector<10x176xf32> to vector<1x176xf32>
    %63 = vector.extract_strided_slice %58 {offsets = [3, 0], sizes = [1, 176], strides = [1, 1]} : vector<10x176xf32> to vector<1x176xf32>
    %64 = arith.maximumf %62, %63 : vector<1x176xf32>
    %65 = vector.extract_strided_slice %58 {offsets = [4, 0], sizes = [1, 176], strides = [1, 1]} : vector<10x176xf32> to vector<1x176xf32>
    %66 = vector.extract_strided_slice %58 {offsets = [5, 0], sizes = [1, 176], strides = [1, 1]} : vector<10x176xf32> to vector<1x176xf32>
    %67 = arith.maximumf %65, %66 : vector<1x176xf32>
    %68 = vector.extract_strided_slice %58 {offsets = [6, 0], sizes = [1, 176], strides = [1, 1]} : vector<10x176xf32> to vector<1x176xf32>
    %69 = vector.extract_strided_slice %58 {offsets = [7, 0], sizes = [1, 176], strides = [1, 1]} : vector<10x176xf32> to vector<1x176xf32>
    %70 = arith.maximumf %68, %69 : vector<1x176xf32>
    %71 = vector.extract_strided_slice %58 {offsets = [8, 0], sizes = [1, 176], strides = [1, 1]} : vector<10x176xf32> to vector<1x176xf32>
    %72 = vector.extract_strided_slice %58 {offsets = [9, 0], sizes = [1, 176], strides = [1, 1]} : vector<10x176xf32> to vector<1x176xf32>
    %73 = arith.maximumf %71, %72 : vector<1x176xf32>
    %74 = tpu.concatenate %61, %64, %67, %70, %73 in 0 : vector<1x176xf32>, vector<1x176xf32>, vector<1x176xf32>, vector<1x176xf32>, vector<1x176xf32> -> vector<5x176xf32>
    %c1_46 = arith.constant 1 : index
    %c0_47 = arith.constant 0 : index
    %75 = vector.load %arg28[%c1_46, %c0_47] : memref<14x176xf32, #tpu.memory_space<vmem>>, vector<5x176xf32>
    tpu.vector_store %arg28[%c1_46, %c0_47], %74 {strides = array<i32>} : memref<14x176xf32, #tpu.memory_space<vmem>>, vector<5x176xf32>,
    %76 = vector.extract_strided_slice %55 {offsets = [10, 0], sizes = [8, 176], strides = [1, 1]} : vector<18x176xf32> to vector<8x176xf32>
    %77 = tpu.concatenate %56, %76, %56 in 0 : vector<1x176xf32>, vector<8x176xf32>, vector<1x176xf32> -> vector<10x176xf32>
    %78 = vector.extract_strided_slice %77 {offsets = [0, 0], sizes = [1, 176], strides = [1, 1]} : vector<10x176xf32> to vector<1x176xf32>
    %79 = vector.extract_strided_slice %77 {offsets = [1, 0], sizes = [1, 176], strides = [1, 1]} : vector<10x176xf32> to vector<1x176xf32>
    %80 = arith.maximumf %78, %79 : vector<1x176xf32>
    %81 = vector.extract_strided_slice %77 {offsets = [2, 0], sizes = [1, 176], strides = [1, 1]} : vector<10x176xf32> to vector<1x176xf32>
    %82 = vector.extract_strided_slice %77 {offsets = [3, 0], sizes = [1, 176], strides = [1, 1]} : vector<10x176xf32> to vector<1x176xf32>
    %83 = arith.maximumf %81, %82 : vector<1x176xf32>
    %84 = vector.extract_strided_slice %77 {offsets = [4, 0], sizes = [1, 176], strides = [1, 1]} : vector<10x176xf32> to vector<1x176xf32>
    %85 = vector.extract_strided_slice %77 {offsets = [5, 0], sizes = [1, 176], strides = [1, 1]} : vector<10x176xf32> to vector<1x176xf32>
    %86 = arith.maximumf %84, %85 : vector<1x176xf32>
    %87 = vector.extract_strided_slice %77 {offsets = [6, 0], sizes = [1, 176], strides = [1, 1]} : vector<10x176xf32> to vector<1x176xf32>
    %88 = vector.extract_strided_slice %77 {offsets = [7, 0], sizes = [1, 176], strides = [1, 1]} : vector<10x176xf32> to vector<1x176xf32>
    %89 = arith.maximumf %87, %88 : vector<1x176xf32>
    %90 = vector.extract_strided_slice %77 {offsets = [8, 0], sizes = [1, 176], strides = [1, 1]} : vector<10x176xf32> to vector<1x176xf32>
    %91 = vector.extract_strided_slice %77 {offsets = [9, 0], sizes = [1, 176], strides = [1, 1]} : vector<10x176xf32> to vector<1x176xf32>
    %92 = arith.maximumf %90, %91 : vector<1x176xf32>
    %93 = tpu.concatenate %80, %83, %86, %89, %92 in 0 : vector<1x176xf32>, vector<1x176xf32>, vector<1x176xf32>, vector<1x176xf32>, vector<1x176xf32> -> vector<5x176xf32>
    %c8 = arith.constant 8 : index
    %c0_48 = arith.constant 0 : index
    %94 = vector.load %arg28[%c8, %c0_48] : memref<14x176xf32, #tpu.memory_space<vmem>>, vector<5x176xf32>
    tpu.vector_store %arg28[%c8, %c0_48], %93 {strides = array<i32>} : memref<14x176xf32, #tpu.memory_space<vmem>>, vector<5x176xf32>,
    %c0_49 = arith.constant 0 : index
    %c0_50 = arith.constant 0 : index
    %95 = vector.load %arg28[%c0_49, %c0_50] : memref<14x176xf32, #tpu.memory_space<vmem>>, vector<12x176xf32>
    %c0_51 = arith.constant 0 : index
    %c0_52 = arith.constant 0 : index
    %c0_53 = arith.constant 0 : index
    %96 = vector.load %arg10[%c0_51, %c0_52, %c0_53] : memref<3x176x352xf32, #tpu.memory_space<vmem>>, vector<1x176x352xf32>
    %97 = vector.shape_cast %96 : vector<1x176x352xf32> to vector<176x352xf32>
    %cst_54 = arith.constant dense<0.000000e+00> : vector<12x352xf32>
    %98 = tpu.matmul %95, %97, %cst_54 {dimension_numbers = #tpu.dot_dimension_numbers<[1], [0], [0], [1], [0, 0, 1, 1], [], []>} : vector<12x176xf32>, vector<176x352xf32>, vector<12x352xf32> -> vector<12x352xf32>
    %c1_55 = arith.constant 1 : index
    %c0_56 = arith.constant 0 : index
    %99 = vector.load %arg28[%c1_55, %c0_56] : memref<14x176xf32, #tpu.memory_space<vmem>>, vector<12x176xf32>
    %c1_57 = arith.constant 1 : index
    %c0_58 = arith.constant 0 : index
    %c0_59 = arith.constant 0 : index
    %100 = vector.load %arg10[%c1_57, %c0_58, %c0_59] : memref<3x176x352xf32, #tpu.memory_space<vmem>>, vector<1x176x352xf32>
    %101 = vector.shape_cast %100 : vector<1x176x352xf32> to vector<176x352xf32>
    %cst_60 = arith.constant dense<0.000000e+00> : vector<12x352xf32>
    %102 = tpu.matmul %99, %101, %cst_60 {dimension_numbers = #tpu.dot_dimension_numbers<[1], [0], [0], [1], [0, 0, 1, 1], [], []>} : vector<12x176xf32>, vector<176x352xf32>, vector<12x352xf32> -> vector<12x352xf32>
    %103 = arith.addf %98, %102 : vector<12x352xf32>
    %c2_61 = arith.constant 2 : index
    %c0_62 = arith.constant 0 : index
    %104 = vector.load %arg28[%c2_61, %c0_62] : memref<14x176xf32, #tpu.memory_space<vmem>>, vector<12x176xf32>
    %c2_63 = arith.constant 2 : index
    %c0_64 = arith.constant 0 : index
    %c0_65 = arith.constant 0 : index
    %105 = vector.load %arg10[%c2_63, %c0_64, %c0_65] : memref<3x176x352xf32, #tpu.memory_space<vmem>>, vector<1x176x352xf32>
    %106 = vector.shape_cast %105 : vector<1x176x352xf32> to vector<176x352xf32>
    %cst_66 = arith.constant dense<0.000000e+00> : vector<12x352xf32>
    %107 = tpu.matmul %104, %106, %cst_66 {dimension_numbers = #tpu.dot_dimension_numbers<[1], [0], [0], [1], [0, 0, 1, 1], [], []>} : vector<12x176xf32>, vector<176x352xf32>, vector<12x352xf32> -> vector<12x352xf32>
    %108 = arith.addf %103, %107 : vector<12x352xf32>
    %c0_67 = arith.constant 0 : index
    %c0_68 = arith.constant 0 : index
    %109 = vector.load %arg17[%c0_67, %c0_68] : memref<1x12xf32, #tpu.memory_space<vmem>>, vector<1x12xf32>
    %cst_69 = arith.constant dense<0.000000e+00> : vector<1x352xf32>
    %110 = tpu.matmul %109, %108, %cst_69 {dimension_numbers = #tpu.dot_dimension_numbers<[1], [0], [0], [1], [0, 0, 1, 1], [], []>} : vector<1x12xf32>, vector<12x352xf32>, vector<1x352xf32> -> vector<1x352xf32>
    %c0_70 = arith.constant 0 : index
    %c0_71 = arith.constant 0 : index
    %111 = vector.load %arg17[%c0_70, %c0_71] : memref<1x12xf32, #tpu.memory_space<vmem>>, vector<1x12xf32>
    %112 = arith.mulf %108, %108 : vector<12x352xf32>
    %cst_72 = arith.constant dense<0.000000e+00> : vector<1x352xf32>
    %113 = tpu.matmul %111, %112, %cst_72 {dimension_numbers = #tpu.dot_dimension_numbers<[1], [0], [0], [1], [0, 0, 1, 1], [], []>} : vector<1x12xf32>, vector<12x352xf32>, vector<1x352xf32> -> vector<1x352xf32>
    %114 = tpu.concatenate %110, %113 in 0 : vector<1x352xf32>, vector<1x352xf32> -> vector<2x352xf32>
    %c0_73 = arith.constant 0 : index
    %c0_74 = arith.constant 0 : index
    %115 = vector.load %arg11[%c0_73, %c0_74] : memref<352x32xf32, #tpu.memory_space<vmem>>, vector<352x32xf32>
    %cst_75 = arith.constant dense<0.000000e+00> : vector<2x32xf32>
    %116 = tpu.matmul %114, %115, %cst_75 {dimension_numbers = #tpu.dot_dimension_numbers<[1], [0], [0], [1], [0, 0, 1, 1], [], []>} : vector<2x352xf32>, vector<352x32xf32>, vector<2x32xf32> -> vector<2x32xf32>
    %cst_76 = arith.constant 0.0090909088 : f32
    %117 = vector.broadcast %cst_76 : f32 to vector<2x32xf32>
    %118 = arith.mulf %116, %117 : vector<2x32xf32>
    %119 = vector.extract_strided_slice %118 {offsets = [0, 0], sizes = [1, 32], strides = [1, 1]} : vector<2x32xf32> to vector<1x32xf32>
    %120 = vector.extract_strided_slice %118 {offsets = [1, 0], sizes = [1, 32], strides = [1, 1]} : vector<2x32xf32> to vector<1x32xf32>
    %121 = arith.mulf %119, %119 : vector<1x32xf32>
    %122 = arith.subf %120, %121 : vector<1x32xf32>
    %c0_77 = arith.constant 0 : index
    %c0_78 = arith.constant 0 : index
    %123 = vector.load %arg15[%c0_77, %c0_78] : memref<1x32xf32, #tpu.memory_space<vmem>>, vector<1x32xf32>
    %cst_79 = arith.constant 9.99999974E-6 : f32
    %124 = vector.broadcast %cst_79 : f32 to vector<1x32xf32>
    %125 = arith.addf %122, %124 : vector<1x32xf32>
    %126 = math.rsqrt %125 : vector<1x32xf32>
    %127 = arith.mulf %123, %126 : vector<1x32xf32>
    %c0_80 = arith.constant 0 : index
    %c0_81 = arith.constant 0 : index
    %128 = vector.load %arg16[%c0_80, %c0_81] : memref<1x32xf32, #tpu.memory_space<vmem>>, vector<1x32xf32>
    %129 = arith.mulf %119, %127 : vector<1x32xf32>
    %130 = arith.subf %128, %129 : vector<1x32xf32>
    %131 = tpu.concatenate %127, %130 in 0 : vector<1x32xf32>, vector<1x32xf32> -> vector<2x32xf32>
    %c0_82 = arith.constant 0 : index
    %c0_83 = arith.constant 0 : index
    %132 = vector.load %arg12[%c0_82, %c0_83] : memref<32x352xf32, #tpu.memory_space<vmem>>, vector<32x352xf32>
    %cst_84 = arith.constant dense<0.000000e+00> : vector<2x352xf32>
    %133 = tpu.matmul %131, %132, %cst_84 {dimension_numbers = #tpu.dot_dimension_numbers<[1], [0], [0], [1], [0, 0, 1, 1], [], []>} : vector<2x32xf32>, vector<32x352xf32>, vector<2x352xf32> -> vector<2x352xf32>
    %134 = vector.extract_strided_slice %133 {offsets = [0, 0], sizes = [1, 352], strides = [1, 1]} : vector<2x352xf32> to vector<1x352xf32>
    %135 = vector.broadcast %134 : vector<1x352xf32> to vector<12x352xf32>
    %136 = arith.mulf %108, %135 : vector<12x352xf32>
    %137 = vector.extract_strided_slice %133 {offsets = [1, 0], sizes = [1, 352], strides = [1, 1]} : vector<2x352xf32> to vector<1x352xf32>
    %138 = vector.broadcast %137 : vector<1x352xf32> to vector<12x352xf32>
    %139 = arith.addf %136, %138 : vector<12x352xf32>
    %cst_85 = arith.constant 0.000000e+00 : f32
    %140 = vector.broadcast %cst_85 : f32 to vector<12x352xf32>
    %141 = arith.maximumf %139, %140 : vector<12x352xf32>
    %c0_86 = arith.constant 0 : index
    %c0_87 = arith.constant 0 : index
    %142 = vector.load %arg13[%c0_86, %c0_87] : memref<352x192xf32, #tpu.memory_space<vmem>>, vector<352x192xf32>
    %cst_88 = arith.constant dense<0.000000e+00> : vector<12x192xf32>
    %143 = tpu.matmul %141, %142, %cst_88 {dimension_numbers = #tpu.dot_dimension_numbers<[1], [0], [0], [1], [0, 0, 1, 1], [], []>} : vector<12x352xf32>, vector<352x192xf32>, vector<12x192xf32> -> vector<12x192xf32>
    %c0_89 = arith.constant 0 : index
    %c0_90 = arith.constant 0 : index
    %144 = vector.load %arg14[%c0_89, %c0_90] : memref<352x192xf32, #tpu.memory_space<vmem>>, vector<352x192xf32>
    %cst_91 = arith.constant dense<0.000000e+00> : vector<12x192xf32>
    %145 = tpu.matmul %141, %144, %cst_91 {dimension_numbers = #tpu.dot_dimension_numbers<[1], [0], [0], [1], [0, 0, 1, 1], [], []>} : vector<12x352xf32>, vector<352x192xf32>, vector<12x192xf32> -> vector<12x192xf32>
    %146 = arith.maximumf %143, %145 : vector<12x192xf32>
    %cst_92 = arith.constant 0.000000e+00 : f32
    %147 = vector.broadcast %cst_92 : f32 to vector<1x192xf32>
    %148 = vector.extract_strided_slice %146 {offsets = [0, 0], sizes = [5, 192], strides = [1, 1]} : vector<12x192xf32> to vector<5x192xf32>
    %149 = tpu.concatenate %147, %148, %147 in 0 : vector<1x192xf32>, vector<5x192xf32>, vector<1x192xf32> -> vector<7x192xf32>
    %150 = vector.extract_strided_slice %149 {offsets = [0, 0], sizes = [1, 192], strides = [1, 1]} : vector<7x192xf32> to vector<1x192xf32>
    %151 = vector.extract_strided_slice %149 {offsets = [1, 0], sizes = [1, 192], strides = [1, 1]} : vector<7x192xf32> to vector<1x192xf32>
    %152 = arith.maximumf %150, %151 : vector<1x192xf32>
    %153 = vector.extract_strided_slice %149 {offsets = [2, 0], sizes = [1, 192], strides = [1, 1]} : vector<7x192xf32> to vector<1x192xf32>
    %154 = vector.extract_strided_slice %149 {offsets = [3, 0], sizes = [1, 192], strides = [1, 1]} : vector<7x192xf32> to vector<1x192xf32>
    %155 = arith.maximumf %153, %154 : vector<1x192xf32>
    %156 = vector.extract_strided_slice %149 {offsets = [4, 0], sizes = [1, 192], strides = [1, 1]} : vector<7x192xf32> to vector<1x192xf32>
    %157 = vector.extract_strided_slice %149 {offsets = [5, 0], sizes = [1, 192], strides = [1, 1]} : vector<7x192xf32> to vector<1x192xf32>
    %158 = arith.maximumf %156, %157 : vector<1x192xf32>
    %159 = tpu.concatenate %152, %155, %158 in 0 : vector<1x192xf32>, vector<1x192xf32>, vector<1x192xf32> -> vector<3x192xf32>
    %c1_93 = arith.constant 1 : index
    %c0_94 = arith.constant 0 : index
    %160 = vector.load %arg29[%c1_93, %c0_94] : memref<10x192xf32, #tpu.memory_space<vmem>>, vector<3x192xf32>
    tpu.vector_store %arg29[%c1_93, %c0_94], %159 {strides = array<i32>} : memref<10x192xf32, #tpu.memory_space<vmem>>, vector<3x192xf32>,
    %161 = vector.extract_strided_slice %146 {offsets = [7, 0], sizes = [5, 192], strides = [1, 1]} : vector<12x192xf32> to vector<5x192xf32>
    %162 = tpu.concatenate %147, %161, %147 in 0 : vector<1x192xf32>, vector<5x192xf32>, vector<1x192xf32> -> vector<7x192xf32>
    %163 = vector.extract_strided_slice %162 {offsets = [0, 0], sizes = [1, 192], strides = [1, 1]} : vector<7x192xf32> to vector<1x192xf32>
    %164 = vector.extract_strided_slice %162 {offsets = [1, 0], sizes = [1, 192], strides = [1, 1]} : vector<7x192xf32> to vector<1x192xf32>
    %165 = arith.maximumf %163, %164 : vector<1x192xf32>
    %166 = vector.extract_strided_slice %162 {offsets = [2, 0], sizes = [1, 192], strides = [1, 1]} : vector<7x192xf32> to vector<1x192xf32>
    %167 = vector.extract_strided_slice %162 {offsets = [3, 0], sizes = [1, 192], strides = [1, 1]} : vector<7x192xf32> to vector<1x192xf32>
    %168 = arith.maximumf %166, %167 : vector<1x192xf32>
    %169 = vector.extract_strided_slice %162 {offsets = [4, 0], sizes = [1, 192], strides = [1, 1]} : vector<7x192xf32> to vector<1x192xf32>
    %170 = vector.extract_strided_slice %162 {offsets = [5, 0], sizes = [1, 192], strides = [1, 1]} : vector<7x192xf32> to vector<1x192xf32>
    %171 = arith.maximumf %169, %170 : vector<1x192xf32>
    %172 = tpu.concatenate %165, %168, %171 in 0 : vector<1x192xf32>, vector<1x192xf32>, vector<1x192xf32> -> vector<3x192xf32>
    %c6 = arith.constant 6 : index
    %c0_95 = arith.constant 0 : index
    %173 = vector.load %arg29[%c6, %c0_95] : memref<10x192xf32, #tpu.memory_space<vmem>>, vector<3x192xf32>
    tpu.vector_store %arg29[%c6, %c0_95], %172 {strides = array<i32>} : memref<10x192xf32, #tpu.memory_space<vmem>>, vector<3x192xf32>,
    %c0_96 = arith.constant 0 : index
    %c0_97 = arith.constant 0 : index
    %174 = vector.load %arg29[%c0_96, %c0_97] : memref<10x192xf32, #tpu.memory_space<vmem>>, vector<8x192xf32>
    %c0_98 = arith.constant 0 : index
    %c0_99 = arith.constant 0 : index
    %c0_100 = arith.constant 0 : index
    %175 = vector.load %arg18[%c0_98, %c0_99, %c0_100] : memref<3x192x384xf32, #tpu.memory_space<vmem>>, vector<1x192x384xf32>
    %176 = vector.shape_cast %175 : vector<1x192x384xf32> to vector<192x384xf32>
    %cst_101 = arith.constant dense<0.000000e+00> : vector<8x384xf32>
    %177 = tpu.matmul %174, %176, %cst_101 {dimension_numbers = #tpu.dot_dimension_numbers<[1], [0], [0], [1], [0, 0, 1, 1], [], []>} : vector<8x192xf32>, vector<192x384xf32>, vector<8x384xf32> -> vector<8x384xf32>
    %c1_102 = arith.constant 1 : index
    %c0_103 = arith.constant 0 : index
    %178 = vector.load %arg29[%c1_102, %c0_103] : memref<10x192xf32, #tpu.memory_space<vmem>>, vector<8x192xf32>
    %c1_104 = arith.constant 1 : index
    %c0_105 = arith.constant 0 : index
    %c0_106 = arith.constant 0 : index
    %179 = vector.load %arg18[%c1_104, %c0_105, %c0_106] : memref<3x192x384xf32, #tpu.memory_space<vmem>>, vector<1x192x384xf32>
    %180 = vector.shape_cast %179 : vector<1x192x384xf32> to vector<192x384xf32>
    %cst_107 = arith.constant dense<0.000000e+00> : vector<8x384xf32>
    %181 = tpu.matmul %178, %180, %cst_107 {dimension_numbers = #tpu.dot_dimension_numbers<[1], [0], [0], [1], [0, 0, 1, 1], [], []>} : vector<8x192xf32>, vector<192x384xf32>, vector<8x384xf32> -> vector<8x384xf32>
    %182 = arith.addf %177, %181 : vector<8x384xf32>
    %c2_108 = arith.constant 2 : index
    %c0_109 = arith.constant 0 : index
    %183 = vector.load %arg29[%c2_108, %c0_109] : memref<10x192xf32, #tpu.memory_space<vmem>>, vector<8x192xf32>
    %c2_110 = arith.constant 2 : index
    %c0_111 = arith.constant 0 : index
    %c0_112 = arith.constant 0 : index
    %184 = vector.load %arg18[%c2_110, %c0_111, %c0_112] : memref<3x192x384xf32, #tpu.memory_space<vmem>>, vector<1x192x384xf32>
    %185 = vector.shape_cast %184 : vector<1x192x384xf32> to vector<192x384xf32>
    %cst_113 = arith.constant dense<0.000000e+00> : vector<8x384xf32>
    %186 = tpu.matmul %183, %185, %cst_113 {dimension_numbers = #tpu.dot_dimension_numbers<[1], [0], [0], [1], [0, 0, 1, 1], [], []>} : vector<8x192xf32>, vector<192x384xf32>, vector<8x384xf32> -> vector<8x384xf32>
    %187 = arith.addf %182, %186 : vector<8x384xf32>
    %c0_114 = arith.constant 0 : index
    %c0_115 = arith.constant 0 : index
    %188 = vector.load %arg23[%c0_114, %c0_115] : memref<1x8xf32, #tpu.memory_space<vmem>>, vector<1x8xf32>
    %cst_116 = arith.constant dense<0.000000e+00> : vector<1x384xf32>
    %189 = tpu.matmul %188, %187, %cst_116 {dimension_numbers = #tpu.dot_dimension_numbers<[1], [0], [0], [1], [0, 0, 1, 1], [], []>} : vector<1x8xf32>, vector<8x384xf32>, vector<1x384xf32> -> vector<1x384xf32>
    %c0_117 = arith.constant 0 : index
    %c0_118 = arith.constant 0 : index
    %190 = vector.load %arg23[%c0_117, %c0_118] : memref<1x8xf32, #tpu.memory_space<vmem>>, vector<1x8xf32>
    %191 = arith.mulf %187, %187 : vector<8x384xf32>
    %cst_119 = arith.constant dense<0.000000e+00> : vector<1x384xf32>
    %192 = tpu.matmul %190, %191, %cst_119 {dimension_numbers = #tpu.dot_dimension_numbers<[1], [0], [0], [1], [0, 0, 1, 1], [], []>} : vector<1x8xf32>, vector<8x384xf32>, vector<1x384xf32> -> vector<1x384xf32>
    %193 = tpu.concatenate %189, %192 in 0 : vector<1x384xf32>, vector<1x384xf32> -> vector<2x384xf32>
    %c0_120 = arith.constant 0 : index
    %c0_121 = arith.constant 0 : index
    %194 = vector.load %arg19[%c0_120, %c0_121] : memref<384x64xf32, #tpu.memory_space<vmem>>, vector<384x64xf32>
    %cst_122 = arith.constant dense<0.000000e+00> : vector<2x64xf32>
    %195 = tpu.matmul %193, %194, %cst_122 {dimension_numbers = #tpu.dot_dimension_numbers<[1], [0], [0], [1], [0, 0, 1, 1], [], []>} : vector<2x384xf32>, vector<384x64xf32>, vector<2x64xf32> -> vector<2x64xf32>
    %cst_123 = arith.constant 0.027777778 : f32
    %196 = vector.broadcast %cst_123 : f32 to vector<2x64xf32>
    %197 = arith.mulf %195, %196 : vector<2x64xf32>
    %198 = vector.extract_strided_slice %197 {offsets = [0, 0], sizes = [1, 64], strides = [1, 1]} : vector<2x64xf32> to vector<1x64xf32>
    %199 = vector.extract_strided_slice %197 {offsets = [1, 0], sizes = [1, 64], strides = [1, 1]} : vector<2x64xf32> to vector<1x64xf32>
    %200 = arith.mulf %198, %198 : vector<1x64xf32>
    %201 = arith.subf %199, %200 : vector<1x64xf32>
    %c0_124 = arith.constant 0 : index
    %c0_125 = arith.constant 0 : index
    %202 = vector.load %arg21[%c0_124, %c0_125] : memref<1x64xf32, #tpu.memory_space<vmem>>, vector<1x64xf32>
    %cst_126 = arith.constant 9.99999974E-6 : f32
    %203 = vector.broadcast %cst_126 : f32 to vector<1x64xf32>
    %204 = arith.addf %201, %203 : vector<1x64xf32>
    %205 = math.rsqrt %204 : vector<1x64xf32>
    %206 = arith.mulf %202, %205 : vector<1x64xf32>
    %c0_127 = arith.constant 0 : index
    %c0_128 = arith.constant 0 : index
    %207 = vector.load %arg22[%c0_127, %c0_128] : memref<1x64xf32, #tpu.memory_space<vmem>>, vector<1x64xf32>
    %208 = arith.mulf %198, %206 : vector<1x64xf32>
    %209 = arith.subf %207, %208 : vector<1x64xf32>
    %210 = tpu.concatenate %206, %209 in 0 : vector<1x64xf32>, vector<1x64xf32> -> vector<2x64xf32>
    %c0_129 = arith.constant 0 : index
    %c0_130 = arith.constant 0 : index
    %211 = vector.load %arg20[%c0_129, %c0_130] : memref<64x384xf32, #tpu.memory_space<vmem>>, vector<64x384xf32>
    %cst_131 = arith.constant dense<0.000000e+00> : vector<2x384xf32>
    %212 = tpu.matmul %210, %211, %cst_131 {dimension_numbers = #tpu.dot_dimension_numbers<[1], [0], [0], [1], [0, 0, 1, 1], [], []>} : vector<2x64xf32>, vector<64x384xf32>, vector<2x384xf32> -> vector<2x384xf32>
    %213 = vector.extract_strided_slice %212 {offsets = [0, 0], sizes = [1, 384], strides = [1, 1]} : vector<2x384xf32> to vector<1x384xf32>
    %214 = vector.broadcast %213 : vector<1x384xf32> to vector<8x384xf32>
    %215 = arith.mulf %187, %214 : vector<8x384xf32>
    %216 = vector.extract_strided_slice %212 {offsets = [1, 0], sizes = [1, 384], strides = [1, 1]} : vector<2x384xf32> to vector<1x384xf32>
    %217 = vector.broadcast %216 : vector<1x384xf32> to vector<8x384xf32>
    %218 = arith.addf %215, %217 : vector<8x384xf32>
    %cst_132 = arith.constant 0.000000e+00 : f32
    %219 = vector.broadcast %cst_132 : f32 to vector<8x384xf32>
    %220 = arith.maximumf %218, %219 : vector<8x384xf32>
    %cst_133 = arith.constant 0.000000e+00 : f32
    %221 = vector.broadcast %cst_133 : f32 to vector<2x64xf32>
    %222 = vector.extract_strided_slice %220 {offsets = [0, 0], sizes = [1, 384], strides = [1, 1]} : vector<8x384xf32> to vector<1x384xf32>
    %223 = vector.extract_strided_slice %220 {offsets = [5, 0], sizes = [1, 384], strides = [1, 1]} : vector<8x384xf32> to vector<1x384xf32>
    %224 = tpu.concatenate %222, %223 in 0 : vector<1x384xf32>, vector<1x384xf32> -> vector<2x384xf32>
    %c0_134 = arith.constant 0 : index
    %c0_135 = arith.constant 0 : index
    %c0_136 = arith.constant 0 : index
    %225 = vector.load %arg24[%c0_134, %c0_135, %c0_136] : memref<3x384x64xf32, #tpu.memory_space<vmem>>, vector<1x384x64xf32>
    %226 = vector.shape_cast %225 : vector<1x384x64xf32> to vector<384x64xf32>
    %cst_137 = arith.constant dense<0.000000e+00> : vector<2x64xf32>
    %227 = tpu.matmul %224, %226, %cst_137 {dimension_numbers = #tpu.dot_dimension_numbers<[1], [0], [0], [1], [0, 0, 1, 1], [], []>} : vector<2x384xf32>, vector<384x64xf32>, vector<2x64xf32> -> vector<2x64xf32>
    %228 = arith.addf %221, %227 : vector<2x64xf32>
    %229 = vector.extract_strided_slice %220 {offsets = [1, 0], sizes = [1, 384], strides = [1, 1]} : vector<8x384xf32> to vector<1x384xf32>
    %230 = vector.extract_strided_slice %220 {offsets = [6, 0], sizes = [1, 384], strides = [1, 1]} : vector<8x384xf32> to vector<1x384xf32>
    %231 = tpu.concatenate %229, %230 in 0 : vector<1x384xf32>, vector<1x384xf32> -> vector<2x384xf32>
    %c1_138 = arith.constant 1 : index
    %c0_139 = arith.constant 0 : index
    %c0_140 = arith.constant 0 : index
    %232 = vector.load %arg24[%c1_138, %c0_139, %c0_140] : memref<3x384x64xf32, #tpu.memory_space<vmem>>, vector<1x384x64xf32>
    %233 = vector.shape_cast %232 : vector<1x384x64xf32> to vector<384x64xf32>
    %cst_141 = arith.constant dense<0.000000e+00> : vector<2x64xf32>
    %234 = tpu.matmul %231, %233, %cst_141 {dimension_numbers = #tpu.dot_dimension_numbers<[1], [0], [0], [1], [0, 0, 1, 1], [], []>} : vector<2x384xf32>, vector<384x64xf32>, vector<2x64xf32> -> vector<2x64xf32>
    %235 = arith.addf %228, %234 : vector<2x64xf32>
    %236 = vector.extract_strided_slice %220 {offsets = [2, 0], sizes = [1, 384], strides = [1, 1]} : vector<8x384xf32> to vector<1x384xf32>
    %237 = vector.extract_strided_slice %220 {offsets = [7, 0], sizes = [1, 384], strides = [1, 1]} : vector<8x384xf32> to vector<1x384xf32>
    %238 = tpu.concatenate %236, %237 in 0 : vector<1x384xf32>, vector<1x384xf32> -> vector<2x384xf32>
    %c2_142 = arith.constant 2 : index
    %c0_143 = arith.constant 0 : index
    %c0_144 = arith.constant 0 : index
    %239 = vector.load %arg24[%c2_142, %c0_143, %c0_144] : memref<3x384x64xf32, #tpu.memory_space<vmem>>, vector<1x384x64xf32>
    %240 = vector.shape_cast %239 : vector<1x384x64xf32> to vector<384x64xf32>
    %cst_145 = arith.constant dense<0.000000e+00> : vector<2x64xf32>
    %241 = tpu.matmul %238, %240, %cst_145 {dimension_numbers = #tpu.dot_dimension_numbers<[1], [0], [0], [1], [0, 0, 1, 1], [], []>} : vector<2x384xf32>, vector<384x64xf32>, vector<2x64xf32> -> vector<2x64xf32>
    %242 = arith.addf %235, %241 : vector<2x64xf32>
    %c0_146 = arith.constant 0 : index
    %c0_147 = arith.constant 0 : index
    %243 = vector.load %arg25[%c0_146, %c0_147] : memref<1x64xf32, #tpu.memory_space<vmem>>, vector<1x64xf32>
    %244 = vector.broadcast %243 : vector<1x64xf32> to vector<2x64xf32>
    %245 = arith.addf %242, %244 : vector<2x64xf32>
    %cst_148 = arith.constant 0.000000e+00 : f32
    %246 = vector.broadcast %cst_148 : f32 to vector<2x64xf32>
    %247 = arith.maximumf %245, %246 : vector<2x64xf32>
    %c0_149 = arith.constant 0 : index
    %c0_150 = arith.constant 0 : index
    %248 = vector.load %arg26[%c0_149, %c0_150] : memref<64x1xf32, #tpu.memory_space<vmem>>, vector<64x1xf32>
    %cst_151 = arith.constant dense<0.000000e+00> : vector<2x1xf32>
    %249 = tpu.matmul %247, %248, %cst_151 {dimension_numbers = #tpu.dot_dimension_numbers<[1], [0], [0], [1], [0, 0, 1, 1], [], []>} : vector<2x64xf32>, vector<64x1xf32>, vector<2x1xf32> -> vector<2x1xf32>
    %c0_152 = arith.constant 0 : index
    %c0_153 = arith.constant 0 : index
    %250 = vector.load %arg27[%c0_152, %c0_153] : memref<2x1xf32, #tpu.memory_space<vmem>>, vector<2x1xf32>
    tpu.vector_store %arg27[%c0_152, %c0_153], %249 {strides = array<i32>} : memref<2x1xf32, #tpu.memory_space<vmem>>, vector<2x1xf32>,
    return
  }
  func.func @transform_0(%arg0: i32) -> (i32, i32) {
    %c0_i32 = arith.constant 0 : i32
    %c0_i32_0 = arith.constant 0 : i32
    %c0_i32_1 = arith.constant 0 : i32
    return %c0_i32, %c0_i32_0 : i32, i32
  }
  func.func @transform_1(%arg0: i32) -> (i32, i32, i32) {
    %c0_i32 = arith.constant 0 : i32
    %c0_i32_0 = arith.constant 0 : i32
    %c0_i32_1 = arith.constant 0 : i32
    %c0_i32_2 = arith.constant 0 : i32
    return %c0_i32, %c0_i32_0, %c0_i32_1 : i32, i32, i32
  }
  func.func @transform_2(%arg0: i32) -> (i32, i32) {
    %c0_i32 = arith.constant 0 : i32
    %c0_i32_0 = arith.constant 0 : i32
    %c0_i32_1 = arith.constant 0 : i32
    return %c0_i32, %c0_i32_0 : i32, i32
  }
  func.func @transform_3(%arg0: i32) -> (i32, i32) {
    %c0_i32 = arith.constant 0 : i32
    %c0_i32_0 = arith.constant 0 : i32
    %c0_i32_1 = arith.constant 0 : i32
    return %c0_i32, %c0_i32_0 : i32, i32
  }
  func.func @transform_4(%arg0: i32) -> (i32, i32) {
    %c0_i32 = arith.constant 0 : i32
    %c0_i32_0 = arith.constant 0 : i32
    %c0_i32_1 = arith.constant 0 : i32
    return %c0_i32, %c0_i32_0 : i32, i32
  }
  func.func @transform_5(%arg0: i32) -> (i32, i32) {
    %c0_i32 = arith.constant 0 : i32
    %c0_i32_0 = arith.constant 0 : i32
    %c0_i32_1 = arith.constant 0 : i32
    return %c0_i32, %c0_i32_0 : i32, i32
  }
  func.func @transform_6(%arg0: i32) -> (i32, i32) {
    %c0_i32 = arith.constant 0 : i32
    %c0_i32_0 = arith.constant 0 : i32
    %c0_i32_1 = arith.constant 0 : i32
    return %c0_i32, %c0_i32_0 : i32, i32
  }
  func.func @transform_7(%arg0: i32) -> (i32, i32) {
    %c0_i32 = arith.constant 0 : i32
    %c0_i32_0 = arith.constant 0 : i32
    %c0_i32_1 = arith.constant 0 : i32
    return %c0_i32, %c0_i32_0 : i32, i32
  }
  func.func @transform_8(%arg0: i32) -> (i32, i32) {
    %c0_i32 = arith.constant 0 : i32
    %c0_i32_0 = arith.constant 0 : i32
    %c0_i32_1 = arith.constant 0 : i32
    return %c0_i32, %c0_i32_0 : i32, i32
  }
  func.func @transform_9(%arg0: i32) -> (i32, i32, i32) {
    %c0_i32 = arith.constant 0 : i32
    %c0_i32_0 = arith.constant 0 : i32
    %c0_i32_1 = arith.constant 0 : i32
    %c0_i32_2 = arith.constant 0 : i32
    return %c0_i32, %c0_i32_0, %c0_i32_1 : i32, i32, i32
  }
  func.func @transform_10(%arg0: i32) -> (i32, i32) {
    %c0_i32 = arith.constant 0 : i32
    %c0_i32_0 = arith.constant 0 : i32
    %c0_i32_1 = arith.constant 0 : i32
    return %c0_i32, %c0_i32_0 : i32, i32
  }
  func.func @transform_11(%arg0: i32) -> (i32, i32) {
    %c0_i32 = arith.constant 0 : i32
    %c0_i32_0 = arith.constant 0 : i32
    %c0_i32_1 = arith.constant 0 : i32
    return %c0_i32, %c0_i32_0 : i32, i32
  }
  func.func @transform_12(%arg0: i32) -> (i32, i32) {
    %c0_i32 = arith.constant 0 : i32
    %c0_i32_0 = arith.constant 0 : i32
    %c0_i32_1 = arith.constant 0 : i32
    return %c0_i32, %c0_i32_0 : i32, i32
  }
  func.func @transform_13(%arg0: i32) -> (i32, i32) {
    %c0_i32 = arith.constant 0 : i32
    %c0_i32_0 = arith.constant 0 : i32
    %c0_i32_1 = arith.constant 0 : i32
    return %c0_i32, %c0_i32_0 : i32, i32
  }
  func.func @transform_14(%arg0: i32) -> (i32, i32) {
    %c0_i32 = arith.constant 0 : i32
    %c0_i32_0 = arith.constant 0 : i32
    %c0_i32_1 = arith.constant 0 : i32
    return %c0_i32, %c0_i32_0 : i32, i32
  }
  func.func @transform_15(%arg0: i32) -> (i32, i32) {
    %c0_i32 = arith.constant 0 : i32
    %c0_i32_0 = arith.constant 0 : i32
    %c0_i32_1 = arith.constant 0 : i32
    return %c0_i32, %c0_i32_0 : i32, i32
  }
  func.func @transform_16(%arg0: i32) -> (i32, i32) {
    %c0_i32 = arith.constant 0 : i32
    %c0_i32_0 = arith.constant 0 : i32
    %c0_i32_1 = arith.constant 0 : i32
    return %c0_i32, %c0_i32_0 : i32, i32
  }
  func.func @transform_17(%arg0: i32) -> (i32, i32, i32) {
    %c0_i32 = arith.constant 0 : i32
    %c0_i32_0 = arith.constant 0 : i32
    %c0_i32_1 = arith.constant 0 : i32
    %c0_i32_2 = arith.constant 0 : i32
    return %c0_i32, %c0_i32_0, %c0_i32_1 : i32, i32, i32
  }
  func.func @transform_18(%arg0: i32) -> (i32, i32) {
    %c0_i32 = arith.constant 0 : i32
    %c0_i32_0 = arith.constant 0 : i32
    %c0_i32_1 = arith.constant 0 : i32
    return %c0_i32, %c0_i32_0 : i32, i32
  }
  func.func @transform_19(%arg0: i32) -> (i32, i32) {
    %c0_i32 = arith.constant 0 : i32
    %c0_i32_0 = arith.constant 0 : i32
    %c0_i32_1 = arith.constant 0 : i32
    return %c0_i32, %c0_i32_0 : i32, i32
  }
  func.func @transform_20(%arg0: i32) -> (i32, i32) {
    %c0_i32 = arith.constant 0 : i32
    %c0_i32_0 = arith.constant 0 : i32
    %c0_i32_1 = arith.constant 0 : i32
    return %c0_i32, %c0_i32_0 : i32, i32
  }
  func.func @transform_21(%arg0: i32) -> (i32, i32) {
    %c0_i32 = arith.constant 0 : i32
    %c0_i32_0 = arith.constant 0 : i32
    %c0_i32_1 = arith.constant 0 : i32
    return %c0_i32, %c0_i32_0 : i32, i32
  }
  func.func @transform_22(%arg0: i32) -> (i32, i32) {
    %c0_i32 = arith.constant 0 : i32
    %c0_i32_0 = arith.constant 0 : i32
    %c0_i32_1 = arith.constant 0 : i32
    return %c0_i32, %c0_i32_0 : i32, i32
  }
  func.func @transform_23(%arg0: i32) -> (i32, i32, i32) {
    %c0_i32 = arith.constant 0 : i32
    %c0_i32_0 = arith.constant 0 : i32
    %c0_i32_1 = arith.constant 0 : i32
    %c0_i32_2 = arith.constant 0 : i32
    return %c0_i32, %c0_i32_0, %c0_i32_1 : i32, i32, i32
  }
  func.func @transform_24(%arg0: i32) -> (i32, i32) {
    %c0_i32 = arith.constant 0 : i32
    %c0_i32_0 = arith.constant 0 : i32
    %c0_i32_1 = arith.constant 0 : i32
    return %c0_i32, %c0_i32_0 : i32, i32
  }
  func.func @transform_25(%arg0: i32) -> (i32, i32) {
    %c0_i32 = arith.constant 0 : i32
    %c0_i32_0 = arith.constant 0 : i32
    %c0_i32_1 = arith.constant 0 : i32
    return %c0_i32, %c0_i32_0 : i32, i32
  }
  func.func @transform_26(%arg0: i32) -> (i32, i32) {
    %c0_i32 = arith.constant 0 : i32
    %c0_i32_0 = arith.constant 0 : i32
    %c0_i32_1 = arith.constant 0 : i32
    return %c0_i32, %c0_i32_0 : i32, i32
  }
}

</mosaic_0001>

<llo_original>
// kernel: model_forward.1
$region0: #{model_forward.1}
  #allocation0 [shape = 'u32[]', space=smem, size = 0x4, offset = 0x4, fixed_abs, tag = 'smem constant byte address 0x4 - core index']
  #allocation1 [shape = 'u32[144,128]{1,0:T(1,128)}', space=vmem, size = 0x12000, scoped, tag = 'internal scratch']
  #allocation2 [shape = 'f32[14,176]{1,0:T(8,128)}', space=vmem, size = 0x4000, scoped, tag = 'scratch operand']
  #allocation3 [shape = 'f32[10,192]{1,0:T(8,128)}', space=vmem, size = 0x4000, scoped, tag = 'scratch operand']
  %s0 = inlined_call_operand.hbm [shape: f32[20,40], index: 0, kind: input, shape index: {}]
  %s1 = inlined_call_operand.hbm [shape: f32[3,40,320], index: 1, kind: input, shape index: {}]
  %s2 = inlined_call_operand.hbm [shape: f32[320,16], index: 2, kind: input, shape index: {}]
  %s3 = inlined_call_operand.hbm [shape: f32[16,320], index: 3, kind: input, shape index: {}]
  %s4 = inlined_call_operand.hbm [shape: f32[320,176], index: 4, kind: input, shape index: {}]
  %s5 = inlined_call_operand.hbm [shape: f32[320,176], index: 5, kind: input, shape index: {}]
  %s6 = inlined_call_operand.hbm [shape: f32[1,16], index: 6, kind: input, shape index: {}]
  %s7 = inlined_call_operand.hbm [shape: f32[1,16], index: 7, kind: input, shape index: {}]
  %s8 = inlined_call_operand.hbm [shape: f32[1,18], index: 8, kind: input, shape index: {}]
  %s9 = inlined_call_operand.hbm [shape: f32[3,176,352], index: 9, kind: input, shape index: {}]
  %s10 = inlined_call_operand.hbm [shape: f32[352,32], index: 10, kind: input, shape index: {}]
  %s11 = inlined_call_operand.hbm [shape: f32[32,352], index: 11, kind: input, shape index: {}]
  %s12 = inlined_call_operand.hbm [shape: f32[352,192], index: 12, kind: input, shape index: {}]
  %s13 = inlined_call_operand.hbm [shape: f32[352,192], index: 13, kind: input, shape index: {}]
  %s14 = inlined_call_operand.hbm [shape: f32[1,32], index: 14, kind: input, shape index: {}]
  %s15 = inlined_call_operand.hbm [shape: f32[1,32], index: 15, kind: input, shape index: {}]
  %s16 = inlined_call_operand.hbm [shape: f32[1,12], index: 16, kind: input, shape index: {}]
  %s17 = inlined_call_operand.hbm [shape: f32[3,192,384], index: 17, kind: input, shape index: {}]
  %s18 = inlined_call_operand.hbm [shape: f32[384,64], index: 18, kind: input, shape index: {}]
  %s19 = inlined_call_operand.hbm [shape: f32[64,384], index: 19, kind: input, shape index: {}]
  %s20 = inlined_call_operand.hbm [shape: f32[1,64], index: 20, kind: input, shape index: {}]
  %s21 = inlined_call_operand.hbm [shape: f32[1,64], index: 21, kind: input, shape index: {}]
  %s22 = inlined_call_operand.hbm [shape: f32[1,8], index: 22, kind: input, shape index: {}]
  %s23 = inlined_call_operand.hbm [shape: f32[3,384,64], index: 23, kind: input, shape index: {}]
  %s24 = inlined_call_operand.hbm [shape: f32[1,64], index: 24, kind: input, shape index: {}]
  %s25 = inlined_call_operand.hbm [shape: f32[64,1], index: 25, kind: input, shape index: {}]
  %s26 = inlined_call_operand.hbm [shape: f32[2,1], index: 26, kind: output, shape index: {}]
  %s27 = sld [smem:[#allocation0]]
  $region218: #{model_forward.1} parent=0
    _
  %s29 = ssub.s32 1, %s27
  %s30 = scalar_select 0, %s29, %s27
  $region1: #{model_forward.1} parent=0
    #allocation4 [shape = 'u8[12288]{0}', space=vmem, size = 0x3000, scoped, tag = 'input window, operand 0, single buffered']
    #allocation5 [shape = 's32[1]{0}', space=sflag, size = 0x4, scoped, tag = 'scoped memory for model_forward.1']
    #allocation6 [shape = 's32[1]{0}', space=sflag, size = 0x4, scoped, tag = 'scoped memory for model_forward.1']
    #allocation7 [shape = 'u8[184320]{0}', space=vmem, size = 0x2d000, scoped, tag = 'input window, operand 1, single buffered']
    #allocation8 [shape = 's32[1]{0}', space=sflag, size = 0x4, scoped, tag = 'scoped memory for model_forward.1']
    #allocation9 [shape = 'u8[163840]{0}', space=vmem, size = 0x28000, scoped, tag = 'input window, operand 2, single buffered']
    #allocation10 [shape = 'u8[24576]{0}', space=vmem, size = 0x6000, scoped, tag = 'input window, operand 3, single buffered']
    #allocation11 [shape = 's32[1]{0}', space=sflag, size = 0x4, scoped, tag = 'scoped memory for model_forward.1']
    #allocation12 [shape = 'u8[327680]{0}', space=vmem, size = 0x50000, scoped, tag = 'input window, operand 4, single buffered']
    #allocation13 [shape = 'u8[327680]{0}', space=vmem, size = 0x50000, scoped, tag = 'input window, operand 5, single buffered']
    #allocation14 [shape = 's32[1]{0}', space=sflag, size = 0x4, scoped, tag = 'scoped memory for model_forward.1']
    #allocation15 [shape = 'u8[512]{0}', space=vmem, size = 0x400, scoped, tag = 'input window, operand 6, single buffered']
    #allocation16 [shape = 'u8[512]{0}', space=vmem, size = 0x400, scoped, tag = 'input window, operand 7, single buffered']
    #allocation17 [shape = 's32[1]{0}', space=sflag, size = 0x4, scoped, tag = 'scoped memory for model_forward.1']
    #allocation18 [shape = 'u8[512]{0}', space=vmem, size = 0x400, scoped, tag = 'input window, operand 8, single buffered']
    #allocation19 [shape = 'u8[811008]{0}', space=vmem, size = 0xc6000, scoped, tag = 'input window, operand 9, single buffered']
    #allocation20 [shape = 's32[1]{0}', space=sflag, size = 0x4, scoped, tag = 'scoped memory for model_forward.1']
    #allocation21 [shape = 'u8[180224]{0}', space=vmem, size = 0x2c000, scoped, tag = 'input window, operand 10, single buffered']
    #allocation22 [shape = 'u8[49152]{0}', space=vmem, size = 0xc000, scoped, tag = 'input window, operand 11, single buffered']
    #allocation23 [shape = 's32[1]{0}', space=sflag, size = 0x4, scoped, tag = 'scoped memory for model_forward.1']
    #allocation24 [shape = 'u8[360448]{0}', space=vmem, size = 0x58000, scoped, tag = 'input window, operand 12, single buffered']
    #allocation25 [shape = 'u8[360448]{0}', space=vmem, size = 0x58000, scoped, tag = 'input window, operand 13, single buffered']
    #allocation26 [shape = 's32[1]{0}', space=sflag, size = 0x4, scoped, tag = 'scoped memory for model_forward.1']
    #allocation27 [shape = 'u8[512]{0}', space=vmem, size = 0x400, scoped, tag = 'input window, operand 14, single buffered']
    #allocation28 [shape = 'u8[512]{0}', space=vmem, size = 0x400, scoped, tag = 'input window, operand 15, single buffered']
    #allocation29 [shape = 's32[1]{0}', space=sflag, size = 0x4, scoped, tag = 'scoped memory for model_forward.1']
    #allocation30 [shape = 'u8[512]{0}', space=vmem, size = 0x400, scoped, tag = 'input window, operand 16, single buffered']
    #allocation31 [shape = 'u8[884736]{0}', space=vmem, size = 0xd8000, scoped, tag = 'input window, operand 17, single buffered']
    #allocation32 [shape = 's32[1]{0}', space=sflag, size = 0x4, scoped, tag = 'scoped memory for model_forward.1']
    #allocation33 [shape = 'u8[196608]{0}', space=vmem, size = 0x30000, scoped, tag = 'input window, operand 18, single buffered']
    #allocation34 [shape = 'u8[98304]{0}', space=vmem, size = 0x18000, scoped, tag = 'input window, operand 19, single buffered']
    #allocation35 [shape = 's32[1]{0}', space=sflag, size = 0x4, scoped, tag = 'scoped memory for model_forward.1']
    #allocation36 [shape = 'u8[512]{0}', space=vmem, size = 0x400, scoped, tag = 'input window, operand 20, single buffered']
    #allocation37 [shape = 'u8[512]{0}', space=vmem, size = 0x400, scoped, tag = 'input window, operand 21, single buffered']
    #allocation38 [shape = 's32[1]{0}', space=sflag, size = 0x4, scoped, tag = 'scoped memory for model_forward.1']
    #allocation39 [shape = 'u8[512]{0}', space=vmem, size = 0x400, scoped, tag = 'input window, operand 22, single buffered']
    #allocation40 [shape = 'u8[589824]{0}', space=vmem, size = 0x90000, scoped, tag = 'input window, operand 23, single buffered']
    #allocation41 [shape = 's32[1]{0}', space=sflag, size = 0x4, scoped, tag = 'scoped memory for model_forward.1']
    #allocation42 [shape = 'u8[512]{0}', space=vmem, size = 0x400, scoped, tag = 'input window, operand 24, single buffered']
    #allocation43 [shape = 'u8[32768]{0}', space=vmem, size = 0x8000, scoped, tag = 'input window, operand 25, single buffered']
    #allocation44 [shape = 's32[1]{0}', space=sflag, size = 0x4, scoped, tag = 'scoped memory for model_forward.1']
    #allocation45 [shape = 'u8[1024]{0}', space=vmem, size = 0x400, scoped, tag = 'output window, operand 0, single buffered']
    %31 = vsyncpa [#allocation5], 0
    %32 = vsyncpa [#allocation8], 0
    %33 = vsyncpa [#allocation11], 0
    %34 = vsyncpa [#allocation14], 0
    %35 = vsyncpa [#allocation17], 0
    %36 = vsyncpa [#allocation20], 0
    %37 = vsyncpa [#allocation23], 0
    %38 = vsyncpa [#allocation26], 0
    %39 = vsyncpa [#allocation29], 0
    %40 = vsyncpa [#allocation32], 0
    %41 = vsyncpa [#allocation35], 0
    %42 = vsyncpa [#allocation38], 0
    %43 = vsyncpa [#allocation41], 0
    %44 = vsyncpa [#allocation44], 0
    %45 = vsyncpa [#allocation6], 0
    // Predicated region
    $region2: #{model_forward.1} parent=1 // pred_check
      _
    $region3: #{model_forward.1} parent=1 // pred_check_branch
      %47 = sbr.rel (0) target = $region5
    $region4: #{model_forward.1} parent=1 // pred_region
      %s49 = ssub.s32 384, 384
      %50 = vsyncadd [#allocation5], %s49
      %s51 = sshll.u32 [#allocation4], 4
      %s52 = int_to_ptr.vmem [resolvable:$true] %s51
      %57 = dma.hbm_to_vmem [thread:$0]  %s0, 384, %s52, [#allocation5], 128, 128, 8
    $region5: #{model_forward.1} parent=1 // pred_fallthru
      _
    // Predicated region
    $region6: #{model_forward.1} parent=1 // pred_check
      _
    $region7: #{model_forward.1} parent=1 // pred_check_branch
      %59 = sbr.rel (0) target = $region9
    $region8: #{model_forward.1} parent=1 // pred_region
      %s61 = ssub.s32 5760, 5760
      %62 = vsyncadd [#allocation8], %s61
      %s63 = sshll.u32 [#allocation7], 4
      %s64 = int_to_ptr.vmem [resolvable:$true] %s63
      %69 = dma.hbm_to_vmem [thread:$0]  %s1, 5760, %s64, [#allocation8], 384, 384, 24
    $region9: #{model_forward.1} parent=1 // pred_fallthru
      _
    // Predicated region
    $region10: #{model_forward.1} parent=1 // pred_check
      _
    $region11: #{model_forward.1} parent=1 // pred_check_branch
      %71 = sbr.rel (0) target = $region13
    $region12: #{model_forward.1} parent=1 // pred_region
      %s73 = ssub.s32 5120, 5120
      %74 = vsyncadd [#allocation8], %s73
      %s75 = sshll.u32 [#allocation9], 4
      %s76 = int_to_ptr.vmem [resolvable:$true] %s75
      %81 = dma.hbm_to_vmem [thread:$0]  %s2, 5120, %s76, [#allocation8], 128, 128, 8
    $region13: #{model_forward.1} parent=1 // pred_fallthru
      _
    // Predicated region
    $region14: #{model_forward.1} parent=1 // pred_check
      _
    $region15: #{model_forward.1} parent=1 // pred_check_branch
      %83 = sbr.rel (0) target = $region17
    $region16: #{model_forward.1} parent=1 // pred_region
      %s85 = ssub.s32 768, 768
      %86 = vsyncadd [#allocation11], %s85
      %s87 = sshll.u32 [#allocation10], 4
      %s88 = int_to_ptr.vmem [resolvable:$true] %s87
      %93 = dma.hbm_to_vmem [thread:$0]  %s3, 768, %s88, [#allocation11], 384, 384, 24
    $region17: #{model_forward.1} parent=1 // pred_fallthru
      _
    // Predicated region
    $region18: #{model_forward.1} parent=1 // pred_check
      _
    $region19: #{model_forward.1} parent=1 // pred_check_branch
      %95 = sbr.rel (0) target = $region21
    $region20: #{model_forward.1} parent=1 // pred_region
      %s97 = ssub.s32 10240, 10240
      %98 = vsyncadd [#allocation11], %s97
      %s99 = sshll.u32 [#allocation12], 4
      %s100 = int_to_ptr.vmem [resolvable:$true] %s99
      %105 = dma.hbm_to_vmem [thread:$0]  %s4, 10240, %s100, [#allocation11], 256, 256, 16
    $region21: #{model_forward.1} parent=1 // pred_fallthru
      _
    // Predicated region
    $region22: #{model_forward.1} parent=1 // pred_check
      _
    $region23: #{model_forward.1} parent=1 // pred_check_branch
      %107 = sbr.rel (0) target = $region25
    $region24: #{model_forward.1} parent=1 // pred_region
      %s109 = ssub.s32 10240, 10240
      %110 = vsyncadd [#allocation14], %s109
      %s111 = sshll.u32 [#allocation13], 4
      %s112 = int_to_ptr.vmem [resolvable:$true] %s111
      %117 = dma.hbm_to_vmem [thread:$0]  %s5, 10240, %s112, [#allocation14], 256, 256, 16
    $region25: #{model_forward.1} parent=1 // pred_fallthru
      _
    // Predicated region
    $region26: #{model_forward.1} parent=1 // pred_check
      _
    $region27: #{model_forward.1} parent=1 // pred_check_branch
      %119 = sbr.rel (0) target = $region29
    $region28: #{model_forward.1} parent=1 // pred_region
      %s121 = ssub.s32 16, 16
      %122 = vsyncadd [#allocation14], %s121
      %s124 = sshll.u32 [#allocation15], 4
      %s125 = int_to_ptr.vmem [resolvable:$true] %s124
      %127 = dma.hbm_to_vmem [thread:$0]  %s6, 16, %s125, [#allocation14]
    $region29: #{model_forward.1} parent=1 // pred_fallthru
      _
    // Predicated region
    $region30: #{model_forward.1} parent=1 // pred_check
      _
    $region31: #{model_forward.1} parent=1 // pred_check_branch
      %129 = sbr.rel (0) target = $region33
    $region32: #{model_forward.1} parent=1 // pred_region
      %s131 = ssub.s32 16, 16
      %132 = vsyncadd [#allocation17], %s131
      %s134 = sshll.u32 [#allocation16], 4
      %s135 = int_to_ptr.vmem [resolvable:$true] %s134
      %137 = dma.hbm_to_vmem [thread:$0]  %s7, 16, %s135, [#allocation17]
    $region33: #{model_forward.1} parent=1 // pred_fallthru
      _
    // Predicated region
    $region34: #{model_forward.1} parent=1 // pred_check
      _
    $region35: #{model_forward.1} parent=1 // pred_check_branch
      %139 = sbr.rel (0) target = $region37
    $region36: #{model_forward.1} parent=1 // pred_region
      %s141 = ssub.s32 16, 16
      %142 = vsyncadd [#allocation17], %s141
      %s144 = sshll.u32 [#allocation18], 4
      %s145 = int_to_ptr.vmem [resolvable:$true] %s144
      %147 = dma.hbm_to_vmem [thread:$0]  %s8, 16, %s145, [#allocation17]
    $region37: #{model_forward.1} parent=1 // pred_fallthru
      _
    // Predicated region
    $region38: #{model_forward.1} parent=1 // pred_check
      _
    $region39: #{model_forward.1} parent=1 // pred_check_branch
      %149 = sbr.rel (0) target = $region41
    $region40: #{model_forward.1} parent=1 // pred_region
      %s151 = ssub.s32 25344, 25344
      %152 = vsyncadd [#allocation20], %s151
      %s153 = sshll.u32 [#allocation19], 4
      %s154 = int_to_ptr.vmem [resolvable:$true] %s153
      %159 = dma.hbm_to_vmem [thread:$0]  %s9, 25344, %s154, [#allocation20], 384, 384, 24
    $region41: #{model_forward.1} parent=1 // pred_fallthru
      _
    // Predicated region
    $region42: #{model_forward.1} parent=1 // pred_check
      _
    $region43: #{model_forward.1} parent=1 // pred_check_branch
      %161 = sbr.rel (0) target = $region45
    $region44: #{model_forward.1} parent=1 // pred_region
      %s163 = ssub.s32 5632, 5632
      %164 = vsyncadd [#allocation20], %s163
      %s165 = sshll.u32 [#allocation21], 4
      %s166 = int_to_ptr.vmem [resolvable:$true] %s165
      %171 = dma.hbm_to_vmem [thread:$0]  %s10, 5632, %s166, [#allocation20], 128, 128, 8
    $region45: #{model_forward.1} parent=1 // pred_fallthru
      _
    // Predicated region
    $region46: #{model_forward.1} parent=1 // pred_check
      _
    $region47: #{model_forward.1} parent=1 // pred_check_branch
      %173 = sbr.rel (0) target = $region49
    $region48: #{model_forward.1} parent=1 // pred_region
      %s175 = ssub.s32 1536, 1536
      %176 = vsyncadd [#allocation23], %s175
      %s177 = sshll.u32 [#allocation22], 4
      %s178 = int_to_ptr.vmem [resolvable:$true] %s177
      %183 = dma.hbm_to_vmem [thread:$0]  %s11, 1536, %s178, [#allocation23], 384, 384, 24
    $region49: #{model_forward.1} parent=1 // pred_fallthru
      _
    // Predicated region
    $region50: #{model_forward.1} parent=1 // pred_check
      _
    $region51: #{model_forward.1} parent=1 // pred_check_branch
      %185 = sbr.rel (0) target = $region53
    $region52: #{model_forward.1} parent=1 // pred_region
      %s187 = ssub.s32 11264, 11264
      %188 = vsyncadd [#allocation23], %s187
      %s189 = sshll.u32 [#allocation24], 4
      %s190 = int_to_ptr.vmem [resolvable:$true] %s189
      %195 = dma.hbm_to_vmem [thread:$0]  %s12, 11264, %s190, [#allocation23], 256, 256, 16
    $region53: #{model_forward.1} parent=1 // pred_fallthru
      _
    // Predicated region
    $region54: #{model_forward.1} parent=1 // pred_check
      _
    $region55: #{model_forward.1} parent=1 // pred_check_branch
      %197 = sbr.rel (0) target = $region57
    $region56: #{model_forward.1} parent=1 // pred_region
      %s199 = ssub.s32 11264, 11264
      %200 = vsyncadd [#allocation26], %s199
      %s201 = sshll.u32 [#allocation25], 4
      %s202 = int_to_ptr.vmem [resolvable:$true] %s201
      %207 = dma.hbm_to_vmem [thread:$0]  %s13, 11264, %s202, [#allocation26], 256, 256, 16
    $region57: #{model_forward.1} parent=1 // pred_fallthru
      _
    // Predicated region
    $region58: #{model_forward.1} parent=1 // pred_check
      _
    $region59: #{model_forward.1} parent=1 // pred_check_branch
      %209 = sbr.rel (0) target = $region61
    $region60: #{model_forward.1} parent=1 // pred_region
      %s211 = ssub.s32 16, 16
      %212 = vsyncadd [#allocation26], %s211
      %s214 = sshll.u32 [#allocation27], 4
      %s215 = int_to_ptr.vmem [resolvable:$true] %s214
      %217 = dma.hbm_to_vmem [thread:$0]  %s14, 16, %s215, [#allocation26]
    $region61: #{model_forward.1} parent=1 // pred_fallthru
      _
    // Predicated region
    $region62: #{model_forward.1} parent=1 // pred_check
      _
    $region63: #{model_forward.1} parent=1 // pred_check_branch
      %219 = sbr.rel (0) target = $region65
    $region64: #{model_forward.1} parent=1 // pred_region
      %s221 = ssub.s32 16, 16
      %222 = vsyncadd [#allocation29], %s221
      %s224 = sshll.u32 [#allocation28], 4
      %s225 = int_to_ptr.vmem [resolvable:$true] %s224
      %227 = dma.hbm_to_vmem [thread:$0]  %s15, 16, %s225, [#allocation29]
    $region65: #{model_forward.1} parent=1 // pred_fallthru
      _
    // Predicated region
    $region66: #{model_forward.1} parent=1 // pred_check
      _
    $region67: #{model_forward.1} parent=1 // pred_check_branch
      %229 = sbr.rel (0) target = $region69
    $region68: #{model_forward.1} parent=1 // pred_region
      %s231 = ssub.s32 16, 16
      %232 = vsyncadd [#allocation29], %s231
      %s234 = sshll.u32 [#allocation30], 4
      %s235 = int_to_ptr.vmem [resolvable:$true] %s234
      %237 = dma.hbm_to_vmem [thread:$0]  %s16, 16, %s235, [#allocation29]
    $region69: #{model_forward.1} parent=1 // pred_fallthru
      _
    // Predicated region
    $region70: #{model_forward.1} parent=1 // pred_check
      _
    $region71: #{model_forward.1} parent=1 // pred_check_branch
      %239 = sbr.rel (0) target = $region73
    $region72: #{model_forward.1} parent=1 // pred_region
      %s241 = ssub.s32 27648, 27648
      %242 = vsyncadd [#allocation32], %s241
      %s243 = sshll.u32 [#allocation31], 4
      %s244 = int_to_ptr.vmem [resolvable:$true] %s243
      %249 = dma.hbm_to_vmem [thread:$0]  %s17, 27648, %s244, [#allocation32], 384, 384, 24
    $region73: #{model_forward.1} parent=1 // pred_fallthru
      _
    // Predicated region
    $region74: #{model_forward.1} parent=1 // pred_check
      _
    $region75: #{model_forward.1} parent=1 // pred_check_branch
      %251 = sbr.rel (0) target = $region77
    $region76: #{model_forward.1} parent=1 // pred_region
      %s253 = ssub.s32 6144, 6144
      %254 = vsyncadd [#allocation32], %s253
      %s255 = sshll.u32 [#allocation33], 4
      %s256 = int_to_ptr.vmem [resolvable:$true] %s255
      %261 = dma.hbm_to_vmem [thread:$0]  %s18, 6144, %s256, [#allocation32], 128, 128, 8
    $region77: #{model_forward.1} parent=1 // pred_fallthru
      _
    // Predicated region
    $region78: #{model_forward.1} parent=1 // pred_check
      _
    $region79: #{model_forward.1} parent=1 // pred_check_branch
      %263 = sbr.rel (0) target = $region81
    $region80: #{model_forward.1} parent=1 // pred_region
      %s265 = ssub.s32 3072, 3072
      %266 = vsyncadd [#allocation35], %s265
      %s267 = sshll.u32 [#allocation34], 4
      %s268 = int_to_ptr.vmem [resolvable:$true] %s267
      %273 = dma.hbm_to_vmem [thread:$0]  %s19, 3072, %s268, [#allocation35], 384, 384, 24
    $region81: #{model_forward.1} parent=1 // pred_fallthru
      _
    // Predicated region
    $region82: #{model_forward.1} parent=1 // pred_check
      _
    $region83: #{model_forward.1} parent=1 // pred_check_branch
      %275 = sbr.rel (0) target = $region85
    $region84: #{model_forward.1} parent=1 // pred_region
      %s277 = ssub.s32 16, 16
      %278 = vsyncadd [#allocation35], %s277
      %s280 = sshll.u32 [#allocation36], 4
      %s281 = int_to_ptr.vmem [resolvable:$true] %s280
      %283 = dma.hbm_to_vmem [thread:$0]  %s20, 16, %s281, [#allocation35]
    $region85: #{model_forward.1} parent=1 // pred_fallthru
      _
    // Predicated region
    $region86: #{model_forward.1} parent=1 // pred_check
      _
    $region87: #{model_forward.1} parent=1 // pred_check_branch
      %285 = sbr.rel (0) target = $region89
    $region88: #{model_forward.1} parent=1 // pred_region
      %s287 = ssub.s32 16, 16
      %288 = vsyncadd [#allocation38], %s287
      %s290 = sshll.u32 [#allocation37], 4
      %s291 = int_to_ptr.vmem [resolvable:$true] %s290
      %293 = dma.hbm_to_vmem [thread:$0]  %s21, 16, %s291, [#allocation38]
    $region89: #{model_forward.1} parent=1 // pred_fallthru
      _
    // Predicated region
    $region90: #{model_forward.1} parent=1 // pred_check
      _
    $region91: #{model_forward.1} parent=1 // pred_check_branch
      %295 = sbr.rel (0) target = $region93
    $region92: #{model_forward.1} parent=1 // pred_region
      %s297 = ssub.s32 16, 16
      %298 = vsyncadd [#allocation38], %s297
      %s300 = sshll.u32 [#allocation39], 4
      %s301 = int_to_ptr.vmem [resolvable:$true] %s300
      %303 = dma.hbm_to_vmem [thread:$0]  %s22, 16, %s301, [#allocation38]
    $region93: #{model_forward.1} parent=1 // pred_fallthru
      _
    // Predicated region
    $region94: #{model_forward.1} parent=1 // pred_check
      _
    $region95: #{model_forward.1} parent=1 // pred_check_branch
      %305 = sbr.rel (0) target = $region97
    $region96: #{model_forward.1} parent=1 // pred_region
      %s307 = ssub.s32 18432, 18432
      %308 = vsyncadd [#allocation41], %s307
      %s309 = sshll.u32 [#allocation40], 4
      %s310 = int_to_ptr.vmem [resolvable:$true] %s309
      %315 = dma.hbm_to_vmem [thread:$0]  %s23, 18432, %s310, [#allocation41], 128, 128, 8
    $region97: #{model_forward.1} parent=1 // pred_fallthru
      _
    // Predicated region
    $region98: #{model_forward.1} parent=1 // pred_check
      _
    $region99: #{model_forward.1} parent=1 // pred_check_branch
      %317 = sbr.rel (0) target = $region101
    $region100: #{model_forward.1} parent=1 // pred_region
      %s319 = ssub.s32 16, 16
      %320 = vsyncadd [#allocation41], %s319
      %s322 = sshll.u32 [#allocation42], 4
      %s323 = int_to_ptr.vmem [resolvable:$true] %s322
      %325 = dma.hbm_to_vmem [thread:$0]  %s24, 16, %s323, [#allocation41]
    $region101: #{model_forward.1} parent=1 // pred_fallthru
      _
    // Predicated region
    $region102: #{model_forward.1} parent=1 // pred_check
      _
    $region103: #{model_forward.1} parent=1 // pred_check_branch
      %327 = sbr.rel (0) target = $region105
    $region104: #{model_forward.1} parent=1 // pred_region
      %s329 = ssub.s32 1024, 1024
      %330 = vsyncadd [#allocation44], %s329
      %s331 = sshll.u32 [#allocation43], 4
      %s332 = int_to_ptr.vmem [resolvable:$true] %s331
      %337 = dma.hbm_to_vmem [thread:$0]  %s25, 1024, %s332, [#allocation44], 128, 128, 8
    $region105: #{model_forward.1} parent=1 // pred_fallthru
      _
    // Predicated region
    $region106: #{model_forward.1} parent=1 // pred_check
      _
    $region107: #{model_forward.1} parent=1 // pred_check_branch
      %339 = sbr.rel (0) target = $region109
    $region108: #{model_forward.1} parent=1 // pred_region
      %340 = dma.done [#allocation5], 384
    $region109: #{model_forward.1} parent=1 // pred_fallthru
      _
    // Predicated region
    $region110: #{model_forward.1} parent=1 // pred_check
      _
    $region111: #{model_forward.1} parent=1 // pred_check_branch
      %342 = sbr.rel (0) target = $region113
    $region112: #{model_forward.1} parent=1 // pred_region
      %343 = dma.done [#allocation8], 5760
    $region113: #{model_forward.1} parent=1 // pred_fallthru
      _
    // Predicated region
    $region114: #{model_forward.1} parent=1 // pred_check
      _
    $region115: #{model_forward.1} parent=1 // pred_check_branch
      %345 = sbr.rel (0) target = $region117
    $region116: #{model_forward.1} parent=1 // pred_region
      %346 = dma.done [#allocation8], 5120
    $region117: #{model_forward.1} parent=1 // pred_fallthru
      _
    // Predicated region
    $region118: #{model_forward.1} parent=1 // pred_check
      _
    $region119: #{model_forward.1} parent=1 // pred_check_branch
      %348 = sbr.rel (0) target = $region121
    $region120: #{model_forward.1} parent=1 // pred_region
      %349 = dma.done [#allocation11], 768
    $region121: #{model_forward.1} parent=1 // pred_fallthru
      _
    // Predicated region
    $region122: #{model_forward.1} parent=1 // pred_check
      _
    $region123: #{model_forward.1} parent=1 // pred_check_branch
      %351 = sbr.rel (0) target = $region125
    $region124: #{model_forward.1} parent=1 // pred_region
      %352 = dma.done [#allocation11], 10240
    $region125: #{model_forward.1} parent=1 // pred_fallthru
      _
    // Predicated region
    $region126: #{model_forward.1} parent=1 // pred_check
      _
    $region127: #{model_forward.1} parent=1 // pred_check_branch
      %354 = sbr.rel (0) target = $region129
    $region128: #{model_forward.1} parent=1 // pred_region
      %355 = dma.done [#allocation14], 10240
    $region129: #{model_forward.1} parent=1 // pred_fallthru
      _
    // Predicated region
    $region130: #{model_forward.1} parent=1 // pred_check
      _
    $region131: #{model_forward.1} parent=1 // pred_check_branch
      %357 = sbr.rel (0) target = $region133
    $region132: #{model_forward.1} parent=1 // pred_region
      %358 = dma.done [#allocation14], 16
    $region133: #{model_forward.1} parent=1 // pred_fallthru
      _
    // Predicated region
    $region134: #{model_forward.1} parent=1 // pred_check
      _
    $region135: #{model_forward.1} parent=1 // pred_check_branch
      %360 = sbr.rel (0) target = $region137
    $region136: #{model_forward.1} parent=1 // pred_region
      %361 = dma.done [#allocation17], 16
    $region137: #{model_forward.1} parent=1 // pred_fallthru
      _
    // Predicated region
    $region138: #{model_forward.1} parent=1 // pred_check
      _
    $region139: #{model_forward.1} parent=1 // pred_check_branch
      %363 = sbr.rel (0) target = $region141
    $region140: #{model_forward.1} parent=1 // pred_region
      %364 = dma.done [#allocation17], 16
    $region141: #{model_forward.1} parent=1 // pred_fallthru
      _
    // Predicated region
    $region142: #{model_forward.1} parent=1 // pred_check
      _
    $region143: #{model_forward.1} parent=1 // pred_check_branch
      %366 = sbr.rel (0) target = $region145
    $region144: #{model_forward.1} parent=1 // pred_region
      %367 = dma.done [#allocation20], 25344
    $region145: #{model_forward.1} parent=1 // pred_fallthru
      _
    // Predicated region
    $region146: #{model_forward.1} parent=1 // pred_check
      _
    $region147: #{model_forward.1} parent=1 // pred_check_branch
      %369 = sbr.rel (0) target = $region149
    $region148: #{model_forward.1} parent=1 // pred_region
      %370 = dma.done [#allocation20], 5632
    $region149: #{model_forward.1} parent=1 // pred_fallthru
      _
    // Predicated region
    $region150: #{model_forward.1} parent=1 // pred_check
      _
    $region151: #{model_forward.1} parent=1 // pred_check_branch
      %372 = sbr.rel (0) target = $region153
    $region152: #{model_forward.1} parent=1 // pred_region
      %373 = dma.done [#allocation23], 1536
    $region153: #{model_forward.1} parent=1 // pred_fallthru
      _
    // Predicated region
    $region154: #{model_forward.1} parent=1 // pred_check
      _
    $region155: #{model_forward.1} parent=1 // pred_check_branch
      %375 = sbr.rel (0) target = $region157
    $region156: #{model_forward.1} parent=1 // pred_region
      %376 = dma.done [#allocation23], 11264
    $region157: #{model_forward.1} parent=1 // pred_fallthru
      _
    // Predicated region
    $region158: #{model_forward.1} parent=1 // pred_check
      _
    $region159: #{model_forward.1} parent=1 // pred_check_branch
      %378 = sbr.rel (0) target = $region161
    $region160: #{model_forward.1} parent=1 // pred_region
      %379 = dma.done [#allocation26], 11264
    $region161: #{model_forward.1} parent=1 // pred_fallthru
      _
    // Predicated region
    $region162: #{model_forward.1} parent=1 // pred_check
      _
    $region163: #{model_forward.1} parent=1 // pred_check_branch
      %381 = sbr.rel (0) target = $region165
    $region164: #{model_forward.1} parent=1 // pred_region
      %382 = dma.done [#allocation26], 16
    $region165: #{model_forward.1} parent=1 // pred_fallthru
      _
    // Predicated region
    $region166: #{model_forward.1} parent=1 // pred_check
      _
    $region167: #{model_forward.1} parent=1 // pred_check_branch
      %384 = sbr.rel (0) target = $region169
    $region168: #{model_forward.1} parent=1 // pred_region
      %385 = dma.done [#allocation29], 16
    $region169: #{model_forward.1} parent=1 // pred_fallthru
      _
    // Predicated region
    $region170: #{model_forward.1} parent=1 // pred_check
      _
    $region171: #{model_forward.1} parent=1 // pred_check_branch
      %387 = sbr.rel (0) target = $region173
    $region172: #{model_forward.1} parent=1 // pred_region
      %388 = dma.done [#allocation29], 16
    $region173: #{model_forward.1} parent=1 // pred_fallthru
      _
    // Predicated region
    $region174: #{model_forward.1} parent=1 // pred_check
      _
    $region175: #{model_forward.1} parent=1 // pred_check_branch
      %390 = sbr.rel (0) target = $region177
    $region176: #{model_forward.1} parent=1 // pred_region
      %391 = dma.done [#allocation32], 27648
    $region177: #{model_forward.1} parent=1 // pred_fallthru
      _
    // Predicated region
    $region178: #{model_forward.1} parent=1 // pred_check
      _
    $region179: #{model_forward.1} parent=1 // pred_check_branch
      %393 = sbr.rel (0) target = $region181
    $region180: #{model_forward.1} parent=1 // pred_region
      %394 = dma.done [#allocation32], 6144
    $region181: #{model_forward.1} parent=1 // pred_fallthru
      _
    // Predicated region
    $region182: #{model_forward.1} parent=1 // pred_check
      _
    $region183: #{model_forward.1} parent=1 // pred_check_branch
      %396 = sbr.rel (0) target = $region185
    $region184: #{model_forward.1} parent=1 // pred_region
      %397 = dma.done [#allocation35], 3072
    $region185: #{model_forward.1} parent=1 // pred_fallthru
      _
    // Predicated region
    $region186: #{model_forward.1} parent=1 // pred_check
      _
    $region187: #{model_forward.1} parent=1 // pred_check_branch
      %399 = sbr.rel (0) target = $region189
    $region188: #{model_forward.1} parent=1 // pred_region
      %400 = dma.done [#allocation35], 16
    $region189: #{model_forward.1} parent=1 // pred_fallthru
      _
    // Predicated region
    $region190: #{model_forward.1} parent=1 // pred_check
      _
    $region191: #{model_forward.1} parent=1 // pred_check_branch
      %402 = sbr.rel (0) target = $region193
    $region192: #{model_forward.1} parent=1 // pred_region
      %403 = dma.done [#allocation38], 16
    $region193: #{model_forward.1} parent=1 // pred_fallthru
      _
    // Predicated region
    $region194: #{model_forward.1} parent=1 // pred_check
      _
    $region195: #{model_forward.1} parent=1 // pred_check_branch
      %405 = sbr.rel (0) target = $region197
    $region196: #{model_forward.1} parent=1 // pred_region
      %406 = dma.done [#allocation38], 16
    $region197: #{model_forward.1} parent=1 // pred_fallthru
      _
    // Predicated region
    $region198: #{model_forward.1} parent=1 // pred_check
      _
    $region199: #{model_forward.1} parent=1 // pred_check_branch
      %408 = sbr.rel (0) target = $region201
    $region200: #{model_forward.1} parent=1 // pred_region
      %409 = dma.done [#allocation41], 18432
    $region201: #{model_forward.1} parent=1 // pred_fallthru
      _
    // Predicated region
    $region202: #{model_forward.1} parent=1 // pred_check
      _
    $region203: #{model_forward.1} parent=1 // pred_check_branch
      %411 = sbr.rel (0) target = $region205
    $region204: #{model_forward.1} parent=1 // pred_region
      %412 = dma.done [#allocation41], 16
    $region205: #{model_forward.1} parent=1 // pred_fallthru
      _
    // Predicated region
    $region206: #{model_forward.1} parent=1 // pred_check
      _
    $region207: #{model_forward.1} parent=1 // pred_check_branch
      %414 = sbr.rel (0) target = $region209
    $region208: #{model_forward.1} parent=1 // pred_region
      %415 = dma.done [#allocation44], 1024
    $region209: #{model_forward.1} parent=1 // pred_fallthru
      _
    %416 = vst [vmem:[#allocation2] sm:$0xff] 0.0
    %vm417 = vcmask 392192
    %418 = vst.msk [vmem:[#allocation2 + $0x8] sm:$0xff] %vm417, 0.0
    %419 = vst [vmem:[#allocation2 + $0x10] sm:$0x3f] 0.0
    %vm420 = vcmask 390144
    %421 = vst.msk [vmem:[#allocation2 + $0x18] sm:$0x3f] %vm420, 0.0
    %422 = vst [vmem:[#allocation3] sm:$0xff] 0.0
    %vm423 = vcmask 523264
    %424 = vst.msk [vmem:[#allocation3 + $0x8] sm:$0xff] %vm423, 0.0
    %425 = vst [vmem:[#allocation3 + $0x10] sm:$0x3] 0.0
    %vm426 = vcmask 517120
    %427 = vst.msk [vmem:[#allocation3 + $0x18] sm:$0x3] %vm426, 0.0
    %v428 = vld [vmem:[#allocation4] sm:$0xff]
    %v429 = vld [vmem:[#allocation4 + $0x8] sm:$0xff]
    %v430 = vld [vmem:[#allocation4 + $0x10] sm:$0x3]
    %v431 = vld [vmem:[#allocation7] sm:$0xff]
    %v432 = vld [vmem:[#allocation7 + $0x8] sm:$0xff]
    %v433 = vld [vmem:[#allocation7 + $0x10] sm:$0xff]
    %v434 = vld [vmem:[#allocation7 + $0x18] sm:$0xff]
    %v435 = vld [vmem:[#allocation7 + $0x20] sm:$0xff]
    %v436 = vld [vmem:[#allocation7 + $0x28] sm:$0xff]
    %v437 = vld [vmem:[#allocation7 + $0x30] sm:$0xff]
    %v438 = vld [vmem:[#allocation7 + $0x38] sm:$0xff]
    %v439 = vld [vmem:[#allocation7 + $0x40] sm:$0xff]
    %v440 = vld [vmem:[#allocation7 + $0x48] sm:$0xff]
    %v441 = vld [vmem:[#allocation7 + $0x50] sm:$0xff]
    %v442 = vld [vmem:[#allocation7 + $0x58] sm:$0xff]
    %v443 = vld [vmem:[#allocation7 + $0x60] sm:$0xff]
    %v444 = vld [vmem:[#allocation7 + $0x68] sm:$0xff]
    %v445 = vld [vmem:[#allocation7 + $0x70] sm:$0xff]
    %v446 = vld [vmem:[#allocation4 + $0x1] sm:$0xff]
    %v447 = vld [vmem:[#allocation4 + $0x9] sm:$0xff]
    %v448 = vld [vmem:[#allocation4 + $0x11] sm:$0x3]
    %s449 = scalar_lea.vmem [#allocation7], 120
    %v450 = vld [vmem:[%s449] sm:$0xff]
    %v451 = vld [vmem:[%s449 + $0x8] sm:$0xff]
    %v452 = vld [vmem:[%s449 + $0x10] sm:$0xff]
    %v453 = vld [vmem:[%s449 + $0x18] sm:$0xff]
    %v454 = vld [vmem:[%s449 + $0x20] sm:$0xff]
    %v455 = vld [vmem:[%s449 + $0x28] sm:$0xff]
    %v456 = vld [vmem:[%s449 + $0x30] sm:$0xff]
    %v457 = vld [vmem:[%s449 + $0x38] sm:$0xff]
    %v458 = vld [vmem:[%s449 + $0x40] sm:$0xff]
    %v459 = vld [vmem:[%s449 + $0x48] sm:$0xff]
    %v460 = vld [vmem:[%s449 + $0x50] sm:$0xff]
    %v461 = vld [vmem:[%s449 + $0x58] sm:$0xff]
    %v462 = vld [vmem:[%s449 + $0x60] sm:$0xff]
    %v463 = vld [vmem:[%s449 + $0x68] sm:$0xff]
    %v464 = vld [vmem:[%s449 + $0x70] sm:$0xff]
    %vm465 = vcmask 326656
    %v467 = vsel %vm465, %v446, 0
    %v470 = vsel %vm465, %v447, 0
    %v473 = vsel %vm465, %v448, 0
    %475 = vmatprep.subr.mxu0 %v451
    %476 = vmatpush1.msra.mxu0 %v450
    %477 = vmatprep.subr.mxu0 %v454
    %478 = vmatpush1.msra.mxu0 %v453
    %479 = vmatprep.subr.mxu0 %v457
    %480 = vmatpush1.msra.mxu0 %v456
    %481 = vmatprep.subr.mxu0 %v460
    %482 = vmatpush1.msra.mxu0 %v459
    %483 = vmatprep.subr.mxu0 %v463
    %484 = vmatpush1.msra.mxu0 %v462
    %485 = vmatprep.subr.mxu0 0.0
    %486 = vmatpush1.msra.mxu0 0.0
    %487 = vmatprep.subr.mxu0 0.0
    %488 = vmatpush1.msra.mxu0 0.0
    %489 = vmatprep.subr.mxu0 0.0
    %490 = vmatpush1.msra.mxu0 0.0
    %491 = vmatprep.subr.mxu0 0.0
    %492 = vmatpush1.msra.mxu0 0.0
    %493 = vmatprep.subr.mxu0 0.0
    %494 = vmatpush1.msra.mxu0 0.0
    %495 = vmatprep.subr.mxu0 0.0
    %496 = vmatpush1.msra.mxu0 0.0
    %497 = vmatprep.subr.mxu0 0.0
    %498 = vmatpush1.msra.mxu0 0.0
    %499 = vmatprep.subr.mxu0 0.0
    %500 = vmatpush1.msra.mxu0 0.0
    %501 = vmatprep.subr.mxu0 0.0
    %502 = vmatpush1.msra.mxu0 0.0
    %503 = vmatprep.subr.mxu0 0.0
    %504 = vmatpush1.msra.mxu0 0.0
    %505 = vmatprep.subr.mxu0 0.0
    %506 = vmatpush1.msra.mxu0 0.0
    %507 = vmatprep.subr.mxu0 0.0
    %508 = vmatpush1.msra.mxu0 0.0
    %509 = vmatprep.subr.mxu0 0.0
    %510 = vmatpush1.msra.mxu0 0.0
    %511 = vmatprep.subr.mxu0 0.0
    %512 = vmatpush1.msra.mxu0 0.0
    %513 = vmatprep.subr.mxu0 0.0
    %514 = vmatpush1.msra.mxu0 0.0
    %515 = vmatprep.subr.mxu0 0.0
    %516 = vmatpush1.msra.mxu0 0.0
    %517 = vmatprep.subr.mxu0 0.0
    %518 = vmatpush1.msra.mxu0 0.0
    %519 = vmatprep.subr.mxu0 0.0
    %520 = vmatpush1.msra.mxu0 0.0
    %521 = vmatprep.subr.mxu0 0.0
    %522 = vmatpush1.msra.mxu0 0.0
    %523 = vmatprep.subr.mxu0 0.0
    %524 = vmatpush1.msra.mxu0 0.0
    %525 = vmatprep.subr.mxu0 0.0
    %526 = vmatpush1.msra.mxu0 0.0
    %527 = vmatprep.subr.mxu0 0.0
    %528 = vmatpush1.msra.mxu0 0.0
    %529 = vmatprep.subr.mxu0 0.0
    %530 = vmatpush1.msra.mxu0 0.0
    %531 = vmatprep.subr.mxu0 0.0
    %532 = vmatpush1.msra.mxu0 0.0
    %533 = vmatprep.subr.mxu0 0.0
    %534 = vmatpush1.msra.mxu0 0.0
    %535 = vmatprep.subr.mxu0 0.0
    %536 = vmatpush1.msra.mxu0 0.0
    %537 = vmatprep.subr.mxu0 0.0
    %538 = vmatpush1.msra.mxu0 0.0
    %539 = vmatprep.mubr.f32.mxu0 0.0
    %540 = vmatmul.mubr.f32.gmra.mrb[0].mxu0 %v467
    %v541 = vpop.f32.mrb[0].mxu0
    %v542 = vadd.f32 0.0, %v541
    %v543 = vpop.f32.mrb[0].mxu0
    %v544 = vadd.f32 0.0, %v543
    %545 = vmatprep.mubr.f32.mxu0 0.0
    %546 = vmatmul.mubr.f32.gmra.mrb[0].mxu0 %v470
    %v547 = vpop.f32.mrb[0].mxu0
    %v548 = vadd.f32 0.0, %v547
    %v549 = vpop.f32.mrb[0].mxu0
    %v550 = vadd.f32 0.0, %v549
    %551 = vmatprep.mubr.f32.mxu0 0.0
    %552 = vmatmul.mubr.f32.gmra.mrb[0].mxu0 %v473
    %v553 = vpop.f32.mrb[0].mxu0
    %v554 = vadd.f32 0.0, %v553
    %v555 = vpop.f32.mrb[0].mxu0
    %v556 = vadd.f32 0.0, %v555
    %557 = vdwg.mxu0
    %558 = vmatprep.subr.mxu0 0.0
    %559 = vmatpush1.msra.mxu0 %v452
    %560 = vmatprep.subr.mxu0 0.0
    %561 = vmatpush1.msra.mxu0 %v455
    %562 = vmatprep.subr.mxu0 0.0
    %563 = vmatpush1.msra.mxu0 %v458
    %564 = vmatprep.subr.mxu0 0.0
    %565 = vmatpush1.msra.mxu0 %v461
    %566 = vmatprep.subr.mxu0 0.0
    %567 = vmatpush1.msra.mxu0 %v464
    %568 = vmatprep.subr.mxu0 0.0
    %569 = vmatpush1.msra.mxu0 0.0
    %570 = vmatprep.subr.mxu0 0.0
    %571 = vmatpush1.msra.mxu0 0.0
    %572 = vmatprep.subr.mxu0 0.0
    %573 = vmatpush1.msra.mxu0 0.0
    %574 = vmatprep.subr.mxu0 0.0
    %575 = vmatpush1.msra.mxu0 0.0
    %576 = vmatprep.subr.mxu0 0.0
    %577 = vmatpush1.msra.mxu0 0.0
    %578 = vmatprep.subr.mxu0 0.0
    %579 = vmatpush1.msra.mxu0 0.0
    %580 = vmatprep.subr.mxu0 0.0
    %581 = vmatpush1.msra.mxu0 0.0
    %582 = vmatprep.subr.mxu0 0.0
    %583 = vmatpush1.msra.mxu0 0.0
    %584 = vmatprep.subr.mxu0 0.0
    %585 = vmatpush1.msra.mxu0 0.0
    %586 = vmatprep.subr.mxu0 0.0
    %587 = vmatpush1.msra.mxu0 0.0
    %588 = vmatprep.subr.mxu0 0.0
    %589 = vmatpush1.msra.mxu0 0.0
    %590 = vmatprep.subr.mxu0 0.0
    %591 = vmatpush1.msra.mxu0 0.0
    %592 = vmatprep.subr.mxu0 0.0
    %593 = vmatpush1.msra.mxu0 0.0
    %594 = vmatprep.subr.mxu0 0.0
    %595 = vmatpush1.msra.mxu0 0.0
    %596 = vmatprep.subr.mxu0 0.0
    %597 = vmatpush1.msra.mxu0 0.0
    %598 = vmatprep.subr.mxu0 0.0
    %599 = vmatpush1.msra.mxu0 0.0
    %600 = vmatprep.subr.mxu0 0.0
    %601 = vmatpush1.msra.mxu0 0.0
    %602 = vmatprep.subr.mxu0 0.0
    %603 = vmatpush1.msra.mxu0 0.0
    %604 = vmatprep.subr.mxu0 0.0
    %605 = vmatpush1.msra.mxu0 0.0
    %606 = vmatprep.subr.mxu0 0.0
    %607 = vmatpush1.msra.mxu0 0.0
    %608 = vmatprep.subr.mxu0 0.0
    %609 = vmatpush1.msra.mxu0 0.0
    %610 = vmatprep.subr.mxu0 0.0
    %611 = vmatpush1.msra.mxu0 0.0
    %612 = vmatprep.subr.mxu0 0.0
    %613 = vmatpush1.msra.mxu0 0.0
    %614 = vmatprep.subr.mxu0 0.0
    %615 = vmatpush1.msra.mxu0 0.0
    %616 = vmatprep.subr.mxu0 0.0
    %617 = vmatpush1.msra.mxu0 0.0
    %618 = vmatprep.subr.mxu0 0.0
    %619 = vmatpush1.msra.mxu0 0.0
    %620 = vmatprep.subr.mxu0 0.0
    %621 = vmatpush1.msra.mxu0 0.0
    %622 = vmatprep.mubr.f32.mxu0 0.0
    %623 = vmatmul.mubr.f32.gmra.mrb[0].mxu0 %v467
    %v624 = vpop.f32.mrb[0].mxu0
    %v625 = vadd.f32 0.0, %v624
    %v626 = vpop.f32.mrb[0].mxu0
    %627 = vmatprep.mubr.f32.mxu0 0.0
    %628 = vmatmul.mubr.f32.gmra.mrb[0].mxu0 %v470
    %v629 = vpop.f32.mrb[0].mxu0
    %v630 = vadd.f32 0.0, %v629
    %v631 = vpop.f32.mrb[0].mxu0
    %632 = vmatprep.mubr.f32.mxu0 0.0
    %633 = vmatmul.mubr.f32.gmra.mrb[0].mxu0 %v473
    %v634 = vpop.f32.mrb[0].mxu0
    %v635 = vadd.f32 0.0, %v634
    %v636 = vpop.f32.mrb[0].mxu0
    %637 = vdwg.mxu0
    %v639 = vsel %vm465, %v428, 0
    %v642 = vsel %vm465, %v429, 0
    %v645 = vsel %vm465, %v430, 0
    %647 = vmatprep.subr.mxu0 %v432
    %648 = vmatpush1.msra.mxu0 %v431
    %649 = vmatprep.subr.mxu0 %v435
    %650 = vmatpush1.msra.mxu0 %v434
    %651 = vmatprep.subr.mxu0 %v438
    %652 = vmatpush1.msra.mxu0 %v437
    %653 = vmatprep.subr.mxu0 %v441
    %654 = vmatpush1.msra.mxu0 %v440
    %655 = vmatprep.subr.mxu0 %v444
    %656 = vmatpush1.msra.mxu0 %v443
    %657 = vmatprep.subr.mxu0 0.0
    %658 = vmatpush1.msra.mxu0 0.0
    %659 = vmatprep.subr.mxu0 0.0
    %660 = vmatpush1.msra.mxu0 0.0
    %661 = vmatprep.subr.mxu0 0.0
    %662 = vmatpush1.msra.mxu0 0.0
    %663 = vmatprep.subr.mxu0 0.0
    %664 = vmatpush1.msra.mxu0 0.0
    %665 = vmatprep.subr.mxu0 0.0
    %666 = vmatpush1.msra.mxu0 0.0
    %667 = vmatprep.subr.mxu0 0.0
    %668 = vmatpush1.msra.mxu0 0.0
    %669 = vmatprep.subr.mxu0 0.0
    %670 = vmatpush1.msra.mxu0 0.0
    %671 = vmatprep.subr.mxu0 0.0
    %672 = vmatpush1.msra.mxu0 0.0
    %673 = vmatprep.subr.mxu0 0.0
    %674 = vmatpush1.msra.mxu0 0.0
    %675 = vmatprep.subr.mxu0 0.0
    %676 = vmatpush1.msra.mxu0 0.0
    %677 = vmatprep.subr.mxu0 0.0
    %678 = vmatpush1.msra.mxu0 0.0
    %679 = vmatprep.subr.mxu0 0.0
    %680 = vmatpush1.msra.mxu0 0.0
    %681 = vmatprep.subr.mxu0 0.0
    %682 = vmatpush1.msra.mxu0 0.0
    %683 = vmatprep.subr.mxu0 0.0
    %684 = vmatpush1.msra.mxu0 0.0
    %685 = vmatprep.subr.mxu0 0.0
    %686 = vmatpush1.msra.mxu0 0.0
    %687 = vmatprep.subr.mxu0 0.0
    %688 = vmatpush1.msra.mxu0 0.0
    %689 = vmatprep.subr.mxu0 0.0
    %690 = vmatpush1.msra.mxu0 0.0
    %691 = vmatprep.subr.mxu0 0.0
    %692 = vmatpush1.msra.mxu0 0.0
    %693 = vmatprep.subr.mxu0 0.0
    %694 = vmatpush1.msra.mxu0 0.0
    %695 = vmatprep.subr.mxu0 0.0
    %696 = vmatpush1.msra.mxu0 0.0
    %697 = vmatprep.subr.mxu0 0.0
    %698 = vmatpush1.msra.mxu0 0.0
    %699 = vmatprep.subr.mxu0 0.0
    %700 = vmatpush1.msra.mxu0 0.0
    %701 = vmatprep.subr.mxu0 0.0
    %702 = vmatpush1.msra.mxu0 0.0
    %703 = vmatprep.subr.mxu0 0.0
    %704 = vmatpush1.msra.mxu0 0.0
    %705 = vmatprep.subr.mxu0 0.0
    %706 = vmatpush1.msra.mxu0 0.0
    %707 = vmatprep.subr.mxu0 0.0
    %708 = vmatpush1.msra.mxu0 0.0
    %709 = vmatprep.subr.mxu0 0.0
    %710 = vmatpush1.msra.mxu0 0.0
    %711 = vmatprep.mubr.f32.mxu0 0.0
    %712 = vmatmul.mubr.f32.gmra.mrb[0].mxu0 %v639
    %v713 = vpop.f32.mrb[0].mxu0
    %v714 = vadd.f32 %v542, %v713
    %v715 = vpop.f32.mrb[0].mxu0
    %v716 = vadd.f32 %v544, %v715
    %717 = vmatprep.mubr.f32.mxu0 0.0
    %718 = vmatmul.mubr.f32.gmra.mrb[0].mxu0 %v642
    %v719 = vpop.f32.mrb[0].mxu0
    %v720 = vadd.f32 %v548, %v719
    %v721 = vpop.f32.mrb[0].mxu0
    %v722 = vadd.f32 %v550, %v721
    %723 = vmatprep.mubr.f32.mxu0 0.0
    %724 = vmatmul.mubr.f32.gmra.mrb[0].mxu0 %v645
    %v725 = vpop.f32.mrb[0].mxu0
    %v726 = vadd.f32 %v554, %v725
    %v727 = vpop.f32.mrb[0].mxu0
    %v728 = vadd.f32 %v556, %v727
    %729 = vdwg.mxu0
    %730 = vmatprep.subr.mxu0 0.0
    %731 = vmatpush1.msra.mxu0 %v433
    %732 = vmatprep.subr.mxu0 0.0
    %733 = vmatpush1.msra.mxu0 %v436
    %734 = vmatprep.subr.mxu0 0.0
    %735 = vmatpush1.msra.mxu0 %v439
    %736 = vmatprep.subr.mxu0 0.0
    %737 = vmatpush1.msra.mxu0 %v442
    %738 = vmatprep.subr.mxu0 0.0
    %739 = vmatpush1.msra.mxu0 %v445
    %740 = vmatprep.subr.mxu0 0.0
    %741 = vmatpush1.msra.mxu0 0.0
    %742 = vmatprep.subr.mxu0 0.0
    %743 = vmatpush1.msra.mxu0 0.0
    %744 = vmatprep.subr.mxu0 0.0
    %745 = vmatpush1.msra.mxu0 0.0
    %746 = vmatprep.subr.mxu0 0.0
    %747 = vmatpush1.msra.mxu0 0.0
    %748 = vmatprep.subr.mxu0 0.0
    %749 = vmatpush1.msra.mxu0 0.0
    %750 = vmatprep.subr.mxu0 0.0
    %751 = vmatpush1.msra.mxu0 0.0
    %752 = vmatprep.subr.mxu0 0.0
    %753 = vmatpush1.msra.mxu0 0.0
    %754 = vmatprep.subr.mxu0 0.0
    %755 = vmatpush1.msra.mxu0 0.0
    %756 = vmatprep.subr.mxu0 0.0
    %757 = vmatpush1.msra.mxu0 0.0
    %758 = vmatprep.subr.mxu0 0.0
    %759 = vmatpush1.msra.mxu0 0.0
    %760 = vmatprep.subr.mxu0 0.0
    %761 = vmatpush1.msra.mxu0 0.0
    %762 = vmatprep.subr.mxu0 0.0
    %763 = vmatpush1.msra.mxu0 0.0
    %764 = vmatprep.subr.mxu0 0.0
    %765 = vmatpush1.msra.mxu0 0.0
    %766 = vmatprep.subr.mxu0 0.0
    %767 = vmatpush1.msra.mxu0 0.0
    %768 = vmatprep.subr.mxu0 0.0
    %769 = vmatpush1.msra.mxu0 0.0
    %770 = vmatprep.subr.mxu0 0.0
    %771 = vmatpush1.msra.mxu0 0.0
    %772 = vmatprep.subr.mxu0 0.0
    %773 = vmatpush1.msra.mxu0 0.0
    %774 = vmatprep.subr.mxu0 0.0
    %775 = vmatpush1.msra.mxu0 0.0
    %776 = vmatprep.subr.mxu0 0.0
    %777 = vmatpush1.msra.mxu0 0.0
    %778 = vmatprep.subr.mxu0 0.0
    %779 = vmatpush1.msra.mxu0 0.0
    %780 = vmatprep.subr.mxu0 0.0
    %781 = vmatpush1.msra.mxu0 0.0
    %782 = vmatprep.subr.mxu0 0.0
    %783 = vmatpush1.msra.mxu0 0.0
    %784 = vmatprep.subr.mxu0 0.0
    %785 = vmatpush1.msra.mxu0 0.0
    %786 = vmatprep.subr.mxu0 0.0
    %787 = vmatpush1.msra.mxu0 0.0
    %788 = vmatprep.subr.mxu0 0.0
    %789 = vmatpush1.msra.mxu0 0.0
    %790 = vmatprep.subr.mxu0 0.0
    %791 = vmatpush1.msra.mxu0 0.0
    %792 = vmatprep.subr.mxu0 0.0
    %793 = vmatpush1.msra.mxu0 0.0
    %794 = vmatprep.mubr.f32.mxu0 0.0
    %795 = vmatmul.mubr.f32.gmra.mrb[0].mxu0 %v639
    %v796 = vpop.f32.mrb[0].mxu0
    %v797 = vadd.f32 %v625, %v796
    %v798 = vpop.f32.mrb[0].mxu0
    %799 = vmatprep.mubr.f32.mxu0 0.0
    %800 = vmatmul.mubr.f32.gmra.mrb[0].mxu0 %v642
    %v801 = vpop.f32.mrb[0].mxu0
    %v802 = vadd.f32 %v630, %v801
    %v803 = vpop.f32.mrb[0].mxu0
    %804 = vmatprep.mubr.f32.mxu0 0.0
    %805 = vmatmul.mubr.f32.gmra.mrb[0].mxu0 %v645
    %v806 = vpop.f32.mrb[0].mxu0
    %v807 = vadd.f32 %v635, %v806
    %v808 = vpop.f32.mrb[0].mxu0
    %809 = vdwg.mxu0
    %v810 = vld [vmem:[#allocation4 + $0x2] sm:$0xff]
    %v811 = vld [vmem:[#allocation4 + $0xa] sm:$0xff]
    %v812 = vld [vmem:[#allocation4 + $0x12] sm:$0x3]
    %s813 = scalar_lea.vmem [#allocation7], 240
    %v814 = vld [vmem:[%s813] sm:$0xff]
    %v815 = vld [vmem:[%s813 + $0x8] sm:$0xff]
    %v816 = vld [vmem:[%s813 + $0x10] sm:$0xff]
    %v817 = vld [vmem:[%s813 + $0x18] sm:$0xff]
    %v818 = vld [vmem:[%s813 + $0x20] sm:$0xff]
    %v819 = vld [vmem:[%s813 + $0x28] sm:$0xff]
    %v820 = vld [vmem:[%s813 + $0x30] sm:$0xff]
    %v821 = vld [vmem:[%s813 + $0x38] sm:$0xff]
    %v822 = vld [vmem:[%s813 + $0x40] sm:$0xff]
    %v823 = vld [vmem:[%s813 + $0x48] sm:$0xff]
    %v824 = vld [vmem:[%s813 + $0x50] sm:$0xff]
    %v825 = vld [vmem:[%s813 + $0x58] sm:$0xff]
    %v826 = vld [vmem:[%s813 + $0x60] sm:$0xff]
    %v827 = vld [vmem:[%s813 + $0x68] sm:$0xff]
    %v828 = vld [vmem:[%s813 + $0x70] sm:$0xff]
    %v830 = vsel %vm465, %v810, 0
    %v833 = vsel %vm465, %v811, 0
    %v836 = vsel %vm465, %v812, 0
    %838 = vmatprep.subr.mxu0 %v815
    %839 = vmatpush1.msra.mxu0 %v814
    %840 = vmatprep.subr.mxu0 %v818
    %841 = vmatpush1.msra.mxu0 %v817
    %842 = vmatprep.subr.mxu0 %v821
    %843 = vmatpush1.msra.mxu0 %v820
    %844 = vmatprep.subr.mxu0 %v824
    %845 = vmatpush1.msra.mxu0 %v823
    %846 = vmatprep.subr.mxu0 %v827
    %847 = vmatpush1.msra.mxu0 %v826
    %848 = vmatprep.subr.mxu0 0.0
    %849 = vmatpush1.msra.mxu0 0.0
    %850 = vmatprep.subr.mxu0 0.0
    %851 = vmatpush1.msra.mxu0 0.0
    %852 = vmatprep.subr.mxu0 0.0
    %853 = vmatpush1.msra.mxu0 0.0
    %854 = vmatprep.subr.mxu0 0.0
    %855 = vmatpush1.msra.mxu0 0.0
    %856 = vmatprep.subr.mxu0 0.0
    %857 = vmatpush1.msra.mxu0 0.0
    %858 = vmatprep.subr.mxu0 0.0
    %859 = vmatpush1.msra.mxu0 0.0
    %860 = vmatprep.subr.mxu0 0.0
    %861 = vmatpush1.msra.mxu0 0.0
    %862 = vmatprep.subr.mxu0 0.0
    %863 = vmatpush1.msra.mxu0 0.0
    %864 = vmatprep.subr.mxu0 0.0
    %865 = vmatpush1.msra.mxu0 0.0
    %866 = vmatprep.subr.mxu0 0.0
    %867 = vmatpush1.msra.mxu0 0.0
    %868 = vmatprep.subr.mxu0 0.0
    %869 = vmatpush1.msra.mxu0 0.0
    %870 = vmatprep.subr.mxu0 0.0
    %871 = vmatpush1.msra.mxu0 0.0
    %872 = vmatprep.subr.mxu0 0.0
    %873 = vmatpush1.msra.mxu0 0.0
    %874 = vmatprep.subr.mxu0 0.0
    %875 = vmatpush1.msra.mxu0 0.0
    %876 = vmatprep.subr.mxu0 0.0
    %877 = vmatpush1.msra.mxu0 0.0
    %878 = vmatprep.subr.mxu0 0.0
    %879 = vmatpush1.msra.mxu0 0.0
    %880 = vmatprep.subr.mxu0 0.0
    %881 = vmatpush1.msra.mxu0 0.0
    %882 = vmatprep.subr.mxu0 0.0
    %883 = vmatpush1.msra.mxu0 0.0
    %884 = vmatprep.subr.mxu0 0.0
    %885 = vmatpush1.msra.mxu0 0.0
    %886 = vmatprep.subr.mxu0 0.0
    %887 = vmatpush1.msra.mxu0 0.0
    %888 = vmatprep.subr.mxu0 0.0
    %889 = vmatpush1.msra.mxu0 0.0
    %890 = vmatprep.subr.mxu0 0.0
    %891 = vmatpush1.msra.mxu0 0.0
    %892 = vmatprep.subr.mxu0 0.0
    %893 = vmatpush1.msra.mxu0 0.0
    %894 = vmatprep.subr.mxu0 0.0
    %895 = vmatpush1.msra.mxu0 0.0
    %896 = vmatprep.subr.mxu0 0.0
    %897 = vmatpush1.msra.mxu0 0.0
    %898 = vmatprep.subr.mxu0 0.0
    %899 = vmatpush1.msra.mxu0 0.0
    %900 = vmatprep.subr.mxu0 0.0
    %901 = vmatpush1.msra.mxu0 0.0
    %902 = vmatprep.mubr.f32.mxu0 0.0
    %903 = vmatmul.mubr.f32.gmra.mrb[0].mxu0 %v830
    %v904 = vpop.f32.mrb[0].mxu0
    %v905 = vadd.f32 0.0, %v904
    %v906 = vpop.f32.mrb[0].mxu0
    %v907 = vadd.f32 0.0, %v906
    %908 = vmatprep.mubr.f32.mxu0 0.0
    %909 = vmatmul.mubr.f32.gmra.mrb[0].mxu0 %v833
    %v910 = vpop.f32.mrb[0].mxu0
    %v911 = vadd.f32 0.0, %v910
    %v912 = vpop.f32.mrb[0].mxu0
    %v913 = vadd.f32 0.0, %v912
    %914 = vmatprep.mubr.f32.mxu0 0.0
    %915 = vmatmul.mubr.f32.gmra.mrb[0].mxu0 %v836
    %v916 = vpop.f32.mrb[0].mxu0
    %v917 = vadd.f32 0.0, %v916
    %v918 = vpop.f32.mrb[0].mxu0
    %v919 = vadd.f32 0.0, %v918
    %920 = vdwg.mxu0
    %921 = vmatprep.subr.mxu0 0.0
    %922 = vmatpush1.msra.mxu0 %v816
    %923 = vmatprep.subr.mxu0 0.0
    %924 = vmatpush1.msra.mxu0 %v819
    %925 = vmatprep.subr.mxu0 0.0
    %926 = vmatpush1.msra.mxu0 %v822
    %927 = vmatprep.subr.mxu0 0.0
    %928 = vmatpush1.msra.mxu0 %v825
    %929 = vmatprep.subr.mxu0 0.0
    %930 = vmatpush1.msra.mxu0 %v828
    %931 = vmatprep.subr.mxu0 0.0
    %932 = vmatpush1.msra.mxu0 0.0
    %933 = vmatprep.subr.mxu0 0.0
    %934 = vmatpush1.msra.mxu0 0.0
    %935 = vmatprep.subr.mxu0 0.0
    %936 = vmatpush1.msra.mxu0 0.0
    %937 = vmatprep.subr.mxu0 0.0
    %938 = vmatpush1.msra.mxu0 0.0
    %939 = vmatprep.subr.mxu0 0.0
    %940 = vmatpush1.msra.mxu0 0.0
    %941 = vmatprep.subr.mxu0 0.0
    %942 = vmatpush1.msra.mxu0 0.0
    %943 = vmatprep.subr.mxu0 0.0
    %944 = vmatpush1.msra.mxu0 0.0
    %945 = vmatprep.subr.mxu0 0.0
    %946 = vmatpush1.msra.mxu0 0.0
    %947 = vmatprep.subr.mxu0 0.0
    %948 = vmatpush1.msra.mxu0 0.0
    %949 = vmatprep.subr.mxu0 0.0
    %950 = vmatpush1.msra.mxu0 0.0
    %951 = vmatprep.subr.mxu0 0.0
    %952 = vmatpush1.msra.mxu0 0.0
    %953 = vmatprep.subr.mxu0 0.0
    %954 = vmatpush1.msra.mxu0 0.0
    %955 = vmatprep.subr.mxu0 0.0
    %956 = vmatpush1.msra.mxu0 0.0
    %957 = vmatprep.subr.mxu0 0.0
    %958 = vmatpush1.msra.mxu0 0.0
    %959 = vmatprep.subr.mxu0 0.0
    %960 = vmatpush1.msra.mxu0 0.0
    %961 = vmatprep.subr.mxu0 0.0
    %962 = vmatpush1.msra.mxu0 0.0
    %963 = vmatprep.subr.mxu0 0.0
    %964 = vmatpush1.msra.mxu0 0.0
    %965 = vmatprep.subr.mxu0 0.0
    %966 = vmatpush1.msra.mxu0 0.0
    %967 = vmatprep.subr.mxu0 0.0
    %968 = vmatpush1.msra.mxu0 0.0
    %969 = vmatprep.subr.mxu0 0.0
    %970 = vmatpush1.msra.mxu0 0.0
    %971 = vmatprep.subr.mxu0 0.0
    %972 = vmatpush1.msra.mxu0 0.0
    %973 = vmatprep.subr.mxu0 0.0
    %974 = vmatpush1.msra.mxu0 0.0
    %975 = vmatprep.subr.mxu0 0.0
    %976 = vmatpush1.msra.mxu0 0.0
    %977 = vmatprep.subr.mxu0 0.0
    %978 = vmatpush1.msra.mxu0 0.0
    %979 = vmatprep.subr.mxu0 0.0
    %980 = vmatpush1.msra.mxu0 0.0
    %981 = vmatprep.subr.mxu0 0.0
    %982 = vmatpush1.msra.mxu0 0.0
    %983 = vmatprep.subr.mxu0 0.0
    %984 = vmatpush1.msra.mxu0 0.0
    %985 = vmatprep.mubr.f32.mxu0 0.0
    %986 = vmatmul.mubr.f32.gmra.mrb[0].mxu0 %v830
    %v987 = vpop.f32.mrb[0].mxu0
    %v988 = vadd.f32 0.0, %v987
    %v989 = vpop.f32.mrb[0].mxu0
    %990 = vmatprep.mubr.f32.mxu0 0.0
    %991 = vmatmul.mubr.f32.gmra.mrb[0].mxu0 %v833
    %v992 = vpop.f32.mrb[0].mxu0
    %v993 = vadd.f32 0.0, %v992
    %v994 = vpop.f32.mrb[0].mxu0
    %995 = vmatprep.mubr.f32.mxu0 0.0
    %996 = vmatmul.mubr.f32.gmra.mrb[0].mxu0 %v836
    %v997 = vpop.f32.mrb[0].mxu0
    %v998 = vadd.f32 0.0, %v997
    %v999 = vpop.f32.mrb[0].mxu0
    %1000 = vdwg.mxu0
    %v1001 = vadd.f32 %v714, %v905
    %v1002 = vadd.f32 %v716, %v907
    %v1003 = vadd.f32 %v797, %v988
    %v1004 = vadd.f32 %v720, %v911
    %v1005 = vadd.f32 %v722, %v913
    %v1006 = vadd.f32 %v802, %v993
    %v1007 = vadd.f32 %v726, %v917
    %v1008 = vadd.f32 %v728, %v919
    %v1009 = vadd.f32 %v807, %v998
    %v1010 = vld [vmem:[#allocation18] sm:$0x1]
    %vm1011 = vcmask 146432
    %v1013 = vsel %vm1011, %v1010, 0
    %vm1015 = vcmask 1041408
    %v1017 = vsel %vm1015, %v1007, 0
    %v1020 = vsel %vm1015, %v1008, 0
    %v1023 = vsel %vm1015, %v1009, 0
    %1025 = vmatprep.subr.mxu0 %v1002
    %1026 = vmatpush1.msra.mxu0 %v1001
    %1027 = vmatprep.subr.mxu0 %v1005
    %1028 = vmatpush1.msra.mxu0 %v1004
    %1029 = vmatprep.subr.mxu0 %v1020
    %1030 = vmatpush1.msra.mxu0 %v1017
    %1031 = vmatprep.subr.mxu0 0.0
    %1032 = vmatpush1.msra.mxu0 0.0
    %1033 = vmatprep.subr.mxu0 0.0
    %1034 = vmatpush1.msra.mxu0 0.0
    %1035 = vmatprep.subr.mxu0 0.0
    %1036 = vmatpush1.msra.mxu0 0.0
    %1037 = vmatprep.subr.mxu0 0.0
    %1038 = vmatpush1.msra.mxu0 0.0
    %1039 = vmatprep.subr.mxu0 0.0
    %1040 = vmatpush1.msra.mxu0 0.0
    %1041 = vmatprep.subr.mxu0 0.0
    %1042 = vmatpush1.msra.mxu0 0.0
    %1043 = vmatprep.subr.mxu0 0.0
    %1044 = vmatpush1.msra.mxu0 0.0
    %1045 = vmatprep.subr.mxu0 0.0
    %1046 = vmatpush1.msra.mxu0 0.0
    %1047 = vmatprep.subr.mxu0 0.0
    %1048 = vmatpush1.msra.mxu0 0.0
    %1049 = vmatprep.subr.mxu0 0.0
    %1050 = vmatpush1.msra.mxu0 0.0
    %1051 = vmatprep.subr.mxu0 0.0
    %1052 = vmatpush1.msra.mxu0 0.0
    %1053 = vmatprep.subr.mxu0 0.0
    %1054 = vmatpush1.msra.mxu0 0.0
    %1055 = vmatprep.subr.mxu0 0.0
    %1056 = vmatpush1.msra.mxu0 0.0
    %1057 = vmatprep.subr.mxu0 0.0
    %1058 = vmatpush1.msra.mxu0 0.0
    %1059 = vmatprep.subr.mxu0 0.0
    %1060 = vmatpush1.msra.mxu0 0.0
    %1061 = vmatprep.subr.mxu0 0.0
    %1062 = vmatpush1.msra.mxu0 0.0
    %1063 = vmatprep.subr.mxu0 0.0
    %1064 = vmatpush1.msra.mxu0 0.0
    %1065 = vmatprep.subr.mxu0 0.0
    %1066 = vmatpush1.msra.mxu0 0.0
    %1067 = vmatprep.subr.mxu0 0.0
    %1068 = vmatpush1.msra.mxu0 0.0
    %1069 = vmatprep.subr.mxu0 0.0
    %1070 = vmatpush1.msra.mxu0 0.0
    %1071 = vmatprep.subr.mxu0 0.0
    %1072 = vmatpush1.msra.mxu0 0.0
    %1073 = vmatprep.subr.mxu0 0.0
    %1074 = vmatpush1.msra.mxu0 0.0
    %1075 = vmatprep.subr.mxu0 0.0
    %1076 = vmatpush1.msra.mxu0 0.0
    %1077 = vmatprep.subr.mxu0 0.0
    %1078 = vmatpush1.msra.mxu0 0.0
    %1079 = vmatprep.subr.mxu0 0.0
    %1080 = vmatpush1.msra.mxu0 0.0
    %1081 = vmatprep.subr.mxu0 0.0
    %1082 = vmatpush1.msra.mxu0 0.0
    %1083 = vmatprep.subr.mxu0 0.0
    %1084 = vmatpush1.msra.mxu0 0.0
    %1085 = vmatprep.subr.mxu0 0.0
    %1086 = vmatpush1.msra.mxu0 0.0
    %1087 = vmatprep.subr.mxu0 0.0
    %1088 = vmatpush1.msra.mxu0 0.0
    %1089 = vmatprep.mubr.f32.mxu0 0.0
    %1090 = vmatmul.mubr.f32.gmra.mrb[0].mxu0 %v1013
    %v1091 = vpop.f32.mrb[0].mxu0
    %v1092 = vadd.f32 0.0, %v1091
    %v1093 = vpop.f32.mrb[0].mxu0
    %v1094 = vadd.f32 0.0, %v1093
    %1095 = vdwg.mxu0
    %1096 = vmatprep.subr.mxu0 0.0
    %1097 = vmatpush1.msra.mxu0 %v1003
    %1098 = vmatprep.subr.mxu0 0.0
    %1099 = vmatpush1.msra.mxu0 %v1006
    %1100 = vmatprep.subr.mxu0 0.0
    %1101 = vmatpush1.msra.mxu0 %v1023
    %1102 = vmatprep.subr.mxu0 0.0
    %1103 = vmatpush1.msra.mxu0 0.0
    %1104 = vmatprep.subr.mxu0 0.0
    %1105 = vmatpush1.msra.mxu0 0.0
    %1106 = vmatprep.subr.mxu0 0.0
    %1107 = vmatpush1.msra.mxu0 0.0
    %1108 = vmatprep.subr.mxu0 0.0
    %1109 = vmatpush1.msra.mxu0 0.0
    %1110 = vmatprep.subr.mxu0 0.0
    %1111 = vmatpush1.msra.mxu0 0.0
    %1112 = vmatprep.subr.mxu0 0.0
    %1113 = vmatpush1.msra.mxu0 0.0
    %1114 = vmatprep.subr.mxu0 0.0
    %1115 = vmatpush1.msra.mxu0 0.0
    %1116 = vmatprep.subr.mxu0 0.0
    %1117 = vmatpush1.msra.mxu0 0.0
    %1118 = vmatprep.subr.mxu0 0.0
    %1119 = vmatpush1.msra.mxu0 0.0
    %1120 = vmatprep.subr.mxu0 0.0
    %1121 = vmatpush1.msra.mxu0 0.0
    %1122 = vmatprep.subr.mxu0 0.0
    %1123 = vmatpush1.msra.mxu0 0.0
    %1124 = vmatprep.subr.mxu0 0.0
    %1125 = vmatpush1.msra.mxu0 0.0
    %1126 = vmatprep.subr.mxu0 0.0
    %1127 = vmatpush1.msra.mxu0 0.0
    %1128 = vmatprep.subr.mxu0 0.0
    %1129 = vmatpush1.msra.mxu0 0.0
    %1130 = vmatprep.subr.mxu0 0.0
    %1131 = vmatpush1.msra.mxu0 0.0
    %1132 = vmatprep.subr.mxu0 0.0
    %1133 = vmatpush1.msra.mxu0 0.0
    %1134 = vmatprep.subr.mxu0 0.0
    %1135 = vmatpush1.msra.mxu0 0.0
    %1136 = vmatprep.subr.mxu0 0.0
    %1137 = vmatpush1.msra.mxu0 0.0
    %1138 = vmatprep.subr.mxu0 0.0
    %1139 = vmatpush1.msra.mxu0 0.0
    %1140 = vmatprep.subr.mxu0 0.0
    %1141 = vmatpush1.msra.mxu0 0.0
    %1142 = vmatprep.subr.mxu0 0.0
    %1143 = vmatpush1.msra.mxu0 0.0
    %1144 = vmatprep.subr.mxu0 0.0
    %1145 = vmatpush1.msra.mxu0 0.0
    %1146 = vmatprep.subr.mxu0 0.0
    %1147 = vmatpush1.msra.mxu0 0.0
    %1148 = vmatprep.subr.mxu0 0.0
    %1149 = vmatpush1.msra.mxu0 0.0
    %1150 = vmatprep.subr.mxu0 0.0
    %1151 = vmatpush1.msra.mxu0 0.0
    %1152 = vmatprep.subr.mxu0 0.0
    %1153 = vmatpush1.msra.mxu0 0.0
    %1154 = vmatprep.subr.mxu0 0.0
    %1155 = vmatpush1.msra.mxu0 0.0
    %1156 = vmatprep.subr.mxu0 0.0
    %1157 = vmatpush1.msra.mxu0 0.0
    %1158 = vmatprep.subr.mxu0 0.0
    %1159 = vmatpush1.msra.mxu0 0.0
    %1160 = vmatprep.mubr.f32.mxu0 0.0
    %1161 = vmatmul.mubr.f32.gmra.mrb[0].mxu0 %v1013
    %v1162 = vpop.f32.mrb[0].mxu0
    %v1163 = vadd.f32 0.0, %v1162
    %v1164 = vpop.f32.mrb[0].mxu0
    %1165 = vdwg.mxu0
    %v1166 = vmul.f32 %v1001, %v1001
    %v1167 = vmul.f32 %v1002, %v1002
    %v1168 = vmul.f32 %v1003, %v1003
    %v1169 = vmul.f32 %v1004, %v1004
    %v1170 = vmul.f32 %v1005, %v1005
    %v1171 = vmul.f32 %v1006, %v1006
    %v1172 = vmul.f32 %v1007, %v1007
    %v1173 = vmul.f32 %v1008, %v1008
    %v1174 = vmul.f32 %v1009, %v1009
    %v1176 = vsel %vm1015, %v1172, 0
    %v1179 = vsel %vm1015, %v1173, 0
    %v1182 = vsel %vm1015, %v1174, 0
    %1184 = vmatprep.subr.mxu0 %v1167
    %1185 = vmatpush1.msra.mxu0 %v1166
    %1186 = vmatprep.subr.mxu0 %v1170
    %1187 = vmatpush1.msra.mxu0 %v1169
    %1188 = vmatprep.subr.mxu0 %v1179
    %1189 = vmatpush1.msra.mxu0 %v1176
    %1190 = vmatprep.subr.mxu0 0.0
    %1191 = vmatpush1.msra.mxu0 0.0
    %1192 = vmatprep.subr.mxu0 0.0
    %1193 = vmatpush1.msra.mxu0 0.0
    %1194 = vmatprep.subr.mxu0 0.0
    %1195 = vmatpush1.msra.mxu0 0.0
    %1196 = vmatprep.subr.mxu0 0.0
    %1197 = vmatpush1.msra.mxu0 0.0
    %1198 = vmatprep.subr.mxu0 0.0
    %1199 = vmatpush1.msra.mxu0 0.0
    %1200 = vmatprep.subr.mxu0 0.0
    %1201 = vmatpush1.msra.mxu0 0.0
    %1202 = vmatprep.subr.mxu0 0.0
    %1203 = vmatpush1.msra.mxu0 0.0
    %1204 = vmatprep.subr.mxu0 0.0
    %1205 = vmatpush1.msra.mxu0 0.0
    %1206 = vmatprep.subr.mxu0 0.0
    %1207 = vmatpush1.msra.mxu0 0.0
    %1208 = vmatprep.subr.mxu0 0.0
    %1209 = vmatpush1.msra.mxu0 0.0
    %1210 = vmatprep.subr.mxu0 0.0
    %1211 = vmatpush1.msra.mxu0 0.0
    %1212 = vmatprep.subr.mxu0 0.0
    %1213 = vmatpush1.msra.mxu0 0.0
    %1214 = vmatprep.subr.mxu0 0.0
    %1215 = vmatpush1.msra.mxu0 0.0
    %1216 = vmatprep.subr.mxu0 0.0
    %1217 = vmatpush1.msra.mxu0 0.0
    %1218 = vmatprep.subr.mxu0 0.0
    %1219 = vmatpush1.msra.mxu0 0.0
    %1220 = vmatprep.subr.mxu0 0.0
    %1221 = vmatpush1.msra.mxu0 0.0
    %1222 = vmatprep.subr.mxu0 0.0
    %1223 = vmatpush1.msra.mxu0 0.0
    %1224 = vmatprep.subr.mxu0 0.0
    %1225 = vmatpush1.msra.mxu0 0.0
    %1226 = vmatprep.subr.mxu0 0.0
    %1227 = vmatpush1.msra.mxu0 0.0
    %1228 = vmatprep.subr.mxu0 0.0
    %1229 = vmatpush1.msra.mxu0 0.0
    %1230 = vmatprep.subr.mxu0 0.0
    %1231 = vmatpush1.msra.mxu0 0.0
    %1232 = vmatprep.subr.mxu0 0.0
    %1233 = vmatpush1.msra.mxu0 0.0
    %1234 = vmatprep.subr.mxu0 0.0
    %1235 = vmatpush1.msra.mxu0 0.0
    %1236 = vmatprep.subr.mxu0 0.0
    %1237 = vmatpush1.msra.mxu0 0.0
    %1238 = vmatprep.subr.mxu0 0.0
    %1239 = vmatpush1.msra.mxu0 0.0
    %1240 = vmatprep.subr.mxu0 0.0
    %1241 = vmatpush1.msra.mxu0 0.0
    %1242 = vmatprep.subr.mxu0 0.0
    %1243 = vmatpush1.msra.mxu0 0.0
    %1244 = vmatprep.subr.mxu0 0.0
    %1245 = vmatpush1.msra.mxu0 0.0
    %1246 = vmatprep.subr.mxu0 0.0
    %1247 = vmatpush1.msra.mxu0 0.0
    %1248 = vmatprep.mubr.f32.mxu0 0.0
    %1249 = vmatmul.mubr.f32.gmra.mrb[0].mxu0 %v1013
    %v1250 = vpop.f32.mrb[0].mxu0
    %v1251 = vadd.f32 0.0, %v1250
    %v1252 = vpop.f32.mrb[0].mxu0
    %v1253 = vadd.f32 0.0, %v1252
    %1254 = vdwg.mxu0
    %1255 = vmatprep.subr.mxu0 0.0
    %1256 = vmatpush1.msra.mxu0 %v1168
    %1257 = vmatprep.subr.mxu0 0.0
    %1258 = vmatpush1.msra.mxu0 %v1171
    %1259 = vmatprep.subr.mxu0 0.0
    %1260 = vmatpush1.msra.mxu0 %v1182
    %1261 = vmatprep.subr.mxu0 0.0
    %1262 = vmatpush1.msra.mxu0 0.0
    %1263 = vmatprep.subr.mxu0 0.0
    %1264 = vmatpush1.msra.mxu0 0.0
    %1265 = vmatprep.subr.mxu0 0.0
    %1266 = vmatpush1.msra.mxu0 0.0
    %1267 = vmatprep.subr.mxu0 0.0
    %1268 = vmatpush1.msra.mxu0 0.0
    %1269 = vmatprep.subr.mxu0 0.0
    %1270 = vmatpush1.msra.mxu0 0.0
    %1271 = vmatprep.subr.mxu0 0.0
    %1272 = vmatpush1.msra.mxu0 0.0
    %1273 = vmatprep.subr.mxu0 0.0
    %1274 = vmatpush1.msra.mxu0 0.0
    %1275 = vmatprep.subr.mxu0 0.0
    %1276 = vmatpush1.msra.mxu0 0.0
    %1277 = vmatprep.subr.mxu0 0.0
    %1278 = vmatpush1.msra.mxu0 0.0
    %1279 = vmatprep.subr.mxu0 0.0
    %1280 = vmatpush1.msra.mxu0 0.0
    %1281 = vmatprep.subr.mxu0 0.0
    %1282 = vmatpush1.msra.mxu0 0.0
    %1283 = vmatprep.subr.mxu0 0.0
    %1284 = vmatpush1.msra.mxu0 0.0
    %1285 = vmatprep.subr.mxu0 0.0
    %1286 = vmatpush1.msra.mxu0 0.0
    %1287 = vmatprep.subr.mxu0 0.0
    %1288 = vmatpush1.msra.mxu0 0.0
    %1289 = vmatprep.subr.mxu0 0.0
    %1290 = vmatpush1.msra.mxu0 0.0
    %1291 = vmatprep.subr.mxu0 0.0
    %1292 = vmatpush1.msra.mxu0 0.0
    %1293 = vmatprep.subr.mxu0 0.0
    %1294 = vmatpush1.msra.mxu0 0.0
    %1295 = vmatprep.subr.mxu0 0.0
    %1296 = vmatpush1.msra.mxu0 0.0
    %1297 = vmatprep.subr.mxu0 0.0
    %1298 = vmatpush1.msra.mxu0 0.0
    %1299 = vmatprep.subr.mxu0 0.0
    %1300 = vmatpush1.msra.mxu0 0.0
    %1301 = vmatprep.subr.mxu0 0.0
    %1302 = vmatpush1.msra.mxu0 0.0
    %1303 = vmatprep.subr.mxu0 0.0
    %1304 = vmatpush1.msra.mxu0 0.0
    %1305 = vmatprep.subr.mxu0 0.0
    %1306 = vmatpush1.msra.mxu0 0.0
    %1307 = vmatprep.subr.mxu0 0.0
    %1308 = vmatpush1.msra.mxu0 0.0
    %1309 = vmatprep.subr.mxu0 0.0
    %1310 = vmatpush1.msra.mxu0 0.0
    %1311 = vmatprep.subr.mxu0 0.0
    %1312 = vmatpush1.msra.mxu0 0.0
    %1313 = vmatprep.subr.mxu0 0.0
    %1314 = vmatpush1.msra.mxu0 0.0
    %1315 = vmatprep.subr.mxu0 0.0
    %1316 = vmatpush1.msra.mxu0 0.0
    %1317 = vmatprep.subr.mxu0 0.0
    %1318 = vmatpush1.msra.mxu0 0.0
    %1319 = vmatprep.mubr.f32.mxu0 0.0
    %1320 = vmatmul.mubr.f32.gmra.mrb[0].mxu0 %v1013
    %v1321 = vpop.f32.mrb[0].mxu0
    %v1322 = vadd.f32 0.0, %v1321
    %v1323 = vpop.f32.mrb[0].mxu0
    %1324 = vdwg.mxu0
    %v1328 = vrot.slane %v1251, 7
    %v1329 = vrot.slane %v1253, 7
    %v1330 = vrot.slane %v1322, 7
    %vm1334 = vcmask 1040384
    %v1335 = vsel %vm1334, %v1092, %v1328
    %v1336 = vsel %vm1334, %v1094, %v1329
    %v1337 = vsel %vm1334, %v1163, %v1330
    %v1338 = vld [vmem:[#allocation9] sm:$0xff]
    %v1339 = vld [vmem:[#allocation9 + $0x8] sm:$0xff]
    %v1340 = vld [vmem:[#allocation9 + $0x10] sm:$0xff]
    %v1341 = vld [vmem:[#allocation9 + $0x18] sm:$0xff]
    %v1342 = vld [vmem:[#allocation9 + $0x20] sm:$0xff]
    %v1343 = vld [vmem:[#allocation9 + $0x28] sm:$0xff]
    %v1344 = vld [vmem:[#allocation9 + $0x30] sm:$0xff]
    %v1345 = vld [vmem:[#allocation9 + $0x38] sm:$0xff]
    %v1346 = vld [vmem:[#allocation9 + $0x40] sm:$0xff]
    %v1347 = vld [vmem:[#allocation9 + $0x48] sm:$0xff]
    %v1348 = vld [vmem:[#allocation9 + $0x50] sm:$0xff]
    %v1349 = vld [vmem:[#allocation9 + $0x58] sm:$0xff]
    %v1350 = vld [vmem:[#allocation9 + $0x60] sm:$0xff]
    %v1351 = vld [vmem:[#allocation9 + $0x68] sm:$0xff]
    %v1352 = vld [vmem:[#allocation9 + $0x70] sm:$0xff]
    %v1353 = vld [vmem:[#allocation9 + $0x78] sm:$0xff]
    %v1354 = vld [vmem:[#allocation9 + $0x80] sm:$0xff]
    %v1355 = vld [vmem:[#allocation9 + $0x88] sm:$0xff]
    %v1356 = vld [vmem:[#allocation9 + $0x90] sm:$0xff]
    %v1357 = vld [vmem:[#allocation9 + $0x98] sm:$0xff]
    %v1358 = vld [vmem:[#allocation9 + $0xa0] sm:$0xff]
    %v1359 = vld [vmem:[#allocation9 + $0xa8] sm:$0xff]
    %v1360 = vld [vmem:[#allocation9 + $0xb0] sm:$0xff]
    %v1361 = vld [vmem:[#allocation9 + $0xb8] sm:$0xff]
    %v1362 = vld [vmem:[#allocation9 + $0xc0] sm:$0xff]
    %v1363 = vld [vmem:[#allocation9 + $0xc8] sm:$0xff]
    %v1364 = vld [vmem:[#allocation9 + $0xd0] sm:$0xff]
    %v1365 = vld [vmem:[#allocation9 + $0xd8] sm:$0xff]
    %v1366 = vld [vmem:[#allocation9 + $0xe0] sm:$0xff]
    %v1367 = vld [vmem:[#allocation9 + $0xe8] sm:$0xff]
    %v1368 = vld [vmem:[#allocation9 + $0xf0] sm:$0xff]
    %v1369 = vld [vmem:[#allocation9 + $0xf8] sm:$0xff]
    %v1370 = vld [vmem:[#allocation9 + $0x100] sm:$0xff]
    %v1371 = vld [vmem:[#allocation9 + $0x108] sm:$0xff]
    %v1372 = vld [vmem:[#allocation9 + $0x110] sm:$0xff]
    %v1373 = vld [vmem:[#allocation9 + $0x118] sm:$0xff]
    %v1374 = vld [vmem:[#allocation9 + $0x120] sm:$0xff]
    %v1375 = vld [vmem:[#allocation9 + $0x128] sm:$0xff]
    %v1376 = vld [vmem:[#allocation9 + $0x130] sm:$0xff]
    %v1377 = vld [vmem:[#allocation9 + $0x138] sm:$0xff]
    %v1379 = vsel %vm423, %v1337, 0
    %1381 = vmatprep.subr.mxu0 0.0
    %1382 = vmatpush1.msra.mxu0 %v1338
    %1383 = vmatprep.subr.mxu0 0.0
    %1384 = vmatpush1.msra.mxu0 %v1339
    %1385 = vmatprep.subr.mxu0 0.0
    %1386 = vmatpush1.msra.mxu0 %v1340
    %1387 = vmatprep.subr.mxu0 0.0
    %1388 = vmatpush1.msra.mxu0 %v1341
    %1389 = vmatprep.subr.mxu0 0.0
    %1390 = vmatpush1.msra.mxu0 %v1342
    %1391 = vmatprep.subr.mxu0 0.0
    %1392 = vmatpush1.msra.mxu0 %v1343
    %1393 = vmatprep.subr.mxu0 0.0
    %1394 = vmatpush1.msra.mxu0 %v1344
    %1395 = vmatprep.subr.mxu0 0.0
    %1396 = vmatpush1.msra.mxu0 %v1345
    %1397 = vmatprep.subr.mxu0 0.0
    %1398 = vmatpush1.msra.mxu0 %v1346
    %1399 = vmatprep.subr.mxu0 0.0
    %1400 = vmatpush1.msra.mxu0 %v1347
    %1401 = vmatprep.subr.mxu0 0.0
    %1402 = vmatpush1.msra.mxu0 %v1348
    %1403 = vmatprep.subr.mxu0 0.0
    %1404 = vmatpush1.msra.mxu0 %v1349
    %1405 = vmatprep.subr.mxu0 0.0
    %1406 = vmatpush1.msra.mxu0 %v1350
    %1407 = vmatprep.subr.mxu0 0.0
    %1408 = vmatpush1.msra.mxu0 %v1351
    %1409 = vmatprep.subr.mxu0 0.0
    %1410 = vmatpush1.msra.mxu0 %v1352
    %1411 = vmatprep.subr.mxu0 0.0
    %1412 = vmatpush1.msra.mxu0 %v1353
    %1413 = vmatprep.subr.mxu0 0.0
    %1414 = vmatpush1.msra.mxu0 %v1354
    %1415 = vmatprep.subr.mxu0 0.0
    %1416 = vmatpush1.msra.mxu0 %v1355
    %1417 = vmatprep.subr.mxu0 0.0
    %1418 = vmatpush1.msra.mxu0 %v1356
    %1419 = vmatprep.subr.mxu0 0.0
    %1420 = vmatpush1.msra.mxu0 %v1357
    %1421 = vmatprep.subr.mxu0 0.0
    %1422 = vmatpush1.msra.mxu0 %v1358
    %1423 = vmatprep.subr.mxu0 0.0
    %1424 = vmatpush1.msra.mxu0 %v1359
    %1425 = vmatprep.subr.mxu0 0.0
    %1426 = vmatpush1.msra.mxu0 %v1360
    %1427 = vmatprep.subr.mxu0 0.0
    %1428 = vmatpush1.msra.mxu0 %v1361
    %1429 = vmatprep.subr.mxu0 0.0
    %1430 = vmatpush1.msra.mxu0 %v1362
    %1431 = vmatprep.subr.mxu0 0.0
    %1432 = vmatpush1.msra.mxu0 %v1363
    %1433 = vmatprep.subr.mxu0 0.0
    %1434 = vmatpush1.msra.mxu0 %v1364
    %1435 = vmatprep.subr.mxu0 0.0
    %1436 = vmatpush1.msra.mxu0 %v1365
    %1437 = vmatprep.subr.mxu0 0.0
    %1438 = vmatpush1.msra.mxu0 %v1366
    %1439 = vmatprep.subr.mxu0 0.0
    %1440 = vmatpush1.msra.mxu0 %v1367
    %1441 = vmatprep.subr.mxu0 0.0
    %1442 = vmatpush1.msra.mxu0 %v1368
    %1443 = vmatprep.subr.mxu0 0.0
    %1444 = vmatpush1.msra.mxu0 %v1369
    %1445 = vmatprep.mubr.f32.mxu0 %v1336
    %1446 = vmatmul.mubr.f32.gmra.mrb[0].mxu0 %v1335
    %v1447 = vpop.f32.mrb[0].mxu0
    %v1448 = vadd.f32 0.0, %v1447
    %v1449 = vpop.f32.mrb[0].mxu0
    %1450 = vdwg.mxu0
    %1451 = vmatprep.subr.mxu0 0.0
    %1452 = vmatpush1.msra.mxu0 %v1370
    %1453 = vmatprep.subr.mxu0 0.0
    %1454 = vmatpush1.msra.mxu0 %v1371
    %1455 = vmatprep.subr.mxu0 0.0
    %1456 = vmatpush1.msra.mxu0 %v1372
    %1457 = vmatprep.subr.mxu0 0.0
    %1458 = vmatpush1.msra.mxu0 %v1373
    %1459 = vmatprep.subr.mxu0 0.0
    %1460 = vmatpush1.msra.mxu0 %v1374
    %1461 = vmatprep.subr.mxu0 0.0
    %1462 = vmatpush1.msra.mxu0 %v1375
    %1463 = vmatprep.subr.mxu0 0.0
    %1464 = vmatpush1.msra.mxu0 %v1376
    %1465 = vmatprep.subr.mxu0 0.0
    %1466 = vmatpush1.msra.mxu0 %v1377
    %1467 = vmatprep.subr.mxu0 0.0
    %1468 = vmatpush1.msra.mxu0 0.0
    %1469 = vmatprep.subr.mxu0 0.0
    %1470 = vmatpush1.msra.mxu0 0.0
    %1471 = vmatprep.subr.mxu0 0.0
    %1472 = vmatpush1.msra.mxu0 0.0
    %1473 = vmatprep.subr.mxu0 0.0
    %1474 = vmatpush1.msra.mxu0 0.0
    %1475 = vmatprep.subr.mxu0 0.0
    %1476 = vmatpush1.msra.mxu0 0.0
    %1477 = vmatprep.subr.mxu0 0.0
    %1478 = vmatpush1.msra.mxu0 0.0
    %1479 = vmatprep.subr.mxu0 0.0
    %1480 = vmatpush1.msra.mxu0 0.0
    %1481 = vmatprep.subr.mxu0 0.0
    %1482 = vmatpush1.msra.mxu0 0.0
    %1483 = vmatprep.subr.mxu0 0.0
    %1484 = vmatpush1.msra.mxu0 0.0
    %1485 = vmatprep.subr.mxu0 0.0
    %1486 = vmatpush1.msra.mxu0 0.0
    %1487 = vmatprep.subr.mxu0 0.0
    %1488 = vmatpush1.msra.mxu0 0.0
    %1489 = vmatprep.subr.mxu0 0.0
    %1490 = vmatpush1.msra.mxu0 0.0
    %1491 = vmatprep.subr.mxu0 0.0
    %1492 = vmatpush1.msra.mxu0 0.0
    %1493 = vmatprep.subr.mxu0 0.0
    %1494 = vmatpush1.msra.mxu0 0.0
    %1495 = vmatprep.subr.mxu0 0.0
    %1496 = vmatpush1.msra.mxu0 0.0
    %1497 = vmatprep.subr.mxu0 0.0
    %1498 = vmatpush1.msra.mxu0 0.0
    %1499 = vmatprep.subr.mxu0 0.0
    %1500 = vmatpush1.msra.mxu0 0.0
    %1501 = vmatprep.subr.mxu0 0.0
    %1502 = vmatpush1.msra.mxu0 0.0
    %1503 = vmatprep.subr.mxu0 0.0
    %1504 = vmatpush1.msra.mxu0 0.0
    %1505 = vmatprep.subr.mxu0 0.0
    %1506 = vmatpush1.msra.mxu0 0.0
    %1507 = vmatprep.subr.mxu0 0.0
    %1508 = vmatpush1.msra.mxu0 0.0
    %1509 = vmatprep.subr.mxu0 0.0
    %1510 = vmatpush1.msra.mxu0 0.0
    %1511 = vmatprep.subr.mxu0 0.0
    %1512 = vmatpush1.msra.mxu0 0.0
    %1513 = vmatprep.subr.mxu0 0.0
    %1514 = vmatpush1.msra.mxu0 0.0
    %1515 = vmatprep.mubr.f32.mxu0 0.0
    %1516 = vmatmul.mubr.f32.gmra.mrb[0].mxu0 %v1379
    %v1517 = vpop.f32.mrb[0].mxu0
    %v1518 = vadd.f32 %v1448, %v1517
    %v1519 = vpop.f32.mrb[0].mxu0
    %1520 = vdwg.mxu0
    %v1521 = vmul.f32 %v1518, 0.003125
    %v1522 = vmul.f32 %v1521, %v1521
    %v1524 = vrot.slane %v1522, 7
    %v1526 = vsub.f32 %v1521, %v1524
    %v1527 = vld [vmem:[#allocation15] sm:$0x1]
    %v1528 = vadd.f32 %v1526, 1e-05
    %v1529 = vrsqrt.pop %v1528
    %v1532 = vunpack.c.l.s4 1966171168
    %v1533 = vunpack.c.0.s8 %v1532
    %v1534 = vlaneseq
    %v1535 = vshrl.u32 %v1534, 7
    %v1536 = vsub.s32 %v1533, %v1535
    %v1537 = vrot.slane %v1529, %v1536
    %v1538 = vcombine.high %v1537, %v1537
    %v1540 = vunpack.c.l.s4 1966171168
    %v1541 = vunpack.c.0.s8 %v1540
    %v1542 = vlaneseq
    %v1543 = vshrl.u32 %v1542, 7
    %v1544 = vsub.s32 %v1541, %v1543
    %v1545 = vrot.slane %v1538, %v1544
    %v1547 = vmul.f32 %v1527, %v1545
    %v1548 = vld [vmem:[#allocation16] sm:$0x1]
    %v1549 = vmul.f32 %v1521, %v1547
    %v1550 = vsub.f32 %v1548, %v1549
    %v1552 = vlaneseq
    %v1553 = vshrl.u32 %v1552, 7
    %v1554 = vsub.s32 0, %v1553
    %v1555 = vrot.slane %v1550, %v1554
    %v1557 = vsel %vm1334, %v1547, %v1555
    %v1558 = vld [vmem:[#allocation10] sm:$0xff]
    %v1559 = vld [vmem:[#allocation10 + $0x8] sm:$0xff]
    %v1560 = vld [vmem:[#allocation10 + $0x10] sm:$0xff]
    %v1561 = vld [vmem:[#allocation10 + $0x18] sm:$0xff]
    %v1562 = vld [vmem:[#allocation10 + $0x20] sm:$0xff]
    %v1563 = vld [vmem:[#allocation10 + $0x28] sm:$0xff]
    %vm1564 = vcmask 130048
    %v1566 = vsel %vm1564, %v1557, 0
    %1568 = vmatprep.subr.mxu0 %v1559
    %1569 = vmatpush1.msra.mxu0 %v1558
    %1570 = vmatprep.subr.mxu0 %v1562
    %1571 = vmatpush1.msra.mxu0 %v1561
    %1572 = vmatprep.subr.mxu0 0.0
    %1573 = vmatpush1.msra.mxu0 0.0
    %1574 = vmatprep.subr.mxu0 0.0
    %1575 = vmatpush1.msra.mxu0 0.0
    %1576 = vmatprep.subr.mxu0 0.0
    %1577 = vmatpush1.msra.mxu0 0.0
    %1578 = vmatprep.subr.mxu0 0.0
    %1579 = vmatpush1.msra.mxu0 0.0
    %1580 = vmatprep.subr.mxu0 0.0
    %1581 = vmatpush1.msra.mxu0 0.0
    %1582 = vmatprep.subr.mxu0 0.0
    %1583 = vmatpush1.msra.mxu0 0.0
    %1584 = vmatprep.subr.mxu0 0.0
    %1585 = vmatpush1.msra.mxu0 0.0
    %1586 = vmatprep.subr.mxu0 0.0
    %1587 = vmatpush1.msra.mxu0 0.0
    %1588 = vmatprep.subr.mxu0 0.0
    %1589 = vmatpush1.msra.mxu0 0.0
    %1590 = vmatprep.subr.mxu0 0.0
    %1591 = vmatpush1.msra.mxu0 0.0
    %1592 = vmatprep.subr.mxu0 0.0
    %1593 = vmatpush1.msra.mxu0 0.0
    %1594 = vmatprep.subr.mxu0 0.0
    %1595 = vmatpush1.msra.mxu0 0.0
    %1596 = vmatprep.subr.mxu0 0.0
    %1597 = vmatpush1.msra.mxu0 0.0
    %1598 = vmatprep.subr.mxu0 0.0
    %1599 = vmatpush1.msra.mxu0 0.0
    %1600 = vmatprep.subr.mxu0 0.0
    %1601 = vmatpush1.msra.mxu0 0.0
    %1602 = vmatprep.subr.mxu0 0.0
    %1603 = vmatpush1.msra.mxu0 0.0
    %1604 = vmatprep.subr.mxu0 0.0
    %1605 = vmatpush1.msra.mxu0 0.0
    %1606 = vmatprep.subr.mxu0 0.0
    %1607 = vmatpush1.msra.mxu0 0.0
    %1608 = vmatprep.subr.mxu0 0.0
    %1609 = vmatpush1.msra.mxu0 0.0
    %1610 = vmatprep.subr.mxu0 0.0
    %1611 = vmatpush1.msra.mxu0 0.0
    %1612 = vmatprep.subr.mxu0 0.0
    %1613 = vmatpush1.msra.mxu0 0.0
    %1614 = vmatprep.subr.mxu0 0.0
    %1615 = vmatpush1.msra.mxu0 0.0
    %1616 = vmatprep.subr.mxu0 0.0
    %1617 = vmatpush1.msra.mxu0 0.0
    %1618 = vmatprep.subr.mxu0 0.0
    %1619 = vmatpush1.msra.mxu0 0.0
    %1620 = vmatprep.subr.mxu0 0.0
    %1621 = vmatpush1.msra.mxu0 0.0
    %1622 = vmatprep.subr.mxu0 0.0
    %1623 = vmatpush1.msra.mxu0 0.0
    %1624 = vmatprep.subr.mxu0 0.0
    %1625 = vmatpush1.msra.mxu0 0.0
    %1626 = vmatprep.subr.mxu0 0.0
    %1627 = vmatpush1.msra.mxu0 0.0
    %1628 = vmatprep.subr.mxu0 0.0
    %1629 = vmatpush1.msra.mxu0 0.0
    %1630 = vmatprep.subr.mxu0 0.0
    %1631 = vmatpush1.msra.mxu0 0.0
    %1632 = vmatprep.mubr.f32.mxu0 0.0
    %1633 = vmatmul.mubr.f32.gmra.mrb[0].mxu0 %v1566
    %v1634 = vpop.f32.mrb[0].mxu0
    %v1635 = vadd.f32 0.0, %v1634
    %v1636 = vpop.f32.mrb[0].mxu0
    %v1637 = vadd.f32 0.0, %v1636
    %1638 = vdwg.mxu0
    %1639 = vmatprep.subr.mxu0 0.0
    %1640 = vmatpush1.msra.mxu0 %v1560
    %1641 = vmatprep.subr.mxu0 0.0
    %1642 = vmatpush1.msra.mxu0 %v1563
    %1643 = vmatprep.subr.mxu0 0.0
    %1644 = vmatpush1.msra.mxu0 0.0
    %1645 = vmatprep.subr.mxu0 0.0
    %1646 = vmatpush1.msra.mxu0 0.0
    %1647 = vmatprep.subr.mxu0 0.0
    %1648 = vmatpush1.msra.mxu0 0.0
    %1649 = vmatprep.subr.mxu0 0.0
    %1650 = vmatpush1.msra.mxu0 0.0
    %1651 = vmatprep.subr.mxu0 0.0
    %1652 = vmatpush1.msra.mxu0 0.0
    %1653 = vmatprep.subr.mxu0 0.0
    %1654 = vmatpush1.msra.mxu0 0.0
    %1655 = vmatprep.subr.mxu0 0.0
    %1656 = vmatpush1.msra.mxu0 0.0
    %1657 = vmatprep.subr.mxu0 0.0
    %1658 = vmatpush1.msra.mxu0 0.0
    %1659 = vmatprep.subr.mxu0 0.0
    %1660 = vmatpush1.msra.mxu0 0.0
    %1661 = vmatprep.subr.mxu0 0.0
    %1662 = vmatpush1.msra.mxu0 0.0
    %1663 = vmatprep.subr.mxu0 0.0
    %1664 = vmatpush1.msra.mxu0 0.0
    %1665 = vmatprep.subr.mxu0 0.0
    %1666 = vmatpush1.msra.mxu0 0.0
    %1667 = vmatprep.subr.mxu0 0.0
    %1668 = vmatpush1.msra.mxu0 0.0
    %1669 = vmatprep.subr.mxu0 0.0
    %1670 = vmatpush1.msra.mxu0 0.0
    %1671 = vmatprep.subr.mxu0 0.0
    %1672 = vmatpush1.msra.mxu0 0.0
    %1673 = vmatprep.subr.mxu0 0.0
    %1674 = vmatpush1.msra.mxu0 0.0
    %1675 = vmatprep.subr.mxu0 0.0
    %1676 = vmatpush1.msra.mxu0 0.0
    %1677 = vmatprep.subr.mxu0 0.0
    %1678 = vmatpush1.msra.mxu0 0.0
    %1679 = vmatprep.subr.mxu0 0.0
    %1680 = vmatpush1.msra.mxu0 0.0
    %1681 = vmatprep.subr.mxu0 0.0
    %1682 = vmatpush1.msra.mxu0 0.0
    %1683 = vmatprep.subr.mxu0 0.0
    %1684 = vmatpush1.msra.mxu0 0.0
    %1685 = vmatprep.subr.mxu0 0.0
    %1686 = vmatpush1.msra.mxu0 0.0
    %1687 = vmatprep.subr.mxu0 0.0
    %1688 = vmatpush1.msra.mxu0 0.0
    %1689 = vmatprep.subr.mxu0 0.0
    %1690 = vmatpush1.msra.mxu0 0.0
    %1691 = vmatprep.subr.mxu0 0.0
    %1692 = vmatpush1.msra.mxu0 0.0
    %1693 = vmatprep.subr.mxu0 0.0
    %1694 = vmatpush1.msra.mxu0 0.0
    %1695 = vmatprep.subr.mxu0 0.0
    %1696 = vmatpush1.msra.mxu0 0.0
    %1697 = vmatprep.subr.mxu0 0.0
    %1698 = vmatpush1.msra.mxu0 0.0
    %1699 = vmatprep.subr.mxu0 0.0
    %1700 = vmatpush1.msra.mxu0 0.0
    %1701 = vmatprep.subr.mxu0 0.0
    %1702 = vmatpush1.msra.mxu0 0.0
    %1703 = vmatprep.mubr.f32.mxu0 0.0
    %1704 = vmatmul.mubr.f32.gmra.mrb[0].mxu0 %v1566
    %v1705 = vpop.f32.mrb[0].mxu0
    %v1706 = vadd.f32 0.0, %v1705
    %v1707 = vpop.f32.mrb[0].mxu0
    %1708 = vdwg.mxu0
    %v1709 = vlaneseq
    %v1710 = vshrl.u32 %v1709, 7
    %v1711 = vsub.s32 0, %v1710
    %v1712 = vrot.slane %v1635, %v1711
    %v1713 = vlaneseq
    %v1714 = vshrl.u32 %v1713, 7
    %v1715 = vsub.s32 0, %v1714
    %v1716 = vrot.slane %v1637, %v1715
    %v1717 = vlaneseq
    %v1718 = vshrl.u32 %v1717, 7
    %v1719 = vsub.s32 0, %v1718
    %v1720 = vrot.slane %v1706, %v1719
    %v1721 = vmul.f32 %v1001, %v1712
    %v1722 = vmul.f32 %v1002, %v1716
    %v1723 = vmul.f32 %v1003, %v1720
    %v1724 = vmul.f32 %v1004, %v1712
    %v1725 = vmul.f32 %v1005, %v1716
    %v1726 = vmul.f32 %v1006, %v1720
    %v1727 = vmul.f32 %v1007, %v1712
    %v1728 = vmul.f32 %v1008, %v1716
    %v1729 = vmul.f32 %v1009, %v1720
    %v1730 = vlaneseq
    %v1731 = vshrl.u32 %v1730, 7
    %v1732 = vsub.s32 1, %v1731
    %v1733 = vrot.slane %v1635, %v1732
    %v1734 = vlaneseq
    %v1735 = vshrl.u32 %v1734, 7
    %v1736 = vsub.s32 1, %v1735
    %v1737 = vrot.slane %v1637, %v1736
    %v1738 = vlaneseq
    %v1739 = vshrl.u32 %v1738, 7
    %v1740 = vsub.s32 1, %v1739
    %v1741 = vrot.slane %v1706, %v1740
    %v1742 = vadd.f32 %v1721, %v1733
    %v1743 = vadd.f32 %v1722, %v1737
    %v1744 = vadd.f32 %v1723, %v1741
    %v1745 = vadd.f32 %v1724, %v1733
    %v1746 = vadd.f32 %v1725, %v1737
    %v1747 = vadd.f32 %v1726, %v1741
    %v1748 = vadd.f32 %v1727, %v1733
    %v1749 = vadd.f32 %v1728, %v1737
    %v1750 = vadd.f32 %v1729, %v1741
    %v1751 = vmax.f32 %v1742, 0.0
    %v1752 = vmax.f32 %v1743, 0.0
    %v1753 = vmax.f32 %v1744, 0.0
    %v1754 = vmax.f32 %v1745, 0.0
    %v1755 = vmax.f32 %v1746, 0.0
    %v1756 = vmax.f32 %v1747, 0.0
    %v1757 = vmax.f32 %v1748, 0.0
    %v1758 = vmax.f32 %v1749, 0.0
    %v1759 = vmax.f32 %v1750, 0.0
    %v1760 = vld [vmem:[#allocation12] sm:$0xff]
    %v1761 = vld [vmem:[#allocation12 + $0x8] sm:$0xff]
    %v1762 = vld [vmem:[#allocation12 + $0x10] sm:$0xff]
    %v1763 = vld [vmem:[#allocation12 + $0x18] sm:$0xff]
    %v1764 = vld [vmem:[#allocation12 + $0x20] sm:$0xff]
    %v1765 = vld [vmem:[#allocation12 + $0x28] sm:$0xff]
    %v1766 = vld [vmem:[#allocation12 + $0x30] sm:$0xff]
    %v1767 = vld [vmem:[#allocation12 + $0x38] sm:$0xff]
    %v1768 = vld [vmem:[#allocation12 + $0x40] sm:$0xff]
    %v1769 = vld [vmem:[#allocation12 + $0x48] sm:$0xff]
    %v1770 = vld [vmem:[#allocation12 + $0x50] sm:$0xff]
    %v1771 = vld [vmem:[#allocation12 + $0x58] sm:$0xff]
    %v1772 = vld [vmem:[#allocation12 + $0x60] sm:$0xff]
    %v1773 = vld [vmem:[#allocation12 + $0x68] sm:$0xff]
    %v1774 = vld [vmem:[#allocation12 + $0x70] sm:$0xff]
    %v1775 = vld [vmem:[#allocation12 + $0x78] sm:$0xff]
    %v1776 = vld [vmem:[#allocation12 + $0x80] sm:$0xff]
    %v1777 = vld [vmem:[#allocation12 + $0x88] sm:$0xff]
    %v1778 = vld [vmem:[#allocation12 + $0x90] sm:$0xff]
    %v1779 = vld [vmem:[#allocation12 + $0x98] sm:$0xff]
    %v1780 = vld [vmem:[#allocation12 + $0xa0] sm:$0xff]
    %v1781 = vld [vmem:[#allocation12 + $0xa8] sm:$0xff]
    %v1782 = vld [vmem:[#allocation12 + $0xb0] sm:$0xff]
    %v1783 = vld [vmem:[#allocation12 + $0xb8] sm:$0xff]
    %v1784 = vld [vmem:[#allocation12 + $0xc0] sm:$0xff]
    %v1785 = vld [vmem:[#allocation12 + $0xc8] sm:$0xff]
    %v1786 = vld [vmem:[#allocation12 + $0xd0] sm:$0xff]
    %v1787 = vld [vmem:[#allocation12 + $0xd8] sm:$0xff]
    %v1788 = vld [vmem:[#allocation12 + $0xe0] sm:$0xff]
    %v1789 = vld [vmem:[#allocation12 + $0xe8] sm:$0xff]
    %v1790 = vld [vmem:[#allocation12 + $0xf0] sm:$0xff]
    %v1791 = vld [vmem:[#allocation12 + $0xf8] sm:$0xff]
    %v1792 = vld [vmem:[#allocation12 + $0x100] sm:$0xff]
    %v1793 = vld [vmem:[#allocation12 + $0x108] sm:$0xff]
    %v1794 = vld [vmem:[#allocation12 + $0x110] sm:$0xff]
    %v1795 = vld [vmem:[#allocation12 + $0x118] sm:$0xff]
    %v1796 = vld [vmem:[#allocation12 + $0x120] sm:$0xff]
    %v1797 = vld [vmem:[#allocation12 + $0x128] sm:$0xff]
    %v1798 = vld [vmem:[#allocation12 + $0x130] sm:$0xff]
    %v1799 = vld [vmem:[#allocation12 + $0x138] sm:$0xff]
    %v1800 = vld [vmem:[#allocation12 + $0x140] sm:$0xff]
    %v1801 = vld [vmem:[#allocation12 + $0x148] sm:$0xff]
    %v1802 = vld [vmem:[#allocation12 + $0x150] sm:$0xff]
    %v1803 = vld [vmem:[#allocation12 + $0x158] sm:$0xff]
    %v1804 = vld [vmem:[#allocation12 + $0x160] sm:$0xff]
    %v1805 = vld [vmem:[#allocation12 + $0x168] sm:$0xff]
    %v1806 = vld [vmem:[#allocation12 + $0x170] sm:$0xff]
    %v1807 = vld [vmem:[#allocation12 + $0x178] sm:$0xff]
    %v1808 = vld [vmem:[#allocation12 + $0x180] sm:$0xff]
    %v1809 = vld [vmem:[#allocation12 + $0x188] sm:$0xff]
    %v1810 = vld [vmem:[#allocation12 + $0x190] sm:$0xff]
    %v1811 = vld [vmem:[#allocation12 + $0x198] sm:$0xff]
    %v1812 = vld [vmem:[#allocation12 + $0x1a0] sm:$0xff]
    %v1813 = vld [vmem:[#allocation12 + $0x1a8] sm:$0xff]
    %v1814 = vld [vmem:[#allocation12 + $0x1b0] sm:$0xff]
    %v1815 = vld [vmem:[#allocation12 + $0x1b8] sm:$0xff]
    %v1816 = vld [vmem:[#allocation12 + $0x1c0] sm:$0xff]
    %v1817 = vld [vmem:[#allocation12 + $0x1c8] sm:$0xff]
    %v1818 = vld [vmem:[#allocation12 + $0x1d0] sm:$0xff]
    %v1819 = vld [vmem:[#allocation12 + $0x1d8] sm:$0xff]
    %v1820 = vld [vmem:[#allocation12 + $0x1e0] sm:$0xff]
    %v1821 = vld [vmem:[#allocation12 + $0x1e8] sm:$0xff]
    %v1822 = vld [vmem:[#allocation12 + $0x1f0] sm:$0xff]
    %v1823 = vld [vmem:[#allocation12 + $0x1f8] sm:$0xff]
    %v1824 = vld [vmem:[#allocation12 + $0x200] sm:$0xff]
    %v1825 = vld [vmem:[#allocation12 + $0x208] sm:$0xff]
    %v1826 = vld [vmem:[#allocation12 + $0x210] sm:$0xff]
    %v1827 = vld [vmem:[#allocation12 + $0x218] sm:$0xff]
    %v1828 = vld [vmem:[#allocation12 + $0x220] sm:$0xff]
    %v1829 = vld [vmem:[#allocation12 + $0x228] sm:$0xff]
    %v1830 = vld [vmem:[#allocation12 + $0x230] sm:$0xff]
    %v1831 = vld [vmem:[#allocation12 + $0x238] sm:$0xff]
    %v1832 = vld [vmem:[#allocation12 + $0x240] sm:$0xff]
    %v1833 = vld [vmem:[#allocation12 + $0x248] sm:$0xff]
    %v1834 = vld [vmem:[#allocation12 + $0x250] sm:$0xff]
    %v1835 = vld [vmem:[#allocation12 + $0x258] sm:$0xff]
    %v1836 = vld [vmem:[#allocation12 + $0x260] sm:$0xff]
    %v1837 = vld [vmem:[#allocation12 + $0x268] sm:$0xff]
    %v1838 = vld [vmem:[#allocation12 + $0x270] sm:$0xff]
    %v1839 = vld [vmem:[#allocation12 + $0x278] sm:$0xff]
    %v1841 = vsel %vm423, %v1753, 0
    %v1844 = vsel %vm423, %v1756, 0
    %v1847 = vsel %vm423, %v1759, 0
    %1849 = vmatprep.subr.mxu0 %v1761
    %1850 = vmatpush1.msra.mxu0 %v1760
    %1851 = vmatprep.subr.mxu0 %v1763
    %1852 = vmatpush1.msra.mxu0 %v1762
    %1853 = vmatprep.subr.mxu0 %v1765
    %1854 = vmatpush1.msra.mxu0 %v1764
    %1855 = vmatprep.subr.mxu0 %v1767
    %1856 = vmatpush1.msra.mxu0 %v1766
    %1857 = vmatprep.subr.mxu0 %v1769
    %1858 = vmatpush1.msra.mxu0 %v1768
    %1859 = vmatprep.subr.mxu0 %v1771
    %1860 = vmatpush1.msra.mxu0 %v1770
    %1861 = vmatprep.subr.mxu0 %v1773
    %1862 = vmatpush1.msra.mxu0 %v1772
    %1863 = vmatprep.subr.mxu0 %v1775
    %1864 = vmatpush1.msra.mxu0 %v1774
    %1865 = vmatprep.subr.mxu0 %v1777
    %1866 = vmatpush1.msra.mxu0 %v1776
    %1867 = vmatprep.subr.mxu0 %v1779
    %1868 = vmatpush1.msra.mxu0 %v1778
    %1869 = vmatprep.subr.mxu0 %v1781
    %1870 = vmatpush1.msra.mxu0 %v1780
    %1871 = vmatprep.subr.mxu0 %v1783
    %1872 = vmatpush1.msra.mxu0 %v1782
    %1873 = vmatprep.subr.mxu0 %v1785
    %1874 = vmatpush1.msra.mxu0 %v1784
    %1875 = vmatprep.subr.mxu0 %v1787
    %1876 = vmatpush1.msra.mxu0 %v1786
    %1877 = vmatprep.subr.mxu0 %v1789
    %1878 = vmatpush1.msra.mxu0 %v1788
    %1879 = vmatprep.subr.mxu0 %v1791
    %1880 = vmatpush1.msra.mxu0 %v1790
    %1881 = vmatprep.subr.mxu0 %v1793
    %1882 = vmatpush1.msra.mxu0 %v1792
    %1883 = vmatprep.subr.mxu0 %v1795
    %1884 = vmatpush1.msra.mxu0 %v1794
    %1885 = vmatprep.subr.mxu0 %v1797
    %1886 = vmatpush1.msra.mxu0 %v1796
    %1887 = vmatprep.subr.mxu0 %v1799
    %1888 = vmatpush1.msra.mxu0 %v1798
    %1889 = vmatprep.subr.mxu0 %v1801
    %1890 = vmatpush1.msra.mxu0 %v1800
    %1891 = vmatprep.subr.mxu0 %v1803
    %1892 = vmatpush1.msra.mxu0 %v1802
    %1893 = vmatprep.subr.mxu0 %v1805
    %1894 = vmatpush1.msra.mxu0 %v1804
    %1895 = vmatprep.subr.mxu0 %v1807
    %1896 = vmatpush1.msra.mxu0 %v1806
    %1897 = vmatprep.subr.mxu0 %v1809
    %1898 = vmatpush1.msra.mxu0 %v1808
    %1899 = vmatprep.subr.mxu0 %v1811
    %1900 = vmatpush1.msra.mxu0 %v1810
    %1901 = vmatprep.subr.mxu0 %v1813
    %1902 = vmatpush1.msra.mxu0 %v1812
    %1903 = vmatprep.subr.mxu0 %v1815
    %1904 = vmatpush1.msra.mxu0 %v1814
    %1905 = vmatprep.subr.mxu0 %v1817
    %1906 = vmatpush1.msra.mxu0 %v1816
    %1907 = vmatprep.subr.mxu0 %v1819
    %1908 = vmatpush1.msra.mxu0 %v1818
    %1909 = vmatprep.subr.mxu0 %v1821
    %1910 = vmatpush1.msra.mxu0 %v1820
    %1911 = vmatprep.subr.mxu0 %v1823
    %1912 = vmatpush1.msra.mxu0 %v1822
    %1913 = vmatprep.mubr.f32.mxu0 %v1752
    %1914 = vmatmul.mubr.f32.gmra.mrb[0].mxu0 %v1751
    %v1915 = vpop.f32.mrb[0].mxu0
    %v1916 = vadd.f32 0.0, %v1915
    %v1917 = vpop.f32.mrb[0].mxu0
    %v1918 = vadd.f32 0.0, %v1917
    %1919 = vmatprep.mubr.f32.mxu0 %v1755
    %1920 = vmatmul.mubr.f32.gmra.mrb[0].mxu0 %v1754
    %v1921 = vpop.f32.mrb[0].mxu0
    %v1922 = vadd.f32 0.0, %v1921
    %v1923 = vpop.f32.mrb[0].mxu0
    %v1924 = vadd.f32 0.0, %v1923
    %1925 = vmatprep.mubr.f32.mxu0 %v1758
    %1926 = vmatmul.mubr.f32.gmra.mrb[0].mxu0 %v1757
    %v1927 = vpop.f32.mrb[0].mxu0
    %v1928 = vadd.f32 0.0, %v1927
    %v1929 = vpop.f32.mrb[0].mxu0
    %v1930 = vadd.f32 0.0, %v1929
    %1931 = vdwg.mxu0
    %1932 = vmatprep.subr.mxu0 %v1825
    %1933 = vmatpush1.msra.mxu0 %v1824
    %1934 = vmatprep.subr.mxu0 %v1827
    %1935 = vmatpush1.msra.mxu0 %v1826
    %1936 = vmatprep.subr.mxu0 %v1829
    %1937 = vmatpush1.msra.mxu0 %v1828
    %1938 = vmatprep.subr.mxu0 %v1831
    %1939 = vmatpush1.msra.mxu0 %v1830
    %1940 = vmatprep.subr.mxu0 %v1833
    %1941 = vmatpush1.msra.mxu0 %v1832
    %1942 = vmatprep.subr.mxu0 %v1835
    %1943 = vmatpush1.msra.mxu0 %v1834
    %1944 = vmatprep.subr.mxu0 %v1837
    %1945 = vmatpush1.msra.mxu0 %v1836
    %1946 = vmatprep.subr.mxu0 %v1839
    %1947 = vmatpush1.msra.mxu0 %v1838
    %1948 = vmatprep.subr.mxu0 0.0
    %1949 = vmatpush1.msra.mxu0 0.0
    %1950 = vmatprep.subr.mxu0 0.0
    %1951 = vmatpush1.msra.mxu0 0.0
    %1952 = vmatprep.subr.mxu0 0.0
    %1953 = vmatpush1.msra.mxu0 0.0
    %1954 = vmatprep.subr.mxu0 0.0
    %1955 = vmatpush1.msra.mxu0 0.0
    %1956 = vmatprep.subr.mxu0 0.0
    %1957 = vmatpush1.msra.mxu0 0.0
    %1958 = vmatprep.subr.mxu0 0.0
    %1959 = vmatpush1.msra.mxu0 0.0
    %1960 = vmatprep.subr.mxu0 0.0
    %1961 = vmatpush1.msra.mxu0 0.0
    %1962 = vmatprep.subr.mxu0 0.0
    %1963 = vmatpush1.msra.mxu0 0.0
    %1964 = vmatprep.subr.mxu0 0.0
    %1965 = vmatpush1.msra.mxu0 0.0
    %1966 = vmatprep.subr.mxu0 0.0
    %1967 = vmatpush1.msra.mxu0 0.0
    %1968 = vmatprep.subr.mxu0 0.0
    %1969 = vmatpush1.msra.mxu0 0.0
    %1970 = vmatprep.subr.mxu0 0.0
    %1971 = vmatpush1.msra.mxu0 0.0
    %1972 = vmatprep.subr.mxu0 0.0
    %1973 = vmatpush1.msra.mxu0 0.0
    %1974 = vmatprep.subr.mxu0 0.0
    %1975 = vmatpush1.msra.mxu0 0.0
    %1976 = vmatprep.subr.mxu0 0.0
    %1977 = vmatpush1.msra.mxu0 0.0
    %1978 = vmatprep.subr.mxu0 0.0
    %1979 = vmatpush1.msra.mxu0 0.0
    %1980 = vmatprep.subr.mxu0 0.0
    %1981 = vmatpush1.msra.mxu0 0.0
    %1982 = vmatprep.subr.mxu0 0.0
    %1983 = vmatpush1.msra.mxu0 0.0
    %1984 = vmatprep.subr.mxu0 0.0
    %1985 = vmatpush1.msra.mxu0 0.0
    %1986 = vmatprep.subr.mxu0 0.0
    %1987 = vmatpush1.msra.mxu0 0.0
    %1988 = vmatprep.subr.mxu0 0.0
    %1989 = vmatpush1.msra.mxu0 0.0
    %1990 = vmatprep.subr.mxu0 0.0
    %1991 = vmatpush1.msra.mxu0 0.0
    %1992 = vmatprep.subr.mxu0 0.0
    %1993 = vmatpush1.msra.mxu0 0.0
    %1994 = vmatprep.subr.mxu0 0.0
    %1995 = vmatpush1.msra.mxu0 0.0
    %1996 = vmatprep.mubr.f32.mxu0 0.0
    %1997 = vmatmul.mubr.f32.gmra.mrb[0].mxu0 %v1841
    %v1998 = vpop.f32.mrb[0].mxu0
    %v1999 = vadd.f32 %v1916, %v1998
    %v2000 = vpop.f32.mrb[0].mxu0
    %v2001 = vadd.f32 %v1918, %v2000
    %2002 = vmatprep.mubr.f32.mxu0 0.0
    %2003 = vmatmul.mubr.f32.gmra.mrb[0].mxu0 %v1844
    %v2004 = vpop.f32.mrb[0].mxu0
    %v2005 = vadd.f32 %v1922, %v2004
    %v2006 = vpop.f32.mrb[0].mxu0
    %v2007 = vadd.f32 %v1924, %v2006
    %2008 = vmatprep.mubr.f32.mxu0 0.0
    %2009 = vmatmul.mubr.f32.gmra.mrb[0].mxu0 %v1847
    %v2010 = vpop.f32.mrb[0].mxu0
    %v2011 = vadd.f32 %v1928, %v2010
    %v2012 = vpop.f32.mrb[0].mxu0
    %v2013 = vadd.f32 %v1930, %v2012
    %2014 = vdwg.mxu0
    %v2015 = vld [vmem:[#allocation13] sm:$0xff]
    %v2016 = vld [vmem:[#allocation13 + $0x8] sm:$0xff]
    %v2017 = vld [vmem:[#allocation13 + $0x10] sm:$0xff]
    %v2018 = vld [vmem:[#allocation13 + $0x18] sm:$0xff]
    %v2019 = vld [vmem:[#allocation13 + $0x20] sm:$0xff]
    %v2020 = vld [vmem:[#allocation13 + $0x28] sm:$0xff]
    %v2021 = vld [vmem:[#allocation13 + $0x30] sm:$0xff]
    %v2022 = vld [vmem:[#allocation13 + $0x38] sm:$0xff]
    %v2023 = vld [vmem:[#allocation13 + $0x40] sm:$0xff]
    %v2024 = vld [vmem:[#allocation13 + $0x48] sm:$0xff]
    %v2025 = vld [vmem:[#allocation13 + $0x50] sm:$0xff]
    %v2026 = vld [vmem:[#allocation13 + $0x58] sm:$0xff]
    %v2027 = vld [vmem:[#allocation13 + $0x60] sm:$0xff]
    %v2028 = vld [vmem:[#allocation13 + $0x68] sm:$0xff]
    %v2029 = vld [vmem:[#allocation13 + $0x70] sm:$0xff]
    %v2030 = vld [vmem:[#allocation13 + $0x78] sm:$0xff]
    %v2031 = vld [vmem:[#allocation13 + $0x80] sm:$0xff]
    %v2032 = vld [vmem:[#allocation13 + $0x88] sm:$0xff]
    %v2033 = vld [vmem:[#allocation13 + $0x90] sm:$0xff]
    %v2034 = vld [vmem:[#allocation13 + $0x98] sm:$0xff]
    %v2035 = vld [vmem:[#allocation13 + $0xa0] sm:$0xff]
    %v2036 = vld [vmem:[#allocation13 + $0xa8] sm:$0xff]
    %v2037 = vld [vmem:[#allocation13 + $0xb0] sm:$0xff]
    %v2038 = vld [vmem:[#allocation13 + $0xb8] sm:$0xff]
    %v2039 = vld [vmem:[#allocation13 + $0xc0] sm:$0xff]
    %v2040 = vld [vmem:[#allocation13 + $0xc8] sm:$0xff]
    %v2041 = vld [vmem:[#allocation13 + $0xd0] sm:$0xff]
    %v2042 = vld [vmem:[#allocation13 + $0xd8] sm:$0xff]
    %v2043 = vld [vmem:[#allocation13 + $0xe0] sm:$0xff]
    %v2044 = vld [vmem:[#allocation13 + $0xe8] sm:$0xff]
    %v2045 = vld [vmem:[#allocation13 + $0xf0] sm:$0xff]
    %v2046 = vld [vmem:[#allocation13 + $0xf8] sm:$0xff]
    %v2047 = vld [vmem:[#allocation13 + $0x100] sm:$0xff]
    %v2048 = vld [vmem:[#allocation13 + $0x108] sm:$0xff]
    %v2049 = vld [vmem:[#allocation13 + $0x110] sm:$0xff]
    %v2050 = vld [vmem:[#allocation13 + $0x118] sm:$0xff]
    %v2051 = vld [vmem:[#allocation13 + $0x120] sm:$0xff]
    %v2052 = vld [vmem:[#allocation13 + $0x128] sm:$0xff]
    %v2053 = vld [vmem:[#allocation13 + $0x130] sm:$0xff]
    %v2054 = vld [vmem:[#allocation13 + $0x138] sm:$0xff]
    %v2055 = vld [vmem:[#allocation13 + $0x140] sm:$0xff]
    %v2056 = vld [vmem:[#allocation13 + $0x148] sm:$0xff]
    %v2057 = vld [vmem:[#allocation13 + $0x150] sm:$0xff]
    %v2058 = vld [vmem:[#allocation13 + $0x158] sm:$0xff]
    %v2059 = vld [vmem:[#allocation13 + $0x160] sm:$0xff]
    %v2060 = vld [vmem:[#allocation13 + $0x168] sm:$0xff]
    %v2061 = vld [vmem:[#allocation13 + $0x170] sm:$0xff]
    %v2062 = vld [vmem:[#allocation13 + $0x178] sm:$0xff]
    %v2063 = vld [vmem:[#allocation13 + $0x180] sm:$0xff]
    %v2064 = vld [vmem:[#allocation13 + $0x188] sm:$0xff]
    %v2065 = vld [vmem:[#allocation13 + $0x190] sm:$0xff]
    %v2066 = vld [vmem:[#allocation13 + $0x198] sm:$0xff]
    %v2067 = vld [vmem:[#allocation13 + $0x1a0] sm:$0xff]
    %v2068 = vld [vmem:[#allocation13 + $0x1a8] sm:$0xff]
    %v2069 = vld [vmem:[#allocation13 + $0x1b0] sm:$0xff]
    %v2070 = vld [vmem:[#allocation13 + $0x1b8] sm:$0xff]
    %v2071 = vld [vmem:[#allocation13 + $0x1c0] sm:$0xff]
    %v2072 = vld [vmem:[#allocation13 + $0x1c8] sm:$0xff]
    %v2073 = vld [vmem:[#allocation13 + $0x1d0] sm:$0xff]
    %v2074 = vld [vmem:[#allocation13 + $0x1d8] sm:$0xff]
    %v2075 = vld [vmem:[#allocation13 + $0x1e0] sm:$0xff]
    %v2076 = vld [vmem:[#allocation13 + $0x1e8] sm:$0xff]
    %v2077 = vld [vmem:[#allocation13 + $0x1f0] sm:$0xff]
    %v2078 = vld [vmem:[#allocation13 + $0x1f8] sm:$0xff]
    %v2079 = vld [vmem:[#allocation13 + $0x200] sm:$0xff]
    %v2080 = vld [vmem:[#allocation13 + $0x208] sm:$0xff]
    %v2081 = vld [vmem:[#allocation13 + $0x210] sm:$0xff]
    %v2082 = vld [vmem:[#allocation13 + $0x218] sm:$0xff]
    %v2083 = vld [vmem:[#allocation13 + $0x220] sm:$0xff]
    %v2084 = vld [vmem:[#allocation13 + $0x228] sm:$0xff]
    %v2085 = vld [vmem:[#allocation13 + $0x230] sm:$0xff]
    %v2086 = vld [vmem:[#allocation13 + $0x238] sm:$0xff]
    %v2087 = vld [vmem:[#allocation13 + $0x240] sm:$0xff]
    %v2088 = vld [vmem:[#allocation13 + $0x248] sm:$0xff]
    %v2089 = vld [vmem:[#allocation13 + $0x250] sm:$0xff]
    %v2090 = vld [vmem:[#allocation13 + $0x258] sm:$0xff]
    %v2091 = vld [vmem:[#allocation13 + $0x260] sm:$0xff]
    %v2092 = vld [vmem:[#allocation13 + $0x268] sm:$0xff]
    %v2093 = vld [vmem:[#allocation13 + $0x270] sm:$0xff]
    %v2094 = vld [vmem:[#allocation13 + $0x278] sm:$0xff]
    %2095 = vmatprep.subr.mxu0 %v2016
    %2096 = vmatpush1.msra.mxu0 %v2015
    %2097 = vmatprep.subr.mxu0 %v2018
    %2098 = vmatpush1.msra.mxu0 %v2017
    %2099 = vmatprep.subr.mxu0 %v2020
    %2100 = vmatpush1.msra.mxu0 %v2019
    %2101 = vmatprep.subr.mxu0 %v2022
    %2102 = vmatpush1.msra.mxu0 %v2021
    %2103 = vmatprep.subr.mxu0 %v2024
    %2104 = vmatpush1.msra.mxu0 %v2023
    %2105 = vmatprep.subr.mxu0 %v2026
    %2106 = vmatpush1.msra.mxu0 %v2025
    %2107 = vmatprep.subr.mxu0 %v2028
    %2108 = vmatpush1.msra.mxu0 %v2027
    %2109 = vmatprep.subr.mxu0 %v2030
    %2110 = vmatpush1.msra.mxu0 %v2029
    %2111 = vmatprep.subr.mxu0 %v2032
    %2112 = vmatpush1.msra.mxu0 %v2031
    %2113 = vmatprep.subr.mxu0 %v2034
    %2114 = vmatpush1.msra.mxu0 %v2033
    %2115 = vmatprep.subr.mxu0 %v2036
    %2116 = vmatpush1.msra.mxu0 %v2035
    %2117 = vmatprep.subr.mxu0 %v2038
    %2118 = vmatpush1.msra.mxu0 %v2037
    %2119 = vmatprep.subr.mxu0 %v2040
    %2120 = vmatpush1.msra.mxu0 %v2039
    %2121 = vmatprep.subr.mxu0 %v2042
    %2122 = vmatpush1.msra.mxu0 %v2041
    %2123 = vmatprep.subr.mxu0 %v2044
    %2124 = vmatpush1.msra.mxu0 %v2043
    %2125 = vmatprep.subr.mxu0 %v2046
    %2126 = vmatpush1.msra.mxu0 %v2045
    %2127 = vmatprep.subr.mxu0 %v2048
    %2128 = vmatpush1.msra.mxu0 %v2047
    %2129 = vmatprep.subr.mxu0 %v2050
    %2130 = vmatpush1.msra.mxu0 %v2049
    %2131 = vmatprep.subr.mxu0 %v2052
    %2132 = vmatpush1.msra.mxu0 %v2051
    %2133 = vmatprep.subr.mxu0 %v2054
    %2134 = vmatpush1.msra.mxu0 %v2053
    %2135 = vmatprep.subr.mxu0 %v2056
    %2136 = vmatpush1.msra.mxu0 %v2055
    %2137 = vmatprep.subr.mxu0 %v2058
    %2138 = vmatpush1.msra.mxu0 %v2057
    %2139 = vmatprep.subr.mxu0 %v2060
    %2140 = vmatpush1.msra.mxu0 %v2059
    %2141 = vmatprep.subr.mxu0 %v2062
    %2142 = vmatpush1.msra.mxu0 %v2061
    %2143 = vmatprep.subr.mxu0 %v2064
    %2144 = vmatpush1.msra.mxu0 %v2063
    %2145 = vmatprep.subr.mxu0 %v2066
    %2146 = vmatpush1.msra.mxu0 %v2065
    %2147 = vmatprep.subr.mxu0 %v2068
    %2148 = vmatpush1.msra.mxu0 %v2067
    %2149 = vmatprep.subr.mxu0 %v2070
    %2150 = vmatpush1.msra.mxu0 %v2069
    %2151 = vmatprep.subr.mxu0 %v2072
    %2152 = vmatpush1.msra.mxu0 %v2071
    %2153 = vmatprep.subr.mxu0 %v2074
    %2154 = vmatpush1.msra.mxu0 %v2073
    %2155 = vmatprep.subr.mxu0 %v2076
    %2156 = vmatpush1.msra.mxu0 %v2075
    %2157 = vmatprep.subr.mxu0 %v2078
    %2158 = vmatpush1.msra.mxu0 %v2077
    %2159 = vmatprep.mubr.f32.mxu0 %v1752
    %2160 = vmatmul.mubr.f32.gmra.mrb[0].mxu0 %v1751
    %v2161 = vpop.f32.mrb[0].mxu0
    %v2162 = vadd.f32 0.0, %v2161
    %v2163 = vpop.f32.mrb[0].mxu0
    %v2164 = vadd.f32 0.0, %v2163
    %2165 = vmatprep.mubr.f32.mxu0 %v1755
    %2166 = vmatmul.mubr.f32.gmra.mrb[0].mxu0 %v1754
    %v2167 = vpop.f32.mrb[0].mxu0
    %v2168 = vadd.f32 0.0, %v2167
    %v2169 = vpop.f32.mrb[0].mxu0
    %v2170 = vadd.f32 0.0, %v2169
    %2171 = vmatprep.mubr.f32.mxu0 %v1758
    %2172 = vmatmul.mubr.f32.gmra.mrb[0].mxu0 %v1757
    %v2173 = vpop.f32.mrb[0].mxu0
    %v2174 = vadd.f32 0.0, %v2173
    %v2175 = vpop.f32.mrb[0].mxu0
    %v2176 = vadd.f32 0.0, %v2175
    %2177 = vdwg.mxu0
    %2178 = vmatprep.subr.mxu0 %v2080
    %2179 = vmatpush1.msra.mxu0 %v2079
    %2180 = vmatprep.subr.mxu0 %v2082
    %2181 = vmatpush1.msra.mxu0 %v2081
    %2182 = vmatprep.subr.mxu0 %v2084
    %2183 = vmatpush1.msra.mxu0 %v2083
    %2184 = vmatprep.subr.mxu0 %v2086
    %2185 = vmatpush1.msra.mxu0 %v2085
    %2186 = vmatprep.subr.mxu0 %v2088
    %2187 = vmatpush1.msra.mxu0 %v2087
    %2188 = vmatprep.subr.mxu0 %v2090
    %2189 = vmatpush1.msra.mxu0 %v2089
    %2190 = vmatprep.subr.mxu0 %v2092
    %2191 = vmatpush1.msra.mxu0 %v2091
    %2192 = vmatprep.subr.mxu0 %v2094
    %2193 = vmatpush1.msra.mxu0 %v2093
    %2194 = vmatprep.subr.mxu0 0.0
    %2195 = vmatpush1.msra.mxu0 0.0
    %2196 = vmatprep.subr.mxu0 0.0
    %2197 = vmatpush1.msra.mxu0 0.0
    %2198 = vmatprep.subr.mxu0 0.0
    %2199 = vmatpush1.msra.mxu0 0.0
    %2200 = vmatprep.subr.mxu0 0.0
    %2201 = vmatpush1.msra.mxu0 0.0
    %2202 = vmatprep.subr.mxu0 0.0
    %2203 = vmatpush1.msra.mxu0 0.0
    %2204 = vmatprep.subr.mxu0 0.0
    %2205 = vmatpush1.msra.mxu0 0.0
    %2206 = vmatprep.subr.mxu0 0.0
    %2207 = vmatpush1.msra.mxu0 0.0
    %2208 = vmatprep.subr.mxu0 0.0
    %2209 = vmatpush1.msra.mxu0 0.0
    %2210 = vmatprep.subr.mxu0 0.0
    %2211 = vmatpush1.msra.mxu0 0.0
    %2212 = vmatprep.subr.mxu0 0.0
    %2213 = vmatpush1.msra.mxu0 0.0
    %2214 = vmatprep.subr.mxu0 0.0
    %2215 = vmatpush1.msra.mxu0 0.0
    %2216 = vmatprep.subr.mxu0 0.0
    %2217 = vmatpush1.msra.mxu0 0.0
    %2218 = vmatprep.subr.mxu0 0.0
    %2219 = vmatpush1.msra.mxu0 0.0
    %2220 = vmatprep.subr.mxu0 0.0
    %2221 = vmatpush1.msra.mxu0 0.0
    %2222 = vmatprep.subr.mxu0 0.0
    %2223 = vmatpush1.msra.mxu0 0.0
    %2224 = vmatprep.subr.mxu0 0.0
    %2225 = vmatpush1.msra.mxu0 0.0
    %2226 = vmatprep.subr.mxu0 0.0
    %2227 = vmatpush1.msra.mxu0 0.0
    %2228 = vmatprep.subr.mxu0 0.0
    %2229 = vmatpush1.msra.mxu0 0.0
    %2230 = vmatprep.subr.mxu0 0.0
    %2231 = vmatpush1.msra.mxu0 0.0
    %2232 = vmatprep.subr.mxu0 0.0
    %2233 = vmatpush1.msra.mxu0 0.0
    %2234 = vmatprep.subr.mxu0 0.0
    %2235 = vmatpush1.msra.mxu0 0.0
    %2236 = vmatprep.subr.mxu0 0.0
    %2237 = vmatpush1.msra.mxu0 0.0
    %2238 = vmatprep.subr.mxu0 0.0
    %2239 = vmatpush1.msra.mxu0 0.0
    %2240 = vmatprep.subr.mxu0 0.0
    %2241 = vmatpush1.msra.mxu0 0.0
    %2242 = vmatprep.mubr.f32.mxu0 0.0
    %2243 = vmatmul.mubr.f32.gmra.mrb[0].mxu0 %v1841
    %v2244 = vpop.f32.mrb[0].mxu0
    %v2245 = vadd.f32 %v2162, %v2244
    %v2246 = vpop.f32.mrb[0].mxu0
    %v2247 = vadd.f32 %v2164, %v2246
    %2248 = vmatprep.mubr.f32.mxu0 0.0
    %2249 = vmatmul.mubr.f32.gmra.mrb[0].mxu0 %v1844
    %v2250 = vpop.f32.mrb[0].mxu0
    %v2251 = vadd.f32 %v2168, %v2250
    %v2252 = vpop.f32.mrb[0].mxu0
    %v2253 = vadd.f32 %v2170, %v2252
    %2254 = vmatprep.mubr.f32.mxu0 0.0
    %2255 = vmatmul.mubr.f32.gmra.mrb[0].mxu0 %v1847
    %v2256 = vpop.f32.mrb[0].mxu0
    %v2257 = vadd.f32 %v2174, %v2256
    %v2258 = vpop.f32.mrb[0].mxu0
    %v2259 = vadd.f32 %v2176, %v2258
    %2260 = vdwg.mxu0
    %v2261 = vmax.f32 %v1999, %v2245
    %v2262 = vmax.f32 %v2001, %v2247
    %v2263 = vmax.f32 %v2005, %v2251
    %v2264 = vmax.f32 %v2007, %v2253
    %v2265 = vmax.f32 %v2011, %v2257
    %v2266 = vmax.f32 %v2013, %v2259
    %v2269 = vrot.slane %v2261, 7
    %v2270 = vrot.slane %v2262, 7
    %v2273 = vsel %vm1334, 0.0, %v2269
    %v2274 = vsel %vm1334, 0.0, %v2270
    %v2275 = vsel %vm1334, %v2269, 0.0
    %v2276 = vsel %vm1334, %v2270, 0.0
    %v2279 = vrot.slane %v2273, 1
    %v2280 = vrot.slane %v2274, 1
    %v2283 = vmax.f32 %v2273, %v2279
    %v2284 = vmax.f32 %v2274, %v2280
    %v2287 = vrot.slane %v2275, 1
    %v2288 = vrot.slane %v2276, 1
    %v2291 = vmax.f32 %v2275, %v2287
    %v2292 = vmax.f32 %v2276, %v2288
    %v2295 = vrot.slane %v2283, 1
    %v2296 = vrot.slane %v2284, 1
    %v2299 = vrot.slane %v2283, 2
    %v2300 = vrot.slane %v2284, 2
    %v2303 = vrot.slane %v2283, 3
    %v2304 = vrot.slane %v2284, 3
    %v2309 = vrot.slane %v2291, 4
    %v2310 = vrot.slane %v2292, 4
    %v2313 = vsel %vm1334, %v2283, %v2295
    %v2314 = vsel %vm1334, %v2284, %v2296
    %v2315 = vsel %vm1015, %v2313, %v2299
    %v2316 = vsel %vm1015, %v2314, %v2300
    %vm2317 = vcmask 1042432
    %v2318 = vsel %vm2317, %v2315, %v2303
    %v2319 = vsel %vm2317, %v2316, %v2304
    %vm2320 = vcmask 1043456
    %v2321 = vsel %vm2320, %v2318, %v2309
    %v2322 = vsel %vm2320, %v2319, %v2310
    %v2325 = vrot.slane %v2321, 7
    %v2326 = vrot.slane %v2322, 7
    %2329 = vst [vmem:[#allocation2] sm:$0x3e] %v2325
    %vm2330 = vcmask 390145
    %2331 = vst.msk [vmem:[#allocation2 + $0x8] sm:$0x3e] %vm2330, %v2326
    %vm2336 = vcmask 1046528
    %v2337 = vrot.slane %v2263, 1
    %v2338 = vrot.slane %v2265, 1
    %v2339 = vsel %vm2336, %v2337, %v2338
    %v2340 = vrot.slane %v2264, 1
    %v2341 = vrot.slane %v2266, 1
    %v2342 = vsel %vm2336, %v2340, %v2341
    %v2347 = vsel %vm1334, 0.0, %v2339
    %v2348 = vsel %vm1334, 0.0, %v2342
    %v2349 = vsel %vm1334, %v2338, 0.0
    %v2350 = vsel %vm1334, %v2341, 0.0
    %v2353 = vrot.slane %v2347, 1
    %v2354 = vrot.slane %v2348, 1
    %v2357 = vmax.f32 %v2347, %v2353
    %v2358 = vmax.f32 %v2348, %v2354
    %v2361 = vrot.slane %v2349, 1
    %v2362 = vrot.slane %v2350, 1
    %v2365 = vmax.f32 %v2349, %v2361
    %v2366 = vmax.f32 %v2350, %v2362
    %v2369 = vrot.slane %v2357, 1
    %v2370 = vrot.slane %v2358, 1
    %v2373 = vrot.slane %v2357, 2
    %v2374 = vrot.slane %v2358, 2
    %v2377 = vrot.slane %v2357, 3
    %v2378 = vrot.slane %v2358, 3
    %v2383 = vrot.slane %v2365, 4
    %v2384 = vrot.slane %v2366, 4
    %v2387 = vsel %vm1334, %v2357, %v2369
    %v2388 = vsel %vm1334, %v2358, %v2370
    %v2389 = vsel %vm1015, %v2387, %v2373
    %v2390 = vsel %vm1015, %v2388, %v2374
    %v2391 = vsel %vm2317, %v2389, %v2377
    %v2392 = vsel %vm2317, %v2390, %v2378
    %v2393 = vsel %vm2320, %v2391, %v2383
    %v2394 = vsel %vm2320, %v2392, %v2384
    %2395 = vst [vmem:[#allocation2 + $0x10] sm:$0x1f] %v2393
    %vm2396 = vcmask 389120
    %2397 = vst.msk [vmem:[#allocation2 + $0x18] sm:$0x1f] %vm2396, %v2394
    %v2398 = vld [vmem:[#allocation2] sm:$0xff]
    %v2399 = vld [vmem:[#allocation2 + $0x8] sm:$0xff]
    %v2400 = vld [vmem:[#allocation2 + $0x10] sm:$0xf]
    %v2401 = vld [vmem:[#allocation2 + $0x18] sm:$0xf]
    %v2402 = vld [vmem:[#allocation19] sm:$0xff]
    %v2403 = vld [vmem:[#allocation19 + $0x8] sm:$0xff]
    %v2404 = vld [vmem:[#allocation19 + $0x10] sm:$0xff]
    %v2405 = vld [vmem:[#allocation19 + $0x18] sm:$0xff]
    %v2406 = vld [vmem:[#allocation19 + $0x20] sm:$0xff]
    %v2407 = vld [vmem:[#allocation19 + $0x28] sm:$0xff]
    %v2408 = vld [vmem:[#allocation19 + $0x30] sm:$0xff]
    %v2409 = vld [vmem:[#allocation19 + $0x38] sm:$0xff]
    %v2410 = vld [vmem:[#allocation19 + $0x40] sm:$0xff]
    %v2411 = vld [vmem:[#allocation19 + $0x48] sm:$0xff]
    %v2412 = vld [vmem:[#allocation19 + $0x50] sm:$0xff]
    %v2413 = vld [vmem:[#allocation19 + $0x58] sm:$0xff]
    %v2414 = vld [vmem:[#allocation19 + $0x60] sm:$0xff]
    %v2415 = vld [vmem:[#allocation19 + $0x68] sm:$0xff]
    %v2416 = vld [vmem:[#allocation19 + $0x70] sm:$0xff]
    %v2417 = vld [vmem:[#allocation19 + $0x78] sm:$0xff]
    %v2418 = vld [vmem:[#allocation19 + $0x80] sm:$0xff]
    %v2419 = vld [vmem:[#allocation19 + $0x88] sm:$0xff]
    %v2420 = vld [vmem:[#allocation19 + $0x90] sm:$0xff]
    %v2421 = vld [vmem:[#allocation19 + $0x98] sm:$0xff]
    %v2422 = vld [vmem:[#allocation19 + $0xa0] sm:$0xff]
    %v2423 = vld [vmem:[#allocation19 + $0xa8] sm:$0xff]
    %v2424 = vld [vmem:[#allocation19 + $0xb0] sm:$0xff]
    %v2425 = vld [vmem:[#allocation19 + $0xb8] sm:$0xff]
    %v2426 = vld [vmem:[#allocation19 + $0xc0] sm:$0xff]
    %v2427 = vld [vmem:[#allocation19 + $0xc8] sm:$0xff]
    %v2428 = vld [vmem:[#allocation19 + $0xd0] sm:$0xff]
    %v2429 = vld [vmem:[#allocation19 + $0xd8] sm:$0xff]
    %v2430 = vld [vmem:[#allocation19 + $0xe0] sm:$0xff]
    %v2431 = vld [vmem:[#allocation19 + $0xe8] sm:$0xff]
    %v2432 = vld [vmem:[#allocation19 + $0xf0] sm:$0xff]
    %v2433 = vld [vmem:[#allocation19 + $0xf8] sm:$0xff]
    %v2434 = vld [vmem:[#allocation19 + $0x100] sm:$0xff]
    %v2435 = vld [vmem:[#allocation19 + $0x108] sm:$0xff]
    %v2436 = vld [vmem:[#allocation19 + $0x110] sm:$0xff]
    %v2437 = vld [vmem:[#allocation19 + $0x118] sm:$0xff]
    %v2438 = vld [vmem:[#allocation19 + $0x120] sm:$0xff]
    %v2439 = vld [vmem:[#allocation19 + $0x128] sm:$0xff]
    %v2440 = vld [vmem:[#allocation19 + $0x130] sm:$0xff]
    %v2441 = vld [vmem:[#allocation19 + $0x138] sm:$0xff]
    %v2442 = vld [vmem:[#allocation19 + $0x140] sm:$0xff]
    %v2443 = vld [vmem:[#allocation19 + $0x148] sm:$0xff]
    %v2444 = vld [vmem:[#allocation19 + $0x150] sm:$0xff]
    %v2445 = vld [vmem:[#allocation19 + $0x158] sm:$0xff]
    %v2446 = vld [vmem:[#allocation19 + $0x160] sm:$0xff]
    %v2447 = vld [vmem:[#allocation19 + $0x168] sm:$0xff]
    %v2448 = vld [vmem:[#allocation19 + $0x170] sm:$0xff]
    %v2449 = vld [vmem:[#allocation19 + $0x178] sm:$0xff]
    %v2450 = vld [vmem:[#allocation19 + $0x180] sm:$0xff]
    %v2451 = vld [vmem:[#allocation19 + $0x188] sm:$0xff]
    %v2452 = vld [vmem:[#allocation19 + $0x190] sm:$0xff]
    %v2453 = vld [vmem:[#allocation19 + $0x198] sm:$0xff]
    %v2454 = vld [vmem:[#allocation19 + $0x1a0] sm:$0xff]
    %v2455 = vld [vmem:[#allocation19 + $0x1a8] sm:$0xff]
    %v2456 = vld [vmem:[#allocation19 + $0x1b0] sm:$0xff]
    %v2457 = vld [vmem:[#allocation19 + $0x1b8] sm:$0xff]
    %v2458 = vld [vmem:[#allocation19 + $0x1c0] sm:$0xff]
    %v2459 = vld [vmem:[#allocation19 + $0x1c8] sm:$0xff]
    %v2460 = vld [vmem:[#allocation19 + $0x1d0] sm:$0xff]
    %v2461 = vld [vmem:[#allocation19 + $0x1d8] sm:$0xff]
    %v2462 = vld [vmem:[#allocation19 + $0x1e0] sm:$0xff]
    %v2463 = vld [vmem:[#allocation19 + $0x1e8] sm:$0xff]
    %v2464 = vld [vmem:[#allocation19 + $0x1f0] sm:$0xff]
    %v2465 = vld [vmem:[#allocation19 + $0x1f8] sm:$0xff]
    %v2466 = vld [vmem:[#allocation19 + $0x200] sm:$0xff]
    %v2467 = vld [vmem:[#allocation19 + $0x208] sm:$0xff]
    %v2468 = vld [vmem:[#allocation2] sm:$0xfe]
    %v2469 = vld [vmem:[#allocation2 + $0x8] sm:$0xfe]
    %v2470 = vld [vmem:[#allocation2 + $0x10] sm:$0x1f]
    %v2471 = vld [vmem:[#allocation2 + $0x18] sm:$0x1f]
    %s2472 = scalar_lea.vmem [#allocation19], 528
    %v2473 = vld [vmem:[%s2472] sm:$0xff]
    %v2474 = vld [vmem:[%s2472 + $0x8] sm:$0xff]
    %v2475 = vld [vmem:[%s2472 + $0x10] sm:$0xff]
    %v2476 = vld [vmem:[%s2472 + $0x18] sm:$0xff]
    %v2477 = vld [vmem:[%s2472 + $0x20] sm:$0xff]
    %v2478 = vld [vmem:[%s2472 + $0x28] sm:$0xff]
    %v2479 = vld [vmem:[%s2472 + $0x30] sm:$0xff]
    %v2480 = vld [vmem:[%s2472 + $0x38] sm:$0xff]
    %v2481 = vld [vmem:[%s2472 + $0x40] sm:$0xff]
    %v2482 = vld [vmem:[%s2472 + $0x48] sm:$0xff]
    %v2483 = vld [vmem:[%s2472 + $0x50] sm:$0xff]
    %v2484 = vld [vmem:[%s2472 + $0x58] sm:$0xff]
    %v2485 = vld [vmem:[%s2472 + $0x60] sm:$0xff]
    %v2486 = vld [vmem:[%s2472 + $0x68] sm:$0xff]
    %v2487 = vld [vmem:[%s2472 + $0x70] sm:$0xff]
    %v2488 = vld [vmem:[%s2472 + $0x78] sm:$0xff]
    %v2489 = vld [vmem:[%s2472 + $0x80] sm:$0xff]
    %v2490 = vld [vmem:[%s2472 + $0x88] sm:$0xff]
    %v2491 = vld [vmem:[%s2472 + $0x90] sm:$0xff]
    %v2492 = vld [vmem:[%s2472 + $0x98] sm:$0xff]
    %v2493 = vld [vmem:[%s2472 + $0xa0] sm:$0xff]
    %v2494 = vld [vmem:[%s2472 + $0xa8] sm:$0xff]
    %v2495 = vld [vmem:[%s2472 + $0xb0] sm:$0xff]
    %v2496 = vld [vmem:[%s2472 + $0xb8] sm:$0xff]
    %v2497 = vld [vmem:[%s2472 + $0xc0] sm:$0xff]
    %v2498 = vld [vmem:[%s2472 + $0xc8] sm:$0xff]
    %v2499 = vld [vmem:[%s2472 + $0xd0] sm:$0xff]
    %v2500 = vld [vmem:[%s2472 + $0xd8] sm:$0xff]
    %v2501 = vld [vmem:[%s2472 + $0xe0] sm:$0xff]
    %v2502 = vld [vmem:[%s2472 + $0xe8] sm:$0xff]
    %v2503 = vld [vmem:[%s2472 + $0xf0] sm:$0xff]
    %v2504 = vld [vmem:[%s2472 + $0xf8] sm:$0xff]
    %v2505 = vld [vmem:[%s2472 + $0x100] sm:$0xff]
    %v2506 = vld [vmem:[%s2472 + $0x108] sm:$0xff]
    %v2507 = vld [vmem:[%s2472 + $0x110] sm:$0xff]
    %v2508 = vld [vmem:[%s2472 + $0x118] sm:$0xff]
    %v2509 = vld [vmem:[%s2472 + $0x120] sm:$0xff]
    %v2510 = vld [vmem:[%s2472 + $0x128] sm:$0xff]
    %v2511 = vld [vmem:[%s2472 + $0x130] sm:$0xff]
    %v2512 = vld [vmem:[%s2472 + $0x138] sm:$0xff]
    %v2513 = vld [vmem:[%s2472 + $0x140] sm:$0xff]
    %v2514 = vld [vmem:[%s2472 + $0x148] sm:$0xff]
    %v2515 = vld [vmem:[%s2472 + $0x150] sm:$0xff]
    %v2516 = vld [vmem:[%s2472 + $0x158] sm:$0xff]
    %v2517 = vld [vmem:[%s2472 + $0x160] sm:$0xff]
    %v2518 = vld [vmem:[%s2472 + $0x168] sm:$0xff]
    %v2519 = vld [vmem:[%s2472 + $0x170] sm:$0xff]
    %v2520 = vld [vmem:[%s2472 + $0x178] sm:$0xff]
    %v2521 = vld [vmem:[%s2472 + $0x180] sm:$0xff]
    %v2522 = vld [vmem:[%s2472 + $0x188] sm:$0xff]
    %v2523 = vld [vmem:[%s2472 + $0x190] sm:$0xff]
    %v2524 = vld [vmem:[%s2472 + $0x198] sm:$0xff]
    %v2525 = vld [vmem:[%s2472 + $0x1a0] sm:$0xff]
    %v2526 = vld [vmem:[%s2472 + $0x1a8] sm:$0xff]
    %v2527 = vld [vmem:[%s2472 + $0x1b0] sm:$0xff]
    %v2528 = vld [vmem:[%s2472 + $0x1b8] sm:$0xff]
    %v2529 = vld [vmem:[%s2472 + $0x1c0] sm:$0xff]
    %v2530 = vld [vmem:[%s2472 + $0x1c8] sm:$0xff]
    %v2531 = vld [vmem:[%s2472 + $0x1d0] sm:$0xff]
    %v2532 = vld [vmem:[%s2472 + $0x1d8] sm:$0xff]
    %v2533 = vld [vmem:[%s2472 + $0x1e0] sm:$0xff]
    %v2534 = vld [vmem:[%s2472 + $0x1e8] sm:$0xff]
    %v2535 = vld [vmem:[%s2472 + $0x1f0] sm:$0xff]
    %v2536 = vld [vmem:[%s2472 + $0x1f8] sm:$0xff]
    %v2537 = vld [vmem:[%s2472 + $0x200] sm:$0xff]
    %v2538 = vld [vmem:[%s2472 + $0x208] sm:$0xff]
    %v2543 = vrot.slane %v2468, 1
    %v2544 = vrot.slane %v2470, 1
    %v2545 = vsel %vm2336, %v2543, %v2544
    %v2546 = vrot.slane %v2469, 1
    %v2547 = vrot.slane %v2471, 1
    %v2548 = vsel %vm2336, %v2546, %v2547
    %v2551 = vsel %vm417, %v2548, 0
    %v2553 = vsel %vm417, %v2547, 0
    %2555 = vmatprep.subr.mxu0 %v2474
    %2556 = vmatpush1.msra.mxu0 %v2473
    %2557 = vmatprep.subr.mxu0 %v2477
    %2558 = vmatpush1.msra.mxu0 %v2476
    %2559 = vmatprep.subr.mxu0 %v2480
    %2560 = vmatpush1.msra.mxu0 %v2479
    %2561 = vmatprep.subr.mxu0 %v2483
    %2562 = vmatpush1.msra.mxu0 %v2482
    %2563 = vmatprep.subr.mxu0 %v2486
    %2564 = vmatpush1.msra.mxu0 %v2485
    %2565 = vmatprep.subr.mxu0 %v2489
    %2566 = vmatpush1.msra.mxu0 %v2488
    %2567 = vmatprep.subr.mxu0 %v2492
    %2568 = vmatpush1.msra.mxu0 %v2491
    %2569 = vmatprep.subr.mxu0 %v2495
    %2570 = vmatpush1.msra.mxu0 %v2494
    %2571 = vmatprep.subr.mxu0 %v2498
    %2572 = vmatpush1.msra.mxu0 %v2497
    %2573 = vmatprep.subr.mxu0 %v2501
    %2574 = vmatpush1.msra.mxu0 %v2500
    %2575 = vmatprep.subr.mxu0 %v2504
    %2576 = vmatpush1.msra.mxu0 %v2503
    %2577 = vmatprep.subr.mxu0 %v2507
    %2578 = vmatpush1.msra.mxu0 %v2506
    %2579 = vmatprep.subr.mxu0 %v2510
    %2580 = vmatpush1.msra.mxu0 %v2509
    %2581 = vmatprep.subr.mxu0 %v2513
    %2582 = vmatpush1.msra.mxu0 %v2512
    %2583 = vmatprep.subr.mxu0 %v2516
    %2584 = vmatpush1.msra.mxu0 %v2515
    %2585 = vmatprep.subr.mxu0 %v2519
    %2586 = vmatpush1.msra.mxu0 %v2518
    %2587 = vmatprep.subr.mxu0 %v2522
    %2588 = vmatpush1.msra.mxu0 %v2521
    %2589 = vmatprep.subr.mxu0 %v2525
    %2590 = vmatpush1.msra.mxu0 %v2524
    %2591 = vmatprep.subr.mxu0 %v2528
    %2592 = vmatpush1.msra.mxu0 %v2527
    %2593 = vmatprep.subr.mxu0 %v2531
    %2594 = vmatpush1.msra.mxu0 %v2530
    %2595 = vmatprep.subr.mxu0 %v2534
    %2596 = vmatpush1.msra.mxu0 %v2533
    %2597 = vmatprep.subr.mxu0 %v2537
    %2598 = vmatpush1.msra.mxu0 %v2536
    %2599 = vmatprep.subr.mxu0 0.0
    %2600 = vmatpush1.msra.mxu0 0.0
    %2601 = vmatprep.subr.mxu0 0.0
    %2602 = vmatpush1.msra.mxu0 0.0
    %2603 = vmatprep.subr.mxu0 0.0
    %2604 = vmatpush1.msra.mxu0 0.0
    %2605 = vmatprep.subr.mxu0 0.0
    %2606 = vmatpush1.msra.mxu0 0.0
    %2607 = vmatprep.subr.mxu0 0.0
    %2608 = vmatpush1.msra.mxu0 0.0
    %2609 = vmatprep.subr.mxu0 0.0
    %2610 = vmatpush1.msra.mxu0 0.0
    %2611 = vmatprep.subr.mxu0 0.0
    %2612 = vmatpush1.msra.mxu0 0.0
    %2613 = vmatprep.subr.mxu0 0.0
    %2614 = vmatpush1.msra.mxu0 0.0
    %2615 = vmatprep.subr.mxu0 0.0
    %2616 = vmatpush1.msra.mxu0 0.0
    %2617 = vmatprep.subr.mxu0 0.0
    %2618 = vmatpush1.msra.mxu0 0.0
    %2619 = vmatprep.mubr.f32.mxu0 %v2551
    %2620 = vmatmul.mubr.f32.gmra.mrb[0].mxu0 %v2545
    %v2621 = vpop.f32.mrb[0].mxu0
    %v2622 = vadd.f32 0.0, %v2621
    %v2623 = vpop.f32.mrb[0].mxu0
    %v2624 = vadd.f32 0.0, %v2623
    %2625 = vmatprep.mubr.f32.mxu0 %v2553
    %2626 = vmatmul.mubr.f32.gmra.mrb[0].mxu0 %v2544
    %v2627 = vpop.f32.mrb[0].mxu0
    %v2628 = vadd.f32 0.0, %v2627
    %v2629 = vpop.f32.mrb[0].mxu0
    %v2630 = vadd.f32 0.0, %v2629
    %2631 = vdwg.mxu0
    %2632 = vmatprep.subr.mxu0 0.0
    %2633 = vmatpush1.msra.mxu0 %v2475
    %2634 = vmatprep.subr.mxu0 0.0
    %2635 = vmatpush1.msra.mxu0 %v2478
    %2636 = vmatprep.subr.mxu0 0.0
    %2637 = vmatpush1.msra.mxu0 %v2481
    %2638 = vmatprep.subr.mxu0 0.0
    %2639 = vmatpush1.msra.mxu0 %v2484
    %2640 = vmatprep.subr.mxu0 0.0
    %2641 = vmatpush1.msra.mxu0 %v2487
    %2642 = vmatprep.subr.mxu0 0.0
    %2643 = vmatpush1.msra.mxu0 %v2490
    %2644 = vmatprep.subr.mxu0 0.0
    %2645 = vmatpush1.msra.mxu0 %v2493
    %2646 = vmatprep.subr.mxu0 0.0
    %2647 = vmatpush1.msra.mxu0 %v2496
    %2648 = vmatprep.subr.mxu0 0.0
    %2649 = vmatpush1.msra.mxu0 %v2499
    %2650 = vmatprep.subr.mxu0 0.0
    %2651 = vmatpush1.msra.mxu0 %v2502
    %2652 = vmatprep.subr.mxu0 0.0
    %2653 = vmatpush1.msra.mxu0 %v2505
    %2654 = vmatprep.subr.mxu0 0.0
    %2655 = vmatpush1.msra.mxu0 %v2508
    %2656 = vmatprep.subr.mxu0 0.0
    %2657 = vmatpush1.msra.mxu0 %v2511
    %2658 = vmatprep.subr.mxu0 0.0
    %2659 = vmatpush1.msra.mxu0 %v2514
    %2660 = vmatprep.subr.mxu0 0.0
    %2661 = vmatpush1.msra.mxu0 %v2517
    %2662 = vmatprep.subr.mxu0 0.0
    %2663 = vmatpush1.msra.mxu0 %v2520
    %2664 = vmatprep.subr.mxu0 0.0
    %2665 = vmatpush1.msra.mxu0 %v2523
    %2666 = vmatprep.subr.mxu0 0.0
    %2667 = vmatpush1.msra.mxu0 %v2526
    %2668 = vmatprep.subr.mxu0 0.0
    %2669 = vmatpush1.msra.mxu0 %v2529
    %2670 = vmatprep.subr.mxu0 0.0
    %2671 = vmatpush1.msra.mxu0 %v2532
    %2672 = vmatprep.subr.mxu0 0.0
    %2673 = vmatpush1.msra.mxu0 %v2535
    %2674 = vmatprep.subr.mxu0 0.0
    %2675 = vmatpush1.msra.mxu0 %v2538
    %2676 = vmatprep.subr.mxu0 0.0
    %2677 = vmatpush1.msra.mxu0 0.0
    %2678 = vmatprep.subr.mxu0 0.0
    %2679 = vmatpush1.msra.mxu0 0.0
    %2680 = vmatprep.subr.mxu0 0.0
    %2681 = vmatpush1.msra.mxu0 0.0
    %2682 = vmatprep.subr.mxu0 0.0
    %2683 = vmatpush1.msra.mxu0 0.0
    %2684 = vmatprep.subr.mxu0 0.0
    %2685 = vmatpush1.msra.mxu0 0.0
    %2686 = vmatprep.subr.mxu0 0.0
    %2687 = vmatpush1.msra.mxu0 0.0
    %2688 = vmatprep.subr.mxu0 0.0
    %2689 = vmatpush1.msra.mxu0 0.0
    %2690 = vmatprep.subr.mxu0 0.0
    %2691 = vmatpush1.msra.mxu0 0.0
    %2692 = vmatprep.subr.mxu0 0.0
    %2693 = vmatpush1.msra.mxu0 0.0
    %2694 = vmatprep.subr.mxu0 0.0
    %2695 = vmatpush1.msra.mxu0 0.0
    %2696 = vmatprep.mubr.f32.mxu0 %v2551
    %2697 = vmatmul.mubr.f32.gmra.mrb[0].mxu0 %v2545
    %v2698 = vpop.f32.mrb[0].mxu0
    %v2699 = vadd.f32 0.0, %v2698
    %v2700 = vpop.f32.mrb[0].mxu0
    %2701 = vmatprep.mubr.f32.mxu0 %v2553
    %2702 = vmatmul.mubr.f32.gmra.mrb[0].mxu0 %v2544
    %v2703 = vpop.f32.mrb[0].mxu0
    %v2704 = vadd.f32 0.0, %v2703
    %v2705 = vpop.f32.mrb[0].mxu0
    %2706 = vdwg.mxu0
    %v2708 = vsel %vm417, %v2399, 0
    %v2711 = vsel %vm417, %v2401, 0
    %2713 = vmatprep.subr.mxu0 %v2403
    %2714 = vmatpush1.msra.mxu0 %v2402
    %2715 = vmatprep.subr.mxu0 %v2406
    %2716 = vmatpush1.msra.mxu0 %v2405
    %2717 = vmatprep.subr.mxu0 %v2409
    %2718 = vmatpush1.msra.mxu0 %v2408
    %2719 = vmatprep.subr.mxu0 %v2412
    %2720 = vmatpush1.msra.mxu0 %v2411
    %2721 = vmatprep.subr.mxu0 %v2415
    %2722 = vmatpush1.msra.mxu0 %v2414
    %2723 = vmatprep.subr.mxu0 %v2418
    %2724 = vmatpush1.msra.mxu0 %v2417
    %2725 = vmatprep.subr.mxu0 %v2421
    %2726 = vmatpush1.msra.mxu0 %v2420
    %2727 = vmatprep.subr.mxu0 %v2424
    %2728 = vmatpush1.msra.mxu0 %v2423
    %2729 = vmatprep.subr.mxu0 %v2427
    %2730 = vmatpush1.msra.mxu0 %v2426
    %2731 = vmatprep.subr.mxu0 %v2430
    %2732 = vmatpush1.msra.mxu0 %v2429
    %2733 = vmatprep.subr.mxu0 %v2433
    %2734 = vmatpush1.msra.mxu0 %v2432
    %2735 = vmatprep.subr.mxu0 %v2436
    %2736 = vmatpush1.msra.mxu0 %v2435
    %2737 = vmatprep.subr.mxu0 %v2439
    %2738 = vmatpush1.msra.mxu0 %v2438
    %2739 = vmatprep.subr.mxu0 %v2442
    %2740 = vmatpush1.msra.mxu0 %v2441
    %2741 = vmatprep.subr.mxu0 %v2445
    %2742 = vmatpush1.msra.mxu0 %v2444
    %2743 = vmatprep.subr.mxu0 %v2448
    %2744 = vmatpush1.msra.mxu0 %v2447
    %2745 = vmatprep.subr.mxu0 %v2451
    %2746 = vmatpush1.msra.mxu0 %v2450
    %2747 = vmatprep.subr.mxu0 %v2454
    %2748 = vmatpush1.msra.mxu0 %v2453
    %2749 = vmatprep.subr.mxu0 %v2457
    %2750 = vmatpush1.msra.mxu0 %v2456
    %2751 = vmatprep.subr.mxu0 %v2460
    %2752 = vmatpush1.msra.mxu0 %v2459
    %2753 = vmatprep.subr.mxu0 %v2463
    %2754 = vmatpush1.msra.mxu0 %v2462
    %2755 = vmatprep.subr.mxu0 %v2466
    %2756 = vmatpush1.msra.mxu0 %v2465
    %2757 = vmatprep.subr.mxu0 0.0
    %2758 = vmatpush1.msra.mxu0 0.0
    %2759 = vmatprep.subr.mxu0 0.0
    %2760 = vmatpush1.msra.mxu0 0.0
    %2761 = vmatprep.subr.mxu0 0.0
    %2762 = vmatpush1.msra.mxu0 0.0
    %2763 = vmatprep.subr.mxu0 0.0
    %2764 = vmatpush1.msra.mxu0 0.0
    %2765 = vmatprep.subr.mxu0 0.0
    %2766 = vmatpush1.msra.mxu0 0.0
    %2767 = vmatprep.subr.mxu0 0.0
    %2768 = vmatpush1.msra.mxu0 0.0
    %2769 = vmatprep.subr.mxu0 0.0
    %2770 = vmatpush1.msra.mxu0 0.0
    %2771 = vmatprep.subr.mxu0 0.0
    %2772 = vmatpush1.msra.mxu0 0.0
    %2773 = vmatprep.subr.mxu0 0.0
    %2774 = vmatpush1.msra.mxu0 0.0
    %2775 = vmatprep.subr.mxu0 0.0
    %2776 = vmatpush1.msra.mxu0 0.0
    %2777 = vmatprep.mubr.f32.mxu0 %v2708
    %2778 = vmatmul.mubr.f32.gmra.mrb[0].mxu0 %v2398
    %v2779 = vpop.f32.mrb[0].mxu0
    %v2780 = vadd.f32 %v2622, %v2779
    %v2781 = vpop.f32.mrb[0].mxu0
    %v2782 = vadd.f32 %v2624, %v2781
    %2783 = vmatprep.mubr.f32.mxu0 %v2711
    %2784 = vmatmul.mubr.f32.gmra.mrb[0].mxu0 %v2400
    %v2785 = vpop.f32.mrb[0].mxu0
    %v2786 = vadd.f32 %v2628, %v2785
    %v2787 = vpop.f32.mrb[0].mxu0
    %v2788 = vadd.f32 %v2630, %v2787
    %2789 = vdwg.mxu0
    %2790 = vmatprep.subr.mxu0 0.0
    %2791 = vmatpush1.msra.mxu0 %v2404
    %2792 = vmatprep.subr.mxu0 0.0
    %2793 = vmatpush1.msra.mxu0 %v2407
    %2794 = vmatprep.subr.mxu0 0.0
    %2795 = vmatpush1.msra.mxu0 %v2410
    %2796 = vmatprep.subr.mxu0 0.0
    %2797 = vmatpush1.msra.mxu0 %v2413
    %2798 = vmatprep.subr.mxu0 0.0
    %2799 = vmatpush1.msra.mxu0 %v2416
    %2800 = vmatprep.subr.mxu0 0.0
    %2801 = vmatpush1.msra.mxu0 %v2419
    %2802 = vmatprep.subr.mxu0 0.0
    %2803 = vmatpush1.msra.mxu0 %v2422
    %2804 = vmatprep.subr.mxu0 0.0
    %2805 = vmatpush1.msra.mxu0 %v2425
    %2806 = vmatprep.subr.mxu0 0.0
    %2807 = vmatpush1.msra.mxu0 %v2428
    %2808 = vmatprep.subr.mxu0 0.0
    %2809 = vmatpush1.msra.mxu0 %v2431
    %2810 = vmatprep.subr.mxu0 0.0
    %2811 = vmatpush1.msra.mxu0 %v2434
    %2812 = vmatprep.subr.mxu0 0.0
    %2813 = vmatpush1.msra.mxu0 %v2437
    %2814 = vmatprep.subr.mxu0 0.0
    %2815 = vmatpush1.msra.mxu0 %v2440
    %2816 = vmatprep.subr.mxu0 0.0
    %2817 = vmatpush1.msra.mxu0 %v2443
    %2818 = vmatprep.subr.mxu0 0.0
    %2819 = vmatpush1.msra.mxu0 %v2446
    %2820 = vmatprep.subr.mxu0 0.0
    %2821 = vmatpush1.msra.mxu0 %v2449
    %2822 = vmatprep.subr.mxu0 0.0
    %2823 = vmatpush1.msra.mxu0 %v2452
    %2824 = vmatprep.subr.mxu0 0.0
    %2825 = vmatpush1.msra.mxu0 %v2455
    %2826 = vmatprep.subr.mxu0 0.0
    %2827 = vmatpush1.msra.mxu0 %v2458
    %2828 = vmatprep.subr.mxu0 0.0
    %2829 = vmatpush1.msra.mxu0 %v2461
    %2830 = vmatprep.subr.mxu0 0.0
    %2831 = vmatpush1.msra.mxu0 %v2464
    %2832 = vmatprep.subr.mxu0 0.0
    %2833 = vmatpush1.msra.mxu0 %v2467
    %2834 = vmatprep.subr.mxu0 0.0
    %2835 = vmatpush1.msra.mxu0 0.0
    %2836 = vmatprep.subr.mxu0 0.0
    %2837 = vmatpush1.msra.mxu0 0.0
    %2838 = vmatprep.subr.mxu0 0.0
    %2839 = vmatpush1.msra.mxu0 0.0
    %2840 = vmatprep.subr.mxu0 0.0
    %2841 = vmatpush1.msra.mxu0 0.0
    %2842 = vmatprep.subr.mxu0 0.0
    %2843 = vmatpush1.msra.mxu0 0.0
    %2844 = vmatprep.subr.mxu0 0.0
    %2845 = vmatpush1.msra.mxu0 0.0
    %2846 = vmatprep.subr.mxu0 0.0
    %2847 = vmatpush1.msra.mxu0 0.0
    %2848 = vmatprep.subr.mxu0 0.0
    %2849 = vmatpush1.msra.mxu0 0.0
    %2850 = vmatprep.subr.mxu0 0.0
    %2851 = vmatpush1.msra.mxu0 0.0
    %2852 = vmatprep.subr.mxu0 0.0
    %2853 = vmatpush1.msra.mxu0 0.0
    %2854 = vmatprep.mubr.f32.mxu0 %v2708
    %2855 = vmatmul.mubr.f32.gmra.mrb[0].mxu0 %v2398
    %v2856 = vpop.f32.mrb[0].mxu0
    %v2857 = vadd.f32 %v2699, %v2856
    %v2858 = vpop.f32.mrb[0].mxu0
    %2859 = vmatprep.mubr.f32.mxu0 %v2711
    %2860 = vmatmul.mubr.f32.gmra.mrb[0].mxu0 %v2400
    %v2861 = vpop.f32.mrb[0].mxu0
    %v2862 = vadd.f32 %v2704, %v2861
    %v2863 = vpop.f32.mrb[0].mxu0
    %2864 = vdwg.mxu0
    %v2865 = vld [vmem:[#allocation2] sm:$0xfc]
    %v2866 = vld [vmem:[#allocation2 + $0x8] sm:$0xfc]
    %v2867 = vld [vmem:[#allocation2 + $0x10] sm:$0x3f]
    %v2868 = vld [vmem:[#allocation2 + $0x18] sm:$0x3f]
    %s2869 = scalar_lea.vmem [#allocation19], 1056
    %v2870 = vld [vmem:[%s2869] sm:$0xff]
    %v2871 = vld [vmem:[%s2869 + $0x8] sm:$0xff]
    %v2872 = vld [vmem:[%s2869 + $0x10] sm:$0xff]
    %v2873 = vld [vmem:[%s2869 + $0x18] sm:$0xff]
    %v2874 = vld [vmem:[%s2869 + $0x20] sm:$0xff]
    %v2875 = vld [vmem:[%s2869 + $0x28] sm:$0xff]
    %v2876 = vld [vmem:[%s2869 + $0x30] sm:$0xff]
    %v2877 = vld [vmem:[%s2869 + $0x38] sm:$0xff]
    %v2878 = vld [vmem:[%s2869 + $0x40] sm:$0xff]
    %v2879 = vld [vmem:[%s2869 + $0x48] sm:$0xff]
    %v2880 = vld [vmem:[%s2869 + $0x50] sm:$0xff]
    %v2881 = vld [vmem:[%s2869 + $0x58] sm:$0xff]
    %v2882 = vld [vmem:[%s2869 + $0x60] sm:$0xff]
    %v2883 = vld [vmem:[%s2869 + $0x68] sm:$0xff]
    %v2884 = vld [vmem:[%s2869 + $0x70] sm:$0xff]
    %v2885 = vld [vmem:[%s2869 + $0x78] sm:$0xff]
    %v2886 = vld [vmem:[%s2869 + $0x80] sm:$0xff]
    %v2887 = vld [vmem:[%s2869 + $0x88] sm:$0xff]
    %v2888 = vld [vmem:[%s2869 + $0x90] sm:$0xff]
    %v2889 = vld [vmem:[%s2869 + $0x98] sm:$0xff]
    %v2890 = vld [vmem:[%s2869 + $0xa0] sm:$0xff]
    %v2891 = vld [vmem:[%s2869 + $0xa8] sm:$0xff]
    %v2892 = vld [vmem:[%s2869 + $0xb0] sm:$0xff]
    %v2893 = vld [vmem:[%s2869 + $0xb8] sm:$0xff]
    %v2894 = vld [vmem:[%s2869 + $0xc0] sm:$0xff]
    %v2895 = vld [vmem:[%s2869 + $0xc8] sm:$0xff]
    %v2896 = vld [vmem:[%s2869 + $0xd0] sm:$0xff]
    %v2897 = vld [vmem:[%s2869 + $0xd8] sm:$0xff]
    %v2898 = vld [vmem:[%s2869 + $0xe0] sm:$0xff]
    %v2899 = vld [vmem:[%s2869 + $0xe8] sm:$0xff]
    %v2900 = vld [vmem:[%s2869 + $0xf0] sm:$0xff]
    %v2901 = vld [vmem:[%s2869 + $0xf8] sm:$0xff]
    %v2902 = vld [vmem:[%s2869 + $0x100] sm:$0xff]
    %v2903 = vld [vmem:[%s2869 + $0x108] sm:$0xff]
    %v2904 = vld [vmem:[%s2869 + $0x110] sm:$0xff]
    %v2905 = vld [vmem:[%s2869 + $0x118] sm:$0xff]
    %v2906 = vld [vmem:[%s2869 + $0x120] sm:$0xff]
    %v2907 = vld [vmem:[%s2869 + $0x128] sm:$0xff]
    %v2908 = vld [vmem:[%s2869 + $0x130] sm:$0xff]
    %v2909 = vld [vmem:[%s2869 + $0x138] sm:$0xff]
    %v2910 = vld [vmem:[%s2869 + $0x140] sm:$0xff]
    %v2911 = vld [vmem:[%s2869 + $0x148] sm:$0xff]
    %v2912 = vld [vmem:[%s2869 + $0x150] sm:$0xff]
    %v2913 = vld [vmem:[%s2869 + $0x158] sm:$0xff]
    %v2914 = vld [vmem:[%s2869 + $0x160] sm:$0xff]
    %v2915 = vld [vmem:[%s2869 + $0x168] sm:$0xff]
    %v2916 = vld [vmem:[%s2869 + $0x170] sm:$0xff]
    %v2917 = vld [vmem:[%s2869 + $0x178] sm:$0xff]
    %v2918 = vld [vmem:[%s2869 + $0x180] sm:$0xff]
    %v2919 = vld [vmem:[%s2869 + $0x188] sm:$0xff]
    %v2920 = vld [vmem:[%s2869 + $0x190] sm:$0xff]
    %v2921 = vld [vmem:[%s2869 + $0x198] sm:$0xff]
    %v2922 = vld [vmem:[%s2869 + $0x1a0] sm:$0xff]
    %v2923 = vld [vmem:[%s2869 + $0x1a8] sm:$0xff]
    %v2924 = vld [vmem:[%s2869 + $0x1b0] sm:$0xff]
    %v2925 = vld [vmem:[%s2869 + $0x1b8] sm:$0xff]
    %v2926 = vld [vmem:[%s2869 + $0x1c0] sm:$0xff]
    %v2927 = vld [vmem:[%s2869 + $0x1c8] sm:$0xff]
    %v2928 = vld [vmem:[%s2869 + $0x1d0] sm:$0xff]
    %v2929 = vld [vmem:[%s2869 + $0x1d8] sm:$0xff]
    %v2930 = vld [vmem:[%s2869 + $0x1e0] sm:$0xff]
    %v2931 = vld [vmem:[%s2869 + $0x1e8] sm:$0xff]
    %v2932 = vld [vmem:[%s2869 + $0x1f0] sm:$0xff]
    %v2933 = vld [vmem:[%s2869 + $0x1f8] sm:$0xff]
    %v2934 = vld [vmem:[%s2869 + $0x200] sm:$0xff]
    %v2935 = vld [vmem:[%s2869 + $0x208] sm:$0xff]
    %vm2940 = vcmask 1045504
    %v2941 = vrot.slane %v2865, 2
    %v2942 = vrot.slane %v2867, 2
    %v2943 = vsel %vm2940, %v2941, %v2942
    %v2944 = vrot.slane %v2866, 2
    %v2945 = vrot.slane %v2868, 2
    %v2946 = vsel %vm2940, %v2944, %v2945
    %v2949 = vsel %vm417, %v2946, 0
    %v2951 = vsel %vm417, %v2945, 0
    %2953 = vmatprep.subr.mxu0 %v2871
    %2954 = vmatpush1.msra.mxu0 %v2870
    %2955 = vmatprep.subr.mxu0 %v2874
    %2956 = vmatpush1.msra.mxu0 %v2873
    %2957 = vmatprep.subr.mxu0 %v2877
    %2958 = vmatpush1.msra.mxu0 %v2876
    %2959 = vmatprep.subr.mxu0 %v2880
    %2960 = vmatpush1.msra.mxu0 %v2879
    %2961 = vmatprep.subr.mxu0 %v2883
    %2962 = vmatpush1.msra.mxu0 %v2882
    %2963 = vmatprep.subr.mxu0 %v2886
    %2964 = vmatpush1.msra.mxu0 %v2885
    %2965 = vmatprep.subr.mxu0 %v2889
    %2966 = vmatpush1.msra.mxu0 %v2888
    %2967 = vmatprep.subr.mxu0 %v2892
    %2968 = vmatpush1.msra.mxu0 %v2891
    %2969 = vmatprep.subr.mxu0 %v2895
    %2970 = vmatpush1.msra.mxu0 %v2894
    %2971 = vmatprep.subr.mxu0 %v2898
    %2972 = vmatpush1.msra.mxu0 %v2897
    %2973 = vmatprep.subr.mxu0 %v2901
    %2974 = vmatpush1.msra.mxu0 %v2900
    %2975 = vmatprep.subr.mxu0 %v2904
    %2976 = vmatpush1.msra.mxu0 %v2903
    %2977 = vmatprep.subr.mxu0 %v2907
    %2978 = vmatpush1.msra.mxu0 %v2906
    %2979 = vmatprep.subr.mxu0 %v2910
    %2980 = vmatpush1.msra.mxu0 %v2909
    %2981 = vmatprep.subr.mxu0 %v2913
    %2982 = vmatpush1.msra.mxu0 %v2912
    %2983 = vmatprep.subr.mxu0 %v2916
    %2984 = vmatpush1.msra.mxu0 %v2915
    %2985 = vmatprep.subr.mxu0 %v2919
    %2986 = vmatpush1.msra.mxu0 %v2918
    %2987 = vmatprep.subr.mxu0 %v2922
    %2988 = vmatpush1.msra.mxu0 %v2921
    %2989 = vmatprep.subr.mxu0 %v2925
    %2990 = vmatpush1.msra.mxu0 %v2924
    %2991 = vmatprep.subr.mxu0 %v2928
    %2992 = vmatpush1.msra.mxu0 %v2927
    %2993 = vmatprep.subr.mxu0 %v2931
    %2994 = vmatpush1.msra.mxu0 %v2930
    %2995 = vmatprep.subr.mxu0 %v2934
    %2996 = vmatpush1.msra.mxu0 %v2933
    %2997 = vmatprep.subr.mxu0 0.0
    %2998 = vmatpush1.msra.mxu0 0.0
    %2999 = vmatprep.subr.mxu0 0.0
    %3000 = vmatpush1.msra.mxu0 0.0
    %3001 = vmatprep.subr.mxu0 0.0
    %3002 = vmatpush1.msra.mxu0 0.0
    %3003 = vmatprep.subr.mxu0 0.0
    %3004 = vmatpush1.msra.mxu0 0.0
    %3005 = vmatprep.subr.mxu0 0.0
    %3006 = vmatpush1.msra.mxu0 0.0
    %3007 = vmatprep.subr.mxu0 0.0
    %3008 = vmatpush1.msra.mxu0 0.0
    %3009 = vmatprep.subr.mxu0 0.0
    %3010 = vmatpush1.msra.mxu0 0.0
    %3011 = vmatprep.subr.mxu0 0.0
    %3012 = vmatpush1.msra.mxu0 0.0
    %3013 = vmatprep.subr.mxu0 0.0
    %3014 = vmatpush1.msra.mxu0 0.0
    %3015 = vmatprep.subr.mxu0 0.0
    %3016 = vmatpush1.msra.mxu0 0.0
    %3017 = vmatprep.mubr.f32.mxu0 %v2949
    %3018 = vmatmul.mubr.f32.gmra.mrb[0].mxu0 %v2943
    %v3019 = vpop.f32.mrb[0].mxu0
    %v3020 = vadd.f32 0.0, %v3019
    %v3021 = vpop.f32.mrb[0].mxu0
    %v3022 = vadd.f32 0.0, %v3021
    %3023 = vmatprep.mubr.f32.mxu0 %v2951
    %3024 = vmatmul.mubr.f32.gmra.mrb[0].mxu0 %v2942
    %v3025 = vpop.f32.mrb[0].mxu0
    %v3026 = vadd.f32 0.0, %v3025
    %v3027 = vpop.f32.mrb[0].mxu0
    %v3028 = vadd.f32 0.0, %v3027
    %3029 = vdwg.mxu0
    %3030 = vmatprep.subr.mxu0 0.0
    %3031 = vmatpush1.msra.mxu0 %v2872
    %3032 = vmatprep.subr.mxu0 0.0
    %3033 = vmatpush1.msra.mxu0 %v2875
    %3034 = vmatprep.subr.mxu0 0.0
    %3035 = vmatpush1.msra.mxu0 %v2878
    %3036 = vmatprep.subr.mxu0 0.0
    %3037 = vmatpush1.msra.mxu0 %v2881
    %3038 = vmatprep.subr.mxu0 0.0
    %3039 = vmatpush1.msra.mxu0 %v2884
    %3040 = vmatprep.subr.mxu0 0.0
    %3041 = vmatpush1.msra.mxu0 %v2887
    %3042 = vmatprep.subr.mxu0 0.0
    %3043 = vmatpush1.msra.mxu0 %v2890
    %3044 = vmatprep.subr.mxu0 0.0
    %3045 = vmatpush1.msra.mxu0 %v2893
    %3046 = vmatprep.subr.mxu0 0.0
    %3047 = vmatpush1.msra.mxu0 %v2896
    %3048 = vmatprep.subr.mxu0 0.0
    %3049 = vmatpush1.msra.mxu0 %v2899
    %3050 = vmatprep.subr.mxu0 0.0
    %3051 = vmatpush1.msra.mxu0 %v2902
    %3052 = vmatprep.subr.mxu0 0.0
    %3053 = vmatpush1.msra.mxu0 %v2905
    %3054 = vmatprep.subr.mxu0 0.0
    %3055 = vmatpush1.msra.mxu0 %v2908
    %3056 = vmatprep.subr.mxu0 0.0
    %3057 = vmatpush1.msra.mxu0 %v2911
    %3058 = vmatprep.subr.mxu0 0.0
    %3059 = vmatpush1.msra.mxu0 %v2914
    %3060 = vmatprep.subr.mxu0 0.0
    %3061 = vmatpush1.msra.mxu0 %v2917
    %3062 = vmatprep.subr.mxu0 0.0
    %3063 = vmatpush1.msra.mxu0 %v2920
    %3064 = vmatprep.subr.mxu0 0.0
    %3065 = vmatpush1.msra.mxu0 %v2923
    %3066 = vmatprep.subr.mxu0 0.0
    %3067 = vmatpush1.msra.mxu0 %v2926
    %3068 = vmatprep.subr.mxu0 0.0
    %3069 = vmatpush1.msra.mxu0 %v2929
    %3070 = vmatprep.subr.mxu0 0.0
    %3071 = vmatpush1.msra.mxu0 %v2932
    %3072 = vmatprep.subr.mxu0 0.0
    %3073 = vmatpush1.msra.mxu0 %v2935
    %3074 = vmatprep.subr.mxu0 0.0
    %3075 = vmatpush1.msra.mxu0 0.0
    %3076 = vmatprep.subr.mxu0 0.0
    %3077 = vmatpush1.msra.mxu0 0.0
    %3078 = vmatprep.subr.mxu0 0.0
    %3079 = vmatpush1.msra.mxu0 0.0
    %3080 = vmatprep.subr.mxu0 0.0
    %3081 = vmatpush1.msra.mxu0 0.0
    %3082 = vmatprep.subr.mxu0 0.0
    %3083 = vmatpush1.msra.mxu0 0.0
    %3084 = vmatprep.subr.mxu0 0.0
    %3085 = vmatpush1.msra.mxu0 0.0
    %3086 = vmatprep.subr.mxu0 0.0
    %3087 = vmatpush1.msra.mxu0 0.0
    %3088 = vmatprep.subr.mxu0 0.0
    %3089 = vmatpush1.msra.mxu0 0.0
    %3090 = vmatprep.subr.mxu0 0.0
    %3091 = vmatpush1.msra.mxu0 0.0
    %3092 = vmatprep.subr.mxu0 0.0
    %3093 = vmatpush1.msra.mxu0 0.0
    %3094 = vmatprep.mubr.f32.mxu0 %v2949
    %3095 = vmatmul.mubr.f32.gmra.mrb[0].mxu0 %v2943
    %v3096 = vpop.f32.mrb[0].mxu0
    %v3097 = vadd.f32 0.0, %v3096
    %v3098 = vpop.f32.mrb[0].mxu0
    %3099 = vmatprep.mubr.f32.mxu0 %v2951
    %3100 = vmatmul.mubr.f32.gmra.mrb[0].mxu0 %v2942
    %v3101 = vpop.f32.mrb[0].mxu0
    %v3102 = vadd.f32 0.0, %v3101
    %v3103 = vpop.f32.mrb[0].mxu0
    %3104 = vdwg.mxu0
    %v3105 = vadd.f32 %v2780, %v3020
    %v3106 = vadd.f32 %v2782, %v3022
    %v3107 = vadd.f32 %v2857, %v3097
    %v3108 = vadd.f32 %v2786, %v3026
    %v3109 = vadd.f32 %v2788, %v3028
    %v3110 = vadd.f32 %v2862, %v3102
    %v3111 = vld [vmem:[#allocation30] sm:$0x1]
    %vm3112 = vcmask 97280
    %v3114 = vsel %vm3112, %v3111, 0
    %v3117 = vsel %vm2320, %v3108, 0
    %v3120 = vsel %vm2320, %v3109, 0
    %v3123 = vsel %vm2320, %v3110, 0
    %3125 = vmatprep.subr.mxu0 %v3106
    %3126 = vmatpush1.msra.mxu0 %v3105
    %3127 = vmatprep.subr.mxu0 %v3120
    %3128 = vmatpush1.msra.mxu0 %v3117
    %3129 = vmatprep.subr.mxu0 0.0
    %3130 = vmatpush1.msra.mxu0 0.0
    %3131 = vmatprep.subr.mxu0 0.0
    %3132 = vmatpush1.msra.mxu0 0.0
    %3133 = vmatprep.subr.mxu0 0.0
    %3134 = vmatpush1.msra.mxu0 0.0
    %3135 = vmatprep.subr.mxu0 0.0
    %3136 = vmatpush1.msra.mxu0 0.0
    %3137 = vmatprep.subr.mxu0 0.0
    %3138 = vmatpush1.msra.mxu0 0.0
    %3139 = vmatprep.subr.mxu0 0.0
    %3140 = vmatpush1.msra.mxu0 0.0
    %3141 = vmatprep.subr.mxu0 0.0
    %3142 = vmatpush1.msra.mxu0 0.0
    %3143 = vmatprep.subr.mxu0 0.0
    %3144 = vmatpush1.msra.mxu0 0.0
    %3145 = vmatprep.subr.mxu0 0.0
    %3146 = vmatpush1.msra.mxu0 0.0
    %3147 = vmatprep.subr.mxu0 0.0
    %3148 = vmatpush1.msra.mxu0 0.0
    %3149 = vmatprep.subr.mxu0 0.0
    %3150 = vmatpush1.msra.mxu0 0.0
    %3151 = vmatprep.subr.mxu0 0.0
    %3152 = vmatpush1.msra.mxu0 0.0
    %3153 = vmatprep.subr.mxu0 0.0
    %3154 = vmatpush1.msra.mxu0 0.0
    %3155 = vmatprep.subr.mxu0 0.0
    %3156 = vmatpush1.msra.mxu0 0.0
    %3157 = vmatprep.subr.mxu0 0.0
    %3158 = vmatpush1.msra.mxu0 0.0
    %3159 = vmatprep.subr.mxu0 0.0
    %3160 = vmatpush1.msra.mxu0 0.0
    %3161 = vmatprep.subr.mxu0 0.0
    %3162 = vmatpush1.msra.mxu0 0.0
    %3163 = vmatprep.subr.mxu0 0.0
    %3164 = vmatpush1.msra.mxu0 0.0
    %3165 = vmatprep.subr.mxu0 0.0
    %3166 = vmatpush1.msra.mxu0 0.0
    %3167 = vmatprep.subr.mxu0 0.0
    %3168 = vmatpush1.msra.mxu0 0.0
    %3169 = vmatprep.subr.mxu0 0.0
    %3170 = vmatpush1.msra.mxu0 0.0
    %3171 = vmatprep.subr.mxu0 0.0
    %3172 = vmatpush1.msra.mxu0 0.0
    %3173 = vmatprep.subr.mxu0 0.0
    %3174 = vmatpush1.msra.mxu0 0.0
    %3175 = vmatprep.subr.mxu0 0.0
    %3176 = vmatpush1.msra.mxu0 0.0
    %3177 = vmatprep.subr.mxu0 0.0
    %3178 = vmatpush1.msra.mxu0 0.0
    %3179 = vmatprep.subr.mxu0 0.0
    %3180 = vmatpush1.msra.mxu0 0.0
    %3181 = vmatprep.subr.mxu0 0.0
    %3182 = vmatpush1.msra.mxu0 0.0
    %3183 = vmatprep.subr.mxu0 0.0
    %3184 = vmatpush1.msra.mxu0 0.0
    %3185 = vmatprep.subr.mxu0 0.0
    %3186 = vmatpush1.msra.mxu0 0.0
    %3187 = vmatprep.subr.mxu0 0.0
    %3188 = vmatpush1.msra.mxu0 0.0
    %3189 = vmatprep.mubr.f32.mxu0 0.0
    %3190 = vmatmul.mubr.f32.gmra.mrb[0].mxu0 %v3114
    %v3191 = vpop.f32.mrb[0].mxu0
    %v3192 = vadd.f32 0.0, %v3191
    %v3193 = vpop.f32.mrb[0].mxu0
    %v3194 = vadd.f32 0.0, %v3193
    %3195 = vdwg.mxu0
    %3196 = vmatprep.subr.mxu0 0.0
    %3197 = vmatpush1.msra.mxu0 %v3107
    %3198 = vmatprep.subr.mxu0 0.0
    %3199 = vmatpush1.msra.mxu0 %v3123
    %3200 = vmatprep.subr.mxu0 0.0
    %3201 = vmatpush1.msra.mxu0 0.0
    %3202 = vmatprep.subr.mxu0 0.0
    %3203 = vmatpush1.msra.mxu0 0.0
    %3204 = vmatprep.subr.mxu0 0.0
    %3205 = vmatpush1.msra.mxu0 0.0
    %3206 = vmatprep.subr.mxu0 0.0
    %3207 = vmatpush1.msra.mxu0 0.0
    %3208 = vmatprep.subr.mxu0 0.0
    %3209 = vmatpush1.msra.mxu0 0.0
    %3210 = vmatprep.subr.mxu0 0.0
    %3211 = vmatpush1.msra.mxu0 0.0
    %3212 = vmatprep.subr.mxu0 0.0
    %3213 = vmatpush1.msra.mxu0 0.0
    %3214 = vmatprep.subr.mxu0 0.0
    %3215 = vmatpush1.msra.mxu0 0.0
    %3216 = vmatprep.subr.mxu0 0.0
    %3217 = vmatpush1.msra.mxu0 0.0
    %3218 = vmatprep.subr.mxu0 0.0
    %3219 = vmatpush1.msra.mxu0 0.0
    %3220 = vmatprep.subr.mxu0 0.0
    %3221 = vmatpush1.msra.mxu0 0.0
    %3222 = vmatprep.subr.mxu0 0.0
    %3223 = vmatpush1.msra.mxu0 0.0
    %3224 = vmatprep.subr.mxu0 0.0
    %3225 = vmatpush1.msra.mxu0 0.0
    %3226 = vmatprep.subr.mxu0 0.0
    %3227 = vmatpush1.msra.mxu0 0.0
    %3228 = vmatprep.subr.mxu0 0.0
    %3229 = vmatpush1.msra.mxu0 0.0
    %3230 = vmatprep.subr.mxu0 0.0
    %3231 = vmatpush1.msra.mxu0 0.0
    %3232 = vmatprep.subr.mxu0 0.0
    %3233 = vmatpush1.msra.mxu0 0.0
    %3234 = vmatprep.subr.mxu0 0.0
    %3235 = vmatpush1.msra.mxu0 0.0
    %3236 = vmatprep.subr.mxu0 0.0
    %3237 = vmatpush1.msra.mxu0 0.0
    %3238 = vmatprep.subr.mxu0 0.0
    %3239 = vmatpush1.msra.mxu0 0.0
    %3240 = vmatprep.subr.mxu0 0.0
    %3241 = vmatpush1.msra.mxu0 0.0
    %3242 = vmatprep.subr.mxu0 0.0
    %3243 = vmatpush1.msra.mxu0 0.0
    %3244 = vmatprep.subr.mxu0 0.0
    %3245 = vmatpush1.msra.mxu0 0.0
    %3246 = vmatprep.subr.mxu0 0.0
    %3247 = vmatpush1.msra.mxu0 0.0
    %3248 = vmatprep.subr.mxu0 0.0
    %3249 = vmatpush1.msra.mxu0 0.0
    %3250 = vmatprep.subr.mxu0 0.0
    %3251 = vmatpush1.msra.mxu0 0.0
    %3252 = vmatprep.subr.mxu0 0.0
    %3253 = vmatpush1.msra.mxu0 0.0
    %3254 = vmatprep.subr.mxu0 0.0
    %3255 = vmatpush1.msra.mxu0 0.0
    %3256 = vmatprep.subr.mxu0 0.0
    %3257 = vmatpush1.msra.mxu0 0.0
    %3258 = vmatprep.subr.mxu0 0.0
    %3259 = vmatpush1.msra.mxu0 0.0
    %3260 = vmatprep.mubr.f32.mxu0 0.0
    %3261 = vmatmul.mubr.f32.gmra.mrb[0].mxu0 %v3114
    %v3262 = vpop.f32.mrb[0].mxu0
    %v3263 = vadd.f32 0.0, %v3262
    %v3264 = vpop.f32.mrb[0].mxu0
    %3265 = vdwg.mxu0
    %v3266 = vmul.f32 %v3105, %v3105
    %v3267 = vmul.f32 %v3106, %v3106
    %v3268 = vmul.f32 %v3107, %v3107
    %v3269 = vmul.f32 %v3108, %v3108
    %v3270 = vmul.f32 %v3109, %v3109
    %v3271 = vmul.f32 %v3110, %v3110
    %v3273 = vsel %vm2320, %v3269, 0
    %v3276 = vsel %vm2320, %v3270, 0
    %v3279 = vsel %vm2320, %v3271, 0
    %3281 = vmatprep.subr.mxu0 %v3267
    %3282 = vmatpush1.msra.mxu0 %v3266
    %3283 = vmatprep.subr.mxu0 %v3276
    %3284 = vmatpush1.msra.mxu0 %v3273
    %3285 = vmatprep.subr.mxu0 0.0
    %3286 = vmatpush1.msra.mxu0 0.0
    %3287 = vmatprep.subr.mxu0 0.0
    %3288 = vmatpush1.msra.mxu0 0.0
    %3289 = vmatprep.subr.mxu0 0.0
    %3290 = vmatpush1.msra.mxu0 0.0
    %3291 = vmatprep.subr.mxu0 0.0
    %3292 = vmatpush1.msra.mxu0 0.0
    %3293 = vmatprep.subr.mxu0 0.0
    %3294 = vmatpush1.msra.mxu0 0.0
    %3295 = vmatprep.subr.mxu0 0.0
    %3296 = vmatpush1.msra.mxu0 0.0
    %3297 = vmatprep.subr.mxu0 0.0
    %3298 = vmatpush1.msra.mxu0 0.0
    %3299 = vmatprep.subr.mxu0 0.0
    %3300 = vmatpush1.msra.mxu0 0.0
    %3301 = vmatprep.subr.mxu0 0.0
    %3302 = vmatpush1.msra.mxu0 0.0
    %3303 = vmatprep.subr.mxu0 0.0
    %3304 = vmatpush1.msra.mxu0 0.0
    %3305 = vmatprep.subr.mxu0 0.0
    %3306 = vmatpush1.msra.mxu0 0.0
    %3307 = vmatprep.subr.mxu0 0.0
    %3308 = vmatpush1.msra.mxu0 0.0
    %3309 = vmatprep.subr.mxu0 0.0
    %3310 = vmatpush1.msra.mxu0 0.0
    %3311 = vmatprep.subr.mxu0 0.0
    %3312 = vmatpush1.msra.mxu0 0.0
    %3313 = vmatprep.subr.mxu0 0.0
    %3314 = vmatpush1.msra.mxu0 0.0
    %3315 = vmatprep.subr.mxu0 0.0
    %3316 = vmatpush1.msra.mxu0 0.0
    %3317 = vmatprep.subr.mxu0 0.0
    %3318 = vmatpush1.msra.mxu0 0.0
    %3319 = vmatprep.subr.mxu0 0.0
    %3320 = vmatpush1.msra.mxu0 0.0
    %3321 = vmatprep.subr.mxu0 0.0
    %3322 = vmatpush1.msra.mxu0 0.0
    %3323 = vmatprep.subr.mxu0 0.0
    %3324 = vmatpush1.msra.mxu0 0.0
    %3325 = vmatprep.subr.mxu0 0.0
    %3326 = vmatpush1.msra.mxu0 0.0
    %3327 = vmatprep.subr.mxu0 0.0
    %3328 = vmatpush1.msra.mxu0 0.0
    %3329 = vmatprep.subr.mxu0 0.0
    %3330 = vmatpush1.msra.mxu0 0.0
    %3331 = vmatprep.subr.mxu0 0.0
    %3332 = vmatpush1.msra.mxu0 0.0
    %3333 = vmatprep.subr.mxu0 0.0
    %3334 = vmatpush1.msra.mxu0 0.0
    %3335 = vmatprep.subr.mxu0 0.0
    %3336 = vmatpush1.msra.mxu0 0.0
    %3337 = vmatprep.subr.mxu0 0.0
    %3338 = vmatpush1.msra.mxu0 0.0
    %3339 = vmatprep.subr.mxu0 0.0
    %3340 = vmatpush1.msra.mxu0 0.0
    %3341 = vmatprep.subr.mxu0 0.0
    %3342 = vmatpush1.msra.mxu0 0.0
    %3343 = vmatprep.subr.mxu0 0.0
    %3344 = vmatpush1.msra.mxu0 0.0
    %3345 = vmatprep.mubr.f32.mxu0 0.0
    %3346 = vmatmul.mubr.f32.gmra.mrb[0].mxu0 %v3114
    %v3347 = vpop.f32.mrb[0].mxu0
    %v3348 = vadd.f32 0.0, %v3347
    %v3349 = vpop.f32.mrb[0].mxu0
    %v3350 = vadd.f32 0.0, %v3349
    %3351 = vdwg.mxu0
    %3352 = vmatprep.subr.mxu0 0.0
    %3353 = vmatpush1.msra.mxu0 %v3268
    %3354 = vmatprep.subr.mxu0 0.0
    %3355 = vmatpush1.msra.mxu0 %v3279
    %3356 = vmatprep.subr.mxu0 0.0
    %3357 = vmatpush1.msra.mxu0 0.0
    %3358 = vmatprep.subr.mxu0 0.0
    %3359 = vmatpush1.msra.mxu0 0.0
    %3360 = vmatprep.subr.mxu0 0.0
    %3361 = vmatpush1.msra.mxu0 0.0
    %3362 = vmatprep.subr.mxu0 0.0
    %3363 = vmatpush1.msra.mxu0 0.0
    %3364 = vmatprep.subr.mxu0 0.0
    %3365 = vmatpush1.msra.mxu0 0.0
    %3366 = vmatprep.subr.mxu0 0.0
    %3367 = vmatpush1.msra.mxu0 0.0
    %3368 = vmatprep.subr.mxu0 0.0
    %3369 = vmatpush1.msra.mxu0 0.0
    %3370 = vmatprep.subr.mxu0 0.0
    %3371 = vmatpush1.msra.mxu0 0.0
    %3372 = vmatprep.subr.mxu0 0.0
    %3373 = vmatpush1.msra.mxu0 0.0
    %3374 = vmatprep.subr.mxu0 0.0
    %3375 = vmatpush1.msra.mxu0 0.0
    %3376 = vmatprep.subr.mxu0 0.0
    %3377 = vmatpush1.msra.mxu0 0.0
    %3378 = vmatprep.subr.mxu0 0.0
    %3379 = vmatpush1.msra.mxu0 0.0
    %3380 = vmatprep.subr.mxu0 0.0
    %3381 = vmatpush1.msra.mxu0 0.0
    %3382 = vmatprep.subr.mxu0 0.0
    %3383 = vmatpush1.msra.mxu0 0.0
    %3384 = vmatprep.subr.mxu0 0.0
    %3385 = vmatpush1.msra.mxu0 0.0
    %3386 = vmatprep.subr.mxu0 0.0
    %3387 = vmatpush1.msra.mxu0 0.0
    %3388 = vmatprep.subr.mxu0 0.0
    %3389 = vmatpush1.msra.mxu0 0.0
    %3390 = vmatprep.subr.mxu0 0.0
    %3391 = vmatpush1.msra.mxu0 0.0
    %3392 = vmatprep.subr.mxu0 0.0
    %3393 = vmatpush1.msra.mxu0 0.0
    %3394 = vmatprep.subr.mxu0 0.0
    %3395 = vmatpush1.msra.mxu0 0.0
    %3396 = vmatprep.subr.mxu0 0.0
    %3397 = vmatpush1.msra.mxu0 0.0
    %3398 = vmatprep.subr.mxu0 0.0
    %3399 = vmatpush1.msra.mxu0 0.0
    %3400 = vmatprep.subr.mxu0 0.0
    %3401 = vmatpush1.msra.mxu0 0.0
    %3402 = vmatprep.subr.mxu0 0.0
    %3403 = vmatpush1.msra.mxu0 0.0
    %3404 = vmatprep.subr.mxu0 0.0
    %3405 = vmatpush1.msra.mxu0 0.0
    %3406 = vmatprep.subr.mxu0 0.0
    %3407 = vmatpush1.msra.mxu0 0.0
    %3408 = vmatprep.subr.mxu0 0.0
    %3409 = vmatpush1.msra.mxu0 0.0
    %3410 = vmatprep.subr.mxu0 0.0
    %3411 = vmatpush1.msra.mxu0 0.0
    %3412 = vmatprep.subr.mxu0 0.0
    %3413 = vmatpush1.msra.mxu0 0.0
    %3414 = vmatprep.subr.mxu0 0.0
    %3415 = vmatpush1.msra.mxu0 0.0
    %3416 = vmatprep.mubr.f32.mxu0 0.0
    %3417 = vmatmul.mubr.f32.gmra.mrb[0].mxu0 %v3114
    %v3418 = vpop.f32.mrb[0].mxu0
    %v3419 = vadd.f32 0.0, %v3418
    %v3420 = vpop.f32.mrb[0].mxu0
    %3421 = vdwg.mxu0
    %v3425 = vrot.slane %v3348, 7
    %v3426 = vrot.slane %v3350, 7
    %v3427 = vrot.slane %v3419, 7
    %v3431 = vsel %vm1334, %v3192, %v3425
    %v3432 = vsel %vm1334, %v3194, %v3426
    %v3433 = vsel %vm1334, %v3263, %v3427
    %v3434 = vld [vmem:[#allocation21] sm:$0xff]
    %v3435 = vld [vmem:[#allocation21 + $0x8] sm:$0xff]
    %v3436 = vld [vmem:[#allocation21 + $0x10] sm:$0xff]
    %v3437 = vld [vmem:[#allocation21 + $0x18] sm:$0xff]
    %v3438 = vld [vmem:[#allocation21 + $0x20] sm:$0xff]
    %v3439 = vld [vmem:[#allocation21 + $0x28] sm:$0xff]
    %v3440 = vld [vmem:[#allocation21 + $0x30] sm:$0xff]
    %v3441 = vld [vmem:[#allocation21 + $0x38] sm:$0xff]
    %v3442 = vld [vmem:[#allocation21 + $0x40] sm:$0xff]
    %v3443 = vld [vmem:[#allocation21 + $0x48] sm:$0xff]
    %v3444 = vld [vmem:[#allocation21 + $0x50] sm:$0xff]
    %v3445 = vld [vmem:[#allocation21 + $0x58] sm:$0xff]
    %v3446 = vld [vmem:[#allocation21 + $0x60] sm:$0xff]
    %v3447 = vld [vmem:[#allocation21 + $0x68] sm:$0xff]
    %v3448 = vld [vmem:[#allocation21 + $0x70] sm:$0xff]
    %v3449 = vld [vmem:[#allocation21 + $0x78] sm:$0xff]
    %v3450 = vld [vmem:[#allocation21 + $0x80] sm:$0xff]
    %v3451 = vld [vmem:[#allocation21 + $0x88] sm:$0xff]
    %v3452 = vld [vmem:[#allocation21 + $0x90] sm:$0xff]
    %v3453 = vld [vmem:[#allocation21 + $0x98] sm:$0xff]
    %v3454 = vld [vmem:[#allocation21 + $0xa0] sm:$0xff]
    %v3455 = vld [vmem:[#allocation21 + $0xa8] sm:$0xff]
    %v3456 = vld [vmem:[#allocation21 + $0xb0] sm:$0xff]
    %v3457 = vld [vmem:[#allocation21 + $0xb8] sm:$0xff]
    %v3458 = vld [vmem:[#allocation21 + $0xc0] sm:$0xff]
    %v3459 = vld [vmem:[#allocation21 + $0xc8] sm:$0xff]
    %v3460 = vld [vmem:[#allocation21 + $0xd0] sm:$0xff]
    %v3461 = vld [vmem:[#allocation21 + $0xd8] sm:$0xff]
    %v3462 = vld [vmem:[#allocation21 + $0xe0] sm:$0xff]
    %v3463 = vld [vmem:[#allocation21 + $0xe8] sm:$0xff]
    %v3464 = vld [vmem:[#allocation21 + $0xf0] sm:$0xff]
    %v3465 = vld [vmem:[#allocation21 + $0xf8] sm:$0xff]
    %v3466 = vld [vmem:[#allocation21 + $0x100] sm:$0xff]
    %v3467 = vld [vmem:[#allocation21 + $0x108] sm:$0xff]
    %v3468 = vld [vmem:[#allocation21 + $0x110] sm:$0xff]
    %v3469 = vld [vmem:[#allocation21 + $0x118] sm:$0xff]
    %v3470 = vld [vmem:[#allocation21 + $0x120] sm:$0xff]
    %v3471 = vld [vmem:[#allocation21 + $0x128] sm:$0xff]
    %v3472 = vld [vmem:[#allocation21 + $0x130] sm:$0xff]
    %v3473 = vld [vmem:[#allocation21 + $0x138] sm:$0xff]
    %v3474 = vld [vmem:[#allocation21 + $0x140] sm:$0xff]
    %v3475 = vld [vmem:[#allocation21 + $0x148] sm:$0xff]
    %v3476 = vld [vmem:[#allocation21 + $0x150] sm:$0xff]
    %v3477 = vld [vmem:[#allocation21 + $0x158] sm:$0xff]
    %vm3478 = vcmask 785408
    %v3480 = vsel %vm3478, %v3433, 0
    %3482 = vmatprep.subr.mxu0 0.0
    %3483 = vmatpush1.msra.mxu0 %v3434
    %3484 = vmatprep.subr.mxu0 0.0
    %3485 = vmatpush1.msra.mxu0 %v3435
    %3486 = vmatprep.subr.mxu0 0.0
    %3487 = vmatpush1.msra.mxu0 %v3436
    %3488 = vmatprep.subr.mxu0 0.0
    %3489 = vmatpush1.msra.mxu0 %v3437
    %3490 = vmatprep.subr.mxu0 0.0
    %3491 = vmatpush1.msra.mxu0 %v3438
    %3492 = vmatprep.subr.mxu0 0.0
    %3493 = vmatpush1.msra.mxu0 %v3439
    %3494 = vmatprep.subr.mxu0 0.0
    %3495 = vmatpush1.msra.mxu0 %v3440
    %3496 = vmatprep.subr.mxu0 0.0
    %3497 = vmatpush1.msra.mxu0 %v3441
    %3498 = vmatprep.subr.mxu0 0.0
    %3499 = vmatpush1.msra.mxu0 %v3442
    %3500 = vmatprep.subr.mxu0 0.0
    %3501 = vmatpush1.msra.mxu0 %v3443
    %3502 = vmatprep.subr.mxu0 0.0
    %3503 = vmatpush1.msra.mxu0 %v3444
    %3504 = vmatprep.subr.mxu0 0.0
    %3505 = vmatpush1.msra.mxu0 %v3445
    %3506 = vmatprep.subr.mxu0 0.0
    %3507 = vmatpush1.msra.mxu0 %v3446
    %3508 = vmatprep.subr.mxu0 0.0
    %3509 = vmatpush1.msra.mxu0 %v3447
    %3510 = vmatprep.subr.mxu0 0.0
    %3511 = vmatpush1.msra.mxu0 %v3448
    %3512 = vmatprep.subr.mxu0 0.0
    %3513 = vmatpush1.msra.mxu0 %v3449
    %3514 = vmatprep.subr.mxu0 0.0
    %3515 = vmatpush1.msra.mxu0 %v3450
    %3516 = vmatprep.subr.mxu0 0.0
    %3517 = vmatpush1.msra.mxu0 %v3451
    %3518 = vmatprep.subr.mxu0 0.0
    %3519 = vmatpush1.msra.mxu0 %v3452
    %3520 = vmatprep.subr.mxu0 0.0
    %3521 = vmatpush1.msra.mxu0 %v3453
    %3522 = vmatprep.subr.mxu0 0.0
    %3523 = vmatpush1.msra.mxu0 %v3454
    %3524 = vmatprep.subr.mxu0 0.0
    %3525 = vmatpush1.msra.mxu0 %v3455
    %3526 = vmatprep.subr.mxu0 0.0
    %3527 = vmatpush1.msra.mxu0 %v3456
    %3528 = vmatprep.subr.mxu0 0.0
    %3529 = vmatpush1.msra.mxu0 %v3457
    %3530 = vmatprep.subr.mxu0 0.0
    %3531 = vmatpush1.msra.mxu0 %v3458
    %3532 = vmatprep.subr.mxu0 0.0
    %3533 = vmatpush1.msra.mxu0 %v3459
    %3534 = vmatprep.subr.mxu0 0.0
    %3535 = vmatpush1.msra.mxu0 %v3460
    %3536 = vmatprep.subr.mxu0 0.0
    %3537 = vmatpush1.msra.mxu0 %v3461
    %3538 = vmatprep.subr.mxu0 0.0
    %3539 = vmatpush1.msra.mxu0 %v3462
    %3540 = vmatprep.subr.mxu0 0.0
    %3541 = vmatpush1.msra.mxu0 %v3463
    %3542 = vmatprep.subr.mxu0 0.0
    %3543 = vmatpush1.msra.mxu0 %v3464
    %3544 = vmatprep.subr.mxu0 0.0
    %3545 = vmatpush1.msra.mxu0 %v3465
    %3546 = vmatprep.mubr.f32.mxu0 %v3432
    %3547 = vmatmul.mubr.f32.gmra.mrb[0].mxu0 %v3431
    %v3548 = vpop.f32.mrb[0].mxu0
    %v3549 = vadd.f32 0.0, %v3548
    %v3550 = vpop.f32.mrb[0].mxu0
    %3551 = vdwg.mxu0
    %3552 = vmatprep.subr.mxu0 0.0
    %3553 = vmatpush1.msra.mxu0 %v3466
    %3554 = vmatprep.subr.mxu0 0.0
    %3555 = vmatpush1.msra.mxu0 %v3467
    %3556 = vmatprep.subr.mxu0 0.0
    %3557 = vmatpush1.msra.mxu0 %v3468
    %3558 = vmatprep.subr.mxu0 0.0
    %3559 = vmatpush1.msra.mxu0 %v3469
    %3560 = vmatprep.subr.mxu0 0.0
    %3561 = vmatpush1.msra.mxu0 %v3470
    %3562 = vmatprep.subr.mxu0 0.0
    %3563 = vmatpush1.msra.mxu0 %v3471
    %3564 = vmatprep.subr.mxu0 0.0
    %3565 = vmatpush1.msra.mxu0 %v3472
    %3566 = vmatprep.subr.mxu0 0.0
    %3567 = vmatpush1.msra.mxu0 %v3473
    %3568 = vmatprep.subr.mxu0 0.0
    %3569 = vmatpush1.msra.mxu0 %v3474
    %3570 = vmatprep.subr.mxu0 0.0
    %3571 = vmatpush1.msra.mxu0 %v3475
    %3572 = vmatprep.subr.mxu0 0.0
    %3573 = vmatpush1.msra.mxu0 %v3476
    %3574 = vmatprep.subr.mxu0 0.0
    %3575 = vmatpush1.msra.mxu0 %v3477
    %3576 = vmatprep.subr.mxu0 0.0
    %3577 = vmatpush1.msra.mxu0 0.0
    %3578 = vmatprep.subr.mxu0 0.0
    %3579 = vmatpush1.msra.mxu0 0.0
    %3580 = vmatprep.subr.mxu0 0.0
    %3581 = vmatpush1.msra.mxu0 0.0
    %3582 = vmatprep.subr.mxu0 0.0
    %3583 = vmatpush1.msra.mxu0 0.0
    %3584 = vmatprep.subr.mxu0 0.0
    %3585 = vmatpush1.msra.mxu0 0.0
    %3586 = vmatprep.subr.mxu0 0.0
    %3587 = vmatpush1.msra.mxu0 0.0
    %3588 = vmatprep.subr.mxu0 0.0
    %3589 = vmatpush1.msra.mxu0 0.0
    %3590 = vmatprep.subr.mxu0 0.0
    %3591 = vmatpush1.msra.mxu0 0.0
    %3592 = vmatprep.subr.mxu0 0.0
    %3593 = vmatpush1.msra.mxu0 0.0
    %3594 = vmatprep.subr.mxu0 0.0
    %3595 = vmatpush1.msra.mxu0 0.0
    %3596 = vmatprep.subr.mxu0 0.0
    %3597 = vmatpush1.msra.mxu0 0.0
    %3598 = vmatprep.subr.mxu0 0.0
    %3599 = vmatpush1.msra.mxu0 0.0
    %3600 = vmatprep.subr.mxu0 0.0
    %3601 = vmatpush1.msra.mxu0 0.0
    %3602 = vmatprep.subr.mxu0 0.0
    %3603 = vmatpush1.msra.mxu0 0.0
    %3604 = vmatprep.subr.mxu0 0.0
    %3605 = vmatpush1.msra.mxu0 0.0
    %3606 = vmatprep.subr.mxu0 0.0
    %3607 = vmatpush1.msra.mxu0 0.0
    %3608 = vmatprep.subr.mxu0 0.0
    %3609 = vmatpush1.msra.mxu0 0.0
    %3610 = vmatprep.subr.mxu0 0.0
    %3611 = vmatpush1.msra.mxu0 0.0
    %3612 = vmatprep.subr.mxu0 0.0
    %3613 = vmatpush1.msra.mxu0 0.0
    %3614 = vmatprep.subr.mxu0 0.0
    %3615 = vmatpush1.msra.mxu0 0.0
    %3616 = vmatprep.mubr.f32.mxu0 0.0
    %3617 = vmatmul.mubr.f32.gmra.mrb[0].mxu0 %v3480
    %v3618 = vpop.f32.mrb[0].mxu0
    %v3619 = vadd.f32 %v3549, %v3618
    %v3620 = vpop.f32.mrb[0].mxu0
    %3621 = vdwg.mxu0
    %v3622 = vmul.f32 %v3619, 0.009090909
    %v3623 = vmul.f32 %v3622, %v3622
    %v3625 = vrot.slane %v3623, 7
    %v3627 = vsub.f32 %v3622, %v3625
    %v3628 = vld [vmem:[#allocation27] sm:$0x1]
    %v3629 = vadd.f32 %v3627, 1e-05
    %v3630 = vrsqrt.pop %v3629
    %v3633 = vunpack.c.l.s4 1966171168
    %v3634 = vunpack.c.0.s8 %v3633
    %v3635 = vlaneseq
    %v3636 = vshrl.u32 %v3635, 7
    %v3637 = vsub.s32 %v3634, %v3636
    %v3638 = vrot.slane %v3630, %v3637
    %v3639 = vcombine.high %v3638, %v3638
    %v3641 = vunpack.c.l.s4 1966171168
    %v3642 = vunpack.c.0.s8 %v3641
    %v3643 = vlaneseq
    %v3644 = vshrl.u32 %v3643, 7
    %v3645 = vsub.s32 %v3642, %v3644
    %v3646 = vrot.slane %v3639, %v3645
    %v3648 = vmul.f32 %v3628, %v3646
    %v3649 = vld [vmem:[#allocation28] sm:$0x1]
    %v3650 = vmul.f32 %v3622, %v3648
    %v3651 = vsub.f32 %v3649, %v3650
    %v3653 = vlaneseq
    %v3654 = vshrl.u32 %v3653, 7
    %v3655 = vsub.s32 0, %v3654
    %v3656 = vrot.slane %v3651, %v3655
    %v3658 = vsel %vm1334, %v3648, %v3656
    %v3659 = vld [vmem:[#allocation22] sm:$0xff]
    %v3660 = vld [vmem:[#allocation22 + $0x8] sm:$0xff]
    %v3661 = vld [vmem:[#allocation22 + $0x10] sm:$0xff]
    %v3662 = vld [vmem:[#allocation22 + $0x18] sm:$0xff]
    %v3663 = vld [vmem:[#allocation22 + $0x20] sm:$0xff]
    %v3664 = vld [vmem:[#allocation22 + $0x28] sm:$0xff]
    %v3665 = vld [vmem:[#allocation22 + $0x30] sm:$0xff]
    %v3666 = vld [vmem:[#allocation22 + $0x38] sm:$0xff]
    %v3667 = vld [vmem:[#allocation22 + $0x40] sm:$0xff]
    %v3668 = vld [vmem:[#allocation22 + $0x48] sm:$0xff]
    %v3669 = vld [vmem:[#allocation22 + $0x50] sm:$0xff]
    %v3670 = vld [vmem:[#allocation22 + $0x58] sm:$0xff]
    %vm3671 = vcmask 261120
    %v3673 = vsel %vm3671, %v3658, 0
    %3675 = vmatprep.subr.mxu0 %v3660
    %3676 = vmatpush1.msra.mxu0 %v3659
    %3677 = vmatprep.subr.mxu0 %v3663
    %3678 = vmatpush1.msra.mxu0 %v3662
    %3679 = vmatprep.subr.mxu0 %v3666
    %3680 = vmatpush1.msra.mxu0 %v3665
    %3681 = vmatprep.subr.mxu0 %v3669
    %3682 = vmatpush1.msra.mxu0 %v3668
    %3683 = vmatprep.subr.mxu0 0.0
    %3684 = vmatpush1.msra.mxu0 0.0
    %3685 = vmatprep.subr.mxu0 0.0
    %3686 = vmatpush1.msra.mxu0 0.0
    %3687 = vmatprep.subr.mxu0 0.0
    %3688 = vmatpush1.msra.mxu0 0.0
    %3689 = vmatprep.subr.mxu0 0.0
    %3690 = vmatpush1.msra.mxu0 0.0
    %3691 = vmatprep.subr.mxu0 0.0
    %3692 = vmatpush1.msra.mxu0 0.0
    %3693 = vmatprep.subr.mxu0 0.0
    %3694 = vmatpush1.msra.mxu0 0.0
    %3695 = vmatprep.subr.mxu0 0.0
    %3696 = vmatpush1.msra.mxu0 0.0
    %3697 = vmatprep.subr.mxu0 0.0
    %3698 = vmatpush1.msra.mxu0 0.0
    %3699 = vmatprep.subr.mxu0 0.0
    %3700 = vmatpush1.msra.mxu0 0.0
    %3701 = vmatprep.subr.mxu0 0.0
    %3702 = vmatpush1.msra.mxu0 0.0
    %3703 = vmatprep.subr.mxu0 0.0
    %3704 = vmatpush1.msra.mxu0 0.0
    %3705 = vmatprep.subr.mxu0 0.0
    %3706 = vmatpush1.msra.mxu0 0.0
    %3707 = vmatprep.subr.mxu0 0.0
    %3708 = vmatpush1.msra.mxu0 0.0
    %3709 = vmatprep.subr.mxu0 0.0
    %3710 = vmatpush1.msra.mxu0 0.0
    %3711 = vmatprep.subr.mxu0 0.0
    %3712 = vmatpush1.msra.mxu0 0.0
    %3713 = vmatprep.subr.mxu0 0.0
    %3714 = vmatpush1.msra.mxu0 0.0
    %3715 = vmatprep.subr.mxu0 0.0
    %3716 = vmatpush1.msra.mxu0 0.0
    %3717 = vmatprep.subr.mxu0 0.0
    %3718 = vmatpush1.msra.mxu0 0.0
    %3719 = vmatprep.subr.mxu0 0.0
    %3720 = vmatpush1.msra.mxu0 0.0
    %3721 = vmatprep.subr.mxu0 0.0
    %3722 = vmatpush1.msra.mxu0 0.0
    %3723 = vmatprep.subr.mxu0 0.0
    %3724 = vmatpush1.msra.mxu0 0.0
    %3725 = vmatprep.subr.mxu0 0.0
    %3726 = vmatpush1.msra.mxu0 0.0
    %3727 = vmatprep.subr.mxu0 0.0
    %3728 = vmatpush1.msra.mxu0 0.0
    %3729 = vmatprep.subr.mxu0 0.0
    %3730 = vmatpush1.msra.mxu0 0.0
    %3731 = vmatprep.subr.mxu0 0.0
    %3732 = vmatpush1.msra.mxu0 0.0
    %3733 = vmatprep.subr.mxu0 0.0
    %3734 = vmatpush1.msra.mxu0 0.0
    %3735 = vmatprep.subr.mxu0 0.0
    %3736 = vmatpush1.msra.mxu0 0.0
    %3737 = vmatprep.subr.mxu0 0.0
    %3738 = vmatpush1.msra.mxu0 0.0
    %3739 = vmatprep.mubr.f32.mxu0 0.0
    %3740 = vmatmul.mubr.f32.gmra.mrb[0].mxu0 %v3673
    %v3741 = vpop.f32.mrb[0].mxu0
    %v3742 = vadd.f32 0.0, %v3741
    %v3743 = vpop.f32.mrb[0].mxu0
    %v3744 = vadd.f32 0.0, %v3743
    %3745 = vdwg.mxu0
    %3746 = vmatprep.subr.mxu0 0.0
    %3747 = vmatpush1.msra.mxu0 %v3661
    %3748 = vmatprep.subr.mxu0 0.0
    %3749 = vmatpush1.msra.mxu0 %v3664
    %3750 = vmatprep.subr.mxu0 0.0
    %3751 = vmatpush1.msra.mxu0 %v3667
    %3752 = vmatprep.subr.mxu0 0.0
    %3753 = vmatpush1.msra.mxu0 %v3670
    %3754 = vmatprep.subr.mxu0 0.0
    %3755 = vmatpush1.msra.mxu0 0.0
    %3756 = vmatprep.subr.mxu0 0.0
    %3757 = vmatpush1.msra.mxu0 0.0
    %3758 = vmatprep.subr.mxu0 0.0
    %3759 = vmatpush1.msra.mxu0 0.0
    %3760 = vmatprep.subr.mxu0 0.0
    %3761 = vmatpush1.msra.mxu0 0.0
    %3762 = vmatprep.subr.mxu0 0.0
    %3763 = vmatpush1.msra.mxu0 0.0
    %3764 = vmatprep.subr.mxu0 0.0
    %3765 = vmatpush1.msra.mxu0 0.0
    %3766 = vmatprep.subr.mxu0 0.0
    %3767 = vmatpush1.msra.mxu0 0.0
    %3768 = vmatprep.subr.mxu0 0.0
    %3769 = vmatpush1.msra.mxu0 0.0
    %3770 = vmatprep.subr.mxu0 0.0
    %3771 = vmatpush1.msra.mxu0 0.0
    %3772 = vmatprep.subr.mxu0 0.0
    %3773 = vmatpush1.msra.mxu0 0.0
    %3774 = vmatprep.subr.mxu0 0.0
    %3775 = vmatpush1.msra.mxu0 0.0
    %3776 = vmatprep.subr.mxu0 0.0
    %3777 = vmatpush1.msra.mxu0 0.0
    %3778 = vmatprep.subr.mxu0 0.0
    %3779 = vmatpush1.msra.mxu0 0.0
    %3780 = vmatprep.subr.mxu0 0.0
    %3781 = vmatpush1.msra.mxu0 0.0
    %3782 = vmatprep.subr.mxu0 0.0
    %3783 = vmatpush1.msra.mxu0 0.0
    %3784 = vmatprep.subr.mxu0 0.0
    %3785 = vmatpush1.msra.mxu0 0.0
    %3786 = vmatprep.subr.mxu0 0.0
    %3787 = vmatpush1.msra.mxu0 0.0
    %3788 = vmatprep.subr.mxu0 0.0
    %3789 = vmatpush1.msra.mxu0 0.0
    %3790 = vmatprep.subr.mxu0 0.0
    %3791 = vmatpush1.msra.mxu0 0.0
    %3792 = vmatprep.subr.mxu0 0.0
    %3793 = vmatpush1.msra.mxu0 0.0
    %3794 = vmatprep.subr.mxu0 0.0
    %3795 = vmatpush1.msra.mxu0 0.0
    %3796 = vmatprep.subr.mxu0 0.0
    %3797 = vmatpush1.msra.mxu0 0.0
    %3798 = vmatprep.subr.mxu0 0.0
    %3799 = vmatpush1.msra.mxu0 0.0
    %3800 = vmatprep.subr.mxu0 0.0
    %3801 = vmatpush1.msra.mxu0 0.0
    %3802 = vmatprep.subr.mxu0 0.0
    %3803 = vmatpush1.msra.mxu0 0.0
    %3804 = vmatprep.subr.mxu0 0.0
    %3805 = vmatpush1.msra.mxu0 0.0
    %3806 = vmatprep.subr.mxu0 0.0
    %3807 = vmatpush1.msra.mxu0 0.0
    %3808 = vmatprep.subr.mxu0 0.0
    %3809 = vmatpush1.msra.mxu0 0.0
    %3810 = vmatprep.mubr.f32.mxu0 0.0
    %3811 = vmatmul.mubr.f32.gmra.mrb[0].mxu0 %v3673
    %v3812 = vpop.f32.mrb[0].mxu0
    %v3813 = vadd.f32 0.0, %v3812
    %v3814 = vpop.f32.mrb[0].mxu0
    %3815 = vdwg.mxu0
    %v3816 = vlaneseq
    %v3817 = vshrl.u32 %v3816, 7
    %v3818 = vsub.s32 0, %v3817
    %v3819 = vrot.slane %v3742, %v3818
    %v3820 = vlaneseq
    %v3821 = vshrl.u32 %v3820, 7
    %v3822 = vsub.s32 0, %v3821
    %v3823 = vrot.slane %v3744, %v3822
    %v3824 = vlaneseq
    %v3825 = vshrl.u32 %v3824, 7
    %v3826 = vsub.s32 0, %v3825
    %v3827 = vrot.slane %v3813, %v3826
    %v3828 = vmul.f32 %v3105, %v3819
    %v3829 = vmul.f32 %v3106, %v3823
    %v3830 = vmul.f32 %v3107, %v3827
    %v3831 = vmul.f32 %v3108, %v3819
    %v3832 = vmul.f32 %v3109, %v3823
    %v3833 = vmul.f32 %v3110, %v3827
    %v3834 = vlaneseq
    %v3835 = vshrl.u32 %v3834, 7
    %v3836 = vsub.s32 1, %v3835
    %v3837 = vrot.slane %v3742, %v3836
    %v3838 = vlaneseq
    %v3839 = vshrl.u32 %v3838, 7
    %v3840 = vsub.s32 1, %v3839
    %v3841 = vrot.slane %v3744, %v3840
    %v3842 = vlaneseq
    %v3843 = vshrl.u32 %v3842, 7
    %v3844 = vsub.s32 1, %v3843
    %v3845 = vrot.slane %v3813, %v3844
    %v3846 = vadd.f32 %v3828, %v3837
    %v3847 = vadd.f32 %v3829, %v3841
    %v3848 = vadd.f32 %v3830, %v3845
    %v3849 = vadd.f32 %v3831, %v3837
    %v3850 = vadd.f32 %v3832, %v3841
    %v3851 = vadd.f32 %v3833, %v3845
    %v3852 = vmax.f32 %v3846, 0.0
    %v3853 = vmax.f32 %v3847, 0.0
    %v3854 = vmax.f32 %v3848, 0.0
    %v3855 = vmax.f32 %v3849, 0.0
    %v3856 = vmax.f32 %v3850, 0.0
    %v3857 = vmax.f32 %v3851, 0.0
    %v3858 = vld [vmem:[#allocation24] sm:$0xff]
    %v3859 = vld [vmem:[#allocation24 + $0x8] sm:$0xff]
    %v3860 = vld [vmem:[#allocation24 + $0x10] sm:$0xff]
    %v3861 = vld [vmem:[#allocation24 + $0x18] sm:$0xff]
    %v3862 = vld [vmem:[#allocation24 + $0x20] sm:$0xff]
    %v3863 = vld [vmem:[#allocation24 + $0x28] sm:$0xff]
    %v3864 = vld [vmem:[#allocation24 + $0x30] sm:$0xff]
    %v3865 = vld [vmem:[#allocation24 + $0x38] sm:$0xff]
    %v3866 = vld [vmem:[#allocation24 + $0x40] sm:$0xff]
    %v3867 = vld [vmem:[#allocation24 + $0x48] sm:$0xff]
    %v3868 = vld [vmem:[#allocation24 + $0x50] sm:$0xff]
    %v3869 = vld [vmem:[#allocation24 + $0x58] sm:$0xff]
    %v3870 = vld [vmem:[#allocation24 + $0x60] sm:$0xff]
    %v3871 = vld [vmem:[#allocation24 + $0x68] sm:$0xff]
    %v3872 = vld [vmem:[#allocation24 + $0x70] sm:$0xff]
    %v3873 = vld [vmem:[#allocation24 + $0x78] sm:$0xff]
    %v3874 = vld [vmem:[#allocation24 + $0x80] sm:$0xff]
    %v3875 = vld [vmem:[#allocation24 + $0x88] sm:$0xff]
    %v3876 = vld [vmem:[#allocation24 + $0x90] sm:$0xff]
    %v3877 = vld [vmem:[#allocation24 + $0x98] sm:$0xff]
    %v3878 = vld [vmem:[#allocation24 + $0xa0] sm:$0xff]
    %v3879 = vld [vmem:[#allocation24 + $0xa8] sm:$0xff]
    %v3880 = vld [vmem:[#allocation24 + $0xb0] sm:$0xff]
    %v3881 = vld [vmem:[#allocation24 + $0xb8] sm:$0xff]
    %v3882 = vld [vmem:[#allocation24 + $0xc0] sm:$0xff]
    %v3883 = vld [vmem:[#allocation24 + $0xc8] sm:$0xff]
    %v3884 = vld [vmem:[#allocation24 + $0xd0] sm:$0xff]
    %v3885 = vld [vmem:[#allocation24 + $0xd8] sm:$0xff]
    %v3886 = vld [vmem:[#allocation24 + $0xe0] sm:$0xff]
    %v3887 = vld [vmem:[#allocation24 + $0xe8] sm:$0xff]
    %v3888 = vld [vmem:[#allocation24 + $0xf0] sm:$0xff]
    %v3889 = vld [vmem:[#allocation24 + $0xf8] sm:$0xff]
    %v3890 = vld [vmem:[#allocation24 + $0x100] sm:$0xff]
    %v3891 = vld [vmem:[#allocation24 + $0x108] sm:$0xff]
    %v3892 = vld [vmem:[#allocation24 + $0x110] sm:$0xff]
    %v3893 = vld [vmem:[#allocation24 + $0x118] sm:$0xff]
    %v3894 = vld [vmem:[#allocation24 + $0x120] sm:$0xff]
    %v3895 = vld [vmem:[#allocation24 + $0x128] sm:$0xff]
    %v3896 = vld [vmem:[#allocation24 + $0x130] sm:$0xff]
    %v3897 = vld [vmem:[#allocation24 + $0x138] sm:$0xff]
    %v3898 = vld [vmem:[#allocation24 + $0x140] sm:$0xff]
    %v3899 = vld [vmem:[#allocation24 + $0x148] sm:$0xff]
    %v3900 = vld [vmem:[#allocation24 + $0x150] sm:$0xff]
    %v3901 = vld [vmem:[#allocation24 + $0x158] sm:$0xff]
    %v3902 = vld [vmem:[#allocation24 + $0x160] sm:$0xff]
    %v3903 = vld [vmem:[#allocation24 + $0x168] sm:$0xff]
    %v3904 = vld [vmem:[#allocation24 + $0x170] sm:$0xff]
    %v3905 = vld [vmem:[#allocation24 + $0x178] sm:$0xff]
    %v3906 = vld [vmem:[#allocation24 + $0x180] sm:$0xff]
    %v3907 = vld [vmem:[#allocation24 + $0x188] sm:$0xff]
    %v3908 = vld [vmem:[#allocation24 + $0x190] sm:$0xff]
    %v3909 = vld [vmem:[#allocation24 + $0x198] sm:$0xff]
    %v3910 = vld [vmem:[#allocation24 + $0x1a0] sm:$0xff]
    %v3911 = vld [vmem:[#allocation24 + $0x1a8] sm:$0xff]
    %v3912 = vld [vmem:[#allocation24 + $0x1b0] sm:$0xff]
    %v3913 = vld [vmem:[#allocation24 + $0x1b8] sm:$0xff]
    %v3914 = vld [vmem:[#allocation24 + $0x1c0] sm:$0xff]
    %v3915 = vld [vmem:[#allocation24 + $0x1c8] sm:$0xff]
    %v3916 = vld [vmem:[#allocation24 + $0x1d0] sm:$0xff]
    %v3917 = vld [vmem:[#allocation24 + $0x1d8] sm:$0xff]
    %v3918 = vld [vmem:[#allocation24 + $0x1e0] sm:$0xff]
    %v3919 = vld [vmem:[#allocation24 + $0x1e8] sm:$0xff]
    %v3920 = vld [vmem:[#allocation24 + $0x1f0] sm:$0xff]
    %v3921 = vld [vmem:[#allocation24 + $0x1f8] sm:$0xff]
    %v3922 = vld [vmem:[#allocation24 + $0x200] sm:$0xff]
    %v3923 = vld [vmem:[#allocation24 + $0x208] sm:$0xff]
    %v3924 = vld [vmem:[#allocation24 + $0x210] sm:$0xff]
    %v3925 = vld [vmem:[#allocation24 + $0x218] sm:$0xff]
    %v3926 = vld [vmem:[#allocation24 + $0x220] sm:$0xff]
    %v3927 = vld [vmem:[#allocation24 + $0x228] sm:$0xff]
    %v3928 = vld [vmem:[#allocation24 + $0x230] sm:$0xff]
    %v3929 = vld [vmem:[#allocation24 + $0x238] sm:$0xff]
    %v3930 = vld [vmem:[#allocation24 + $0x240] sm:$0xff]
    %v3931 = vld [vmem:[#allocation24 + $0x248] sm:$0xff]
    %v3932 = vld [vmem:[#allocation24 + $0x250] sm:$0xff]
    %v3933 = vld [vmem:[#allocation24 + $0x258] sm:$0xff]
    %v3934 = vld [vmem:[#allocation24 + $0x260] sm:$0xff]
    %v3935 = vld [vmem:[#allocation24 + $0x268] sm:$0xff]
    %v3936 = vld [vmem:[#allocation24 + $0x270] sm:$0xff]
    %v3937 = vld [vmem:[#allocation24 + $0x278] sm:$0xff]
    %v3938 = vld [vmem:[#allocation24 + $0x280] sm:$0xff]
    %v3939 = vld [vmem:[#allocation24 + $0x288] sm:$0xff]
    %v3940 = vld [vmem:[#allocation24 + $0x290] sm:$0xff]
    %v3941 = vld [vmem:[#allocation24 + $0x298] sm:$0xff]
    %v3942 = vld [vmem:[#allocation24 + $0x2a0] sm:$0xff]
    %v3943 = vld [vmem:[#allocation24 + $0x2a8] sm:$0xff]
    %v3944 = vld [vmem:[#allocation24 + $0x2b0] sm:$0xff]
    %v3945 = vld [vmem:[#allocation24 + $0x2b8] sm:$0xff]
    %v3947 = vsel %vm3478, %v3854, 0
    %v3950 = vsel %vm3478, %v3857, 0
    %3952 = vmatprep.subr.mxu0 %v3859
    %3953 = vmatpush1.msra.mxu0 %v3858
    %3954 = vmatprep.subr.mxu0 %v3861
    %3955 = vmatpush1.msra.mxu0 %v3860
    %3956 = vmatprep.subr.mxu0 %v3863
    %3957 = vmatpush1.msra.mxu0 %v3862
    %3958 = vmatprep.subr.mxu0 %v3865
    %3959 = vmatpush1.msra.mxu0 %v3864
    %3960 = vmatprep.subr.mxu0 %v3867
    %3961 = vmatpush1.msra.mxu0 %v3866
    %3962 = vmatprep.subr.mxu0 %v3869
    %3963 = vmatpush1.msra.mxu0 %v3868
    %3964 = vmatprep.subr.mxu0 %v3871
    %3965 = vmatpush1.msra.mxu0 %v3870
    %3966 = vmatprep.subr.mxu0 %v3873
    %3967 = vmatpush1.msra.mxu0 %v3872
    %3968 = vmatprep.subr.mxu0 %v3875
    %3969 = vmatpush1.msra.mxu0 %v3874
    %3970 = vmatprep.subr.mxu0 %v3877
    %3971 = vmatpush1.msra.mxu0 %v3876
    %3972 = vmatprep.subr.mxu0 %v3879
    %3973 = vmatpush1.msra.mxu0 %v3878
    %3974 = vmatprep.subr.mxu0 %v3881
    %3975 = vmatpush1.msra.mxu0 %v3880
    %3976 = vmatprep.subr.mxu0 %v3883
    %3977 = vmatpush1.msra.mxu0 %v3882
    %3978 = vmatprep.subr.mxu0 %v3885
    %3979 = vmatpush1.msra.mxu0 %v3884
    %3980 = vmatprep.subr.mxu0 %v3887
    %3981 = vmatpush1.msra.mxu0 %v3886
    %3982 = vmatprep.subr.mxu0 %v3889
    %3983 = vmatpush1.msra.mxu0 %v3888
    %3984 = vmatprep.subr.mxu0 %v3891
    %3985 = vmatpush1.msra.mxu0 %v3890
    %3986 = vmatprep.subr.mxu0 %v3893
    %3987 = vmatpush1.msra.mxu0 %v3892
    %3988 = vmatprep.subr.mxu0 %v3895
    %3989 = vmatpush1.msra.mxu0 %v3894
    %3990 = vmatprep.subr.mxu0 %v3897
    %3991 = vmatpush1.msra.mxu0 %v3896
    %3992 = vmatprep.subr.mxu0 %v3899
    %3993 = vmatpush1.msra.mxu0 %v3898
    %3994 = vmatprep.subr.mxu0 %v3901
    %3995 = vmatpush1.msra.mxu0 %v3900
    %3996 = vmatprep.subr.mxu0 %v3903
    %3997 = vmatpush1.msra.mxu0 %v3902
    %3998 = vmatprep.subr.mxu0 %v3905
    %3999 = vmatpush1.msra.mxu0 %v3904
    %4000 = vmatprep.subr.mxu0 %v3907
    %4001 = vmatpush1.msra.mxu0 %v3906
    %4002 = vmatprep.subr.mxu0 %v3909
    %4003 = vmatpush1.msra.mxu0 %v3908
    %4004 = vmatprep.subr.mxu0 %v3911
    %4005 = vmatpush1.msra.mxu0 %v3910
    %4006 = vmatprep.subr.mxu0 %v3913
    %4007 = vmatpush1.msra.mxu0 %v3912
    %4008 = vmatprep.subr.mxu0 %v3915
    %4009 = vmatpush1.msra.mxu0 %v3914
    %4010 = vmatprep.subr.mxu0 %v3917
    %4011 = vmatpush1.msra.mxu0 %v3916
    %4012 = vmatprep.subr.mxu0 %v3919
    %4013 = vmatpush1.msra.mxu0 %v3918
    %4014 = vmatprep.subr.mxu0 %v3921
    %4015 = vmatpush1.msra.mxu0 %v3920
    %4016 = vmatprep.mubr.f32.mxu0 %v3853
    %4017 = vmatmul.mubr.f32.gmra.mrb[0].mxu0 %v3852
    %v4018 = vpop.f32.mrb[0].mxu0
    %v4019 = vadd.f32 0.0, %v4018
    %v4020 = vpop.f32.mrb[0].mxu0
    %v4021 = vadd.f32 0.0, %v4020
    %4022 = vmatprep.mubr.f32.mxu0 %v3856
    %4023 = vmatmul.mubr.f32.gmra.mrb[0].mxu0 %v3855
    %v4024 = vpop.f32.mrb[0].mxu0
    %v4025 = vadd.f32 0.0, %v4024
    %v4026 = vpop.f32.mrb[0].mxu0
    %v4027 = vadd.f32 0.0, %v4026
    %4028 = vdwg.mxu0
    %4029 = vmatprep.subr.mxu0 %v3923
    %4030 = vmatpush1.msra.mxu0 %v3922
    %4031 = vmatprep.subr.mxu0 %v3925
    %4032 = vmatpush1.msra.mxu0 %v3924
    %4033 = vmatprep.subr.mxu0 %v3927
    %4034 = vmatpush1.msra.mxu0 %v3926
    %4035 = vmatprep.subr.mxu0 %v3929
    %4036 = vmatpush1.msra.mxu0 %v3928
    %4037 = vmatprep.subr.mxu0 %v3931
    %4038 = vmatpush1.msra.mxu0 %v3930
    %4039 = vmatprep.subr.mxu0 %v3933
    %4040 = vmatpush1.msra.mxu0 %v3932
    %4041 = vmatprep.subr.mxu0 %v3935
    %4042 = vmatpush1.msra.mxu0 %v3934
    %4043 = vmatprep.subr.mxu0 %v3937
    %4044 = vmatpush1.msra.mxu0 %v3936
    %4045 = vmatprep.subr.mxu0 %v3939
    %4046 = vmatpush1.msra.mxu0 %v3938
    %4047 = vmatprep.subr.mxu0 %v3941
    %4048 = vmatpush1.msra.mxu0 %v3940
    %4049 = vmatprep.subr.mxu0 %v3943
    %4050 = vmatpush1.msra.mxu0 %v3942
    %4051 = vmatprep.subr.mxu0 %v3945
    %4052 = vmatpush1.msra.mxu0 %v3944
    %4053 = vmatprep.subr.mxu0 0.0
    %4054 = vmatpush1.msra.mxu0 0.0
    %4055 = vmatprep.subr.mxu0 0.0
    %4056 = vmatpush1.msra.mxu0 0.0
    %4057 = vmatprep.subr.mxu0 0.0
    %4058 = vmatpush1.msra.mxu0 0.0
    %4059 = vmatprep.subr.mxu0 0.0
    %4060 = vmatpush1.msra.mxu0 0.0
    %4061 = vmatprep.subr.mxu0 0.0
    %4062 = vmatpush1.msra.mxu0 0.0
    %4063 = vmatprep.subr.mxu0 0.0
    %4064 = vmatpush1.msra.mxu0 0.0
    %4065 = vmatprep.subr.mxu0 0.0
    %4066 = vmatpush1.msra.mxu0 0.0
    %4067 = vmatprep.subr.mxu0 0.0
    %4068 = vmatpush1.msra.mxu0 0.0
    %4069 = vmatprep.subr.mxu0 0.0
    %4070 = vmatpush1.msra.mxu0 0.0
    %4071 = vmatprep.subr.mxu0 0.0
    %4072 = vmatpush1.msra.mxu0 0.0
    %4073 = vmatprep.subr.mxu0 0.0
    %4074 = vmatpush1.msra.mxu0 0.0
    %4075 = vmatprep.subr.mxu0 0.0
    %4076 = vmatpush1.msra.mxu0 0.0
    %4077 = vmatprep.subr.mxu0 0.0
    %4078 = vmatpush1.msra.mxu0 0.0
    %4079 = vmatprep.subr.mxu0 0.0
    %4080 = vmatpush1.msra.mxu0 0.0
    %4081 = vmatprep.subr.mxu0 0.0
    %4082 = vmatpush1.msra.mxu0 0.0
    %4083 = vmatprep.subr.mxu0 0.0
    %4084 = vmatpush1.msra.mxu0 0.0
    %4085 = vmatprep.subr.mxu0 0.0
    %4086 = vmatpush1.msra.mxu0 0.0
    %4087 = vmatprep.subr.mxu0 0.0
    %4088 = vmatpush1.msra.mxu0 0.0
    %4089 = vmatprep.subr.mxu0 0.0
    %4090 = vmatpush1.msra.mxu0 0.0
    %4091 = vmatprep.subr.mxu0 0.0
    %4092 = vmatpush1.msra.mxu0 0.0
    %4093 = vmatprep.mubr.f32.mxu0 0.0
    %4094 = vmatmul.mubr.f32.gmra.mrb[0].mxu0 %v3947
    %v4095 = vpop.f32.mrb[0].mxu0
    %v4096 = vadd.f32 %v4019, %v4095
    %v4097 = vpop.f32.mrb[0].mxu0
    %v4098 = vadd.f32 %v4021, %v4097
    %4099 = vmatprep.mubr.f32.mxu0 0.0
    %4100 = vmatmul.mubr.f32.gmra.mrb[0].mxu0 %v3950
    %v4101 = vpop.f32.mrb[0].mxu0
    %v4102 = vadd.f32 %v4025, %v4101
    %v4103 = vpop.f32.mrb[0].mxu0
    %v4104 = vadd.f32 %v4027, %v4103
    %4105 = vdwg.mxu0
    %v4106 = vld [vmem:[#allocation25] sm:$0xff]
    %v4107 = vld [vmem:[#allocation25 + $0x8] sm:$0xff]
    %v4108 = vld [vmem:[#allocation25 + $0x10] sm:$0xff]
    %v4109 = vld [vmem:[#allocation25 + $0x18] sm:$0xff]
    %v4110 = vld [vmem:[#allocation25 + $0x20] sm:$0xff]
    %v4111 = vld [vmem:[#allocation25 + $0x28] sm:$0xff]
    %v4112 = vld [vmem:[#allocation25 + $0x30] sm:$0xff]
    %v4113 = vld [vmem:[#allocation25 + $0x38] sm:$0xff]
    %v4114 = vld [vmem:[#allocation25 + $0x40] sm:$0xff]
    %v4115 = vld [vmem:[#allocation25 + $0x48] sm:$0xff]
    %v4116 = vld [vmem:[#allocation25 + $0x50] sm:$0xff]
    %v4117 = vld [vmem:[#allocation25 + $0x58] sm:$0xff]
    %v4118 = vld [vmem:[#allocation25 + $0x60] sm:$0xff]
    %v4119 = vld [vmem:[#allocation25 + $0x68] sm:$0xff]
    %v4120 = vld [vmem:[#allocation25 + $0x70] sm:$0xff]
    %v4121 = vld [vmem:[#allocation25 + $0x78] sm:$0xff]
    %v4122 = vld [vmem:[#allocation25 + $0x80] sm:$0xff]
    %v4123 = vld [vmem:[#allocation25 + $0x88] sm:$0xff]
    %v4124 = vld [vmem:[#allocation25 + $0x90] sm:$0xff]
    %v4125 = vld [vmem:[#allocation25 + $0x98] sm:$0xff]
    %v4126 = vld [vmem:[#allocation25 + $0xa0] sm:$0xff]
    %v4127 = vld [vmem:[#allocation25 + $0xa8] sm:$0xff]
    %v4128 = vld [vmem:[#allocation25 + $0xb0] sm:$0xff]
    %v4129 = vld [vmem:[#allocation25 + $0xb8] sm:$0xff]
    %v4130 = vld [vmem:[#allocation25 + $0xc0] sm:$0xff]
    %v4131 = vld [vmem:[#allocation25 + $0xc8] sm:$0xff]
    %v4132 = vld [vmem:[#allocation25 + $0xd0] sm:$0xff]
    %v4133 = vld [vmem:[#allocation25 + $0xd8] sm:$0xff]
    %v4134 = vld [vmem:[#allocation25 + $0xe0] sm:$0xff]
    %v4135 = vld [vmem:[#allocation25 + $0xe8] sm:$0xff]
    %v4136 = vld [vmem:[#allocation25 + $0xf0] sm:$0xff]
    %v4137 = vld [vmem:[#allocation25 + $0xf8] sm:$0xff]
    %v4138 = vld [vmem:[#allocation25 + $0x100] sm:$0xff]
    %v4139 = vld [vmem:[#allocation25 + $0x108] sm:$0xff]
    %v4140 = vld [vmem:[#allocation25 + $0x110] sm:$0xff]
    %v4141 = vld [vmem:[#allocation25 + $0x118] sm:$0xff]
    %v4142 = vld [vmem:[#allocation25 + $0x120] sm:$0xff]
    %v4143 = vld [vmem:[#allocation25 + $0x128] sm:$0xff]
    %v4144 = vld [vmem:[#allocation25 + $0x130] sm:$0xff]
    %v4145 = vld [vmem:[#allocation25 + $0x138] sm:$0xff]
    %v4146 = vld [vmem:[#allocation25 + $0x140] sm:$0xff]
    %v4147 = vld [vmem:[#allocation25 + $0x148] sm:$0xff]
    %v4148 = vld [vmem:[#allocation25 + $0x150] sm:$0xff]
    %v4149 = vld [vmem:[#allocation25 + $0x158] sm:$0xff]
    %v4150 = vld [vmem:[#allocation25 + $0x160] sm:$0xff]
    %v4151 = vld [vmem:[#allocation25 + $0x168] sm:$0xff]
    %v4152 = vld [vmem:[#allocation25 + $0x170] sm:$0xff]
    %v4153 = vld [vmem:[#allocation25 + $0x178] sm:$0xff]
    %v4154 = vld [vmem:[#allocation25 + $0x180] sm:$0xff]
    %v4155 = vld [vmem:[#allocation25 + $0x188] sm:$0xff]
    %v4156 = vld [vmem:[#allocation25 + $0x190] sm:$0xff]
    %v4157 = vld [vmem:[#allocation25 + $0x198] sm:$0xff]
    %v4158 = vld [vmem:[#allocation25 + $0x1a0] sm:$0xff]
    %v4159 = vld [vmem:[#allocation25 + $0x1a8] sm:$0xff]
    %v4160 = vld [vmem:[#allocation25 + $0x1b0] sm:$0xff]
    %v4161 = vld [vmem:[#allocation25 + $0x1b8] sm:$0xff]
    %v4162 = vld [vmem:[#allocation25 + $0x1c0] sm:$0xff]
    %v4163 = vld [vmem:[#allocation25 + $0x1c8] sm:$0xff]
    %v4164 = vld [vmem:[#allocation25 + $0x1d0] sm:$0xff]
    %v4165 = vld [vmem:[#allocation25 + $0x1d8] sm:$0xff]
    %v4166 = vld [vmem:[#allocation25 + $0x1e0] sm:$0xff]
    %v4167 = vld [vmem:[#allocation25 + $0x1e8] sm:$0xff]
    %v4168 = vld [vmem:[#allocation25 + $0x1f0] sm:$0xff]
    %v4169 = vld [vmem:[#allocation25 + $0x1f8] sm:$0xff]
    %v4170 = vld [vmem:[#allocation25 + $0x200] sm:$0xff]
    %v4171 = vld [vmem:[#allocation25 + $0x208] sm:$0xff]
    %v4172 = vld [vmem:[#allocation25 + $0x210] sm:$0xff]
    %v4173 = vld [vmem:[#allocation25 + $0x218] sm:$0xff]
    %v4174 = vld [vmem:[#allocation25 + $0x220] sm:$0xff]
    %v4175 = vld [vmem:[#allocation25 + $0x228] sm:$0xff]
    %v4176 = vld [vmem:[#allocation25 + $0x230] sm:$0xff]
    %v4177 = vld [vmem:[#allocation25 + $0x238] sm:$0xff]
    %v4178 = vld [vmem:[#allocation25 + $0x240] sm:$0xff]
    %v4179 = vld [vmem:[#allocation25 + $0x248] sm:$0xff]
    %v4180 = vld [vmem:[#allocation25 + $0x250] sm:$0xff]
    %v4181 = vld [vmem:[#allocation25 + $0x258] sm:$0xff]
    %v4182 = vld [vmem:[#allocation25 + $0x260] sm:$0xff]
    %v4183 = vld [vmem:[#allocation25 + $0x268] sm:$0xff]
    %v4184 = vld [vmem:[#allocation25 + $0x270] sm:$0xff]
    %v4185 = vld [vmem:[#allocation25 + $0x278] sm:$0xff]
    %v4186 = vld [vmem:[#allocation25 + $0x280] sm:$0xff]
    %v4187 = vld [vmem:[#allocation25 + $0x288] sm:$0xff]
    %v4188 = vld [vmem:[#allocation25 + $0x290] sm:$0xff]
    %v4189 = vld [vmem:[#allocation25 + $0x298] sm:$0xff]
    %v4190 = vld [vmem:[#allocation25 + $0x2a0] sm:$0xff]
    %v4191 = vld [vmem:[#allocation25 + $0x2a8] sm:$0xff]
    %v4192 = vld [vmem:[#allocation25 + $0x2b0] sm:$0xff]
    %v4193 = vld [vmem:[#allocation25 + $0x2b8] sm:$0xff]
    %4194 = vmatprep.subr.mxu0 %v4107
    %4195 = vmatpush1.msra.mxu0 %v4106
    %4196 = vmatprep.subr.mxu0 %v4109
    %4197 = vmatpush1.msra.mxu0 %v4108
    %4198 = vmatprep.subr.mxu0 %v4111
    %4199 = vmatpush1.msra.mxu0 %v4110
    %4200 = vmatprep.subr.mxu0 %v4113
    %4201 = vmatpush1.msra.mxu0 %v4112
    %4202 = vmatprep.subr.mxu0 %v4115
    %4203 = vmatpush1.msra.mxu0 %v4114
    %4204 = vmatprep.subr.mxu0 %v4117
    %4205 = vmatpush1.msra.mxu0 %v4116
    %4206 = vmatprep.subr.mxu0 %v4119
    %4207 = vmatpush1.msra.mxu0 %v4118
    %4208 = vmatprep.subr.mxu0 %v4121
    %4209 = vmatpush1.msra.mxu0 %v4120
    %4210 = vmatprep.subr.mxu0 %v4123
    %4211 = vmatpush1.msra.mxu0 %v4122
    %4212 = vmatprep.subr.mxu0 %v4125
    %4213 = vmatpush1.msra.mxu0 %v4124
    %4214 = vmatprep.subr.mxu0 %v4127
    %4215 = vmatpush1.msra.mxu0 %v4126
    %4216 = vmatprep.subr.mxu0 %v4129
    %4217 = vmatpush1.msra.mxu0 %v4128
    %4218 = vmatprep.subr.mxu0 %v4131
    %4219 = vmatpush1.msra.mxu0 %v4130
    %4220 = vmatprep.subr.mxu0 %v4133
    %4221 = vmatpush1.msra.mxu0 %v4132
    %4222 = vmatprep.subr.mxu0 %v4135
    %4223 = vmatpush1.msra.mxu0 %v4134
    %4224 = vmatprep.subr.mxu0 %v4137
    %4225 = vmatpush1.msra.mxu0 %v4136
    %4226 = vmatprep.subr.mxu0 %v4139
    %4227 = vmatpush1.msra.mxu0 %v4138
    %4228 = vmatprep.subr.mxu0 %v4141
    %4229 = vmatpush1.msra.mxu0 %v4140
    %4230 = vmatprep.subr.mxu0 %v4143
    %4231 = vmatpush1.msra.mxu0 %v4142
    %4232 = vmatprep.subr.mxu0 %v4145
    %4233 = vmatpush1.msra.mxu0 %v4144
    %4234 = vmatprep.subr.mxu0 %v4147
    %4235 = vmatpush1.msra.mxu0 %v4146
    %4236 = vmatprep.subr.mxu0 %v4149
    %4237 = vmatpush1.msra.mxu0 %v4148
    %4238 = vmatprep.subr.mxu0 %v4151
    %4239 = vmatpush1.msra.mxu0 %v4150
    %4240 = vmatprep.subr.mxu0 %v4153
    %4241 = vmatpush1.msra.mxu0 %v4152
    %4242 = vmatprep.subr.mxu0 %v4155
    %4243 = vmatpush1.msra.mxu0 %v4154
    %4244 = vmatprep.subr.mxu0 %v4157
    %4245 = vmatpush1.msra.mxu0 %v4156
    %4246 = vmatprep.subr.mxu0 %v4159
    %4247 = vmatpush1.msra.mxu0 %v4158
    %4248 = vmatprep.subr.mxu0 %v4161
    %4249 = vmatpush1.msra.mxu0 %v4160
    %4250 = vmatprep.subr.mxu0 %v4163
    %4251 = vmatpush1.msra.mxu0 %v4162
    %4252 = vmatprep.subr.mxu0 %v4165
    %4253 = vmatpush1.msra.mxu0 %v4164
    %4254 = vmatprep.subr.mxu0 %v4167
    %4255 = vmatpush1.msra.mxu0 %v4166
    %4256 = vmatprep.subr.mxu0 %v4169
    %4257 = vmatpush1.msra.mxu0 %v4168
    %4258 = vmatprep.mubr.f32.mxu0 %v3853
    %4259 = vmatmul.mubr.f32.gmra.mrb[0].mxu0 %v3852
    %v4260 = vpop.f32.mrb[0].mxu0
    %v4261 = vadd.f32 0.0, %v4260
    %v4262 = vpop.f32.mrb[0].mxu0
    %v4263 = vadd.f32 0.0, %v4262
    %4264 = vmatprep.mubr.f32.mxu0 %v3856
    %4265 = vmatmul.mubr.f32.gmra.mrb[0].mxu0 %v3855
    %v4266 = vpop.f32.mrb[0].mxu0
    %v4267 = vadd.f32 0.0, %v4266
    %v4268 = vpop.f32.mrb[0].mxu0
    %v4269 = vadd.f32 0.0, %v4268
    %4270 = vdwg.mxu0
    %4271 = vmatprep.subr.mxu0 %v4171
    %4272 = vmatpush1.msra.mxu0 %v4170
    %4273 = vmatprep.subr.mxu0 %v4173
    %4274 = vmatpush1.msra.mxu0 %v4172
    %4275 = vmatprep.subr.mxu0 %v4175
    %4276 = vmatpush1.msra.mxu0 %v4174
    %4277 = vmatprep.subr.mxu0 %v4177
    %4278 = vmatpush1.msra.mxu0 %v4176
    %4279 = vmatprep.subr.mxu0 %v4179
    %4280 = vmatpush1.msra.mxu0 %v4178
    %4281 = vmatprep.subr.mxu0 %v4181
    %4282 = vmatpush1.msra.mxu0 %v4180
    %4283 = vmatprep.subr.mxu0 %v4183
    %4284 = vmatpush1.msra.mxu0 %v4182
    %4285 = vmatprep.subr.mxu0 %v4185
    %4286 = vmatpush1.msra.mxu0 %v4184
    %4287 = vmatprep.subr.mxu0 %v4187
    %4288 = vmatpush1.msra.mxu0 %v4186
    %4289 = vmatprep.subr.mxu0 %v4189
    %4290 = vmatpush1.msra.mxu0 %v4188
    %4291 = vmatprep.subr.mxu0 %v4191
    %4292 = vmatpush1.msra.mxu0 %v4190
    %4293 = vmatprep.subr.mxu0 %v4193
    %4294 = vmatpush1.msra.mxu0 %v4192
    %4295 = vmatprep.subr.mxu0 0.0
    %4296 = vmatpush1.msra.mxu0 0.0
    %4297 = vmatprep.subr.mxu0 0.0
    %4298 = vmatpush1.msra.mxu0 0.0
    %4299 = vmatprep.subr.mxu0 0.0
    %4300 = vmatpush1.msra.mxu0 0.0
    %4301 = vmatprep.subr.mxu0 0.0
    %4302 = vmatpush1.msra.mxu0 0.0
    %4303 = vmatprep.subr.mxu0 0.0
    %4304 = vmatpush1.msra.mxu0 0.0
    %4305 = vmatprep.subr.mxu0 0.0
    %4306 = vmatpush1.msra.mxu0 0.0
    %4307 = vmatprep.subr.mxu0 0.0
    %4308 = vmatpush1.msra.mxu0 0.0
    %4309 = vmatprep.subr.mxu0 0.0
    %4310 = vmatpush1.msra.mxu0 0.0
    %4311 = vmatprep.subr.mxu0 0.0
    %4312 = vmatpush1.msra.mxu0 0.0
    %4313 = vmatprep.subr.mxu0 0.0
    %4314 = vmatpush1.msra.mxu0 0.0
    %4315 = vmatprep.subr.mxu0 0.0
    %4316 = vmatpush1.msra.mxu0 0.0
    %4317 = vmatprep.subr.mxu0 0.0
    %4318 = vmatpush1.msra.mxu0 0.0
    %4319 = vmatprep.subr.mxu0 0.0
    %4320 = vmatpush1.msra.mxu0 0.0
    %4321 = vmatprep.subr.mxu0 0.0
    %4322 = vmatpush1.msra.mxu0 0.0
    %4323 = vmatprep.subr.mxu0 0.0
    %4324 = vmatpush1.msra.mxu0 0.0
    %4325 = vmatprep.subr.mxu0 0.0
    %4326 = vmatpush1.msra.mxu0 0.0
    %4327 = vmatprep.subr.mxu0 0.0
    %4328 = vmatpush1.msra.mxu0 0.0
    %4329 = vmatprep.subr.mxu0 0.0
    %4330 = vmatpush1.msra.mxu0 0.0
    %4331 = vmatprep.subr.mxu0 0.0
    %4332 = vmatpush1.msra.mxu0 0.0
    %4333 = vmatprep.subr.mxu0 0.0
    %4334 = vmatpush1.msra.mxu0 0.0
    %4335 = vmatprep.mubr.f32.mxu0 0.0
    %4336 = vmatmul.mubr.f32.gmra.mrb[0].mxu0 %v3947
    %v4337 = vpop.f32.mrb[0].mxu0
    %v4338 = vadd.f32 %v4261, %v4337
    %v4339 = vpop.f32.mrb[0].mxu0
    %v4340 = vadd.f32 %v4263, %v4339
    %4341 = vmatprep.mubr.f32.mxu0 0.0
    %4342 = vmatmul.mubr.f32.gmra.mrb[0].mxu0 %v3950
    %v4343 = vpop.f32.mrb[0].mxu0
    %v4344 = vadd.f32 %v4267, %v4343
    %v4345 = vpop.f32.mrb[0].mxu0
    %v4346 = vadd.f32 %v4269, %v4345
    %4347 = vdwg.mxu0
    %v4348 = vmax.f32 %v4096, %v4338
    %v4349 = vmax.f32 %v4098, %v4340
    %v4350 = vmax.f32 %v4102, %v4344
    %v4351 = vmax.f32 %v4104, %v4346
    %v4354 = vrot.slane %v4348, 7
    %v4355 = vrot.slane %v4349, 7
    %v4358 = vsel %vm1334, 0.0, %v4354
    %v4359 = vsel %vm1334, 0.0, %v4355
    %v4360 = vsel %vm2940, %v4358, 0.0
    %v4361 = vsel %vm2940, %v4359, 0.0
    %v4364 = vrot.slane %v4360, 1
    %v4365 = vrot.slane %v4361, 1
    %v4368 = vmax.f32 %v4360, %v4364
    %v4369 = vmax.f32 %v4361, %v4365
    %v4372 = vrot.slane %v4368, 1
    %v4373 = vrot.slane %v4369, 1
    %v4376 = vrot.slane %v4368, 2
    %v4377 = vrot.slane %v4369, 2
    %v4380 = vsel %vm1334, %v4368, %v4372
    %v4381 = vsel %vm1334, %v4369, %v4373
    %v4382 = vsel %vm1015, %v4380, %v4376
    %v4383 = vsel %vm1015, %v4381, %v4377
    %v4386 = vrot.slane %v4382, 7
    %v4387 = vrot.slane %v4383, 7
    %4390 = vst [vmem:[#allocation3] sm:$0xe] %v4386
    %vm4391 = vcmask 519169
    %4392 = vst.msk [vmem:[#allocation3 + $0x8] sm:$0xe] %vm4391, %v4387
    %v4395 = vrot.slane %v4348, 6
    %v4396 = vrot.slane %v4350, 6
    %v4397 = vsel %vm1015, %v4395, %v4396
    %v4398 = vrot.slane %v4349, 6
    %v4399 = vrot.slane %v4351, 6
    %v4400 = vsel %vm1015, %v4398, %v4399
    %v4403 = vsel %vm1334, 0.0, %v4397
    %v4404 = vsel %vm1334, 0.0, %v4400
    %v4405 = vsel %vm2940, %v4403, 0.0
    %v4406 = vsel %vm2940, %v4404, 0.0
    %v4409 = vrot.slane %v4405, 1
    %v4410 = vrot.slane %v4406, 1
    %v4413 = vmax.f32 %v4405, %v4409
    %v4414 = vmax.f32 %v4406, %v4410
    %v4417 = vrot.slane %v4413, 1
    %v4418 = vrot.slane %v4414, 1
    %v4421 = vrot.slane %v4413, 2
    %v4422 = vrot.slane %v4414, 2
    %v4425 = vsel %vm1334, %v4413, %v4417
    %v4426 = vsel %vm1334, %v4414, %v4418
    %v4427 = vsel %vm1015, %v4425, %v4421
    %v4428 = vsel %vm1015, %v4426, %v4422
    %v4431 = vrot.slane %v4427, 2
    %v4432 = vrot.slane %v4428, 2
    %4435 = vst [vmem:[#allocation3] sm:$0xc0] %v4431
    %vm4436 = vcmask 523270
    %4437 = vst.msk [vmem:[#allocation3 + $0x8] sm:$0xc0] %vm4436, %v4432
    %4438 = vst [vmem:[#allocation3 + $0x10] sm:$0x1] %v4431
    %vm4439 = vcmask 516096
    %4440 = vst.msk [vmem:[#allocation3 + $0x18] sm:$0x1] %vm4439, %v4432
    %v4441 = vld [vmem:[#allocation3] sm:$0xff]
    %v4442 = vld [vmem:[#allocation3 + $0x8] sm:$0xff]
    %v4443 = vld [vmem:[#allocation31] sm:$0xff]
    %v4444 = vld [vmem:[#allocation31 + $0x8] sm:$0xff]
    %v4445 = vld [vmem:[#allocation31 + $0x10] sm:$0xff]
    %v4446 = vld [vmem:[#allocation31 + $0x18] sm:$0xff]
    %v4447 = vld [vmem:[#allocation31 + $0x20] sm:$0xff]
    %v4448 = vld [vmem:[#allocation31 + $0x28] sm:$0xff]
    %v4449 = vld [vmem:[#allocation31 + $0x30] sm:$0xff]
    %v4450 = vld [vmem:[#allocation31 + $0x38] sm:$0xff]
    %v4451 = vld [vmem:[#allocation31 + $0x40] sm:$0xff]
    %v4452 = vld [vmem:[#allocation31 + $0x48] sm:$0xff]
    %v4453 = vld [vmem:[#allocation31 + $0x50] sm:$0xff]
    %v4454 = vld [vmem:[#allocation31 + $0x58] sm:$0xff]
    %v4455 = vld [vmem:[#allocation31 + $0x60] sm:$0xff]
    %v4456 = vld [vmem:[#allocation31 + $0x68] sm:$0xff]
    %v4457 = vld [vmem:[#allocation31 + $0x70] sm:$0xff]
    %v4458 = vld [vmem:[#allocation31 + $0x78] sm:$0xff]
    %v4459 = vld [vmem:[#allocation31 + $0x80] sm:$0xff]
    %v4460 = vld [vmem:[#allocation31 + $0x88] sm:$0xff]
    %v4461 = vld [vmem:[#allocation31 + $0x90] sm:$0xff]
    %v4462 = vld [vmem:[#allocation31 + $0x98] sm:$0xff]
    %v4463 = vld [vmem:[#allocation31 + $0xa0] sm:$0xff]
    %v4464 = vld [vmem:[#allocation31 + $0xa8] sm:$0xff]
    %v4465 = vld [vmem:[#allocation31 + $0xb0] sm:$0xff]
    %v4466 = vld [vmem:[#allocation31 + $0xb8] sm:$0xff]
    %v4467 = vld [vmem:[#allocation31 + $0xc0] sm:$0xff]
    %v4468 = vld [vmem:[#allocation31 + $0xc8] sm:$0xff]
    %v4469 = vld [vmem:[#allocation31 + $0xd0] sm:$0xff]
    %v4470 = vld [vmem:[#allocation31 + $0xd8] sm:$0xff]
    %v4471 = vld [vmem:[#allocation31 + $0xe0] sm:$0xff]
    %v4472 = vld [vmem:[#allocation31 + $0xe8] sm:$0xff]
    %v4473 = vld [vmem:[#allocation31 + $0xf0] sm:$0xff]
    %v4474 = vld [vmem:[#allocation31 + $0xf8] sm:$0xff]
    %v4475 = vld [vmem:[#allocation31 + $0x100] sm:$0xff]
    %v4476 = vld [vmem:[#allocation31 + $0x108] sm:$0xff]
    %v4477 = vld [vmem:[#allocation31 + $0x110] sm:$0xff]
    %v4478 = vld [vmem:[#allocation31 + $0x118] sm:$0xff]
    %v4479 = vld [vmem:[#allocation31 + $0x120] sm:$0xff]
    %v4480 = vld [vmem:[#allocation31 + $0x128] sm:$0xff]
    %v4481 = vld [vmem:[#allocation31 + $0x130] sm:$0xff]
    %v4482 = vld [vmem:[#allocation31 + $0x138] sm:$0xff]
    %v4483 = vld [vmem:[#allocation31 + $0x140] sm:$0xff]
    %v4484 = vld [vmem:[#allocation31 + $0x148] sm:$0xff]
    %v4485 = vld [vmem:[#allocation31 + $0x150] sm:$0xff]
    %v4486 = vld [vmem:[#allocation31 + $0x158] sm:$0xff]
    %v4487 = vld [vmem:[#allocation31 + $0x160] sm:$0xff]
    %v4488 = vld [vmem:[#allocation31 + $0x168] sm:$0xff]
    %v4489 = vld [vmem:[#allocation31 + $0x170] sm:$0xff]
    %v4490 = vld [vmem:[#allocation31 + $0x178] sm:$0xff]
    %v4491 = vld [vmem:[#allocation31 + $0x180] sm:$0xff]
    %v4492 = vld [vmem:[#allocation31 + $0x188] sm:$0xff]
    %v4493 = vld [vmem:[#allocation31 + $0x190] sm:$0xff]
    %v4494 = vld [vmem:[#allocation31 + $0x198] sm:$0xff]
    %v4495 = vld [vmem:[#allocation31 + $0x1a0] sm:$0xff]
    %v4496 = vld [vmem:[#allocation31 + $0x1a8] sm:$0xff]
    %v4497 = vld [vmem:[#allocation31 + $0x1b0] sm:$0xff]
    %v4498 = vld [vmem:[#allocation31 + $0x1b8] sm:$0xff]
    %v4499 = vld [vmem:[#allocation31 + $0x1c0] sm:$0xff]
    %v4500 = vld [vmem:[#allocation31 + $0x1c8] sm:$0xff]
    %v4501 = vld [vmem:[#allocation31 + $0x1d0] sm:$0xff]
    %v4502 = vld [vmem:[#allocation31 + $0x1d8] sm:$0xff]
    %v4503 = vld [vmem:[#allocation31 + $0x1e0] sm:$0xff]
    %v4504 = vld [vmem:[#allocation31 + $0x1e8] sm:$0xff]
    %v4505 = vld [vmem:[#allocation31 + $0x1f0] sm:$0xff]
    %v4506 = vld [vmem:[#allocation31 + $0x1f8] sm:$0xff]
    %v4507 = vld [vmem:[#allocation31 + $0x200] sm:$0xff]
    %v4508 = vld [vmem:[#allocation31 + $0x208] sm:$0xff]
    %v4509 = vld [vmem:[#allocation31 + $0x210] sm:$0xff]
    %v4510 = vld [vmem:[#allocation31 + $0x218] sm:$0xff]
    %v4511 = vld [vmem:[#allocation31 + $0x220] sm:$0xff]
    %v4512 = vld [vmem:[#allocation31 + $0x228] sm:$0xff]
    %v4513 = vld [vmem:[#allocation31 + $0x230] sm:$0xff]
    %v4514 = vld [vmem:[#allocation31 + $0x238] sm:$0xff]
    %v4515 = vld [vmem:[#allocation3] sm:$0xfe]
    %v4516 = vld [vmem:[#allocation3 + $0x8] sm:$0xfe]
    %v4517 = vld [vmem:[#allocation3 + $0x10] sm:$0x1]
    %v4518 = vld [vmem:[#allocation3 + $0x18] sm:$0x1]
    %s4519 = scalar_lea.vmem [#allocation31], 576
    %v4520 = vld [vmem:[%s4519] sm:$0xff]
    %v4521 = vld [vmem:[%s4519 + $0x8] sm:$0xff]
    %v4522 = vld [vmem:[%s4519 + $0x10] sm:$0xff]
    %v4523 = vld [vmem:[%s4519 + $0x18] sm:$0xff]
    %v4524 = vld [vmem:[%s4519 + $0x20] sm:$0xff]
    %v4525 = vld [vmem:[%s4519 + $0x28] sm:$0xff]
    %v4526 = vld [vmem:[%s4519 + $0x30] sm:$0xff]
    %v4527 = vld [vmem:[%s4519 + $0x38] sm:$0xff]
    %v4528 = vld [vmem:[%s4519 + $0x40] sm:$0xff]
    %v4529 = vld [vmem:[%s4519 + $0x48] sm:$0xff]
    %v4530 = vld [vmem:[%s4519 + $0x50] sm:$0xff]
    %v4531 = vld [vmem:[%s4519 + $0x58] sm:$0xff]
    %v4532 = vld [vmem:[%s4519 + $0x60] sm:$0xff]
    %v4533 = vld [vmem:[%s4519 + $0x68] sm:$0xff]
    %v4534 = vld [vmem:[%s4519 + $0x70] sm:$0xff]
    %v4535 = vld [vmem:[%s4519 + $0x78] sm:$0xff]
    %v4536 = vld [vmem:[%s4519 + $0x80] sm:$0xff]
    %v4537 = vld [vmem:[%s4519 + $0x88] sm:$0xff]
    %v4538 = vld [vmem:[%s4519 + $0x90] sm:$0xff]
    %v4539 = vld [vmem:[%s4519 + $0x98] sm:$0xff]
    %v4540 = vld [vmem:[%s4519 + $0xa0] sm:$0xff]
    %v4541 = vld [vmem:[%s4519 + $0xa8] sm:$0xff]
    %v4542 = vld [vmem:[%s4519 + $0xb0] sm:$0xff]
    %v4543 = vld [vmem:[%s4519 + $0xb8] sm:$0xff]
    %v4544 = vld [vmem:[%s4519 + $0xc0] sm:$0xff]
    %v4545 = vld [vmem:[%s4519 + $0xc8] sm:$0xff]
    %v4546 = vld [vmem:[%s4519 + $0xd0] sm:$0xff]
    %v4547 = vld [vmem:[%s4519 + $0xd8] sm:$0xff]
    %v4548 = vld [vmem:[%s4519 + $0xe0] sm:$0xff]
    %v4549 = vld [vmem:[%s4519 + $0xe8] sm:$0xff]
    %v4550 = vld [vmem:[%s4519 + $0xf0] sm:$0xff]
    %v4551 = vld [vmem:[%s4519 + $0xf8] sm:$0xff]
    %v4552 = vld [vmem:[%s4519 + $0x100] sm:$0xff]
    %v4553 = vld [vmem:[%s4519 + $0x108] sm:$0xff]
    %v4554 = vld [vmem:[%s4519 + $0x110] sm:$0xff]
    %v4555 = vld [vmem:[%s4519 + $0x118] sm:$0xff]
    %v4556 = vld [vmem:[%s4519 + $0x120] sm:$0xff]
    %v4557 = vld [vmem:[%s4519 + $0x128] sm:$0xff]
    %v4558 = vld [vmem:[%s4519 + $0x130] sm:$0xff]
    %v4559 = vld [vmem:[%s4519 + $0x138] sm:$0xff]
    %v4560 = vld [vmem:[%s4519 + $0x140] sm:$0xff]
    %v4561 = vld [vmem:[%s4519 + $0x148] sm:$0xff]
    %v4562 = vld [vmem:[%s4519 + $0x150] sm:$0xff]
    %v4563 = vld [vmem:[%s4519 + $0x158] sm:$0xff]
    %v4564 = vld [vmem:[%s4519 + $0x160] sm:$0xff]
    %v4565 = vld [vmem:[%s4519 + $0x168] sm:$0xff]
    %v4566 = vld [vmem:[%s4519 + $0x170] sm:$0xff]
    %v4567 = vld [vmem:[%s4519 + $0x178] sm:$0xff]
    %v4568 = vld [vmem:[%s4519 + $0x180] sm:$0xff]
    %v4569 = vld [vmem:[%s4519 + $0x188] sm:$0xff]
    %v4570 = vld [vmem:[%s4519 + $0x190] sm:$0xff]
    %v4571 = vld [vmem:[%s4519 + $0x198] sm:$0xff]
    %v4572 = vld [vmem:[%s4519 + $0x1a0] sm:$0xff]
    %v4573 = vld [vmem:[%s4519 + $0x1a8] sm:$0xff]
    %v4574 = vld [vmem:[%s4519 + $0x1b0] sm:$0xff]
    %v4575 = vld [vmem:[%s4519 + $0x1b8] sm:$0xff]
    %v4576 = vld [vmem:[%s4519 + $0x1c0] sm:$0xff]
    %v4577 = vld [vmem:[%s4519 + $0x1c8] sm:$0xff]
    %v4578 = vld [vmem:[%s4519 + $0x1d0] sm:$0xff]
    %v4579 = vld [vmem:[%s4519 + $0x1d8] sm:$0xff]
    %v4580 = vld [vmem:[%s4519 + $0x1e0] sm:$0xff]
    %v4581 = vld [vmem:[%s4519 + $0x1e8] sm:$0xff]
    %v4582 = vld [vmem:[%s4519 + $0x1f0] sm:$0xff]
    %v4583 = vld [vmem:[%s4519 + $0x1f8] sm:$0xff]
    %v4584 = vld [vmem:[%s4519 + $0x200] sm:$0xff]
    %v4585 = vld [vmem:[%s4519 + $0x208] sm:$0xff]
    %v4586 = vld [vmem:[%s4519 + $0x210] sm:$0xff]
    %v4587 = vld [vmem:[%s4519 + $0x218] sm:$0xff]
    %v4588 = vld [vmem:[%s4519 + $0x220] sm:$0xff]
    %v4589 = vld [vmem:[%s4519 + $0x228] sm:$0xff]
    %v4590 = vld [vmem:[%s4519 + $0x230] sm:$0xff]
    %v4591 = vld [vmem:[%s4519 + $0x238] sm:$0xff]
    %v4596 = vrot.slane %v4515, 1
    %v4597 = vrot.slane %v4517, 1
    %v4598 = vsel %vm2336, %v4596, %v4597
    %v4599 = vrot.slane %v4516, 1
    %v4600 = vrot.slane %v4518, 1
    %v4601 = vsel %vm2336, %v4599, %v4600
    %v4603 = vsel %vm423, %v4601, 0
    %4605 = vmatprep.subr.mxu0 %v4521
    %4606 = vmatpush1.msra.mxu0 %v4520
    %4607 = vmatprep.subr.mxu0 %v4524
    %4608 = vmatpush1.msra.mxu0 %v4523
    %4609 = vmatprep.subr.mxu0 %v4527
    %4610 = vmatpush1.msra.mxu0 %v4526
    %4611 = vmatprep.subr.mxu0 %v4530
    %4612 = vmatpush1.msra.mxu0 %v4529
    %4613 = vmatprep.subr.mxu0 %v4533
    %4614 = vmatpush1.msra.mxu0 %v4532
    %4615 = vmatprep.subr.mxu0 %v4536
    %4616 = vmatpush1.msra.mxu0 %v4535
    %4617 = vmatprep.subr.mxu0 %v4539
    %4618 = vmatpush1.msra.mxu0 %v4538
    %4619 = vmatprep.subr.mxu0 %v4542
    %4620 = vmatpush1.msra.mxu0 %v4541
    %4621 = vmatprep.subr.mxu0 %v4545
    %4622 = vmatpush1.msra.mxu0 %v4544
    %4623 = vmatprep.subr.mxu0 %v4548
    %4624 = vmatpush1.msra.mxu0 %v4547
    %4625 = vmatprep.subr.mxu0 %v4551
    %4626 = vmatpush1.msra.mxu0 %v4550
    %4627 = vmatprep.subr.mxu0 %v4554
    %4628 = vmatpush1.msra.mxu0 %v4553
    %4629 = vmatprep.subr.mxu0 %v4557
    %4630 = vmatpush1.msra.mxu0 %v4556
    %4631 = vmatprep.subr.mxu0 %v4560
    %4632 = vmatpush1.msra.mxu0 %v4559
    %4633 = vmatprep.subr.mxu0 %v4563
    %4634 = vmatpush1.msra.mxu0 %v4562
    %4635 = vmatprep.subr.mxu0 %v4566
    %4636 = vmatpush1.msra.mxu0 %v4565
    %4637 = vmatprep.subr.mxu0 %v4569
    %4638 = vmatpush1.msra.mxu0 %v4568
    %4639 = vmatprep.subr.mxu0 %v4572
    %4640 = vmatpush1.msra.mxu0 %v4571
    %4641 = vmatprep.subr.mxu0 %v4575
    %4642 = vmatpush1.msra.mxu0 %v4574
    %4643 = vmatprep.subr.mxu0 %v4578
    %4644 = vmatpush1.msra.mxu0 %v4577
    %4645 = vmatprep.subr.mxu0 %v4581
    %4646 = vmatpush1.msra.mxu0 %v4580
    %4647 = vmatprep.subr.mxu0 %v4584
    %4648 = vmatpush1.msra.mxu0 %v4583
    %4649 = vmatprep.subr.mxu0 %v4587
    %4650 = vmatpush1.msra.mxu0 %v4586
    %4651 = vmatprep.subr.mxu0 %v4590
    %4652 = vmatpush1.msra.mxu0 %v4589
    %4653 = vmatprep.subr.mxu0 0.0
    %4654 = vmatpush1.msra.mxu0 0.0
    %4655 = vmatprep.subr.mxu0 0.0
    %4656 = vmatpush1.msra.mxu0 0.0
    %4657 = vmatprep.subr.mxu0 0.0
    %4658 = vmatpush1.msra.mxu0 0.0
    %4659 = vmatprep.subr.mxu0 0.0
    %4660 = vmatpush1.msra.mxu0 0.0
    %4661 = vmatprep.subr.mxu0 0.0
    %4662 = vmatpush1.msra.mxu0 0.0
    %4663 = vmatprep.subr.mxu0 0.0
    %4664 = vmatpush1.msra.mxu0 0.0
    %4665 = vmatprep.subr.mxu0 0.0
    %4666 = vmatpush1.msra.mxu0 0.0
    %4667 = vmatprep.subr.mxu0 0.0
    %4668 = vmatpush1.msra.mxu0 0.0
    %4669 = vmatprep.mubr.f32.mxu0 %v4603
    %4670 = vmatmul.mubr.f32.gmra.mrb[0].mxu0 %v4598
    %v4671 = vpop.f32.mrb[0].mxu0
    %v4672 = vadd.f32 0.0, %v4671
    %v4673 = vpop.f32.mrb[0].mxu0
    %v4674 = vadd.f32 0.0, %v4673
    %4675 = vdwg.mxu0
    %4676 = vmatprep.subr.mxu0 0.0
    %4677 = vmatpush1.msra.mxu0 %v4522
    %4678 = vmatprep.subr.mxu0 0.0
    %4679 = vmatpush1.msra.mxu0 %v4525
    %4680 = vmatprep.subr.mxu0 0.0
    %4681 = vmatpush1.msra.mxu0 %v4528
    %4682 = vmatprep.subr.mxu0 0.0
    %4683 = vmatpush1.msra.mxu0 %v4531
    %4684 = vmatprep.subr.mxu0 0.0
    %4685 = vmatpush1.msra.mxu0 %v4534
    %4686 = vmatprep.subr.mxu0 0.0
    %4687 = vmatpush1.msra.mxu0 %v4537
    %4688 = vmatprep.subr.mxu0 0.0
    %4689 = vmatpush1.msra.mxu0 %v4540
    %4690 = vmatprep.subr.mxu0 0.0
    %4691 = vmatpush1.msra.mxu0 %v4543
    %4692 = vmatprep.subr.mxu0 0.0
    %4693 = vmatpush1.msra.mxu0 %v4546
    %4694 = vmatprep.subr.mxu0 0.0
    %4695 = vmatpush1.msra.mxu0 %v4549
    %4696 = vmatprep.subr.mxu0 0.0
    %4697 = vmatpush1.msra.mxu0 %v4552
    %4698 = vmatprep.subr.mxu0 0.0
    %4699 = vmatpush1.msra.mxu0 %v4555
    %4700 = vmatprep.subr.mxu0 0.0
    %4701 = vmatpush1.msra.mxu0 %v4558
    %4702 = vmatprep.subr.mxu0 0.0
    %4703 = vmatpush1.msra.mxu0 %v4561
    %4704 = vmatprep.subr.mxu0 0.0
    %4705 = vmatpush1.msra.mxu0 %v4564
    %4706 = vmatprep.subr.mxu0 0.0
    %4707 = vmatpush1.msra.mxu0 %v4567
    %4708 = vmatprep.subr.mxu0 0.0
    %4709 = vmatpush1.msra.mxu0 %v4570
    %4710 = vmatprep.subr.mxu0 0.0
    %4711 = vmatpush1.msra.mxu0 %v4573
    %4712 = vmatprep.subr.mxu0 0.0
    %4713 = vmatpush1.msra.mxu0 %v4576
    %4714 = vmatprep.subr.mxu0 0.0
    %4715 = vmatpush1.msra.mxu0 %v4579
    %4716 = vmatprep.subr.mxu0 0.0
    %4717 = vmatpush1.msra.mxu0 %v4582
    %4718 = vmatprep.subr.mxu0 0.0
    %4719 = vmatpush1.msra.mxu0 %v4585
    %4720 = vmatprep.subr.mxu0 0.0
    %4721 = vmatpush1.msra.mxu0 %v4588
    %4722 = vmatprep.subr.mxu0 0.0
    %4723 = vmatpush1.msra.mxu0 %v4591
    %4724 = vmatprep.subr.mxu0 0.0
    %4725 = vmatpush1.msra.mxu0 0.0
    %4726 = vmatprep.subr.mxu0 0.0
    %4727 = vmatpush1.msra.mxu0 0.0
    %4728 = vmatprep.subr.mxu0 0.0
    %4729 = vmatpush1.msra.mxu0 0.0
    %4730 = vmatprep.subr.mxu0 0.0
    %4731 = vmatpush1.msra.mxu0 0.0
    %4732 = vmatprep.subr.mxu0 0.0
    %4733 = vmatpush1.msra.mxu0 0.0
    %4734 = vmatprep.subr.mxu0 0.0
    %4735 = vmatpush1.msra.mxu0 0.0
    %4736 = vmatprep.subr.mxu0 0.0
    %4737 = vmatpush1.msra.mxu0 0.0
    %4738 = vmatprep.subr.mxu0 0.0
    %4739 = vmatpush1.msra.mxu0 0.0
    %4740 = vmatprep.mubr.f32.mxu0 %v4603
    %4741 = vmatmul.mubr.f32.gmra.mrb[0].mxu0 %v4598
    %v4742 = vpop.f32.mrb[0].mxu0
    %v4743 = vadd.f32 0.0, %v4742
    %v4744 = vpop.f32.mrb[0].mxu0
    %4745 = vdwg.mxu0
    %v4747 = vsel %vm423, %v4442, 0
    %4749 = vmatprep.subr.mxu0 %v4444
    %4750 = vmatpush1.msra.mxu0 %v4443
    %4751 = vmatprep.subr.mxu0 %v4447
    %4752 = vmatpush1.msra.mxu0 %v4446
    %4753 = vmatprep.subr.mxu0 %v4450
    %4754 = vmatpush1.msra.mxu0 %v4449
    %4755 = vmatprep.subr.mxu0 %v4453
    %4756 = vmatpush1.msra.mxu0 %v4452
    %4757 = vmatprep.subr.mxu0 %v4456
    %4758 = vmatpush1.msra.mxu0 %v4455
    %4759 = vmatprep.subr.mxu0 %v4459
    %4760 = vmatpush1.msra.mxu0 %v4458
    %4761 = vmatprep.subr.mxu0 %v4462
    %4762 = vmatpush1.msra.mxu0 %v4461
    %4763 = vmatprep.subr.mxu0 %v4465
    %4764 = vmatpush1.msra.mxu0 %v4464
    %4765 = vmatprep.subr.mxu0 %v4468
    %4766 = vmatpush1.msra.mxu0 %v4467
    %4767 = vmatprep.subr.mxu0 %v4471
    %4768 = vmatpush1.msra.mxu0 %v4470
    %4769 = vmatprep.subr.mxu0 %v4474
    %4770 = vmatpush1.msra.mxu0 %v4473
    %4771 = vmatprep.subr.mxu0 %v4477
    %4772 = vmatpush1.msra.mxu0 %v4476
    %4773 = vmatprep.subr.mxu0 %v4480
    %4774 = vmatpush1.msra.mxu0 %v4479
    %4775 = vmatprep.subr.mxu0 %v4483
    %4776 = vmatpush1.msra.mxu0 %v4482
    %4777 = vmatprep.subr.mxu0 %v4486
    %4778 = vmatpush1.msra.mxu0 %v4485
    %4779 = vmatprep.subr.mxu0 %v4489
    %4780 = vmatpush1.msra.mxu0 %v4488
    %4781 = vmatprep.subr.mxu0 %v4492
    %4782 = vmatpush1.msra.mxu0 %v4491
    %4783 = vmatprep.subr.mxu0 %v4495
    %4784 = vmatpush1.msra.mxu0 %v4494
    %4785 = vmatprep.subr.mxu0 %v4498
    %4786 = vmatpush1.msra.mxu0 %v4497
    %4787 = vmatprep.subr.mxu0 %v4501
    %4788 = vmatpush1.msra.mxu0 %v4500
    %4789 = vmatprep.subr.mxu0 %v4504
    %4790 = vmatpush1.msra.mxu0 %v4503
    %4791 = vmatprep.subr.mxu0 %v4507
    %4792 = vmatpush1.msra.mxu0 %v4506
    %4793 = vmatprep.subr.mxu0 %v4510
    %4794 = vmatpush1.msra.mxu0 %v4509
    %4795 = vmatprep.subr.mxu0 %v4513
    %4796 = vmatpush1.msra.mxu0 %v4512
    %4797 = vmatprep.subr.mxu0 0.0
    %4798 = vmatpush1.msra.mxu0 0.0
    %4799 = vmatprep.subr.mxu0 0.0
    %4800 = vmatpush1.msra.mxu0 0.0
    %4801 = vmatprep.subr.mxu0 0.0
    %4802 = vmatpush1.msra.mxu0 0.0
    %4803 = vmatprep.subr.mxu0 0.0
    %4804 = vmatpush1.msra.mxu0 0.0
    %4805 = vmatprep.subr.mxu0 0.0
    %4806 = vmatpush1.msra.mxu0 0.0
    %4807 = vmatprep.subr.mxu0 0.0
    %4808 = vmatpush1.msra.mxu0 0.0
    %4809 = vmatprep.subr.mxu0 0.0
    %4810 = vmatpush1.msra.mxu0 0.0
    %4811 = vmatprep.subr.mxu0 0.0
    %4812 = vmatpush1.msra.mxu0 0.0
    %4813 = vmatprep.mubr.f32.mxu0 %v4747
    %4814 = vmatmul.mubr.f32.gmra.mrb[0].mxu0 %v4441
    %v4815 = vpop.f32.mrb[0].mxu0
    %v4816 = vadd.f32 %v4672, %v4815
    %v4817 = vpop.f32.mrb[0].mxu0
    %v4818 = vadd.f32 %v4674, %v4817
    %4819 = vdwg.mxu0
    %4820 = vmatprep.subr.mxu0 0.0
    %4821 = vmatpush1.msra.mxu0 %v4445
    %4822 = vmatprep.subr.mxu0 0.0
    %4823 = vmatpush1.msra.mxu0 %v4448
    %4824 = vmatprep.subr.mxu0 0.0
    %4825 = vmatpush1.msra.mxu0 %v4451
    %4826 = vmatprep.subr.mxu0 0.0
    %4827 = vmatpush1.msra.mxu0 %v4454
    %4828 = vmatprep.subr.mxu0 0.0
    %4829 = vmatpush1.msra.mxu0 %v4457
    %4830 = vmatprep.subr.mxu0 0.0
    %4831 = vmatpush1.msra.mxu0 %v4460
    %4832 = vmatprep.subr.mxu0 0.0
    %4833 = vmatpush1.msra.mxu0 %v4463
    %4834 = vmatprep.subr.mxu0 0.0
    %4835 = vmatpush1.msra.mxu0 %v4466
    %4836 = vmatprep.subr.mxu0 0.0
    %4837 = vmatpush1.msra.mxu0 %v4469
    %4838 = vmatprep.subr.mxu0 0.0
    %4839 = vmatpush1.msra.mxu0 %v4472
    %4840 = vmatprep.subr.mxu0 0.0
    %4841 = vmatpush1.msra.mxu0 %v4475
    %4842 = vmatprep.subr.mxu0 0.0
    %4843 = vmatpush1.msra.mxu0 %v4478
    %4844 = vmatprep.subr.mxu0 0.0
    %4845 = vmatpush1.msra.mxu0 %v4481
    %4846 = vmatprep.subr.mxu0 0.0
    %4847 = vmatpush1.msra.mxu0 %v4484
    %4848 = vmatprep.subr.mxu0 0.0
    %4849 = vmatpush1.msra.mxu0 %v4487
    %4850 = vmatprep.subr.mxu0 0.0
    %4851 = vmatpush1.msra.mxu0 %v4490
    %4852 = vmatprep.subr.mxu0 0.0
    %4853 = vmatpush1.msra.mxu0 %v4493
    %4854 = vmatprep.subr.mxu0 0.0
    %4855 = vmatpush1.msra.mxu0 %v4496
    %4856 = vmatprep.subr.mxu0 0.0
    %4857 = vmatpush1.msra.mxu0 %v4499
    %4858 = vmatprep.subr.mxu0 0.0
    %4859 = vmatpush1.msra.mxu0 %v4502
    %4860 = vmatprep.subr.mxu0 0.0
    %4861 = vmatpush1.msra.mxu0 %v4505
    %4862 = vmatprep.subr.mxu0 0.0
    %4863 = vmatpush1.msra.mxu0 %v4508
    %4864 = vmatprep.subr.mxu0 0.0
    %4865 = vmatpush1.msra.mxu0 %v4511
    %4866 = vmatprep.subr.mxu0 0.0
    %4867 = vmatpush1.msra.mxu0 %v4514
    %4868 = vmatprep.subr.mxu0 0.0
    %4869 = vmatpush1.msra.mxu0 0.0
    %4870 = vmatprep.subr.mxu0 0.0
    %4871 = vmatpush1.msra.mxu0 0.0
    %4872 = vmatprep.subr.mxu0 0.0
    %4873 = vmatpush1.msra.mxu0 0.0
    %4874 = vmatprep.subr.mxu0 0.0
    %4875 = vmatpush1.msra.mxu0 0.0
    %4876 = vmatprep.subr.mxu0 0.0
    %4877 = vmatpush1.msra.mxu0 0.0
    %4878 = vmatprep.subr.mxu0 0.0
    %4879 = vmatpush1.msra.mxu0 0.0
    %4880 = vmatprep.subr.mxu0 0.0
    %4881 = vmatpush1.msra.mxu0 0.0
    %4882 = vmatprep.subr.mxu0 0.0
    %4883 = vmatpush1.msra.mxu0 0.0
    %4884 = vmatprep.mubr.f32.mxu0 %v4747
    %4885 = vmatmul.mubr.f32.gmra.mrb[0].mxu0 %v4441
    %v4886 = vpop.f32.mrb[0].mxu0
    %v4887 = vadd.f32 %v4743, %v4886
    %v4888 = vpop.f32.mrb[0].mxu0
    %4889 = vdwg.mxu0
    %v4890 = vld [vmem:[#allocation3] sm:$0xfc]
    %v4891 = vld [vmem:[#allocation3 + $0x8] sm:$0xfc]
    %v4892 = vld [vmem:[#allocation3 + $0x10] sm:$0x3]
    %v4893 = vld [vmem:[#allocation3 + $0x18] sm:$0x3]
    %s4894 = scalar_lea.vmem [#allocation31], 1152
    %v4895 = vld [vmem:[%s4894] sm:$0xff]
    %v4896 = vld [vmem:[%s4894 + $0x8] sm:$0xff]
    %v4897 = vld [vmem:[%s4894 + $0x10] sm:$0xff]
    %v4898 = vld [vmem:[%s4894 + $0x18] sm:$0xff]
    %v4899 = vld [vmem:[%s4894 + $0x20] sm:$0xff]
    %v4900 = vld [vmem:[%s4894 + $0x28] sm:$0xff]
    %v4901 = vld [vmem:[%s4894 + $0x30] sm:$0xff]
    %v4902 = vld [vmem:[%s4894 + $0x38] sm:$0xff]
    %v4903 = vld [vmem:[%s4894 + $0x40] sm:$0xff]
    %v4904 = vld [vmem:[%s4894 + $0x48] sm:$0xff]
    %v4905 = vld [vmem:[%s4894 + $0x50] sm:$0xff]
    %v4906 = vld [vmem:[%s4894 + $0x58] sm:$0xff]
    %v4907 = vld [vmem:[%s4894 + $0x60] sm:$0xff]
    %v4908 = vld [vmem:[%s4894 + $0x68] sm:$0xff]
    %v4909 = vld [vmem:[%s4894 + $0x70] sm:$0xff]
    %v4910 = vld [vmem:[%s4894 + $0x78] sm:$0xff]
    %v4911 = vld [vmem:[%s4894 + $0x80] sm:$0xff]
    %v4912 = vld [vmem:[%s4894 + $0x88] sm:$0xff]
    %v4913 = vld [vmem:[%s4894 + $0x90] sm:$0xff]
    %v4914 = vld [vmem:[%s4894 + $0x98] sm:$0xff]
    %v4915 = vld [vmem:[%s4894 + $0xa0] sm:$0xff]
    %v4916 = vld [vmem:[%s4894 + $0xa8] sm:$0xff]
    %v4917 = vld [vmem:[%s4894 + $0xb0] sm:$0xff]
    %v4918 = vld [vmem:[%s4894 + $0xb8] sm:$0xff]
    %v4919 = vld [vmem:[%s4894 + $0xc0] sm:$0xff]
    %v4920 = vld [vmem:[%s4894 + $0xc8] sm:$0xff]
    %v4921 = vld [vmem:[%s4894 + $0xd0] sm:$0xff]
    %v4922 = vld [vmem:[%s4894 + $0xd8] sm:$0xff]
    %v4923 = vld [vmem:[%s4894 + $0xe0] sm:$0xff]
    %v4924 = vld [vmem:[%s4894 + $0xe8] sm:$0xff]
    %v4925 = vld [vmem:[%s4894 + $0xf0] sm:$0xff]
    %v4926 = vld [vmem:[%s4894 + $0xf8] sm:$0xff]
    %v4927 = vld [vmem:[%s4894 + $0x100] sm:$0xff]
    %v4928 = vld [vmem:[%s4894 + $0x108] sm:$0xff]
    %v4929 = vld [vmem:[%s4894 + $0x110] sm:$0xff]
    %v4930 = vld [vmem:[%s4894 + $0x118] sm:$0xff]
    %v4931 = vld [vmem:[%s4894 + $0x120] sm:$0xff]
    %v4932 = vld [vmem:[%s4894 + $0x128] sm:$0xff]
    %v4933 = vld [vmem:[%s4894 + $0x130] sm:$0xff]
    %v4934 = vld [vmem:[%s4894 + $0x138] sm:$0xff]
    %v4935 = vld [vmem:[%s4894 + $0x140] sm:$0xff]
    %v4936 = vld [vmem:[%s4894 + $0x148] sm:$0xff]
    %v4937 = vld [vmem:[%s4894 + $0x150] sm:$0xff]
    %v4938 = vld [vmem:[%s4894 + $0x158] sm:$0xff]
    %v4939 = vld [vmem:[%s4894 + $0x160] sm:$0xff]
    %v4940 = vld [vmem:[%s4894 + $0x168] sm:$0xff]
    %v4941 = vld [vmem:[%s4894 + $0x170] sm:$0xff]
    %v4942 = vld [vmem:[%s4894 + $0x178] sm:$0xff]
    %v4943 = vld [vmem:[%s4894 + $0x180] sm:$0xff]
    %v4944 = vld [vmem:[%s4894 + $0x188] sm:$0xff]
    %v4945 = vld [vmem:[%s4894 + $0x190] sm:$0xff]
    %v4946 = vld [vmem:[%s4894 + $0x198] sm:$0xff]
    %v4947 = vld [vmem:[%s4894 + $0x1a0] sm:$0xff]
    %v4948 = vld [vmem:[%s4894 + $0x1a8] sm:$0xff]
    %v4949 = vld [vmem:[%s4894 + $0x1b0] sm:$0xff]
    %v4950 = vld [vmem:[%s4894 + $0x1b8] sm:$0xff]
    %v4951 = vld [vmem:[%s4894 + $0x1c0] sm:$0xff]
    %v4952 = vld [vmem:[%s4894 + $0x1c8] sm:$0xff]
    %v4953 = vld [vmem:[%s4894 + $0x1d0] sm:$0xff]
    %v4954 = vld [vmem:[%s4894 + $0x1d8] sm:$0xff]
    %v4955 = vld [vmem:[%s4894 + $0x1e0] sm:$0xff]
    %v4956 = vld [vmem:[%s4894 + $0x1e8] sm:$0xff]
    %v4957 = vld [vmem:[%s4894 + $0x1f0] sm:$0xff]
    %v4958 = vld [vmem:[%s4894 + $0x1f8] sm:$0xff]
    %v4959 = vld [vmem:[%s4894 + $0x200] sm:$0xff]
    %v4960 = vld [vmem:[%s4894 + $0x208] sm:$0xff]
    %v4961 = vld [vmem:[%s4894 + $0x210] sm:$0xff]
    %v4962 = vld [vmem:[%s4894 + $0x218] sm:$0xff]
    %v4963 = vld [vmem:[%s4894 + $0x220] sm:$0xff]
    %v4964 = vld [vmem:[%s4894 + $0x228] sm:$0xff]
    %v4965 = vld [vmem:[%s4894 + $0x230] sm:$0xff]
    %v4966 = vld [vmem:[%s4894 + $0x238] sm:$0xff]
    %v4971 = vrot.slane %v4890, 2
    %v4972 = vrot.slane %v4892, 2
    %v4973 = vsel %vm2940, %v4971, %v4972
    %v4974 = vrot.slane %v4891, 2
    %v4975 = vrot.slane %v4893, 2
    %v4976 = vsel %vm2940, %v4974, %v4975
    %v4978 = vsel %vm423, %v4976, 0
    %4980 = vmatprep.subr.mxu0 %v4896
    %4981 = vmatpush1.msra.mxu0 %v4895
    %4982 = vmatprep.subr.mxu0 %v4899
    %4983 = vmatpush1.msra.mxu0 %v4898
    %4984 = vmatprep.subr.mxu0 %v4902
    %4985 = vmatpush1.msra.mxu0 %v4901
    %4986 = vmatprep.subr.mxu0 %v4905
    %4987 = vmatpush1.msra.mxu0 %v4904
    %4988 = vmatprep.subr.mxu0 %v4908
    %4989 = vmatpush1.msra.mxu0 %v4907
    %4990 = vmatprep.subr.mxu0 %v4911
    %4991 = vmatpush1.msra.mxu0 %v4910
    %4992 = vmatprep.subr.mxu0 %v4914
    %4993 = vmatpush1.msra.mxu0 %v4913
    %4994 = vmatprep.subr.mxu0 %v4917
    %4995 = vmatpush1.msra.mxu0 %v4916
    %4996 = vmatprep.subr.mxu0 %v4920
    %4997 = vmatpush1.msra.mxu0 %v4919
    %4998 = vmatprep.subr.mxu0 %v4923
    %4999 = vmatpush1.msra.mxu0 %v4922
    %5000 = vmatprep.subr.mxu0 %v4926
    %5001 = vmatpush1.msra.mxu0 %v4925
    %5002 = vmatprep.subr.mxu0 %v4929
    %5003 = vmatpush1.msra.mxu0 %v4928
    %5004 = vmatprep.subr.mxu0 %v4932
    %5005 = vmatpush1.msra.mxu0 %v4931
    %5006 = vmatprep.subr.mxu0 %v4935
    %5007 = vmatpush1.msra.mxu0 %v4934
    %5008 = vmatprep.subr.mxu0 %v4938
    %5009 = vmatpush1.msra.mxu0 %v4937
    %5010 = vmatprep.subr.mxu0 %v4941
    %5011 = vmatpush1.msra.mxu0 %v4940
    %5012 = vmatprep.subr.mxu0 %v4944
    %5013 = vmatpush1.msra.mxu0 %v4943
    %5014 = vmatprep.subr.mxu0 %v4947
    %5015 = vmatpush1.msra.mxu0 %v4946
    %5016 = vmatprep.subr.mxu0 %v4950
    %5017 = vmatpush1.msra.mxu0 %v4949
    %5018 = vmatprep.subr.mxu0 %v4953
    %5019 = vmatpush1.msra.mxu0 %v4952
    %5020 = vmatprep.subr.mxu0 %v4956
    %5021 = vmatpush1.msra.mxu0 %v4955
    %5022 = vmatprep.subr.mxu0 %v4959
    %5023 = vmatpush1.msra.mxu0 %v4958
    %5024 = vmatprep.subr.mxu0 %v4962
    %5025 = vmatpush1.msra.mxu0 %v4961
    %5026 = vmatprep.subr.mxu0 %v4965
    %5027 = vmatpush1.msra.mxu0 %v4964
    %5028 = vmatprep.subr.mxu0 0.0
    %5029 = vmatpush1.msra.mxu0 0.0
    %5030 = vmatprep.subr.mxu0 0.0
    %5031 = vmatpush1.msra.mxu0 0.0
    %5032 = vmatprep.subr.mxu0 0.0
    %5033 = vmatpush1.msra.mxu0 0.0
    %5034 = vmatprep.subr.mxu0 0.0
    %5035 = vmatpush1.msra.mxu0 0.0
    %5036 = vmatprep.subr.mxu0 0.0
    %5037 = vmatpush1.msra.mxu0 0.0
    %5038 = vmatprep.subr.mxu0 0.0
    %5039 = vmatpush1.msra.mxu0 0.0
    %5040 = vmatprep.subr.mxu0 0.0
    %5041 = vmatpush1.msra.mxu0 0.0
    %5042 = vmatprep.subr.mxu0 0.0
    %5043 = vmatpush1.msra.mxu0 0.0
    %5044 = vmatprep.mubr.f32.mxu0 %v4978
    %5045 = vmatmul.mubr.f32.gmra.mrb[0].mxu0 %v4973
    %v5046 = vpop.f32.mrb[0].mxu0
    %v5047 = vadd.f32 0.0, %v5046
    %v5048 = vpop.f32.mrb[0].mxu0
    %v5049 = vadd.f32 0.0, %v5048
    %5050 = vdwg.mxu0
    %5051 = vmatprep.subr.mxu0 0.0
    %5052 = vmatpush1.msra.mxu0 %v4897
    %5053 = vmatprep.subr.mxu0 0.0
    %5054 = vmatpush1.msra.mxu0 %v4900
    %5055 = vmatprep.subr.mxu0 0.0
    %5056 = vmatpush1.msra.mxu0 %v4903
    %5057 = vmatprep.subr.mxu0 0.0
    %5058 = vmatpush1.msra.mxu0 %v4906
    %5059 = vmatprep.subr.mxu0 0.0
    %5060 = vmatpush1.msra.mxu0 %v4909
    %5061 = vmatprep.subr.mxu0 0.0
    %5062 = vmatpush1.msra.mxu0 %v4912
    %5063 = vmatprep.subr.mxu0 0.0
    %5064 = vmatpush1.msra.mxu0 %v4915
    %5065 = vmatprep.subr.mxu0 0.0
    %5066 = vmatpush1.msra.mxu0 %v4918
    %5067 = vmatprep.subr.mxu0 0.0
    %5068 = vmatpush1.msra.mxu0 %v4921
    %5069 = vmatprep.subr.mxu0 0.0
    %5070 = vmatpush1.msra.mxu0 %v4924
    %5071 = vmatprep.subr.mxu0 0.0
    %5072 = vmatpush1.msra.mxu0 %v4927
    %5073 = vmatprep.subr.mxu0 0.0
    %5074 = vmatpush1.msra.mxu0 %v4930
    %5075 = vmatprep.subr.mxu0 0.0
    %5076 = vmatpush1.msra.mxu0 %v4933
    %5077 = vmatprep.subr.mxu0 0.0
    %5078 = vmatpush1.msra.mxu0 %v4936
    %5079 = vmatprep.subr.mxu0 0.0
    %5080 = vmatpush1.msra.mxu0 %v4939
    %5081 = vmatprep.subr.mxu0 0.0
    %5082 = vmatpush1.msra.mxu0 %v4942
    %5083 = vmatprep.subr.mxu0 0.0
    %5084 = vmatpush1.msra.mxu0 %v4945
    %5085 = vmatprep.subr.mxu0 0.0
    %5086 = vmatpush1.msra.mxu0 %v4948
    %5087 = vmatprep.subr.mxu0 0.0
    %5088 = vmatpush1.msra.mxu0 %v4951
    %5089 = vmatprep.subr.mxu0 0.0
    %5090 = vmatpush1.msra.mxu0 %v4954
    %5091 = vmatprep.subr.mxu0 0.0
    %5092 = vmatpush1.msra.mxu0 %v4957
    %5093 = vmatprep.subr.mxu0 0.0
    %5094 = vmatpush1.msra.mxu0 %v4960
    %5095 = vmatprep.subr.mxu0 0.0
    %5096 = vmatpush1.msra.mxu0 %v4963
    %5097 = vmatprep.subr.mxu0 0.0
    %5098 = vmatpush1.msra.mxu0 %v4966
    %5099 = vmatprep.subr.mxu0 0.0
    %5100 = vmatpush1.msra.mxu0 0.0
    %5101 = vmatprep.subr.mxu0 0.0
    %5102 = vmatpush1.msra.mxu0 0.0
    %5103 = vmatprep.subr.mxu0 0.0
    %5104 = vmatpush1.msra.mxu0 0.0
    %5105 = vmatprep.subr.mxu0 0.0
    %5106 = vmatpush1.msra.mxu0 0.0
    %5107 = vmatprep.subr.mxu0 0.0
    %5108 = vmatpush1.msra.mxu0 0.0
    %5109 = vmatprep.subr.mxu0 0.0
    %5110 = vmatpush1.msra.mxu0 0.0
    %5111 = vmatprep.subr.mxu0 0.0
    %5112 = vmatpush1.msra.mxu0 0.0
    %5113 = vmatprep.subr.mxu0 0.0
    %5114 = vmatpush1.msra.mxu0 0.0
    %5115 = vmatprep.mubr.f32.mxu0 %v4978
    %5116 = vmatmul.mubr.f32.gmra.mrb[0].mxu0 %v4973
    %v5117 = vpop.f32.mrb[0].mxu0
    %v5118 = vadd.f32 0.0, %v5117
    %v5119 = vpop.f32.mrb[0].mxu0
    %5120 = vdwg.mxu0
    %v5121 = vadd.f32 %v4816, %v5047
    %v5122 = vadd.f32 %v4818, %v5049
    %v5123 = vadd.f32 %v4887, %v5118
    %v5124 = vld [vmem:[#allocation39] sm:$0x1]
    %vm5125 = vcmask 64512
    %v5127 = vsel %vm5125, %v5124, 0
    %5129 = vmatprep.subr.mxu0 %v5122
    %5130 = vmatpush1.msra.mxu0 %v5121
    %5131 = vmatprep.subr.mxu0 0.0
    %5132 = vmatpush1.msra.mxu0 0.0
    %5133 = vmatprep.subr.mxu0 0.0
    %5134 = vmatpush1.msra.mxu0 0.0
    %5135 = vmatprep.subr.mxu0 0.0
    %5136 = vmatpush1.msra.mxu0 0.0
    %5137 = vmatprep.subr.mxu0 0.0
    %5138 = vmatpush1.msra.mxu0 0.0
    %5139 = vmatprep.subr.mxu0 0.0
    %5140 = vmatpush1.msra.mxu0 0.0
    %5141 = vmatprep.subr.mxu0 0.0
    %5142 = vmatpush1.msra.mxu0 0.0
    %5143 = vmatprep.subr.mxu0 0.0
    %5144 = vmatpush1.msra.mxu0 0.0
    %5145 = vmatprep.subr.mxu0 0.0
    %5146 = vmatpush1.msra.mxu0 0.0
    %5147 = vmatprep.subr.mxu0 0.0
    %5148 = vmatpush1.msra.mxu0 0.0
    %5149 = vmatprep.subr.mxu0 0.0
    %5150 = vmatpush1.msra.mxu0 0.0
    %5151 = vmatprep.subr.mxu0 0.0
    %5152 = vmatpush1.msra.mxu0 0.0
    %5153 = vmatprep.subr.mxu0 0.0
    %5154 = vmatpush1.msra.mxu0 0.0
    %5155 = vmatprep.subr.mxu0 0.0
    %5156 = vmatpush1.msra.mxu0 0.0
    %5157 = vmatprep.subr.mxu0 0.0
    %5158 = vmatpush1.msra.mxu0 0.0
    %5159 = vmatprep.subr.mxu0 0.0
    %5160 = vmatpush1.msra.mxu0 0.0
    %5161 = vmatprep.subr.mxu0 0.0
    %5162 = vmatpush1.msra.mxu0 0.0
    %5163 = vmatprep.subr.mxu0 0.0
    %5164 = vmatpush1.msra.mxu0 0.0
    %5165 = vmatprep.subr.mxu0 0.0
    %5166 = vmatpush1.msra.mxu0 0.0
    %5167 = vmatprep.subr.mxu0 0.0
    %5168 = vmatpush1.msra.mxu0 0.0
    %5169 = vmatprep.subr.mxu0 0.0
    %5170 = vmatpush1.msra.mxu0 0.0
    %5171 = vmatprep.subr.mxu0 0.0
    %5172 = vmatpush1.msra.mxu0 0.0
    %5173 = vmatprep.subr.mxu0 0.0
    %5174 = vmatpush1.msra.mxu0 0.0
    %5175 = vmatprep.subr.mxu0 0.0
    %5176 = vmatpush1.msra.mxu0 0.0
    %5177 = vmatprep.subr.mxu0 0.0
    %5178 = vmatpush1.msra.mxu0 0.0
    %5179 = vmatprep.subr.mxu0 0.0
    %5180 = vmatpush1.msra.mxu0 0.0
    %5181 = vmatprep.subr.mxu0 0.0
    %5182 = vmatpush1.msra.mxu0 0.0
    %5183 = vmatprep.subr.mxu0 0.0
    %5184 = vmatpush1.msra.mxu0 0.0
    %5185 = vmatprep.subr.mxu0 0.0
    %5186 = vmatpush1.msra.mxu0 0.0
    %5187 = vmatprep.subr.mxu0 0.0
    %5188 = vmatpush1.msra.mxu0 0.0
    %5189 = vmatprep.subr.mxu0 0.0
    %5190 = vmatpush1.msra.mxu0 0.0
    %5191 = vmatprep.subr.mxu0 0.0
    %5192 = vmatpush1.msra.mxu0 0.0
    %5193 = vmatprep.mubr.f32.mxu0 0.0
    %5194 = vmatmul.mubr.f32.gmra.mrb[0].mxu0 %v5127
    %v5195 = vpop.f32.mrb[0].mxu0
    %v5196 = vadd.f32 0.0, %v5195
    %v5197 = vpop.f32.mrb[0].mxu0
    %v5198 = vadd.f32 0.0, %v5197
    %5199 = vdwg.mxu0
    %5200 = vmatprep.subr.mxu0 0.0
    %5201 = vmatpush1.msra.mxu0 %v5123
    %5202 = vmatprep.subr.mxu0 0.0
    %5203 = vmatpush1.msra.mxu0 0.0
    %5204 = vmatprep.subr.mxu0 0.0
    %5205 = vmatpush1.msra.mxu0 0.0
    %5206 = vmatprep.subr.mxu0 0.0
    %5207 = vmatpush1.msra.mxu0 0.0
    %5208 = vmatprep.subr.mxu0 0.0
    %5209 = vmatpush1.msra.mxu0 0.0
    %5210 = vmatprep.subr.mxu0 0.0
    %5211 = vmatpush1.msra.mxu0 0.0
    %5212 = vmatprep.subr.mxu0 0.0
    %5213 = vmatpush1.msra.mxu0 0.0
    %5214 = vmatprep.subr.mxu0 0.0
    %5215 = vmatpush1.msra.mxu0 0.0
    %5216 = vmatprep.subr.mxu0 0.0
    %5217 = vmatpush1.msra.mxu0 0.0
    %5218 = vmatprep.subr.mxu0 0.0
    %5219 = vmatpush1.msra.mxu0 0.0
    %5220 = vmatprep.subr.mxu0 0.0
    %5221 = vmatpush1.msra.mxu0 0.0
    %5222 = vmatprep.subr.mxu0 0.0
    %5223 = vmatpush1.msra.mxu0 0.0
    %5224 = vmatprep.subr.mxu0 0.0
    %5225 = vmatpush1.msra.mxu0 0.0
    %5226 = vmatprep.subr.mxu0 0.0
    %5227 = vmatpush1.msra.mxu0 0.0
    %5228 = vmatprep.subr.mxu0 0.0
    %5229 = vmatpush1.msra.mxu0 0.0
    %5230 = vmatprep.subr.mxu0 0.0
    %5231 = vmatpush1.msra.mxu0 0.0
    %5232 = vmatprep.subr.mxu0 0.0
    %5233 = vmatpush1.msra.mxu0 0.0
    %5234 = vmatprep.subr.mxu0 0.0
    %5235 = vmatpush1.msra.mxu0 0.0
    %5236 = vmatprep.subr.mxu0 0.0
    %5237 = vmatpush1.msra.mxu0 0.0
    %5238 = vmatprep.subr.mxu0 0.0
    %5239 = vmatpush1.msra.mxu0 0.0
    %5240 = vmatprep.subr.mxu0 0.0
    %5241 = vmatpush1.msra.mxu0 0.0
    %5242 = vmatprep.subr.mxu0 0.0
    %5243 = vmatpush1.msra.mxu0 0.0
    %5244 = vmatprep.subr.mxu0 0.0
    %5245 = vmatpush1.msra.mxu0 0.0
    %5246 = vmatprep.subr.mxu0 0.0
    %5247 = vmatpush1.msra.mxu0 0.0
    %5248 = vmatprep.subr.mxu0 0.0
    %5249 = vmatpush1.msra.mxu0 0.0
    %5250 = vmatprep.subr.mxu0 0.0
    %5251 = vmatpush1.msra.mxu0 0.0
    %5252 = vmatprep.subr.mxu0 0.0
    %5253 = vmatpush1.msra.mxu0 0.0
    %5254 = vmatprep.subr.mxu0 0.0
    %5255 = vmatpush1.msra.mxu0 0.0
    %5256 = vmatprep.subr.mxu0 0.0
    %5257 = vmatpush1.msra.mxu0 0.0
    %5258 = vmatprep.subr.mxu0 0.0
    %5259 = vmatpush1.msra.mxu0 0.0
    %5260 = vmatprep.subr.mxu0 0.0
    %5261 = vmatpush1.msra.mxu0 0.0
    %5262 = vmatprep.subr.mxu0 0.0
    %5263 = vmatpush1.msra.mxu0 0.0
    %5264 = vmatprep.mubr.f32.mxu0 0.0
    %5265 = vmatmul.mubr.f32.gmra.mrb[0].mxu0 %v5127
    %v5266 = vpop.f32.mrb[0].mxu0
    %v5267 = vadd.f32 0.0, %v5266
    %v5268 = vpop.f32.mrb[0].mxu0
    %5269 = vdwg.mxu0
    %v5270 = vmul.f32 %v5121, %v5121
    %v5271 = vmul.f32 %v5122, %v5122
    %v5272 = vmul.f32 %v5123, %v5123
    %5273 = vmatprep.subr.mxu0 %v5271
    %5274 = vmatpush1.msra.mxu0 %v5270
    %5275 = vmatprep.subr.mxu0 0.0
    %5276 = vmatpush1.msra.mxu0 0.0
    %5277 = vmatprep.subr.mxu0 0.0
    %5278 = vmatpush1.msra.mxu0 0.0
    %5279 = vmatprep.subr.mxu0 0.0
    %5280 = vmatpush1.msra.mxu0 0.0
    %5281 = vmatprep.subr.mxu0 0.0
    %5282 = vmatpush1.msra.mxu0 0.0
    %5283 = vmatprep.subr.mxu0 0.0
    %5284 = vmatpush1.msra.mxu0 0.0
    %5285 = vmatprep.subr.mxu0 0.0
    %5286 = vmatpush1.msra.mxu0 0.0
    %5287 = vmatprep.subr.mxu0 0.0
    %5288 = vmatpush1.msra.mxu0 0.0
    %5289 = vmatprep.subr.mxu0 0.0
    %5290 = vmatpush1.msra.mxu0 0.0
    %5291 = vmatprep.subr.mxu0 0.0
    %5292 = vmatpush1.msra.mxu0 0.0
    %5293 = vmatprep.subr.mxu0 0.0
    %5294 = vmatpush1.msra.mxu0 0.0
    %5295 = vmatprep.subr.mxu0 0.0
    %5296 = vmatpush1.msra.mxu0 0.0
    %5297 = vmatprep.subr.mxu0 0.0
    %5298 = vmatpush1.msra.mxu0 0.0
    %5299 = vmatprep.subr.mxu0 0.0
    %5300 = vmatpush1.msra.mxu0 0.0
    %5301 = vmatprep.subr.mxu0 0.0
    %5302 = vmatpush1.msra.mxu0 0.0
    %5303 = vmatprep.subr.mxu0 0.0
    %5304 = vmatpush1.msra.mxu0 0.0
    %5305 = vmatprep.subr.mxu0 0.0
    %5306 = vmatpush1.msra.mxu0 0.0
    %5307 = vmatprep.subr.mxu0 0.0
    %5308 = vmatpush1.msra.mxu0 0.0
    %5309 = vmatprep.subr.mxu0 0.0
    %5310 = vmatpush1.msra.mxu0 0.0
    %5311 = vmatprep.subr.mxu0 0.0
    %5312 = vmatpush1.msra.mxu0 0.0
    %5313 = vmatprep.subr.mxu0 0.0
    %5314 = vmatpush1.msra.mxu0 0.0
    %5315 = vmatprep.subr.mxu0 0.0
    %5316 = vmatpush1.msra.mxu0 0.0
    %5317 = vmatprep.subr.mxu0 0.0
    %5318 = vmatpush1.msra.mxu0 0.0
    %5319 = vmatprep.subr.mxu0 0.0
    %5320 = vmatpush1.msra.mxu0 0.0
    %5321 = vmatprep.subr.mxu0 0.0
    %5322 = vmatpush1.msra.mxu0 0.0
    %5323 = vmatprep.subr.mxu0 0.0
    %5324 = vmatpush1.msra.mxu0 0.0
    %5325 = vmatprep.subr.mxu0 0.0
    %5326 = vmatpush1.msra.mxu0 0.0
    %5327 = vmatprep.subr.mxu0 0.0
    %5328 = vmatpush1.msra.mxu0 0.0
    %5329 = vmatprep.subr.mxu0 0.0
    %5330 = vmatpush1.msra.mxu0 0.0
    %5331 = vmatprep.subr.mxu0 0.0
    %5332 = vmatpush1.msra.mxu0 0.0
    %5333 = vmatprep.subr.mxu0 0.0
    %5334 = vmatpush1.msra.mxu0 0.0
    %5335 = vmatprep.subr.mxu0 0.0
    %5336 = vmatpush1.msra.mxu0 0.0
    %5337 = vmatprep.mubr.f32.mxu0 0.0
    %5338 = vmatmul.mubr.f32.gmra.mrb[0].mxu0 %v5127
    %v5339 = vpop.f32.mrb[0].mxu0
    %v5340 = vadd.f32 0.0, %v5339
    %v5341 = vpop.f32.mrb[0].mxu0
    %v5342 = vadd.f32 0.0, %v5341
    %5343 = vdwg.mxu0
    %5344 = vmatprep.subr.mxu0 0.0
    %5345 = vmatpush1.msra.mxu0 %v5272
    %5346 = vmatprep.subr.mxu0 0.0
    %5347 = vmatpush1.msra.mxu0 0.0
    %5348 = vmatprep.subr.mxu0 0.0
    %5349 = vmatpush1.msra.mxu0 0.0
    %5350 = vmatprep.subr.mxu0 0.0
    %5351 = vmatpush1.msra.mxu0 0.0
    %5352 = vmatprep.subr.mxu0 0.0
    %5353 = vmatpush1.msra.mxu0 0.0
    %5354 = vmatprep.subr.mxu0 0.0
    %5355 = vmatpush1.msra.mxu0 0.0
    %5356 = vmatprep.subr.mxu0 0.0
    %5357 = vmatpush1.msra.mxu0 0.0
    %5358 = vmatprep.subr.mxu0 0.0
    %5359 = vmatpush1.msra.mxu0 0.0
    %5360 = vmatprep.subr.mxu0 0.0
    %5361 = vmatpush1.msra.mxu0 0.0
    %5362 = vmatprep.subr.mxu0 0.0
    %5363 = vmatpush1.msra.mxu0 0.0
    %5364 = vmatprep.subr.mxu0 0.0
    %5365 = vmatpush1.msra.mxu0 0.0
    %5366 = vmatprep.subr.mxu0 0.0
    %5367 = vmatpush1.msra.mxu0 0.0
    %5368 = vmatprep.subr.mxu0 0.0
    %5369 = vmatpush1.msra.mxu0 0.0
    %5370 = vmatprep.subr.mxu0 0.0
    %5371 = vmatpush1.msra.mxu0 0.0
    %5372 = vmatprep.subr.mxu0 0.0
    %5373 = vmatpush1.msra.mxu0 0.0
    %5374 = vmatprep.subr.mxu0 0.0
    %5375 = vmatpush1.msra.mxu0 0.0
    %5376 = vmatprep.subr.mxu0 0.0
    %5377 = vmatpush1.msra.mxu0 0.0
    %5378 = vmatprep.subr.mxu0 0.0
    %5379 = vmatpush1.msra.mxu0 0.0
    %5380 = vmatprep.subr.mxu0 0.0
    %5381 = vmatpush1.msra.mxu0 0.0
    %5382 = vmatprep.subr.mxu0 0.0
    %5383 = vmatpush1.msra.mxu0 0.0
    %5384 = vmatprep.subr.mxu0 0.0
    %5385 = vmatpush1.msra.mxu0 0.0
    %5386 = vmatprep.subr.mxu0 0.0
    %5387 = vmatpush1.msra.mxu0 0.0
    %5388 = vmatprep.subr.mxu0 0.0
    %5389 = vmatpush1.msra.mxu0 0.0
    %5390 = vmatprep.subr.mxu0 0.0
    %5391 = vmatpush1.msra.mxu0 0.0
    %5392 = vmatprep.subr.mxu0 0.0
    %5393 = vmatpush1.msra.mxu0 0.0
    %5394 = vmatprep.subr.mxu0 0.0
    %5395 = vmatpush1.msra.mxu0 0.0
    %5396 = vmatprep.subr.mxu0 0.0
    %5397 = vmatpush1.msra.mxu0 0.0
    %5398 = vmatprep.subr.mxu0 0.0
    %5399 = vmatpush1.msra.mxu0 0.0
    %5400 = vmatprep.subr.mxu0 0.0
    %5401 = vmatpush1.msra.mxu0 0.0
    %5402 = vmatprep.subr.mxu0 0.0
    %5403 = vmatpush1.msra.mxu0 0.0
    %5404 = vmatprep.subr.mxu0 0.0
    %5405 = vmatpush1.msra.mxu0 0.0
    %5406 = vmatprep.subr.mxu0 0.0
    %5407 = vmatpush1.msra.mxu0 0.0
    %5408 = vmatprep.mubr.f32.mxu0 0.0
    %5409 = vmatmul.mubr.f32.gmra.mrb[0].mxu0 %v5127
    %v5410 = vpop.f32.mrb[0].mxu0
    %v5411 = vadd.f32 0.0, %v5410
    %v5412 = vpop.f32.mrb[0].mxu0
    %5413 = vdwg.mxu0
    %v5417 = vrot.slane %v5340, 7
    %v5418 = vrot.slane %v5342, 7
    %v5419 = vrot.slane %v5411, 7
    %v5423 = vsel %vm1334, %v5196, %v5417
    %v5424 = vsel %vm1334, %v5198, %v5418
    %v5425 = vsel %vm1334, %v5267, %v5419
    %v5426 = vld [vmem:[#allocation33] sm:$0xff]
    %v5427 = vld [vmem:[#allocation33 + $0x8] sm:$0xff]
    %v5428 = vld [vmem:[#allocation33 + $0x10] sm:$0xff]
    %v5429 = vld [vmem:[#allocation33 + $0x18] sm:$0xff]
    %v5430 = vld [vmem:[#allocation33 + $0x20] sm:$0xff]
    %v5431 = vld [vmem:[#allocation33 + $0x28] sm:$0xff]
    %v5432 = vld [vmem:[#allocation33 + $0x30] sm:$0xff]
    %v5433 = vld [vmem:[#allocation33 + $0x38] sm:$0xff]
    %v5434 = vld [vmem:[#allocation33 + $0x40] sm:$0xff]
    %v5435 = vld [vmem:[#allocation33 + $0x48] sm:$0xff]
    %v5436 = vld [vmem:[#allocation33 + $0x50] sm:$0xff]
    %v5437 = vld [vmem:[#allocation33 + $0x58] sm:$0xff]
    %v5438 = vld [vmem:[#allocation33 + $0x60] sm:$0xff]
    %v5439 = vld [vmem:[#allocation33 + $0x68] sm:$0xff]
    %v5440 = vld [vmem:[#allocation33 + $0x70] sm:$0xff]
    %v5441 = vld [vmem:[#allocation33 + $0x78] sm:$0xff]
    %v5442 = vld [vmem:[#allocation33 + $0x80] sm:$0xff]
    %v5443 = vld [vmem:[#allocation33 + $0x88] sm:$0xff]
    %v5444 = vld [vmem:[#allocation33 + $0x90] sm:$0xff]
    %v5445 = vld [vmem:[#allocation33 + $0x98] sm:$0xff]
    %v5446 = vld [vmem:[#allocation33 + $0xa0] sm:$0xff]
    %v5447 = vld [vmem:[#allocation33 + $0xa8] sm:$0xff]
    %v5448 = vld [vmem:[#allocation33 + $0xb0] sm:$0xff]
    %v5449 = vld [vmem:[#allocation33 + $0xb8] sm:$0xff]
    %v5450 = vld [vmem:[#allocation33 + $0xc0] sm:$0xff]
    %v5451 = vld [vmem:[#allocation33 + $0xc8] sm:$0xff]
    %v5452 = vld [vmem:[#allocation33 + $0xd0] sm:$0xff]
    %v5453 = vld [vmem:[#allocation33 + $0xd8] sm:$0xff]
    %v5454 = vld [vmem:[#allocation33 + $0xe0] sm:$0xff]
    %v5455 = vld [vmem:[#allocation33 + $0xe8] sm:$0xff]
    %v5456 = vld [vmem:[#allocation33 + $0xf0] sm:$0xff]
    %v5457 = vld [vmem:[#allocation33 + $0xf8] sm:$0xff]
    %v5458 = vld [vmem:[#allocation33 + $0x100] sm:$0xff]
    %v5459 = vld [vmem:[#allocation33 + $0x108] sm:$0xff]
    %v5460 = vld [vmem:[#allocation33 + $0x110] sm:$0xff]
    %v5461 = vld [vmem:[#allocation33 + $0x118] sm:$0xff]
    %v5462 = vld [vmem:[#allocation33 + $0x120] sm:$0xff]
    %v5463 = vld [vmem:[#allocation33 + $0x128] sm:$0xff]
    %v5464 = vld [vmem:[#allocation33 + $0x130] sm:$0xff]
    %v5465 = vld [vmem:[#allocation33 + $0x138] sm:$0xff]
    %v5466 = vld [vmem:[#allocation33 + $0x140] sm:$0xff]
    %v5467 = vld [vmem:[#allocation33 + $0x148] sm:$0xff]
    %v5468 = vld [vmem:[#allocation33 + $0x150] sm:$0xff]
    %v5469 = vld [vmem:[#allocation33 + $0x158] sm:$0xff]
    %v5470 = vld [vmem:[#allocation33 + $0x160] sm:$0xff]
    %v5471 = vld [vmem:[#allocation33 + $0x168] sm:$0xff]
    %v5472 = vld [vmem:[#allocation33 + $0x170] sm:$0xff]
    %v5473 = vld [vmem:[#allocation33 + $0x178] sm:$0xff]
    %5474 = vmatprep.subr.mxu0 0.0
    %5475 = vmatpush1.msra.mxu0 %v5426
    %5476 = vmatprep.subr.mxu0 0.0
    %5477 = vmatpush1.msra.mxu0 %v5427
    %5478 = vmatprep.subr.mxu0 0.0
    %5479 = vmatpush1.msra.mxu0 %v5428
    %5480 = vmatprep.subr.mxu0 0.0
    %5481 = vmatpush1.msra.mxu0 %v5429
    %5482 = vmatprep.subr.mxu0 0.0
    %5483 = vmatpush1.msra.mxu0 %v5430
    %5484 = vmatprep.subr.mxu0 0.0
    %5485 = vmatpush1.msra.mxu0 %v5431
    %5486 = vmatprep.subr.mxu0 0.0
    %5487 = vmatpush1.msra.mxu0 %v5432
    %5488 = vmatprep.subr.mxu0 0.0
    %5489 = vmatpush1.msra.mxu0 %v5433
    %5490 = vmatprep.subr.mxu0 0.0
    %5491 = vmatpush1.msra.mxu0 %v5434
    %5492 = vmatprep.subr.mxu0 0.0
    %5493 = vmatpush1.msra.mxu0 %v5435
    %5494 = vmatprep.subr.mxu0 0.0
    %5495 = vmatpush1.msra.mxu0 %v5436
    %5496 = vmatprep.subr.mxu0 0.0
    %5497 = vmatpush1.msra.mxu0 %v5437
    %5498 = vmatprep.subr.mxu0 0.0
    %5499 = vmatpush1.msra.mxu0 %v5438
    %5500 = vmatprep.subr.mxu0 0.0
    %5501 = vmatpush1.msra.mxu0 %v5439
    %5502 = vmatprep.subr.mxu0 0.0
    %5503 = vmatpush1.msra.mxu0 %v5440
    %5504 = vmatprep.subr.mxu0 0.0
    %5505 = vmatpush1.msra.mxu0 %v5441
    %5506 = vmatprep.subr.mxu0 0.0
    %5507 = vmatpush1.msra.mxu0 %v5442
    %5508 = vmatprep.subr.mxu0 0.0
    %5509 = vmatpush1.msra.mxu0 %v5443
    %5510 = vmatprep.subr.mxu0 0.0
    %5511 = vmatpush1.msra.mxu0 %v5444
    %5512 = vmatprep.subr.mxu0 0.0
    %5513 = vmatpush1.msra.mxu0 %v5445
    %5514 = vmatprep.subr.mxu0 0.0
    %5515 = vmatpush1.msra.mxu0 %v5446
    %5516 = vmatprep.subr.mxu0 0.0
    %5517 = vmatpush1.msra.mxu0 %v5447
    %5518 = vmatprep.subr.mxu0 0.0
    %5519 = vmatpush1.msra.mxu0 %v5448
    %5520 = vmatprep.subr.mxu0 0.0
    %5521 = vmatpush1.msra.mxu0 %v5449
    %5522 = vmatprep.subr.mxu0 0.0
    %5523 = vmatpush1.msra.mxu0 %v5450
    %5524 = vmatprep.subr.mxu0 0.0
    %5525 = vmatpush1.msra.mxu0 %v5451
    %5526 = vmatprep.subr.mxu0 0.0
    %5527 = vmatpush1.msra.mxu0 %v5452
    %5528 = vmatprep.subr.mxu0 0.0
    %5529 = vmatpush1.msra.mxu0 %v5453
    %5530 = vmatprep.subr.mxu0 0.0
    %5531 = vmatpush1.msra.mxu0 %v5454
    %5532 = vmatprep.subr.mxu0 0.0
    %5533 = vmatpush1.msra.mxu0 %v5455
    %5534 = vmatprep.subr.mxu0 0.0
    %5535 = vmatpush1.msra.mxu0 %v5456
    %5536 = vmatprep.subr.mxu0 0.0
    %5537 = vmatpush1.msra.mxu0 %v5457
    %5538 = vmatprep.mubr.f32.mxu0 %v5424
    %5539 = vmatmul.mubr.f32.gmra.mrb[0].mxu0 %v5423
    %v5540 = vpop.f32.mrb[0].mxu0
    %v5541 = vadd.f32 0.0, %v5540
    %v5542 = vpop.f32.mrb[0].mxu0
    %5543 = vdwg.mxu0
    %5544 = vmatprep.subr.mxu0 0.0
    %5545 = vmatpush1.msra.mxu0 %v5458
    %5546 = vmatprep.subr.mxu0 0.0
    %5547 = vmatpush1.msra.mxu0 %v5459
    %5548 = vmatprep.subr.mxu0 0.0
    %5549 = vmatpush1.msra.mxu0 %v5460
    %5550 = vmatprep.subr.mxu0 0.0
    %5551 = vmatpush1.msra.mxu0 %v5461
    %5552 = vmatprep.subr.mxu0 0.0
    %5553 = vmatpush1.msra.mxu0 %v5462
    %5554 = vmatprep.subr.mxu0 0.0
    %5555 = vmatpush1.msra.mxu0 %v5463
    %5556 = vmatprep.subr.mxu0 0.0
    %5557 = vmatpush1.msra.mxu0 %v5464
    %5558 = vmatprep.subr.mxu0 0.0
    %5559 = vmatpush1.msra.mxu0 %v5465
    %5560 = vmatprep.subr.mxu0 0.0
    %5561 = vmatpush1.msra.mxu0 %v5466
    %5562 = vmatprep.subr.mxu0 0.0
    %5563 = vmatpush1.msra.mxu0 %v5467
    %5564 = vmatprep.subr.mxu0 0.0
    %5565 = vmatpush1.msra.mxu0 %v5468
    %5566 = vmatprep.subr.mxu0 0.0
    %5567 = vmatpush1.msra.mxu0 %v5469
    %5568 = vmatprep.subr.mxu0 0.0
    %5569 = vmatpush1.msra.mxu0 %v5470
    %5570 = vmatprep.subr.mxu0 0.0
    %5571 = vmatpush1.msra.mxu0 %v5471
    %5572 = vmatprep.subr.mxu0 0.0
    %5573 = vmatpush1.msra.mxu0 %v5472
    %5574 = vmatprep.subr.mxu0 0.0
    %5575 = vmatpush1.msra.mxu0 %v5473
    %5576 = vmatprep.subr.mxu0 0.0
    %5577 = vmatpush1.msra.mxu0 0.0
    %5578 = vmatprep.subr.mxu0 0.0
    %5579 = vmatpush1.msra.mxu0 0.0
    %5580 = vmatprep.subr.mxu0 0.0
    %5581 = vmatpush1.msra.mxu0 0.0
    %5582 = vmatprep.subr.mxu0 0.0
    %5583 = vmatpush1.msra.mxu0 0.0
    %5584 = vmatprep.subr.mxu0 0.0
    %5585 = vmatpush1.msra.mxu0 0.0
    %5586 = vmatprep.subr.mxu0 0.0
    %5587 = vmatpush1.msra.mxu0 0.0
    %5588 = vmatprep.subr.mxu0 0.0
    %5589 = vmatpush1.msra.mxu0 0.0
    %5590 = vmatprep.subr.mxu0 0.0
    %5591 = vmatpush1.msra.mxu0 0.0
    %5592 = vmatprep.subr.mxu0 0.0
    %5593 = vmatpush1.msra.mxu0 0.0
    %5594 = vmatprep.subr.mxu0 0.0
    %5595 = vmatpush1.msra.mxu0 0.0
    %5596 = vmatprep.subr.mxu0 0.0
    %5597 = vmatpush1.msra.mxu0 0.0
    %5598 = vmatprep.subr.mxu0 0.0
    %5599 = vmatpush1.msra.mxu0 0.0
    %5600 = vmatprep.subr.mxu0 0.0
    %5601 = vmatpush1.msra.mxu0 0.0
    %5602 = vmatprep.subr.mxu0 0.0
    %5603 = vmatpush1.msra.mxu0 0.0
    %5604 = vmatprep.subr.mxu0 0.0
    %5605 = vmatpush1.msra.mxu0 0.0
    %5606 = vmatprep.subr.mxu0 0.0
    %5607 = vmatpush1.msra.mxu0 0.0
    %5608 = vmatprep.mubr.f32.mxu0 0.0
    %5609 = vmatmul.mubr.f32.gmra.mrb[0].mxu0 %v5425
    %v5610 = vpop.f32.mrb[0].mxu0
    %v5611 = vadd.f32 %v5541, %v5610
    %v5612 = vpop.f32.mrb[0].mxu0
    %5613 = vdwg.mxu0
    %v5614 = vmul.f32 %v5611, 0.027777778
    %v5615 = vmul.f32 %v5614, %v5614
    %v5617 = vrot.slane %v5615, 7
    %v5619 = vsub.f32 %v5614, %v5617
    %v5620 = vld [vmem:[#allocation36] sm:$0x1]
    %v5621 = vadd.f32 %v5619, 1e-05
    %v5622 = vrsqrt.pop %v5621
    %v5625 = vunpack.c.l.s4 1966171168
    %v5626 = vunpack.c.0.s8 %v5625
    %v5627 = vlaneseq
    %v5628 = vshrl.u32 %v5627, 7
    %v5629 = vsub.s32 %v5626, %v5628
    %v5630 = vrot.slane %v5622, %v5629
    %v5631 = vcombine.high %v5630, %v5630
    %v5633 = vunpack.c.l.s4 1966171168
    %v5634 = vunpack.c.0.s8 %v5633
    %v5635 = vlaneseq
    %v5636 = vshrl.u32 %v5635, 7
    %v5637 = vsub.s32 %v5634, %v5636
    %v5638 = vrot.slane %v5631, %v5637
    %v5640 = vmul.f32 %v5620, %v5638
    %v5641 = vld [vmem:[#allocation37] sm:$0x1]
    %v5642 = vmul.f32 %v5614, %v5640
    %v5643 = vsub.f32 %v5641, %v5642
    %v5645 = vlaneseq
    %v5646 = vshrl.u32 %v5645, 7
    %v5647 = vsub.s32 0, %v5646
    %v5648 = vrot.slane %v5643, %v5647
    %v5650 = vsel %vm1334, %v5640, %v5648
    %v5651 = vld [vmem:[#allocation34] sm:$0xff]
    %v5652 = vld [vmem:[#allocation34 + $0x8] sm:$0xff]
    %v5653 = vld [vmem:[#allocation34 + $0x10] sm:$0xff]
    %v5654 = vld [vmem:[#allocation34 + $0x18] sm:$0xff]
    %v5655 = vld [vmem:[#allocation34 + $0x20] sm:$0xff]
    %v5656 = vld [vmem:[#allocation34 + $0x28] sm:$0xff]
    %v5657 = vld [vmem:[#allocation34 + $0x30] sm:$0xff]
    %v5658 = vld [vmem:[#allocation34 + $0x38] sm:$0xff]
    %v5659 = vld [vmem:[#allocation34 + $0x40] sm:$0xff]
    %v5660 = vld [vmem:[#allocation34 + $0x48] sm:$0xff]
    %v5661 = vld [vmem:[#allocation34 + $0x50] sm:$0xff]
    %v5662 = vld [vmem:[#allocation34 + $0x58] sm:$0xff]
    %v5663 = vld [vmem:[#allocation34 + $0x60] sm:$0xff]
    %v5664 = vld [vmem:[#allocation34 + $0x68] sm:$0xff]
    %v5665 = vld [vmem:[#allocation34 + $0x70] sm:$0xff]
    %v5666 = vld [vmem:[#allocation34 + $0x78] sm:$0xff]
    %v5667 = vld [vmem:[#allocation34 + $0x80] sm:$0xff]
    %v5668 = vld [vmem:[#allocation34 + $0x88] sm:$0xff]
    %v5669 = vld [vmem:[#allocation34 + $0x90] sm:$0xff]
    %v5670 = vld [vmem:[#allocation34 + $0x98] sm:$0xff]
    %v5671 = vld [vmem:[#allocation34 + $0xa0] sm:$0xff]
    %v5672 = vld [vmem:[#allocation34 + $0xa8] sm:$0xff]
    %v5673 = vld [vmem:[#allocation34 + $0xb0] sm:$0xff]
    %v5674 = vld [vmem:[#allocation34 + $0xb8] sm:$0xff]
    %v5676 = vsel %vm423, %v5650, 0
    %5678 = vmatprep.subr.mxu0 %v5652
    %5679 = vmatpush1.msra.mxu0 %v5651
    %5680 = vmatprep.subr.mxu0 %v5655
    %5681 = vmatpush1.msra.mxu0 %v5654
    %5682 = vmatprep.subr.mxu0 %v5658
    %5683 = vmatpush1.msra.mxu0 %v5657
    %5684 = vmatprep.subr.mxu0 %v5661
    %5685 = vmatpush1.msra.mxu0 %v5660
    %5686 = vmatprep.subr.mxu0 %v5664
    %5687 = vmatpush1.msra.mxu0 %v5663
    %5688 = vmatprep.subr.mxu0 %v5667
    %5689 = vmatpush1.msra.mxu0 %v5666
    %5690 = vmatprep.subr.mxu0 %v5670
    %5691 = vmatpush1.msra.mxu0 %v5669
    %5692 = vmatprep.subr.mxu0 %v5673
    %5693 = vmatpush1.msra.mxu0 %v5672
    %5694 = vmatprep.subr.mxu0 0.0
    %5695 = vmatpush1.msra.mxu0 0.0
    %5696 = vmatprep.subr.mxu0 0.0
    %5697 = vmatpush1.msra.mxu0 0.0
    %5698 = vmatprep.subr.mxu0 0.0
    %5699 = vmatpush1.msra.mxu0 0.0
    %5700 = vmatprep.subr.mxu0 0.0
    %5701 = vmatpush1.msra.mxu0 0.0
    %5702 = vmatprep.subr.mxu0 0.0
    %5703 = vmatpush1.msra.mxu0 0.0
    %5704 = vmatprep.subr.mxu0 0.0
    %5705 = vmatpush1.msra.mxu0 0.0
    %5706 = vmatprep.subr.mxu0 0.0
    %5707 = vmatpush1.msra.mxu0 0.0
    %5708 = vmatprep.subr.mxu0 0.0
    %5709 = vmatpush1.msra.mxu0 0.0
    %5710 = vmatprep.subr.mxu0 0.0
    %5711 = vmatpush1.msra.mxu0 0.0
    %5712 = vmatprep.subr.mxu0 0.0
    %5713 = vmatpush1.msra.mxu0 0.0
    %5714 = vmatprep.subr.mxu0 0.0
    %5715 = vmatpush1.msra.mxu0 0.0
    %5716 = vmatprep.subr.mxu0 0.0
    %5717 = vmatpush1.msra.mxu0 0.0
    %5718 = vmatprep.subr.mxu0 0.0
    %5719 = vmatpush1.msra.mxu0 0.0
    %5720 = vmatprep.subr.mxu0 0.0
    %5721 = vmatpush1.msra.mxu0 0.0
    %5722 = vmatprep.subr.mxu0 0.0
    %5723 = vmatpush1.msra.mxu0 0.0
    %5724 = vmatprep.subr.mxu0 0.0
    %5725 = vmatpush1.msra.mxu0 0.0
    %5726 = vmatprep.subr.mxu0 0.0
    %5727 = vmatpush1.msra.mxu0 0.0
    %5728 = vmatprep.subr.mxu0 0.0
    %5729 = vmatpush1.msra.mxu0 0.0
    %5730 = vmatprep.subr.mxu0 0.0
    %5731 = vmatpush1.msra.mxu0 0.0
    %5732 = vmatprep.subr.mxu0 0.0
    %5733 = vmatpush1.msra.mxu0 0.0
    %5734 = vmatprep.subr.mxu0 0.0
    %5735 = vmatpush1.msra.mxu0 0.0
    %5736 = vmatprep.subr.mxu0 0.0
    %5737 = vmatpush1.msra.mxu0 0.0
    %5738 = vmatprep.subr.mxu0 0.0
    %5739 = vmatpush1.msra.mxu0 0.0
    %5740 = vmatprep.subr.mxu0 0.0
    %5741 = vmatpush1.msra.mxu0 0.0
    %5742 = vmatprep.mubr.f32.mxu0 0.0
    %5743 = vmatmul.mubr.f32.gmra.mrb[0].mxu0 %v5676
    %v5744 = vpop.f32.mrb[0].mxu0
    %v5745 = vadd.f32 0.0, %v5744
    %v5746 = vpop.f32.mrb[0].mxu0
    %v5747 = vadd.f32 0.0, %v5746
    %5748 = vdwg.mxu0
    %5749 = vmatprep.subr.mxu0 0.0
    %5750 = vmatpush1.msra.mxu0 %v5653
    %5751 = vmatprep.subr.mxu0 0.0
    %5752 = vmatpush1.msra.mxu0 %v5656
    %5753 = vmatprep.subr.mxu0 0.0
    %5754 = vmatpush1.msra.mxu0 %v5659
    %5755 = vmatprep.subr.mxu0 0.0
    %5756 = vmatpush1.msra.mxu0 %v5662
    %5757 = vmatprep.subr.mxu0 0.0
    %5758 = vmatpush1.msra.mxu0 %v5665
    %5759 = vmatprep.subr.mxu0 0.0
    %5760 = vmatpush1.msra.mxu0 %v5668
    %5761 = vmatprep.subr.mxu0 0.0
    %5762 = vmatpush1.msra.mxu0 %v5671
    %5763 = vmatprep.subr.mxu0 0.0
    %5764 = vmatpush1.msra.mxu0 %v5674
    %5765 = vmatprep.subr.mxu0 0.0
    %5766 = vmatpush1.msra.mxu0 0.0
    %5767 = vmatprep.subr.mxu0 0.0
    %5768 = vmatpush1.msra.mxu0 0.0
    %5769 = vmatprep.subr.mxu0 0.0
    %5770 = vmatpush1.msra.mxu0 0.0
    %5771 = vmatprep.subr.mxu0 0.0
    %5772 = vmatpush1.msra.mxu0 0.0
    %5773 = vmatprep.subr.mxu0 0.0
    %5774 = vmatpush1.msra.mxu0 0.0
    %5775 = vmatprep.subr.mxu0 0.0
    %5776 = vmatpush1.msra.mxu0 0.0
    %5777 = vmatprep.subr.mxu0 0.0
    %5778 = vmatpush1.msra.mxu0 0.0
    %5779 = vmatprep.subr.mxu0 0.0
    %5780 = vmatpush1.msra.mxu0 0.0
    %5781 = vmatprep.subr.mxu0 0.0
    %5782 = vmatpush1.msra.mxu0 0.0
    %5783 = vmatprep.subr.mxu0 0.0
    %5784 = vmatpush1.msra.mxu0 0.0
    %5785 = vmatprep.subr.mxu0 0.0
    %5786 = vmatpush1.msra.mxu0 0.0
    %5787 = vmatprep.subr.mxu0 0.0
    %5788 = vmatpush1.msra.mxu0 0.0
    %5789 = vmatprep.subr.mxu0 0.0
    %5790 = vmatpush1.msra.mxu0 0.0
    %5791 = vmatprep.subr.mxu0 0.0
    %5792 = vmatpush1.msra.mxu0 0.0
    %5793 = vmatprep.subr.mxu0 0.0
    %5794 = vmatpush1.msra.mxu0 0.0
    %5795 = vmatprep.subr.mxu0 0.0
    %5796 = vmatpush1.msra.mxu0 0.0
    %5797 = vmatprep.subr.mxu0 0.0
    %5798 = vmatpush1.msra.mxu0 0.0
    %5799 = vmatprep.subr.mxu0 0.0
    %5800 = vmatpush1.msra.mxu0 0.0
    %5801 = vmatprep.subr.mxu0 0.0
    %5802 = vmatpush1.msra.mxu0 0.0
    %5803 = vmatprep.subr.mxu0 0.0
    %5804 = vmatpush1.msra.mxu0 0.0
    %5805 = vmatprep.subr.mxu0 0.0
    %5806 = vmatpush1.msra.mxu0 0.0
    %5807 = vmatprep.subr.mxu0 0.0
    %5808 = vmatpush1.msra.mxu0 0.0
    %5809 = vmatprep.subr.mxu0 0.0
    %5810 = vmatpush1.msra.mxu0 0.0
    %5811 = vmatprep.subr.mxu0 0.0
    %5812 = vmatpush1.msra.mxu0 0.0
    %5813 = vmatprep.mubr.f32.mxu0 0.0
    %5814 = vmatmul.mubr.f32.gmra.mrb[0].mxu0 %v5676
    %v5815 = vpop.f32.mrb[0].mxu0
    %v5816 = vadd.f32 0.0, %v5815
    %v5817 = vpop.f32.mrb[0].mxu0
    %5818 = vdwg.mxu0
    %v5819 = vlaneseq
    %v5820 = vshrl.u32 %v5819, 7
    %v5821 = vsub.s32 0, %v5820
    %v5822 = vrot.slane %v5745, %v5821
    %v5823 = vlaneseq
    %v5824 = vshrl.u32 %v5823, 7
    %v5825 = vsub.s32 0, %v5824
    %v5826 = vrot.slane %v5747, %v5825
    %v5827 = vlaneseq
    %v5828 = vshrl.u32 %v5827, 7
    %v5829 = vsub.s32 0, %v5828
    %v5830 = vrot.slane %v5816, %v5829
    %v5831 = vmul.f32 %v5121, %v5822
    %v5832 = vmul.f32 %v5122, %v5826
    %v5833 = vmul.f32 %v5123, %v5830
    %v5834 = vlaneseq
    %v5835 = vshrl.u32 %v5834, 7
    %v5836 = vsub.s32 1, %v5835
    %v5837 = vrot.slane %v5745, %v5836
    %v5838 = vlaneseq
    %v5839 = vshrl.u32 %v5838, 7
    %v5840 = vsub.s32 1, %v5839
    %v5841 = vrot.slane %v5747, %v5840
    %v5842 = vlaneseq
    %v5843 = vshrl.u32 %v5842, 7
    %v5844 = vsub.s32 1, %v5843
    %v5845 = vrot.slane %v5816, %v5844
    %v5846 = vadd.f32 %v5831, %v5837
    %v5847 = vadd.f32 %v5832, %v5841
    %v5848 = vadd.f32 %v5833, %v5845
    %v5849 = vmax.f32 %v5846, 0.0
    %v5850 = vmax.f32 %v5847, 0.0
    %v5851 = vmax.f32 %v5848, 0.0
    %v5855 = vrot.slane %v5849, 4
    %v5856 = vrot.slane %v5850, 4
    %v5857 = vrot.slane %v5851, 4
    %v5861 = vsel %vm1334, %v5849, %v5855
    %v5862 = vsel %vm1334, %v5850, %v5856
    %v5863 = vsel %vm1334, %v5851, %v5857
    %v5864 = vld [vmem:[#allocation40] sm:$0xff]
    %v5865 = vld [vmem:[#allocation40 + $0x8] sm:$0xff]
    %v5866 = vld [vmem:[#allocation40 + $0x10] sm:$0xff]
    %v5867 = vld [vmem:[#allocation40 + $0x18] sm:$0xff]
    %v5868 = vld [vmem:[#allocation40 + $0x20] sm:$0xff]
    %v5869 = vld [vmem:[#allocation40 + $0x28] sm:$0xff]
    %v5870 = vld [vmem:[#allocation40 + $0x30] sm:$0xff]
    %v5871 = vld [vmem:[#allocation40 + $0x38] sm:$0xff]
    %v5872 = vld [vmem:[#allocation40 + $0x40] sm:$0xff]
    %v5873 = vld [vmem:[#allocation40 + $0x48] sm:$0xff]
    %v5874 = vld [vmem:[#allocation40 + $0x50] sm:$0xff]
    %v5875 = vld [vmem:[#allocation40 + $0x58] sm:$0xff]
    %v5876 = vld [vmem:[#allocation40 + $0x60] sm:$0xff]
    %v5877 = vld [vmem:[#allocation40 + $0x68] sm:$0xff]
    %v5878 = vld [vmem:[#allocation40 + $0x70] sm:$0xff]
    %v5879 = vld [vmem:[#allocation40 + $0x78] sm:$0xff]
    %v5880 = vld [vmem:[#allocation40 + $0x80] sm:$0xff]
    %v5881 = vld [vmem:[#allocation40 + $0x88] sm:$0xff]
    %v5882 = vld [vmem:[#allocation40 + $0x90] sm:$0xff]
    %v5883 = vld [vmem:[#allocation40 + $0x98] sm:$0xff]
    %v5884 = vld [vmem:[#allocation40 + $0xa0] sm:$0xff]
    %v5885 = vld [vmem:[#allocation40 + $0xa8] sm:$0xff]
    %v5886 = vld [vmem:[#allocation40 + $0xb0] sm:$0xff]
    %v5887 = vld [vmem:[#allocation40 + $0xb8] sm:$0xff]
    %v5888 = vld [vmem:[#allocation40 + $0xc0] sm:$0xff]
    %v5889 = vld [vmem:[#allocation40 + $0xc8] sm:$0xff]
    %v5890 = vld [vmem:[#allocation40 + $0xd0] sm:$0xff]
    %v5891 = vld [vmem:[#allocation40 + $0xd8] sm:$0xff]
    %v5892 = vld [vmem:[#allocation40 + $0xe0] sm:$0xff]
    %v5893 = vld [vmem:[#allocation40 + $0xe8] sm:$0xff]
    %v5894 = vld [vmem:[#allocation40 + $0xf0] sm:$0xff]
    %v5895 = vld [vmem:[#allocation40 + $0xf8] sm:$0xff]
    %v5896 = vld [vmem:[#allocation40 + $0x100] sm:$0xff]
    %v5897 = vld [vmem:[#allocation40 + $0x108] sm:$0xff]
    %v5898 = vld [vmem:[#allocation40 + $0x110] sm:$0xff]
    %v5899 = vld [vmem:[#allocation40 + $0x118] sm:$0xff]
    %v5900 = vld [vmem:[#allocation40 + $0x120] sm:$0xff]
    %v5901 = vld [vmem:[#allocation40 + $0x128] sm:$0xff]
    %v5902 = vld [vmem:[#allocation40 + $0x130] sm:$0xff]
    %v5903 = vld [vmem:[#allocation40 + $0x138] sm:$0xff]
    %v5904 = vld [vmem:[#allocation40 + $0x140] sm:$0xff]
    %v5905 = vld [vmem:[#allocation40 + $0x148] sm:$0xff]
    %v5906 = vld [vmem:[#allocation40 + $0x150] sm:$0xff]
    %v5907 = vld [vmem:[#allocation40 + $0x158] sm:$0xff]
    %v5908 = vld [vmem:[#allocation40 + $0x160] sm:$0xff]
    %v5909 = vld [vmem:[#allocation40 + $0x168] sm:$0xff]
    %v5910 = vld [vmem:[#allocation40 + $0x170] sm:$0xff]
    %v5911 = vld [vmem:[#allocation40 + $0x178] sm:$0xff]
    %v5912 = vrot.slane %v5849, 1
    %v5913 = vrot.slane %v5850, 1
    %v5914 = vrot.slane %v5851, 1
    %v5918 = vrot.slane %v5849, 5
    %v5919 = vrot.slane %v5850, 5
    %v5920 = vrot.slane %v5851, 5
    %v5924 = vsel %vm1334, %v5912, %v5918
    %v5925 = vsel %vm1334, %v5913, %v5919
    %v5926 = vsel %vm1334, %v5914, %v5920
    %s5927 = scalar_lea.vmem [#allocation40], 384
    %v5928 = vld [vmem:[%s5927] sm:$0xff]
    %v5929 = vld [vmem:[%s5927 + $0x8] sm:$0xff]
    %v5930 = vld [vmem:[%s5927 + $0x10] sm:$0xff]
    %v5931 = vld [vmem:[%s5927 + $0x18] sm:$0xff]
    %v5932 = vld [vmem:[%s5927 + $0x20] sm:$0xff]
    %v5933 = vld [vmem:[%s5927 + $0x28] sm:$0xff]
    %v5934 = vld [vmem:[%s5927 + $0x30] sm:$0xff]
    %v5935 = vld [vmem:[%s5927 + $0x38] sm:$0xff]
    %v5936 = vld [vmem:[%s5927 + $0x40] sm:$0xff]
    %v5937 = vld [vmem:[%s5927 + $0x48] sm:$0xff]
    %v5938 = vld [vmem:[%s5927 + $0x50] sm:$0xff]
    %v5939 = vld [vmem:[%s5927 + $0x58] sm:$0xff]
    %v5940 = vld [vmem:[%s5927 + $0x60] sm:$0xff]
    %v5941 = vld [vmem:[%s5927 + $0x68] sm:$0xff]
    %v5942 = vld [vmem:[%s5927 + $0x70] sm:$0xff]
    %v5943 = vld [vmem:[%s5927 + $0x78] sm:$0xff]
    %v5944 = vld [vmem:[%s5927 + $0x80] sm:$0xff]
    %v5945 = vld [vmem:[%s5927 + $0x88] sm:$0xff]
    %v5946 = vld [vmem:[%s5927 + $0x90] sm:$0xff]
    %v5947 = vld [vmem:[%s5927 + $0x98] sm:$0xff]
    %v5948 = vld [vmem:[%s5927 + $0xa0] sm:$0xff]
    %v5949 = vld [vmem:[%s5927 + $0xa8] sm:$0xff]
    %v5950 = vld [vmem:[%s5927 + $0xb0] sm:$0xff]
    %v5951 = vld [vmem:[%s5927 + $0xb8] sm:$0xff]
    %v5952 = vld [vmem:[%s5927 + $0xc0] sm:$0xff]
    %v5953 = vld [vmem:[%s5927 + $0xc8] sm:$0xff]
    %v5954 = vld [vmem:[%s5927 + $0xd0] sm:$0xff]
    %v5955 = vld [vmem:[%s5927 + $0xd8] sm:$0xff]
    %v5956 = vld [vmem:[%s5927 + $0xe0] sm:$0xff]
    %v5957 = vld [vmem:[%s5927 + $0xe8] sm:$0xff]
    %v5958 = vld [vmem:[%s5927 + $0xf0] sm:$0xff]
    %v5959 = vld [vmem:[%s5927 + $0xf8] sm:$0xff]
    %v5960 = vld [vmem:[%s5927 + $0x100] sm:$0xff]
    %v5961 = vld [vmem:[%s5927 + $0x108] sm:$0xff]
    %v5962 = vld [vmem:[%s5927 + $0x110] sm:$0xff]
    %v5963 = vld [vmem:[%s5927 + $0x118] sm:$0xff]
    %v5964 = vld [vmem:[%s5927 + $0x120] sm:$0xff]
    %v5965 = vld [vmem:[%s5927 + $0x128] sm:$0xff]
    %v5966 = vld [vmem:[%s5927 + $0x130] sm:$0xff]
    %v5967 = vld [vmem:[%s5927 + $0x138] sm:$0xff]
    %v5968 = vld [vmem:[%s5927 + $0x140] sm:$0xff]
    %v5969 = vld [vmem:[%s5927 + $0x148] sm:$0xff]
    %v5970 = vld [vmem:[%s5927 + $0x150] sm:$0xff]
    %v5971 = vld [vmem:[%s5927 + $0x158] sm:$0xff]
    %v5972 = vld [vmem:[%s5927 + $0x160] sm:$0xff]
    %v5973 = vld [vmem:[%s5927 + $0x168] sm:$0xff]
    %v5974 = vld [vmem:[%s5927 + $0x170] sm:$0xff]
    %v5975 = vld [vmem:[%s5927 + $0x178] sm:$0xff]
    %5976 = vmatprep.subr.mxu0 0.0
    %5977 = vmatpush1.msra.mxu0 %v5928
    %5978 = vmatprep.subr.mxu0 0.0
    %5979 = vmatpush1.msra.mxu0 %v5929
    %5980 = vmatprep.subr.mxu0 0.0
    %5981 = vmatpush1.msra.mxu0 %v5930
    %5982 = vmatprep.subr.mxu0 0.0
    %5983 = vmatpush1.msra.mxu0 %v5931
    %5984 = vmatprep.subr.mxu0 0.0
    %5985 = vmatpush1.msra.mxu0 %v5932
    %5986 = vmatprep.subr.mxu0 0.0
    %5987 = vmatpush1.msra.mxu0 %v5933
    %5988 = vmatprep.subr.mxu0 0.0
    %5989 = vmatpush1.msra.mxu0 %v5934
    %5990 = vmatprep.subr.mxu0 0.0
    %5991 = vmatpush1.msra.mxu0 %v5935
    %5992 = vmatprep.subr.mxu0 0.0
    %5993 = vmatpush1.msra.mxu0 %v5936
    %5994 = vmatprep.subr.mxu0 0.0
    %5995 = vmatpush1.msra.mxu0 %v5937
    %5996 = vmatprep.subr.mxu0 0.0
    %5997 = vmatpush1.msra.mxu0 %v5938
    %5998 = vmatprep.subr.mxu0 0.0
    %5999 = vmatpush1.msra.mxu0 %v5939
    %6000 = vmatprep.subr.mxu0 0.0
    %6001 = vmatpush1.msra.mxu0 %v5940
    %6002 = vmatprep.subr.mxu0 0.0
    %6003 = vmatpush1.msra.mxu0 %v5941
    %6004 = vmatprep.subr.mxu0 0.0
    %6005 = vmatpush1.msra.mxu0 %v5942
    %6006 = vmatprep.subr.mxu0 0.0
    %6007 = vmatpush1.msra.mxu0 %v5943
    %6008 = vmatprep.subr.mxu0 0.0
    %6009 = vmatpush1.msra.mxu0 %v5944
    %6010 = vmatprep.subr.mxu0 0.0
    %6011 = vmatpush1.msra.mxu0 %v5945
    %6012 = vmatprep.subr.mxu0 0.0
    %6013 = vmatpush1.msra.mxu0 %v5946
    %6014 = vmatprep.subr.mxu0 0.0
    %6015 = vmatpush1.msra.mxu0 %v5947
    %6016 = vmatprep.subr.mxu0 0.0
    %6017 = vmatpush1.msra.mxu0 %v5948
    %6018 = vmatprep.subr.mxu0 0.0
    %6019 = vmatpush1.msra.mxu0 %v5949
    %6020 = vmatprep.subr.mxu0 0.0
    %6021 = vmatpush1.msra.mxu0 %v5950
    %6022 = vmatprep.subr.mxu0 0.0
    %6023 = vmatpush1.msra.mxu0 %v5951
    %6024 = vmatprep.subr.mxu0 0.0
    %6025 = vmatpush1.msra.mxu0 %v5952
    %6026 = vmatprep.subr.mxu0 0.0
    %6027 = vmatpush1.msra.mxu0 %v5953
    %6028 = vmatprep.subr.mxu0 0.0
    %6029 = vmatpush1.msra.mxu0 %v5954
    %6030 = vmatprep.subr.mxu0 0.0
    %6031 = vmatpush1.msra.mxu0 %v5955
    %6032 = vmatprep.subr.mxu0 0.0
    %6033 = vmatpush1.msra.mxu0 %v5956
    %6034 = vmatprep.subr.mxu0 0.0
    %6035 = vmatpush1.msra.mxu0 %v5957
    %6036 = vmatprep.subr.mxu0 0.0
    %6037 = vmatpush1.msra.mxu0 %v5958
    %6038 = vmatprep.subr.mxu0 0.0
    %6039 = vmatpush1.msra.mxu0 %v5959
    %6040 = vmatprep.mubr.f32.mxu0 %v5925
    %6041 = vmatmul.mubr.f32.gmra.mrb[0].mxu0 %v5924
    %v6042 = vpop.f32.mrb[0].mxu0
    %v6043 = vadd.f32 0.0, %v6042
    %v6044 = vpop.f32.mrb[0].mxu0
    %6045 = vdwg.mxu0
    %6046 = vmatprep.subr.mxu0 0.0
    %6047 = vmatpush1.msra.mxu0 %v5960
    %6048 = vmatprep.subr.mxu0 0.0
    %6049 = vmatpush1.msra.mxu0 %v5961
    %6050 = vmatprep.subr.mxu0 0.0
    %6051 = vmatpush1.msra.mxu0 %v5962
    %6052 = vmatprep.subr.mxu0 0.0
    %6053 = vmatpush1.msra.mxu0 %v5963
    %6054 = vmatprep.subr.mxu0 0.0
    %6055 = vmatpush1.msra.mxu0 %v5964
    %6056 = vmatprep.subr.mxu0 0.0
    %6057 = vmatpush1.msra.mxu0 %v5965
    %6058 = vmatprep.subr.mxu0 0.0
    %6059 = vmatpush1.msra.mxu0 %v5966
    %6060 = vmatprep.subr.mxu0 0.0
    %6061 = vmatpush1.msra.mxu0 %v5967
    %6062 = vmatprep.subr.mxu0 0.0
    %6063 = vmatpush1.msra.mxu0 %v5968
    %6064 = vmatprep.subr.mxu0 0.0
    %6065 = vmatpush1.msra.mxu0 %v5969
    %6066 = vmatprep.subr.mxu0 0.0
    %6067 = vmatpush1.msra.mxu0 %v5970
    %6068 = vmatprep.subr.mxu0 0.0
    %6069 = vmatpush1.msra.mxu0 %v5971
    %6070 = vmatprep.subr.mxu0 0.0
    %6071 = vmatpush1.msra.mxu0 %v5972
    %6072 = vmatprep.subr.mxu0 0.0
    %6073 = vmatpush1.msra.mxu0 %v5973
    %6074 = vmatprep.subr.mxu0 0.0
    %6075 = vmatpush1.msra.mxu0 %v5974
    %6076 = vmatprep.subr.mxu0 0.0
    %6077 = vmatpush1.msra.mxu0 %v5975
    %6078 = vmatprep.subr.mxu0 0.0
    %6079 = vmatpush1.msra.mxu0 0.0
    %6080 = vmatprep.subr.mxu0 0.0
    %6081 = vmatpush1.msra.mxu0 0.0
    %6082 = vmatprep.subr.mxu0 0.0
    %6083 = vmatpush1.msra.mxu0 0.0
    %6084 = vmatprep.subr.mxu0 0.0
    %6085 = vmatpush1.msra.mxu0 0.0
    %6086 = vmatprep.subr.mxu0 0.0
    %6087 = vmatpush1.msra.mxu0 0.0
    %6088 = vmatprep.subr.mxu0 0.0
    %6089 = vmatpush1.msra.mxu0 0.0
    %6090 = vmatprep.subr.mxu0 0.0
    %6091 = vmatpush1.msra.mxu0 0.0
    %6092 = vmatprep.subr.mxu0 0.0
    %6093 = vmatpush1.msra.mxu0 0.0
    %6094 = vmatprep.subr.mxu0 0.0
    %6095 = vmatpush1.msra.mxu0 0.0
    %6096 = vmatprep.subr.mxu0 0.0
    %6097 = vmatpush1.msra.mxu0 0.0
    %6098 = vmatprep.subr.mxu0 0.0
    %6099 = vmatpush1.msra.mxu0 0.0
    %6100 = vmatprep.subr.mxu0 0.0
    %6101 = vmatpush1.msra.mxu0 0.0
    %6102 = vmatprep.subr.mxu0 0.0
    %6103 = vmatpush1.msra.mxu0 0.0
    %6104 = vmatprep.subr.mxu0 0.0
    %6105 = vmatpush1.msra.mxu0 0.0
    %6106 = vmatprep.subr.mxu0 0.0
    %6107 = vmatpush1.msra.mxu0 0.0
    %6108 = vmatprep.subr.mxu0 0.0
    %6109 = vmatpush1.msra.mxu0 0.0
    %6110 = vmatprep.mubr.f32.mxu0 0.0
    %6111 = vmatmul.mubr.f32.gmra.mrb[0].mxu0 %v5926
    %v6112 = vpop.f32.mrb[0].mxu0
    %v6113 = vadd.f32 %v6043, %v6112
    %v6114 = vpop.f32.mrb[0].mxu0
    %6115 = vdwg.mxu0
    %6116 = vmatprep.subr.mxu0 0.0
    %6117 = vmatpush1.msra.mxu0 %v5864
    %6118 = vmatprep.subr.mxu0 0.0
    %6119 = vmatpush1.msra.mxu0 %v5865
    %6120 = vmatprep.subr.mxu0 0.0
    %6121 = vmatpush1.msra.mxu0 %v5866
    %6122 = vmatprep.subr.mxu0 0.0
    %6123 = vmatpush1.msra.mxu0 %v5867
    %6124 = vmatprep.subr.mxu0 0.0
    %6125 = vmatpush1.msra.mxu0 %v5868
    %6126 = vmatprep.subr.mxu0 0.0
    %6127 = vmatpush1.msra.mxu0 %v5869
    %6128 = vmatprep.subr.mxu0 0.0
    %6129 = vmatpush1.msra.mxu0 %v5870
    %6130 = vmatprep.subr.mxu0 0.0
    %6131 = vmatpush1.msra.mxu0 %v5871
    %6132 = vmatprep.subr.mxu0 0.0
    %6133 = vmatpush1.msra.mxu0 %v5872
    %6134 = vmatprep.subr.mxu0 0.0
    %6135 = vmatpush1.msra.mxu0 %v5873
    %6136 = vmatprep.subr.mxu0 0.0
    %6137 = vmatpush1.msra.mxu0 %v5874
    %6138 = vmatprep.subr.mxu0 0.0
    %6139 = vmatpush1.msra.mxu0 %v5875
    %6140 = vmatprep.subr.mxu0 0.0
    %6141 = vmatpush1.msra.mxu0 %v5876
    %6142 = vmatprep.subr.mxu0 0.0
    %6143 = vmatpush1.msra.mxu0 %v5877
    %6144 = vmatprep.subr.mxu0 0.0
    %6145 = vmatpush1.msra.mxu0 %v5878
    %6146 = vmatprep.subr.mxu0 0.0
    %6147 = vmatpush1.msra.mxu0 %v5879
    %6148 = vmatprep.subr.mxu0 0.0
    %6149 = vmatpush1.msra.mxu0 %v5880
    %6150 = vmatprep.subr.mxu0 0.0
    %6151 = vmatpush1.msra.mxu0 %v5881
    %6152 = vmatprep.subr.mxu0 0.0
    %6153 = vmatpush1.msra.mxu0 %v5882
    %6154 = vmatprep.subr.mxu0 0.0
    %6155 = vmatpush1.msra.mxu0 %v5883
    %6156 = vmatprep.subr.mxu0 0.0
    %6157 = vmatpush1.msra.mxu0 %v5884
    %6158 = vmatprep.subr.mxu0 0.0
    %6159 = vmatpush1.msra.mxu0 %v5885
    %6160 = vmatprep.subr.mxu0 0.0
    %6161 = vmatpush1.msra.mxu0 %v5886
    %6162 = vmatprep.subr.mxu0 0.0
    %6163 = vmatpush1.msra.mxu0 %v5887
    %6164 = vmatprep.subr.mxu0 0.0
    %6165 = vmatpush1.msra.mxu0 %v5888
    %6166 = vmatprep.subr.mxu0 0.0
    %6167 = vmatpush1.msra.mxu0 %v5889
    %6168 = vmatprep.subr.mxu0 0.0
    %6169 = vmatpush1.msra.mxu0 %v5890
    %6170 = vmatprep.subr.mxu0 0.0
    %6171 = vmatpush1.msra.mxu0 %v5891
    %6172 = vmatprep.subr.mxu0 0.0
    %6173 = vmatpush1.msra.mxu0 %v5892
    %6174 = vmatprep.subr.mxu0 0.0
    %6175 = vmatpush1.msra.mxu0 %v5893
    %6176 = vmatprep.subr.mxu0 0.0
    %6177 = vmatpush1.msra.mxu0 %v5894
    %6178 = vmatprep.subr.mxu0 0.0
    %6179 = vmatpush1.msra.mxu0 %v5895
    %6180 = vmatprep.mubr.f32.mxu0 %v5862
    %6181 = vmatmul.mubr.f32.gmra.mrb[0].mxu0 %v5861
    %v6182 = vpop.f32.mrb[0].mxu0
    %v6183 = vadd.f32 %v6113, %v6182
    %v6184 = vpop.f32.mrb[0].mxu0
    %6185 = vdwg.mxu0
    %6186 = vmatprep.subr.mxu0 0.0
    %6187 = vmatpush1.msra.mxu0 %v5896
    %6188 = vmatprep.subr.mxu0 0.0
    %6189 = vmatpush1.msra.mxu0 %v5897
    %6190 = vmatprep.subr.mxu0 0.0
    %6191 = vmatpush1.msra.mxu0 %v5898
    %6192 = vmatprep.subr.mxu0 0.0
    %6193 = vmatpush1.msra.mxu0 %v5899
    %6194 = vmatprep.subr.mxu0 0.0
    %6195 = vmatpush1.msra.mxu0 %v5900
    %6196 = vmatprep.subr.mxu0 0.0
    %6197 = vmatpush1.msra.mxu0 %v5901
    %6198 = vmatprep.subr.mxu0 0.0
    %6199 = vmatpush1.msra.mxu0 %v5902
    %6200 = vmatprep.subr.mxu0 0.0
    %6201 = vmatpush1.msra.mxu0 %v5903
    %6202 = vmatprep.subr.mxu0 0.0
    %6203 = vmatpush1.msra.mxu0 %v5904
    %6204 = vmatprep.subr.mxu0 0.0
    %6205 = vmatpush1.msra.mxu0 %v5905
    %6206 = vmatprep.subr.mxu0 0.0
    %6207 = vmatpush1.msra.mxu0 %v5906
    %6208 = vmatprep.subr.mxu0 0.0
    %6209 = vmatpush1.msra.mxu0 %v5907
    %6210 = vmatprep.subr.mxu0 0.0
    %6211 = vmatpush1.msra.mxu0 %v5908
    %6212 = vmatprep.subr.mxu0 0.0
    %6213 = vmatpush1.msra.mxu0 %v5909
    %6214 = vmatprep.subr.mxu0 0.0
    %6215 = vmatpush1.msra.mxu0 %v5910
    %6216 = vmatprep.subr.mxu0 0.0
    %6217 = vmatpush1.msra.mxu0 %v5911
    %6218 = vmatprep.subr.mxu0 0.0
    %6219 = vmatpush1.msra.mxu0 0.0
    %6220 = vmatprep.subr.mxu0 0.0
    %6221 = vmatpush1.msra.mxu0 0.0
    %6222 = vmatprep.subr.mxu0 0.0
    %6223 = vmatpush1.msra.mxu0 0.0
    %6224 = vmatprep.subr.mxu0 0.0
    %6225 = vmatpush1.msra.mxu0 0.0
    %6226 = vmatprep.subr.mxu0 0.0
    %6227 = vmatpush1.msra.mxu0 0.0
    %6228 = vmatprep.subr.mxu0 0.0
    %6229 = vmatpush1.msra.mxu0 0.0
    %6230 = vmatprep.subr.mxu0 0.0
    %6231 = vmatpush1.msra.mxu0 0.0
    %6232 = vmatprep.subr.mxu0 0.0
    %6233 = vmatpush1.msra.mxu0 0.0
    %6234 = vmatprep.subr.mxu0 0.0
    %6235 = vmatpush1.msra.mxu0 0.0
    %6236 = vmatprep.subr.mxu0 0.0
    %6237 = vmatpush1.msra.mxu0 0.0
    %6238 = vmatprep.subr.mxu0 0.0
    %6239 = vmatpush1.msra.mxu0 0.0
    %6240 = vmatprep.subr.mxu0 0.0
    %6241 = vmatpush1.msra.mxu0 0.0
    %6242 = vmatprep.subr.mxu0 0.0
    %6243 = vmatpush1.msra.mxu0 0.0
    %6244 = vmatprep.subr.mxu0 0.0
    %6245 = vmatpush1.msra.mxu0 0.0
    %6246 = vmatprep.subr.mxu0 0.0
    %6247 = vmatpush1.msra.mxu0 0.0
    %6248 = vmatprep.subr.mxu0 0.0
    %6249 = vmatpush1.msra.mxu0 0.0
    %6250 = vmatprep.mubr.f32.mxu0 0.0
    %6251 = vmatmul.mubr.f32.gmra.mrb[0].mxu0 %v5863
    %v6252 = vpop.f32.mrb[0].mxu0
    %v6253 = vadd.f32 %v6183, %v6252
    %v6254 = vpop.f32.mrb[0].mxu0
    %6255 = vdwg.mxu0
    %v6256 = vrot.slane %v5849, 2
    %v6257 = vrot.slane %v5850, 2
    %v6258 = vrot.slane %v5851, 2
    %v6262 = vrot.slane %v5849, 6
    %v6263 = vrot.slane %v5850, 6
    %v6264 = vrot.slane %v5851, 6
    %v6268 = vsel %vm1334, %v6256, %v6262
    %v6269 = vsel %vm1334, %v6257, %v6263
    %v6270 = vsel %vm1334, %v6258, %v6264
    %s6271 = scalar_lea.vmem [#allocation40], 768
    %v6272 = vld [vmem:[%s6271] sm:$0xff]
    %v6273 = vld [vmem:[%s6271 + $0x8] sm:$0xff]
    %v6274 = vld [vmem:[%s6271 + $0x10] sm:$0xff]
    %v6275 = vld [vmem:[%s6271 + $0x18] sm:$0xff]
    %v6276 = vld [vmem:[%s6271 + $0x20] sm:$0xff]
    %v6277 = vld [vmem:[%s6271 + $0x28] sm:$0xff]
    %v6278 = vld [vmem:[%s6271 + $0x30] sm:$0xff]
    %v6279 = vld [vmem:[%s6271 + $0x38] sm:$0xff]
    %v6280 = vld [vmem:[%s6271 + $0x40] sm:$0xff]
    %v6281 = vld [vmem:[%s6271 + $0x48] sm:$0xff]
    %v6282 = vld [vmem:[%s6271 + $0x50] sm:$0xff]
    %v6283 = vld [vmem:[%s6271 + $0x58] sm:$0xff]
    %v6284 = vld [vmem:[%s6271 + $0x60] sm:$0xff]
    %v6285 = vld [vmem:[%s6271 + $0x68] sm:$0xff]
    %v6286 = vld [vmem:[%s6271 + $0x70] sm:$0xff]
    %v6287 = vld [vmem:[%s6271 + $0x78] sm:$0xff]
    %v6288 = vld [vmem:[%s6271 + $0x80] sm:$0xff]
    %v6289 = vld [vmem:[%s6271 + $0x88] sm:$0xff]
    %v6290 = vld [vmem:[%s6271 + $0x90] sm:$0xff]
    %v6291 = vld [vmem:[%s6271 + $0x98] sm:$0xff]
    %v6292 = vld [vmem:[%s6271 + $0xa0] sm:$0xff]
    %v6293 = vld [vmem:[%s6271 + $0xa8] sm:$0xff]
    %v6294 = vld [vmem:[%s6271 + $0xb0] sm:$0xff]
    %v6295 = vld [vmem:[%s6271 + $0xb8] sm:$0xff]
    %v6296 = vld [vmem:[%s6271 + $0xc0] sm:$0xff]
    %v6297 = vld [vmem:[%s6271 + $0xc8] sm:$0xff]
    %v6298 = vld [vmem:[%s6271 + $0xd0] sm:$0xff]
    %v6299 = vld [vmem:[%s6271 + $0xd8] sm:$0xff]
    %v6300 = vld [vmem:[%s6271 + $0xe0] sm:$0xff]
    %v6301 = vld [vmem:[%s6271 + $0xe8] sm:$0xff]
    %v6302 = vld [vmem:[%s6271 + $0xf0] sm:$0xff]
    %v6303 = vld [vmem:[%s6271 + $0xf8] sm:$0xff]
    %v6304 = vld [vmem:[%s6271 + $0x100] sm:$0xff]
    %v6305 = vld [vmem:[%s6271 + $0x108] sm:$0xff]
    %v6306 = vld [vmem:[%s6271 + $0x110] sm:$0xff]
    %v6307 = vld [vmem:[%s6271 + $0x118] sm:$0xff]
    %v6308 = vld [vmem:[%s6271 + $0x120] sm:$0xff]
    %v6309 = vld [vmem:[%s6271 + $0x128] sm:$0xff]
    %v6310 = vld [vmem:[%s6271 + $0x130] sm:$0xff]
    %v6311 = vld [vmem:[%s6271 + $0x138] sm:$0xff]
    %v6312 = vld [vmem:[%s6271 + $0x140] sm:$0xff]
    %v6313 = vld [vmem:[%s6271 + $0x148] sm:$0xff]
    %v6314 = vld [vmem:[%s6271 + $0x150] sm:$0xff]
    %v6315 = vld [vmem:[%s6271 + $0x158] sm:$0xff]
    %v6316 = vld [vmem:[%s6271 + $0x160] sm:$0xff]
    %v6317 = vld [vmem:[%s6271 + $0x168] sm:$0xff]
    %v6318 = vld [vmem:[%s6271 + $0x170] sm:$0xff]
    %v6319 = vld [vmem:[%s6271 + $0x178] sm:$0xff]
    %6320 = vmatprep.subr.mxu0 0.0
    %6321 = vmatpush1.msra.mxu0 %v6272
    %6322 = vmatprep.subr.mxu0 0.0
    %6323 = vmatpush1.msra.mxu0 %v6273
    %6324 = vmatprep.subr.mxu0 0.0
    %6325 = vmatpush1.msra.mxu0 %v6274
    %6326 = vmatprep.subr.mxu0 0.0
    %6327 = vmatpush1.msra.mxu0 %v6275
    %6328 = vmatprep.subr.mxu0 0.0
    %6329 = vmatpush1.msra.mxu0 %v6276
    %6330 = vmatprep.subr.mxu0 0.0
    %6331 = vmatpush1.msra.mxu0 %v6277
    %6332 = vmatprep.subr.mxu0 0.0
    %6333 = vmatpush1.msra.mxu0 %v6278
    %6334 = vmatprep.subr.mxu0 0.0
    %6335 = vmatpush1.msra.mxu0 %v6279
    %6336 = vmatprep.subr.mxu0 0.0
    %6337 = vmatpush1.msra.mxu0 %v6280
    %6338 = vmatprep.subr.mxu0 0.0
    %6339 = vmatpush1.msra.mxu0 %v6281
    %6340 = vmatprep.subr.mxu0 0.0
    %6341 = vmatpush1.msra.mxu0 %v6282
    %6342 = vmatprep.subr.mxu0 0.0
    %6343 = vmatpush1.msra.mxu0 %v6283
    %6344 = vmatprep.subr.mxu0 0.0
    %6345 = vmatpush1.msra.mxu0 %v6284
    %6346 = vmatprep.subr.mxu0 0.0
    %6347 = vmatpush1.msra.mxu0 %v6285
    %6348 = vmatprep.subr.mxu0 0.0
    %6349 = vmatpush1.msra.mxu0 %v6286
    %6350 = vmatprep.subr.mxu0 0.0
    %6351 = vmatpush1.msra.mxu0 %v6287
    %6352 = vmatprep.subr.mxu0 0.0
    %6353 = vmatpush1.msra.mxu0 %v6288
    %6354 = vmatprep.subr.mxu0 0.0
    %6355 = vmatpush1.msra.mxu0 %v6289
    %6356 = vmatprep.subr.mxu0 0.0
    %6357 = vmatpush1.msra.mxu0 %v6290
    %6358 = vmatprep.subr.mxu0 0.0
    %6359 = vmatpush1.msra.mxu0 %v6291
    %6360 = vmatprep.subr.mxu0 0.0
    %6361 = vmatpush1.msra.mxu0 %v6292
    %6362 = vmatprep.subr.mxu0 0.0
    %6363 = vmatpush1.msra.mxu0 %v6293
    %6364 = vmatprep.subr.mxu0 0.0
    %6365 = vmatpush1.msra.mxu0 %v6294
    %6366 = vmatprep.subr.mxu0 0.0
    %6367 = vmatpush1.msra.mxu0 %v6295
    %6368 = vmatprep.subr.mxu0 0.0
    %6369 = vmatpush1.msra.mxu0 %v6296
    %6370 = vmatprep.subr.mxu0 0.0
    %6371 = vmatpush1.msra.mxu0 %v6297
    %6372 = vmatprep.subr.mxu0 0.0
    %6373 = vmatpush1.msra.mxu0 %v6298
    %6374 = vmatprep.subr.mxu0 0.0
    %6375 = vmatpush1.msra.mxu0 %v6299
    %6376 = vmatprep.subr.mxu0 0.0
    %6377 = vmatpush1.msra.mxu0 %v6300
    %6378 = vmatprep.subr.mxu0 0.0
    %6379 = vmatpush1.msra.mxu0 %v6301
    %6380 = vmatprep.subr.mxu0 0.0
    %6381 = vmatpush1.msra.mxu0 %v6302
    %6382 = vmatprep.subr.mxu0 0.0
    %6383 = vmatpush1.msra.mxu0 %v6303
    %6384 = vmatprep.mubr.f32.mxu0 %v6269
    %6385 = vmatmul.mubr.f32.gmra.mrb[0].mxu0 %v6268
    %v6386 = vpop.f32.mrb[0].mxu0
    %v6387 = vadd.f32 0.0, %v6386
    %v6388 = vpop.f32.mrb[0].mxu0
    %6389 = vdwg.mxu0
    %6390 = vmatprep.subr.mxu0 0.0
    %6391 = vmatpush1.msra.mxu0 %v6304
    %6392 = vmatprep.subr.mxu0 0.0
    %6393 = vmatpush1.msra.mxu0 %v6305
    %6394 = vmatprep.subr.mxu0 0.0
    %6395 = vmatpush1.msra.mxu0 %v6306
    %6396 = vmatprep.subr.mxu0 0.0
    %6397 = vmatpush1.msra.mxu0 %v6307
    %6398 = vmatprep.subr.mxu0 0.0
    %6399 = vmatpush1.msra.mxu0 %v6308
    %6400 = vmatprep.subr.mxu0 0.0
    %6401 = vmatpush1.msra.mxu0 %v6309
    %6402 = vmatprep.subr.mxu0 0.0
    %6403 = vmatpush1.msra.mxu0 %v6310
    %6404 = vmatprep.subr.mxu0 0.0
    %6405 = vmatpush1.msra.mxu0 %v6311
    %6406 = vmatprep.subr.mxu0 0.0
    %6407 = vmatpush1.msra.mxu0 %v6312
    %6408 = vmatprep.subr.mxu0 0.0
    %6409 = vmatpush1.msra.mxu0 %v6313
    %6410 = vmatprep.subr.mxu0 0.0
    %6411 = vmatpush1.msra.mxu0 %v6314
    %6412 = vmatprep.subr.mxu0 0.0
    %6413 = vmatpush1.msra.mxu0 %v6315
    %6414 = vmatprep.subr.mxu0 0.0
    %6415 = vmatpush1.msra.mxu0 %v6316
    %6416 = vmatprep.subr.mxu0 0.0
    %6417 = vmatpush1.msra.mxu0 %v6317
    %6418 = vmatprep.subr.mxu0 0.0
    %6419 = vmatpush1.msra.mxu0 %v6318
    %6420 = vmatprep.subr.mxu0 0.0
    %6421 = vmatpush1.msra.mxu0 %v6319
    %6422 = vmatprep.subr.mxu0 0.0
    %6423 = vmatpush1.msra.mxu0 0.0
    %6424 = vmatprep.subr.mxu0 0.0
    %6425 = vmatpush1.msra.mxu0 0.0
    %6426 = vmatprep.subr.mxu0 0.0
    %6427 = vmatpush1.msra.mxu0 0.0
    %6428 = vmatprep.subr.mxu0 0.0
    %6429 = vmatpush1.msra.mxu0 0.0
    %6430 = vmatprep.subr.mxu0 0.0
    %6431 = vmatpush1.msra.mxu0 0.0
    %6432 = vmatprep.subr.mxu0 0.0
    %6433 = vmatpush1.msra.mxu0 0.0
    %6434 = vmatprep.subr.mxu0 0.0
    %6435 = vmatpush1.msra.mxu0 0.0
    %6436 = vmatprep.subr.mxu0 0.0
    %6437 = vmatpush1.msra.mxu0 0.0
    %6438 = vmatprep.subr.mxu0 0.0
    %6439 = vmatpush1.msra.mxu0 0.0
    %6440 = vmatprep.subr.mxu0 0.0
    %6441 = vmatpush1.msra.mxu0 0.0
    %6442 = vmatprep.subr.mxu0 0.0
    %6443 = vmatpush1.msra.mxu0 0.0
    %6444 = vmatprep.subr.mxu0 0.0
    %6445 = vmatpush1.msra.mxu0 0.0
    %6446 = vmatprep.subr.mxu0 0.0
    %6447 = vmatpush1.msra.mxu0 0.0
    %6448 = vmatprep.subr.mxu0 0.0
    %6449 = vmatpush1.msra.mxu0 0.0
    %6450 = vmatprep.subr.mxu0 0.0
    %6451 = vmatpush1.msra.mxu0 0.0
    %6452 = vmatprep.subr.mxu0 0.0
    %6453 = vmatpush1.msra.mxu0 0.0
    %6454 = vmatprep.mubr.f32.mxu0 0.0
    %6455 = vmatmul.mubr.f32.gmra.mrb[0].mxu0 %v6270
    %v6456 = vpop.f32.mrb[0].mxu0
    %v6457 = vadd.f32 %v6387, %v6456
    %v6458 = vpop.f32.mrb[0].mxu0
    %6459 = vdwg.mxu0
    %v6460 = vadd.f32 %v6253, %v6457
    %v6461 = vld [vmem:[#allocation42] sm:$0x1]
    %v6463 = vlaneseq
    %v6464 = vshrl.u32 %v6463, 7
    %v6465 = vsub.s32 0, %v6464
    %v6466 = vrot.slane %v6461, %v6465
    %v6468 = vadd.f32 %v6460, %v6466
    %v6469 = vmax.f32 %v6468, 0.0
    %v6470 = vld [vmem:[#allocation43] sm:$0xff]
    %v6471 = vld [vmem:[#allocation43 + $0x8] sm:$0xff]
    %v6472 = vld [vmem:[#allocation43 + $0x10] sm:$0xff]
    %v6473 = vld [vmem:[#allocation43 + $0x18] sm:$0xff]
    %v6474 = vld [vmem:[#allocation43 + $0x20] sm:$0xff]
    %v6475 = vld [vmem:[#allocation43 + $0x28] sm:$0xff]
    %v6476 = vld [vmem:[#allocation43 + $0x30] sm:$0xff]
    %v6477 = vld [vmem:[#allocation43 + $0x38] sm:$0xff]
    %v6479 = vsel %vm423, %v6469, 0
    %6481 = vmatprep.subr.mxu0 0.0
    %6482 = vmatpush1.msra.mxu0 %v6470
    %6483 = vmatprep.subr.mxu0 0.0
    %6484 = vmatpush1.msra.mxu0 %v6471
    %6485 = vmatprep.subr.mxu0 0.0
    %6486 = vmatpush1.msra.mxu0 %v6472
    %6487 = vmatprep.subr.mxu0 0.0
    %6488 = vmatpush1.msra.mxu0 %v6473
    %6489 = vmatprep.subr.mxu0 0.0
    %6490 = vmatpush1.msra.mxu0 %v6474
    %6491 = vmatprep.subr.mxu0 0.0
    %6492 = vmatpush1.msra.mxu0 %v6475
    %6493 = vmatprep.subr.mxu0 0.0
    %6494 = vmatpush1.msra.mxu0 %v6476
    %6495 = vmatprep.subr.mxu0 0.0
    %6496 = vmatpush1.msra.mxu0 %v6477
    %6497 = vmatprep.subr.mxu0 0.0
    %6498 = vmatpush1.msra.mxu0 0.0
    %6499 = vmatprep.subr.mxu0 0.0
    %6500 = vmatpush1.msra.mxu0 0.0
    %6501 = vmatprep.subr.mxu0 0.0
    %6502 = vmatpush1.msra.mxu0 0.0
    %6503 = vmatprep.subr.mxu0 0.0
    %6504 = vmatpush1.msra.mxu0 0.0
    %6505 = vmatprep.subr.mxu0 0.0
    %6506 = vmatpush1.msra.mxu0 0.0
    %6507 = vmatprep.subr.mxu0 0.0
    %6508 = vmatpush1.msra.mxu0 0.0
    %6509 = vmatprep.subr.mxu0 0.0
    %6510 = vmatpush1.msra.mxu0 0.0
    %6511 = vmatprep.subr.mxu0 0.0
    %6512 = vmatpush1.msra.mxu0 0.0
    %6513 = vmatprep.subr.mxu0 0.0
    %6514 = vmatpush1.msra.mxu0 0.0
    %6515 = vmatprep.subr.mxu0 0.0
    %6516 = vmatpush1.msra.mxu0 0.0
    %6517 = vmatprep.subr.mxu0 0.0
    %6518 = vmatpush1.msra.mxu0 0.0
    %6519 = vmatprep.subr.mxu0 0.0
    %6520 = vmatpush1.msra.mxu0 0.0
    %6521 = vmatprep.subr.mxu0 0.0
    %6522 = vmatpush1.msra.mxu0 0.0
    %6523 = vmatprep.subr.mxu0 0.0
    %6524 = vmatpush1.msra.mxu0 0.0
    %6525 = vmatprep.subr.mxu0 0.0
    %6526 = vmatpush1.msra.mxu0 0.0
    %6527 = vmatprep.subr.mxu0 0.0
    %6528 = vmatpush1.msra.mxu0 0.0
    %6529 = vmatprep.subr.mxu0 0.0
    %6530 = vmatpush1.msra.mxu0 0.0
    %6531 = vmatprep.subr.mxu0 0.0
    %6532 = vmatpush1.msra.mxu0 0.0
    %6533 = vmatprep.subr.mxu0 0.0
    %6534 = vmatpush1.msra.mxu0 0.0
    %6535 = vmatprep.subr.mxu0 0.0
    %6536 = vmatpush1.msra.mxu0 0.0
    %6537 = vmatprep.subr.mxu0 0.0
    %6538 = vmatpush1.msra.mxu0 0.0
    %6539 = vmatprep.subr.mxu0 0.0
    %6540 = vmatpush1.msra.mxu0 0.0
    %6541 = vmatprep.subr.mxu0 0.0
    %6542 = vmatpush1.msra.mxu0 0.0
    %6543 = vmatprep.subr.mxu0 0.0
    %6544 = vmatpush1.msra.mxu0 0.0
    %6545 = vmatprep.mubr.f32.mxu0 0.0
    %6546 = vmatmul.mubr.f32.gmra.mrb[0].mxu0 %v6479
    %v6547 = vpop.f32.mrb[0].mxu0
    %v6548 = vadd.f32 0.0, %v6547
    %v6549 = vpop.f32.mrb[0].mxu0
    %6550 = vdwg.mxu0
    %vm6551 = vcmask 1024
    %6552 = vst.msk [vmem:[#allocation45] sm:$0x3] %vm6551, %v6548
    // Predicated region
    $region210: #{model_forward.1} parent=1 // pred_check
      _
    $region211: #{model_forward.1} parent=1 // pred_check_branch
      %6554 = sbr.rel (0) target = $region213
    $region212: #{model_forward.1} parent=1 // pred_region
      %s6556 = ssub.s32 32, 32
      %6557 = vsyncadd [#allocation6], %s6556
      %s6559 = sshll.u32 [#allocation45], 4
      %s6560 = int_to_ptr.vmem [resolvable:$true] %s6559
      %6562 = dma.vmem_to_hbm [thread:$0]  %s6560, 32, %s26, [#allocation6]
    $region213: #{model_forward.1} parent=1 // pred_fallthru
      _
    // Predicated region
    $region214: #{model_forward.1} parent=1 // pred_check
      _
    $region215: #{model_forward.1} parent=1 // pred_check_branch
      %6564 = sbr.rel (0) target = $region217
    $region216: #{model_forward.1} parent=1 // pred_region
      %6565 = dma.done [#allocation6], 32
    $region217: #{model_forward.1} parent=1 // pred_fallthru
      _
    %6566 = vsyncpa [#allocation5], 1
    %6567 = vsyncpa [#allocation8], 1
    %6568 = vsyncpa [#allocation11], 1
    %6569 = vsyncpa [#allocation14], 1
    %6570 = vsyncpa [#allocation17], 1
    %6571 = vsyncpa [#allocation20], 1
    %6572 = vsyncpa [#allocation23], 1
    %6573 = vsyncpa [#allocation26], 1
    %6574 = vsyncpa [#allocation29], 1
    %6575 = vsyncpa [#allocation32], 1
    %6576 = vsyncpa [#allocation35], 1
    %6577 = vsyncpa [#allocation38], 1
    %6578 = vsyncpa [#allocation41], 1
    %6579 = vsyncpa [#allocation44], 1
    %6580 = vsyncpa [#allocation6], 1

</llo_original>
